<compile_context>
chip_gen: v5e
topology: v5e:2x2
jax: 0.10.0
libtpu: 0.0.40
codegen_flags: <defaults>
</compile_context>

<pallas_src>
import jax
import jax.numpy as jnp
from jax.experimental import pallas as pl
from jax.experimental.pallas import tpu as pltpu

EPS = 1e-5          # nn.BatchNorm2d default eps
LANE = 128          # TPU lane width


def _bn_relu(y, count, gamma, beta):
    """Training-mode BatchNorm2d + ReLU on a (M, Cp) f32 slab (per-lane stats)."""
    inv_count = 1.0 / count
    s = jnp.sum(y, axis=0, keepdims=True)               # (1, Cp)
    ss = jnp.sum(y * y, axis=0, keepdims=True)          # (1, Cp)  single pass
    mean = s * inv_count
    var = ss * inv_count - mean * mean                  # biased variance
    inv_std = jax.lax.rsqrt(var + EPS)                  # EUP slot
    scale = gamma * inv_std                             # (1, Cp)
    shift = beta - mean * scale                         # (1, Cp)
    return jnp.maximum(y * scale + shift, 0.0)


def _resblock_kernel(x_ref, w1_ref, w2_ref, g1_ref, b1_ref, g2_ref, b2_ref,
                     out_ref, pad_ref):
    # x_ref  : (N, H, W, Cp)      f32 NHWC, channels zero-padded to LANE
    # w*_ref : (9*Cp, Cp)         bf16, rows ordered (kh, kw, cin)
    # g*,b*  : (1, Cp)            f32 BatchNorm affine params (zero-padded)
    # out_ref: (N, H, W, Cp)      f32 (lane-dense, Cp = 128-multiple)
    # pad_ref: (N, H+2, W+2, Cp)  f32 VMEM scratch shared by both convs
    N, H, W, Cp = x_ref.shape
    Hp, Wp = H + 2, W + 2
    M = N * H * W

    # Zero only the 1-pixel halo, once. The interior is fully overwritten
    # before each conv; the halo stays zero across both convs.
    zrow = jnp.zeros((N, 1, Wp, Cp), jnp.float32)
    zcol = jnp.zeros((N, H, 1, Cp), jnp.float32)
    pad_ref[:, 0:1, :, :] = zrow
    pad_ref[:, Hp - 1:Hp, :, :] = zrow
    pad_ref[:, 1:1 + H, 0:1, :] = zcol
    pad_ref[:, 1:1 + H, Wp - 1:Wp, :] = zcol

    def conv3x3(w_ref):
        # im2col: 9 lane-aligned shifted slabs concatenated along lanes, then
        # one MXU matmul with K = 9*Cp (bf16 operands, f32 accumulation).
        cols = []
        for kh in range(3):
            for kw in range(3):
                cols.append(
                    pad_ref[:, kh:kh + H, kw:kw + W, :]
                    .reshape(M, Cp).astype(jnp.bfloat16))
        patches = jnp.concatenate(cols, axis=-1)          # (M, 9*Cp) bf16
        return jnp.dot(patches, w_ref[...],
                       preferred_element_type=jnp.float32)  # (M, Cp) f32

    x_f32 = x_ref[...]                                    # residual branch (f32)

    # ---- conv1 -> bn1 -> relu1 ----
    pad_ref[:, 1:1 + H, 1:1 + W, :] = x_f32
    y1 = _bn_relu(conv3x3(w1_ref), M, g1_ref[...], b1_ref[...])   # (M, Cp)

    # ---- conv2 -> bn2 -> relu2 ----
    pad_ref[:, 1:1 + H, 1:1 + W, :] = y1.reshape(N, H, W, Cp)
    y2 = _bn_relu(conv3x3(w2_ref), M, g2_ref[...], b2_ref[...])   # (M, Cp)

    # ---- residual add (128-lane-dense unmasked store) ----
    out_ref[...] = x_f32 + y2.reshape(N, H, W, Cp)


@jax.jit
def resblock2d_pallas(x_nchw, w1_oihw, w2_oihw, gamma1, beta1, gamma2, beta2):
    """x_nchw: (N, C, H, W) float32; conv weights in PyTorch OIHW layout."""
    N, C, H, W = x_nchw.shape
    Cp = ((C + LANE - 1) // LANE) * LANE

    # NCHW -> NHWC + channel pad to a 128 multiple (single fused XLA relayout;
    # the spatial halo is handled inside the kernel, no jnp.pad HBM pass).
    x_nhwc = jnp.transpose(x_nchw, (0, 2, 3, 1)).astype(jnp.float32)
    x_nhwc = jnp.pad(x_nhwc, ((0, 0), (0, 0), (0, 0), (0, Cp - C)))

    def pack_w(w_oihw):
        # OIHW -> (kh, kw, cin, cout), zero-pad channels, flatten K = 9*Cp, bf16.
        w = jnp.transpose(w_oihw, (2, 3, 1, 0)).astype(jnp.float32)
        w = jnp.pad(w, ((0, 0), (0, 0), (0, Cp - C), (0, Cp - C)))
        return w.reshape(9 * Cp, Cp).astype(jnp.bfloat16)

    def pack_vec(v):
        return jnp.pad(v.reshape(1, C).astype(jnp.float32),
                       ((0, 0), (0, Cp - C)))

    w1, w2 = pack_w(w1_oihw), pack_w(w2_oihw)
    g1, b1, g2, b2 = map(pack_vec, (gamma1, beta1, gamma2, beta2))

    vmem = pl.BlockSpec(memory_space=pltpu.MemorySpace.VMEM)

    out_nhwc = pl.pallas_call(
        _resblock_kernel,
        out_shape=jax.ShapeDtypeStruct((N, H, W, Cp), jnp.float32),
        in_specs=[vmem] * 7,
        out_specs=vmem,
        scratch_shapes=[pltpu.VMEM((N, H + 2, W + 2, Cp), jnp.float32)],
        compiler_params=pltpu.CompilerParams(
            vmem_limit_bytes=32 * 1024 * 1024),
    )(x_nhwc, w1, w2, g1, b1, g2, b2)

    # drop channel padding, NHWC -> NCHW
    return jnp.transpose(out_nhwc[..., :C], (0, 3, 1, 2))


def resblock2d_ref(x, w1, w2, g1, b1, g2, b2):
    """Pure-JAX f32 reference matching the PyTorch forward (training-mode BN)."""
    def conv(a, w):
        return jax.lax.conv_general_dilated(
            a, w, window_strides=(1, 1), padding=((1, 1), (1, 1)),
            dimension_numbers=("NCHW", "OIHW", "NCHW"))

    def bn_relu(y, g, b):
        mean = y.mean(axis=(0, 2, 3), keepdims=True)
        var = ((y - mean) ** 2).mean(axis=(0, 2, 3), keepdims=True)
        yn = (y - mean) / jnp.sqrt(var + EPS)
        return jnp.maximum(yn * g.reshape(1, -1, 1, 1) + b.reshape(1, -1, 1, 1), 0.0)

    y = bn_relu(conv(x, w1), g1, b1)
    y = bn_relu(conv(y, w2), g2, b2)
    return x + y


if __name__ == "__main__":
    key = jax.random.PRNGKey(0)
    kx, kw1, kw2, kg1, kb1, kg2, kb2 = jax.random.split(key, 7)

    N, C, H, W = 2, 4, 16, 16
    x = jax.random.normal(kx, (N, C, H, W), dtype=jnp.float32)

    # deterministic parameter init (shapes from Resblock2d.__init__)
    w1 = 0.1 * jax.random.normal(kw1, (C, C, 3, 3), dtype=jnp.float32)   # Conv2d_1.weight
    w2 = 0.1 * jax.random.normal(kw2, (C, C, 3, 3), dtype=jnp.float32)   # Conv2d_2.weight
    gamma1 = 1.0 + 0.1 * jax.random.normal(kg1, (C,), dtype=jnp.float32)  # norm_1.weight
    beta1 = 0.1 * jax.random.normal(kb1, (C,), dtype=jnp.float32)         # norm_1.bias
    gamma2 = 1.0 + 0.1 * jax.random.normal(kg2, (C,), dtype=jnp.float32)  # norm_2.weight
    beta2 = 0.1 * jax.random.normal(kb2, (C,), dtype=jnp.float32)         # norm_2.bias

    out = jax.block_until_ready(
        resblock2d_pallas(x, w1, w2, gamma1, beta1, gamma2, beta2))
    ref = jax.block_until_ready(
        resblock2d_ref(x, w1, w2, gamma1, beta1, gamma2, beta2))

    assert out.shape == (N, C, H, W)
    # bf16 MXU operands with f32 accumulation -> bf16-appropriate tolerance
    # vs the pure-f32 reference.
    assert jnp.allclose(out, ref, atol=2e-2, rtol=2e-2), "mismatch vs reference"

    print("KERNEL_OK")
</pallas_src>

<mosaic_0001>
module attributes {stable_mosaic.version = 11 : i64} {
  func.func @_resblock_kernel(%arg0: memref<2x16x16x128xf32, #tpu.memory_space<vmem>>, %arg1: memref<1152x128xbf16, #tpu.memory_space<vmem>>, %arg2: memref<1152x128xbf16, #tpu.memory_space<vmem>>, %arg3: memref<1x128xf32, #tpu.memory_space<vmem>>, %arg4: memref<1x128xf32, #tpu.memory_space<vmem>>, %arg5: memref<1x128xf32, #tpu.memory_space<vmem>>, %arg6: memref<1x128xf32, #tpu.memory_space<vmem>>, %arg7: memref<2x16x16x128xf32, #tpu.memory_space<vmem>>, %arg8: memref<2x18x18x128xf32, #tpu.memory_space<vmem>>) attributes {dimension_semantics = [], scalar_prefetch = 0 : i64, scratch_operands = 1 : i64, tpu.core_type = #tpu.core_type<tc>} {
    %cst = arith.constant 0.000000e+00 : f32
    %0 = vector.broadcast %cst : f32 to vector<2x1x18x128xf32>
    %cst_0 = arith.constant 0.000000e+00 : f32
    %1 = vector.broadcast %cst_0 : f32 to vector<2x16x1x128xf32>
    %c0 = arith.constant 0 : index
    %c0_1 = arith.constant 0 : index
    %c0_2 = arith.constant 0 : index
    %c0_3 = arith.constant 0 : index
    %2 = vector.load %arg8[%c0, %c0_1, %c0_2, %c0_3] : memref<2x18x18x128xf32, #tpu.memory_space<vmem>>, vector<2x1x18x128xf32>
    tpu.vector_store %arg8[%c0, %c0_1, %c0_2, %c0_3], %0 {strides = array<i32>} : memref<2x18x18x128xf32, #tpu.memory_space<vmem>>, vector<2x1x18x128xf32>,
    %c0_4 = arith.constant 0 : index
    %c17 = arith.constant 17 : index
    %c0_5 = arith.constant 0 : index
    %c0_6 = arith.constant 0 : index
    %3 = vector.load %arg8[%c0_4, %c17, %c0_5, %c0_6] : memref<2x18x18x128xf32, #tpu.memory_space<vmem>>, vector<2x1x18x128xf32>
    tpu.vector_store %arg8[%c0_4, %c17, %c0_5, %c0_6], %0 {strides = array<i32>} : memref<2x18x18x128xf32, #tpu.memory_space<vmem>>, vector<2x1x18x128xf32>,
    %c0_7 = arith.constant 0 : index
    %c1 = arith.constant 1 : index
    %c0_8 = arith.constant 0 : index
    %c0_9 = arith.constant 0 : index
    %4 = vector.load %arg8[%c0_7, %c1, %c0_8, %c0_9] : memref<2x18x18x128xf32, #tpu.memory_space<vmem>>, vector<2x16x1x128xf32>
    tpu.vector_store %arg8[%c0_7, %c1, %c0_8, %c0_9], %1 {strides = array<i32>} : memref<2x18x18x128xf32, #tpu.memory_space<vmem>>, vector<2x16x1x128xf32>,
    %c0_10 = arith.constant 0 : index
    %c1_11 = arith.constant 1 : index
    %c17_12 = arith.constant 17 : index
    %c0_13 = arith.constant 0 : index
    %5 = vector.load %arg8[%c0_10, %c1_11, %c17_12, %c0_13] : memref<2x18x18x128xf32, #tpu.memory_space<vmem>>, vector<2x16x1x128xf32>
    tpu.vector_store %arg8[%c0_10, %c1_11, %c17_12, %c0_13], %1 {strides = array<i32>} : memref<2x18x18x128xf32, #tpu.memory_space<vmem>>, vector<2x16x1x128xf32>,
    %c0_14 = arith.constant 0 : index
    %c0_15 = arith.constant 0 : index
    %c0_16 = arith.constant 0 : index
    %c0_17 = arith.constant 0 : index
    %6 = vector.load %arg0[%c0_14, %c0_15, %c0_16, %c0_17] : memref<2x16x16x128xf32, #tpu.memory_space<vmem>>, vector<2x16x16x128xf32>
    %c0_18 = arith.constant 0 : index
    %c1_19 = arith.constant 1 : index
    %c1_20 = arith.constant 1 : index
    %c0_21 = arith.constant 0 : index
    %7 = vector.load %arg8[%c0_18, %c1_19, %c1_20, %c0_21] : memref<2x18x18x128xf32, #tpu.memory_space<vmem>>, vector<2x16x16x128xf32>
    tpu.vector_store %arg8[%c0_18, %c1_19, %c1_20, %c0_21], %6 {strides = array<i32>} : memref<2x18x18x128xf32, #tpu.memory_space<vmem>>, vector<2x16x16x128xf32>,
    %c0_22 = arith.constant 0 : index
    %c0_23 = arith.constant 0 : index
    %c0_24 = arith.constant 0 : index
    %c0_25 = arith.constant 0 : index
    %8 = vector.load %arg8[%c0_22, %c0_23, %c0_24, %c0_25] : memref<2x18x18x128xf32, #tpu.memory_space<vmem>>, vector<2x16x16x128xf32>
    %9 = vector.shape_cast %8 : vector<2x16x16x128xf32> to vector<512x128xf32>
    %10 = arith.truncf %9 : vector<512x128xf32> to vector<512x128xbf16>
    %c0_26 = arith.constant 0 : index
    %c0_27 = arith.constant 0 : index
    %c1_28 = arith.constant 1 : index
    %c0_29 = arith.constant 0 : index
    %11 = vector.load %arg8[%c0_26, %c0_27, %c1_28, %c0_29] : memref<2x18x18x128xf32, #tpu.memory_space<vmem>>, vector<2x16x16x128xf32>
    %12 = vector.shape_cast %11 : vector<2x16x16x128xf32> to vector<512x128xf32>
    %13 = arith.truncf %12 : vector<512x128xf32> to vector<512x128xbf16>
    %c0_30 = arith.constant 0 : index
    %c0_31 = arith.constant 0 : index
    %c2 = arith.constant 2 : index
    %c0_32 = arith.constant 0 : index
    %14 = vector.load %arg8[%c0_30, %c0_31, %c2, %c0_32] : memref<2x18x18x128xf32, #tpu.memory_space<vmem>>, vector<2x16x16x128xf32>
    %15 = vector.shape_cast %14 : vector<2x16x16x128xf32> to vector<512x128xf32>
    %16 = arith.truncf %15 : vector<512x128xf32> to vector<512x128xbf16>
    %c0_33 = arith.constant 0 : index
    %c1_34 = arith.constant 1 : index
    %c0_35 = arith.constant 0 : index
    %c0_36 = arith.constant 0 : index
    %17 = vector.load %arg8[%c0_33, %c1_34, %c0_35, %c0_36] : memref<2x18x18x128xf32, #tpu.memory_space<vmem>>, vector<2x16x16x128xf32>
    %18 = vector.shape_cast %17 : vector<2x16x16x128xf32> to vector<512x128xf32>
    %19 = arith.truncf %18 : vector<512x128xf32> to vector<512x128xbf16>
    %c0_37 = arith.constant 0 : index
    %c1_38 = arith.constant 1 : index
    %c1_39 = arith.constant 1 : index
    %c0_40 = arith.constant 0 : index
    %20 = vector.load %arg8[%c0_37, %c1_38, %c1_39, %c0_40] : memref<2x18x18x128xf32, #tpu.memory_space<vmem>>, vector<2x16x16x128xf32>
    %21 = vector.shape_cast %20 : vector<2x16x16x128xf32> to vector<512x128xf32>
    %22 = arith.truncf %21 : vector<512x128xf32> to vector<512x128xbf16>
    %c0_41 = arith.constant 0 : index
    %c1_42 = arith.constant 1 : index
    %c2_43 = arith.constant 2 : index
    %c0_44 = arith.constant 0 : index
    %23 = vector.load %arg8[%c0_41, %c1_42, %c2_43, %c0_44] : memref<2x18x18x128xf32, #tpu.memory_space<vmem>>, vector<2x16x16x128xf32>
    %24 = vector.shape_cast %23 : vector<2x16x16x128xf32> to vector<512x128xf32>
    %25 = arith.truncf %24 : vector<512x128xf32> to vector<512x128xbf16>
    %c0_45 = arith.constant 0 : index
    %c2_46 = arith.constant 2 : index
    %c0_47 = arith.constant 0 : index
    %c0_48 = arith.constant 0 : index
    %26 = vector.load %arg8[%c0_45, %c2_46, %c0_47, %c0_48] : memref<2x18x18x128xf32, #tpu.memory_space<vmem>>, vector<2x16x16x128xf32>
    %27 = vector.shape_cast %26 : vector<2x16x16x128xf32> to vector<512x128xf32>
    %28 = arith.truncf %27 : vector<512x128xf32> to vector<512x128xbf16>
    %c0_49 = arith.constant 0 : index
    %c2_50 = arith.constant 2 : index
    %c1_51 = arith.constant 1 : index
    %c0_52 = arith.constant 0 : index
    %29 = vector.load %arg8[%c0_49, %c2_50, %c1_51, %c0_52] : memref<2x18x18x128xf32, #tpu.memory_space<vmem>>, vector<2x16x16x128xf32>
    %30 = vector.shape_cast %29 : vector<2x16x16x128xf32> to vector<512x128xf32>
    %31 = arith.truncf %30 : vector<512x128xf32> to vector<512x128xbf16>
    %c0_53 = arith.constant 0 : index
    %c2_54 = arith.constant 2 : index
    %c2_55 = arith.constant 2 : index
    %c0_56 = arith.constant 0 : index
    %32 = vector.load %arg8[%c0_53, %c2_54, %c2_55, %c0_56] : memref<2x18x18x128xf32, #tpu.memory_space<vmem>>, vector<2x16x16x128xf32>
    %33 = vector.shape_cast %32 : vector<2x16x16x128xf32> to vector<512x128xf32>
    %34 = arith.truncf %33 : vector<512x128xf32> to vector<512x128xbf16>
    %35 = tpu.concatenate %10, %13, %16, %19, %22, %25, %28, %31, %34 in 1 : vector<512x128xbf16>, vector<512x128xbf16>, vector<512x128xbf16>, vector<512x128xbf16>, vector<512x128xbf16>, vector<512x128xbf16>, vector<512x128xbf16>, vector<512x128xbf16>, vector<512x128xbf16> -> vector<512x1152xbf16>
    %c0_57 = arith.constant 0 : index
    %c0_58 = arith.constant 0 : index
    %36 = vector.load %arg1[%c0_57, %c0_58] : memref<1152x128xbf16, #tpu.memory_space<vmem>>, vector<1152x128xbf16>
    %cst_59 = arith.constant dense<0.000000e+00> : vector<512x128xf32>
    %37 = tpu.matmul %35, %36, %cst_59 {dimension_numbers = #tpu.dot_dimension_numbers<[1], [0], [0], [1], [0, 0, 1, 1], [], []>} : vector<512x1152xbf16>, vector<1152x128xbf16>, vector<512x128xf32> -> vector<512x128xf32>
    %c0_60 = arith.constant 0 : index
    %c0_61 = arith.constant 0 : index
    %38 = vector.load %arg3[%c0_60, %c0_61] : memref<1x128xf32, #tpu.memory_space<vmem>>, vector<1x128xf32>
    %c0_62 = arith.constant 0 : index
    %c0_63 = arith.constant 0 : index
    %39 = vector.load %arg4[%c0_62, %c0_63] : memref<1x128xf32, #tpu.memory_space<vmem>>, vector<1x128xf32>
    %cst_64 = arith.constant dense<0.000000e+00> : vector<128xf32>
    %40 = vector.multi_reduction <add>, %37, %cst_64 [0] : vector<512x128xf32> to vector<128xf32>
    %41 = vector.shape_cast %40 : vector<128xf32> to vector<1x128xf32>
    %42 = arith.mulf %37, %37 : vector<512x128xf32>
    %cst_65 = arith.constant dense<0.000000e+00> : vector<128xf32>
    %43 = vector.multi_reduction <add>, %42, %cst_65 [0] : vector<512x128xf32> to vector<128xf32>
    %44 = vector.shape_cast %43 : vector<128xf32> to vector<1x128xf32>
    %cst_66 = arith.constant 0.001953125 : f32
    %45 = vector.broadcast %cst_66 : f32 to vector<1x128xf32>
    %46 = arith.mulf %41, %45 : vector<1x128xf32>
    %cst_67 = arith.constant 0.001953125 : f32
    %47 = vector.broadcast %cst_67 : f32 to vector<1x128xf32>
    %48 = arith.mulf %44, %47 : vector<1x128xf32>
    %49 = arith.mulf %46, %46 : vector<1x128xf32>
    %50 = arith.subf %48, %49 : vector<1x128xf32>
    %cst_68 = arith.constant 9.99999974E-6 : f32
    %51 = vector.broadcast %cst_68 : f32 to vector<1x128xf32>
    %52 = arith.addf %50, %51 : vector<1x128xf32>
    %53 = math.rsqrt %52 : vector<1x128xf32>
    %54 = arith.mulf %38, %53 : vector<1x128xf32>
    %55 = arith.mulf %46, %54 : vector<1x128xf32>
    %56 = arith.subf %39, %55 : vector<1x128xf32>
    %57 = vector.broadcast %54 : vector<1x128xf32> to vector<512x128xf32>
    %58 = arith.mulf %37, %57 : vector<512x128xf32>
    %59 = vector.broadcast %56 : vector<1x128xf32> to vector<512x128xf32>
    %60 = arith.addf %58, %59 : vector<512x128xf32>
    %cst_69 = arith.constant 0.000000e+00 : f32
    %61 = vector.broadcast %cst_69 : f32 to vector<512x128xf32>
    %62 = arith.maximumf %60, %61 : vector<512x128xf32>
    %63 = vector.shape_cast %62 : vector<512x128xf32> to vector<2x16x16x128xf32>
    %c0_70 = arith.constant 0 : index
    %c1_71 = arith.constant 1 : index
    %c1_72 = arith.constant 1 : index
    %c0_73 = arith.constant 0 : index
    %64 = vector.load %arg8[%c0_70, %c1_71, %c1_72, %c0_73] : memref<2x18x18x128xf32, #tpu.memory_space<vmem>>, vector<2x16x16x128xf32>
    tpu.vector_store %arg8[%c0_70, %c1_71, %c1_72, %c0_73], %63 {strides = array<i32>} : memref<2x18x18x128xf32, #tpu.memory_space<vmem>>, vector<2x16x16x128xf32>,
    %c0_74 = arith.constant 0 : index
    %c0_75 = arith.constant 0 : index
    %c0_76 = arith.constant 0 : index
    %c0_77 = arith.constant 0 : index
    %65 = vector.load %arg8[%c0_74, %c0_75, %c0_76, %c0_77] : memref<2x18x18x128xf32, #tpu.memory_space<vmem>>, vector<2x16x16x128xf32>
    %66 = vector.shape_cast %65 : vector<2x16x16x128xf32> to vector<512x128xf32>
    %67 = arith.truncf %66 : vector<512x128xf32> to vector<512x128xbf16>
    %c0_78 = arith.constant 0 : index
    %c0_79 = arith.constant 0 : index
    %c1_80 = arith.constant 1 : index
    %c0_81 = arith.constant 0 : index
    %68 = vector.load %arg8[%c0_78, %c0_79, %c1_80, %c0_81] : memref<2x18x18x128xf32, #tpu.memory_space<vmem>>, vector<2x16x16x128xf32>
    %69 = vector.shape_cast %68 : vector<2x16x16x128xf32> to vector<512x128xf32>
    %70 = arith.truncf %69 : vector<512x128xf32> to vector<512x128xbf16>
    %c0_82 = arith.constant 0 : index
    %c0_83 = arith.constant 0 : index
    %c2_84 = arith.constant 2 : index
    %c0_85 = arith.constant 0 : index
    %71 = vector.load %arg8[%c0_82, %c0_83, %c2_84, %c0_85] : memref<2x18x18x128xf32, #tpu.memory_space<vmem>>, vector<2x16x16x128xf32>
    %72 = vector.shape_cast %71 : vector<2x16x16x128xf32> to vector<512x128xf32>
    %73 = arith.truncf %72 : vector<512x128xf32> to vector<512x128xbf16>
    %c0_86 = arith.constant 0 : index
    %c1_87 = arith.constant 1 : index
    %c0_88 = arith.constant 0 : index
    %c0_89 = arith.constant 0 : index
    %74 = vector.load %arg8[%c0_86, %c1_87, %c0_88, %c0_89] : memref<2x18x18x128xf32, #tpu.memory_space<vmem>>, vector<2x16x16x128xf32>
    %75 = vector.shape_cast %74 : vector<2x16x16x128xf32> to vector<512x128xf32>
    %76 = arith.truncf %75 : vector<512x128xf32> to vector<512x128xbf16>
    %c0_90 = arith.constant 0 : index
    %c1_91 = arith.constant 1 : index
    %c1_92 = arith.constant 1 : index
    %c0_93 = arith.constant 0 : index
    %77 = vector.load %arg8[%c0_90, %c1_91, %c1_92, %c0_93] : memref<2x18x18x128xf32, #tpu.memory_space<vmem>>, vector<2x16x16x128xf32>
    %78 = vector.shape_cast %77 : vector<2x16x16x128xf32> to vector<512x128xf32>
    %79 = arith.truncf %78 : vector<512x128xf32> to vector<512x128xbf16>
    %c0_94 = arith.constant 0 : index
    %c1_95 = arith.constant 1 : index
    %c2_96 = arith.constant 2 : index
    %c0_97 = arith.constant 0 : index
    %80 = vector.load %arg8[%c0_94, %c1_95, %c2_96, %c0_97] : memref<2x18x18x128xf32, #tpu.memory_space<vmem>>, vector<2x16x16x128xf32>
    %81 = vector.shape_cast %80 : vector<2x16x16x128xf32> to vector<512x128xf32>
    %82 = arith.truncf %81 : vector<512x128xf32> to vector<512x128xbf16>
    %c0_98 = arith.constant 0 : index
    %c2_99 = arith.constant 2 : index
    %c0_100 = arith.constant 0 : index
    %c0_101 = arith.constant 0 : index
    %83 = vector.load %arg8[%c0_98, %c2_99, %c0_100, %c0_101] : memref<2x18x18x128xf32, #tpu.memory_space<vmem>>, vector<2x16x16x128xf32>
    %84 = vector.shape_cast %83 : vector<2x16x16x128xf32> to vector<512x128xf32>
    %85 = arith.truncf %84 : vector<512x128xf32> to vector<512x128xbf16>
    %c0_102 = arith.constant 0 : index
    %c2_103 = arith.constant 2 : index
    %c1_104 = arith.constant 1 : index
    %c0_105 = arith.constant 0 : index
    %86 = vector.load %arg8[%c0_102, %c2_103, %c1_104, %c0_105] : memref<2x18x18x128xf32, #tpu.memory_space<vmem>>, vector<2x16x16x128xf32>
    %87 = vector.shape_cast %86 : vector<2x16x16x128xf32> to vector<512x128xf32>
    %88 = arith.truncf %87 : vector<512x128xf32> to vector<512x128xbf16>
    %c0_106 = arith.constant 0 : index
    %c2_107 = arith.constant 2 : index
    %c2_108 = arith.constant 2 : index
    %c0_109 = arith.constant 0 : index
    %89 = vector.load %arg8[%c0_106, %c2_107, %c2_108, %c0_109] : memref<2x18x18x128xf32, #tpu.memory_space<vmem>>, vector<2x16x16x128xf32>
    %90 = vector.shape_cast %89 : vector<2x16x16x128xf32> to vector<512x128xf32>
    %91 = arith.truncf %90 : vector<512x128xf32> to vector<512x128xbf16>
    %92 = tpu.concatenate %67, %70, %73, %76, %79, %82, %85, %88, %91 in 1 : vector<512x128xbf16>, vector<512x128xbf16>, vector<512x128xbf16>, vector<512x128xbf16>, vector<512x128xbf16>, vector<512x128xbf16>, vector<512x128xbf16>, vector<512x128xbf16>, vector<512x128xbf16> -> vector<512x1152xbf16>
    %c0_110 = arith.constant 0 : index
    %c0_111 = arith.constant 0 : index
    %93 = vector.load %arg2[%c0_110, %c0_111] : memref<1152x128xbf16, #tpu.memory_space<vmem>>, vector<1152x128xbf16>
    %cst_112 = arith.constant dense<0.000000e+00> : vector<512x128xf32>
    %94 = tpu.matmul %92, %93, %cst_112 {dimension_numbers = #tpu.dot_dimension_numbers<[1], [0], [0], [1], [0, 0, 1, 1], [], []>} : vector<512x1152xbf16>, vector<1152x128xbf16>, vector<512x128xf32> -> vector<512x128xf32>
    %c0_113 = arith.constant 0 : index
    %c0_114 = arith.constant 0 : index
    %95 = vector.load %arg5[%c0_113, %c0_114] : memref<1x128xf32, #tpu.memory_space<vmem>>, vector<1x128xf32>
    %c0_115 = arith.constant 0 : index
    %c0_116 = arith.constant 0 : index
    %96 = vector.load %arg6[%c0_115, %c0_116] : memref<1x128xf32, #tpu.memory_space<vmem>>, vector<1x128xf32>
    %cst_117 = arith.constant dense<0.000000e+00> : vector<128xf32>
    %97 = vector.multi_reduction <add>, %94, %cst_117 [0] : vector<512x128xf32> to vector<128xf32>
    %98 = vector.shape_cast %97 : vector<128xf32> to vector<1x128xf32>
    %99 = arith.mulf %94, %94 : vector<512x128xf32>
    %cst_118 = arith.constant dense<0.000000e+00> : vector<128xf32>
    %100 = vector.multi_reduction <add>, %99, %cst_118 [0] : vector<512x128xf32> to vector<128xf32>
    %101 = vector.shape_cast %100 : vector<128xf32> to vector<1x128xf32>
    %cst_119 = arith.constant 0.001953125 : f32
    %102 = vector.broadcast %cst_119 : f32 to vector<1x128xf32>
    %103 = arith.mulf %98, %102 : vector<1x128xf32>
    %cst_120 = arith.constant 0.001953125 : f32
    %104 = vector.broadcast %cst_120 : f32 to vector<1x128xf32>
    %105 = arith.mulf %101, %104 : vector<1x128xf32>
    %106 = arith.mulf %103, %103 : vector<1x128xf32>
    %107 = arith.subf %105, %106 : vector<1x128xf32>
    %cst_121 = arith.constant 9.99999974E-6 : f32
    %108 = vector.broadcast %cst_121 : f32 to vector<1x128xf32>
    %109 = arith.addf %107, %108 : vector<1x128xf32>
    %110 = math.rsqrt %109 : vector<1x128xf32>
    %111 = arith.mulf %95, %110 : vector<1x128xf32>
    %112 = arith.mulf %103, %111 : vector<1x128xf32>
    %113 = arith.subf %96, %112 : vector<1x128xf32>
    %114 = vector.broadcast %111 : vector<1x128xf32> to vector<512x128xf32>
    %115 = arith.mulf %94, %114 : vector<512x128xf32>
    %116 = vector.broadcast %113 : vector<1x128xf32> to vector<512x128xf32>
    %117 = arith.addf %115, %116 : vector<512x128xf32>
    %cst_122 = arith.constant 0.000000e+00 : f32
    %118 = vector.broadcast %cst_122 : f32 to vector<512x128xf32>
    %119 = arith.maximumf %117, %118 : vector<512x128xf32>
    %120 = vector.shape_cast %119 : vector<512x128xf32> to vector<2x16x16x128xf32>
    %121 = arith.addf %6, %120 : vector<2x16x16x128xf32>
    %c0_123 = arith.constant 0 : index
    %c0_124 = arith.constant 0 : index
    %c0_125 = arith.constant 0 : index
    %c0_126 = arith.constant 0 : index
    %122 = vector.load %arg7[%c0_123, %c0_124, %c0_125, %c0_126] : memref<2x16x16x128xf32, #tpu.memory_space<vmem>>, vector<2x16x16x128xf32>
    tpu.vector_store %arg7[%c0_123, %c0_124, %c0_125, %c0_126], %121 {strides = array<i32>} : memref<2x16x16x128xf32, #tpu.memory_space<vmem>>, vector<2x16x16x128xf32>,
    return
  }
}

</mosaic_0001>

<llo_original>
// kernel: resblock2d_pallas.1
$region0: #{resblock2d_pallas.1}
  #allocation0 [shape = 'u32[]', space=smem, size = 0x4, offset = 0x4, fixed_abs, tag = 'smem constant byte address 0x4 - core index']
  #allocation1 [shape = 'u32[72,128]{1,0:T(1,128)}', space=vmem, size = 0x9000, scoped, tag = 'internal scratch']
  #allocation2 [shape = 'f32[2,18,18,128]{3,2,1,0:T(8,128)}', space=vmem, size = 0x6c000, scoped, tag = 'scratch operand']
  %s0 = inlined_call_operand.vmem [shape: f32[2,16,16,128], index: 0, kind: input, shape index: {}]
  %s1 = inlined_call_operand.vmem [shape: bf16[1152,128], index: 1, kind: input, shape index: {}]
  %s2 = inlined_call_operand.vmem [shape: bf16[1152,128], index: 2, kind: input, shape index: {}]
  %s3 = inlined_call_operand.vmem [shape: f32[1,128], index: 3, kind: input, shape index: {}]
  %s4 = inlined_call_operand.vmem [shape: f32[1,128], index: 4, kind: input, shape index: {}]
  %s5 = inlined_call_operand.vmem [shape: f32[1,128], index: 5, kind: input, shape index: {}]
  %s6 = inlined_call_operand.vmem [shape: f32[1,128], index: 6, kind: input, shape index: {}]
  %s7 = inlined_call_operand.vmem [shape: f32[2,16,16,128], index: 7, kind: output, shape index: {}]
  %s8 = sld [smem:[#allocation0]]
  $region38: #{resblock2d_pallas.1} parent=0
    _
  %s10 = ssub.s32 1, %s8
  %s11 = scalar_select 0, %s10, %s8
  // Predicated region
  $region2: #{resblock2d_pallas.1} parent=0 // pred_check
    _
  $region3: #{resblock2d_pallas.1} parent=0 // pred_check_branch
    %13 = sbr.rel (0) target = $region5
  $region4: #{resblock2d_pallas.1} parent=0 // pred_region
    _
  $region5: #{resblock2d_pallas.1} parent=0 // pred_fallthru
    _
  // Predicated region
  $region6: #{resblock2d_pallas.1} parent=0 // pred_check
    _
  $region7: #{resblock2d_pallas.1} parent=0 // pred_check_branch
    %15 = sbr.rel (0) target = $region9
  $region8: #{resblock2d_pallas.1} parent=0 // pred_region
    _
  $region9: #{resblock2d_pallas.1} parent=0 // pred_fallthru
    _
  // Predicated region
  $region10: #{resblock2d_pallas.1} parent=0 // pred_check
    _
  $region11: #{resblock2d_pallas.1} parent=0 // pred_check_branch
    %17 = sbr.rel (0) target = $region13
  $region12: #{resblock2d_pallas.1} parent=0 // pred_region
    _
  $region13: #{resblock2d_pallas.1} parent=0 // pred_fallthru
    _
  // Predicated region
  $region14: #{resblock2d_pallas.1} parent=0 // pred_check
    _
  $region15: #{resblock2d_pallas.1} parent=0 // pred_check_branch
    %19 = sbr.rel (0) target = $region17
  $region16: #{resblock2d_pallas.1} parent=0 // pred_region
    _
  $region17: #{resblock2d_pallas.1} parent=0 // pred_fallthru
    _
  // Predicated region
  $region18: #{resblock2d_pallas.1} parent=0 // pred_check
    _
  $region19: #{resblock2d_pallas.1} parent=0 // pred_check_branch
    %21 = sbr.rel (0) target = $region21
  $region20: #{resblock2d_pallas.1} parent=0 // pred_region
    _
  $region21: #{resblock2d_pallas.1} parent=0 // pred_fallthru
    _
  // Predicated region
  $region22: #{resblock2d_pallas.1} parent=0 // pred_check
    _
  $region23: #{resblock2d_pallas.1} parent=0 // pred_check_branch
    %23 = sbr.rel (0) target = $region25
  $region24: #{resblock2d_pallas.1} parent=0 // pred_region
    _
  $region25: #{resblock2d_pallas.1} parent=0 // pred_fallthru
    _
  // Predicated region
  $region26: #{resblock2d_pallas.1} parent=0 // pred_check
    _
  $region27: #{resblock2d_pallas.1} parent=0 // pred_check_branch
    %25 = sbr.rel (0) target = $region29
  $region28: #{resblock2d_pallas.1} parent=0 // pred_region
    _
  $region29: #{resblock2d_pallas.1} parent=0 // pred_fallthru
    _
  %26 = vst [vmem:[#allocation2] sm:$0xff] 0.0
  %27 = vst [vmem:[#allocation2 + $0x8] sm:$0xff] 0.0
  %28 = vst [vmem:[#allocation2 + $0x10] sm:$0x3] 0.0
  %29 = vst [vmem:[#allocation2 + $0x1b0] sm:$0xff] 0.0
  %30 = vst [vmem:[#allocation2 + $0x1b8] sm:$0xff] 0.0
  %31 = vst [vmem:[#allocation2 + $0x1c0] sm:$0x3] 0.0
  %s32 = scalar_lea.vmem [#allocation2], 408
  %33 = vst [vmem:[%s32] sm:$0xff] 0.0
  %34 = vst [vmem:[%s32 + $0x8] sm:$0xff] 0.0
  %35 = vst [vmem:[%s32 + $0x10] sm:$0x3] 0.0
  %36 = vst [vmem:[%s32 + $0x1b0] sm:$0xff] 0.0
  %37 = vst [vmem:[%s32 + $0x1b8] sm:$0xff] 0.0
  %38 = vst [vmem:[%s32 + $0x1c0] sm:$0x3] 0.0
  %s39 = scalar_lea.vmem [#allocation2], 24
  %40 = vst [vmem:[%s39] sm:$0x1] 0.0
  %41 = vst [vmem:[%s39 + $0x18] sm:$0x1] 0.0
  %42 = vst [vmem:[%s39 + $0x30] sm:$0x1] 0.0
  %43 = vst [vmem:[%s39 + $0x48] sm:$0x1] 0.0
  %44 = vst [vmem:[%s39 + $0x60] sm:$0x1] 0.0
  %45 = vst [vmem:[%s39 + $0x78] sm:$0x1] 0.0
  %46 = vst [vmem:[%s39 + $0x90] sm:$0x1] 0.0
  %47 = vst [vmem:[%s39 + $0xa8] sm:$0x1] 0.0
  %48 = vst [vmem:[%s39 + $0xc0] sm:$0x1] 0.0
  %49 = vst [vmem:[%s39 + $0xd8] sm:$0x1] 0.0
  %50 = vst [vmem:[%s39 + $0xf0] sm:$0x1] 0.0
  %51 = vst [vmem:[%s39 + $0x108] sm:$0x1] 0.0
  %52 = vst [vmem:[%s39 + $0x120] sm:$0x1] 0.0
  %53 = vst [vmem:[%s39 + $0x138] sm:$0x1] 0.0
  %54 = vst [vmem:[%s39 + $0x150] sm:$0x1] 0.0
  %55 = vst [vmem:[%s39 + $0x168] sm:$0x1] 0.0
  %56 = vst [vmem:[%s39 + $0x1b0] sm:$0x1] 0.0
  %57 = vst [vmem:[%s39 + $0x1c8] sm:$0x1] 0.0
  %58 = vst [vmem:[%s39 + $0x1e0] sm:$0x1] 0.0
  %59 = vst [vmem:[%s39 + $0x1f8] sm:$0x1] 0.0
  %60 = vst [vmem:[%s39 + $0x210] sm:$0x1] 0.0
  %61 = vst [vmem:[%s39 + $0x228] sm:$0x1] 0.0
  %62 = vst [vmem:[%s39 + $0x240] sm:$0x1] 0.0
  %63 = vst [vmem:[%s39 + $0x258] sm:$0x1] 0.0
  %64 = vst [vmem:[%s39 + $0x270] sm:$0x1] 0.0
  %65 = vst [vmem:[%s39 + $0x288] sm:$0x1] 0.0
  %66 = vst [vmem:[%s39 + $0x2a0] sm:$0x1] 0.0
  %67 = vst [vmem:[%s39 + $0x2b8] sm:$0x1] 0.0
  %68 = vst [vmem:[%s39 + $0x2d0] sm:$0x1] 0.0
  %69 = vst [vmem:[%s39 + $0x2e8] sm:$0x1] 0.0
  %70 = vst [vmem:[%s39 + $0x300] sm:$0x1] 0.0
  %71 = vst [vmem:[%s39 + $0x318] sm:$0x1] 0.0
  %72 = vst [vmem:[%s39 + $0x11] sm:$0x1] 0.0
  %73 = vst [vmem:[%s39 + $0x29] sm:$0x1] 0.0
  %74 = vst [vmem:[%s39 + $0x41] sm:$0x1] 0.0
  %75 = vst [vmem:[%s39 + $0x59] sm:$0x1] 0.0
  %76 = vst [vmem:[%s39 + $0x71] sm:$0x1] 0.0
  %77 = vst [vmem:[%s39 + $0x89] sm:$0x1] 0.0
  %78 = vst [vmem:[%s39 + $0xa1] sm:$0x1] 0.0
  %79 = vst [vmem:[%s39 + $0xb9] sm:$0x1] 0.0
  %80 = vst [vmem:[%s39 + $0xd1] sm:$0x1] 0.0
  %81 = vst [vmem:[%s39 + $0xe9] sm:$0x1] 0.0
  %82 = vst [vmem:[%s39 + $0x101] sm:$0x1] 0.0
  %83 = vst [vmem:[%s39 + $0x119] sm:$0x1] 0.0
  %84 = vst [vmem:[%s39 + $0x131] sm:$0x1] 0.0
  %85 = vst [vmem:[%s39 + $0x149] sm:$0x1] 0.0
  %86 = vst [vmem:[%s39 + $0x161] sm:$0x1] 0.0
  %87 = vst [vmem:[%s39 + $0x179] sm:$0x1] 0.0
  %88 = vst [vmem:[%s39 + $0x1c1] sm:$0x1] 0.0
  %89 = vst [vmem:[%s39 + $0x1d9] sm:$0x1] 0.0
  %90 = vst [vmem:[%s39 + $0x1f1] sm:$0x1] 0.0
  %91 = vst [vmem:[%s39 + $0x209] sm:$0x1] 0.0
  %92 = vst [vmem:[%s39 + $0x221] sm:$0x1] 0.0
  %93 = vst [vmem:[%s39 + $0x239] sm:$0x1] 0.0
  %94 = vst [vmem:[%s39 + $0x251] sm:$0x1] 0.0
  %95 = vst [vmem:[%s39 + $0x269] sm:$0x1] 0.0
  %96 = vst [vmem:[%s39 + $0x281] sm:$0x1] 0.0
  %97 = vst [vmem:[%s39 + $0x299] sm:$0x1] 0.0
  %98 = vst [vmem:[%s39 + $0x2b1] sm:$0x1] 0.0
  %99 = vst [vmem:[%s39 + $0x2c9] sm:$0x1] 0.0
  %100 = vst [vmem:[%s39 + $0x2e1] sm:$0x1] 0.0
  %101 = vst [vmem:[%s39 + $0x2f9] sm:$0x1] 0.0
  %102 = vst [vmem:[%s39 + $0x311] sm:$0x1] 0.0
  %103 = vst [vmem:[%s39 + $0x329] sm:$0x1] 0.0
  %v104 = vld [vmem:[%s0] sm:$0xff]
  %v105 = vld [vmem:[%s0 + $0x8] sm:$0xff]
  %v106 = vld [vmem:[%s0 + $0x10] sm:$0xff]
  %v107 = vld [vmem:[%s0 + $0x18] sm:$0xff]
  %v108 = vld [vmem:[%s0 + $0x20] sm:$0xff]
  %v109 = vld [vmem:[%s0 + $0x28] sm:$0xff]
  %v110 = vld [vmem:[%s0 + $0x30] sm:$0xff]
  %v111 = vld [vmem:[%s0 + $0x38] sm:$0xff]
  %v112 = vld [vmem:[%s0 + $0x40] sm:$0xff]
  %v113 = vld [vmem:[%s0 + $0x48] sm:$0xff]
  %v114 = vld [vmem:[%s0 + $0x50] sm:$0xff]
  %v115 = vld [vmem:[%s0 + $0x58] sm:$0xff]
  %v116 = vld [vmem:[%s0 + $0x60] sm:$0xff]
  %v117 = vld [vmem:[%s0 + $0x68] sm:$0xff]
  %v118 = vld [vmem:[%s0 + $0x70] sm:$0xff]
  %v119 = vld [vmem:[%s0 + $0x78] sm:$0xff]
  %v120 = vld [vmem:[%s0 + $0x80] sm:$0xff]
  %v121 = vld [vmem:[%s0 + $0x88] sm:$0xff]
  %v122 = vld [vmem:[%s0 + $0x90] sm:$0xff]
  %v123 = vld [vmem:[%s0 + $0x98] sm:$0xff]
  %v124 = vld [vmem:[%s0 + $0xa0] sm:$0xff]
  %v125 = vld [vmem:[%s0 + $0xa8] sm:$0xff]
  %v126 = vld [vmem:[%s0 + $0xb0] sm:$0xff]
  %v127 = vld [vmem:[%s0 + $0xb8] sm:$0xff]
  %v128 = vld [vmem:[%s0 + $0xc0] sm:$0xff]
  %v129 = vld [vmem:[%s0 + $0xc8] sm:$0xff]
  %v130 = vld [vmem:[%s0 + $0xd0] sm:$0xff]
  %v131 = vld [vmem:[%s0 + $0xd8] sm:$0xff]
  %v132 = vld [vmem:[%s0 + $0xe0] sm:$0xff]
  %v133 = vld [vmem:[%s0 + $0xe8] sm:$0xff]
  %v134 = vld [vmem:[%s0 + $0xf0] sm:$0xff]
  %v135 = vld [vmem:[%s0 + $0xf8] sm:$0xff]
  %v136 = vld [vmem:[%s0 + $0x100] sm:$0xff]
  %v137 = vld [vmem:[%s0 + $0x108] sm:$0xff]
  %v138 = vld [vmem:[%s0 + $0x110] sm:$0xff]
  %v139 = vld [vmem:[%s0 + $0x118] sm:$0xff]
  %v140 = vld [vmem:[%s0 + $0x120] sm:$0xff]
  %v141 = vld [vmem:[%s0 + $0x128] sm:$0xff]
  %v142 = vld [vmem:[%s0 + $0x130] sm:$0xff]
  %v143 = vld [vmem:[%s0 + $0x138] sm:$0xff]
  %v144 = vld [vmem:[%s0 + $0x140] sm:$0xff]
  %v145 = vld [vmem:[%s0 + $0x148] sm:$0xff]
  %v146 = vld [vmem:[%s0 + $0x150] sm:$0xff]
  %v147 = vld [vmem:[%s0 + $0x158] sm:$0xff]
  %v148 = vld [vmem:[%s0 + $0x160] sm:$0xff]
  %v149 = vld [vmem:[%s0 + $0x168] sm:$0xff]
  %v150 = vld [vmem:[%s0 + $0x170] sm:$0xff]
  %v151 = vld [vmem:[%s0 + $0x178] sm:$0xff]
  %v152 = vld [vmem:[%s0 + $0x180] sm:$0xff]
  %v153 = vld [vmem:[%s0 + $0x188] sm:$0xff]
  %v154 = vld [vmem:[%s0 + $0x190] sm:$0xff]
  %v155 = vld [vmem:[%s0 + $0x198] sm:$0xff]
  %v156 = vld [vmem:[%s0 + $0x1a0] sm:$0xff]
  %v157 = vld [vmem:[%s0 + $0x1a8] sm:$0xff]
  %v158 = vld [vmem:[%s0 + $0x1b0] sm:$0xff]
  %v159 = vld [vmem:[%s0 + $0x1b8] sm:$0xff]
  %v160 = vld [vmem:[%s0 + $0x1c0] sm:$0xff]
  %v161 = vld [vmem:[%s0 + $0x1c8] sm:$0xff]
  %v162 = vld [vmem:[%s0 + $0x1d0] sm:$0xff]
  %v163 = vld [vmem:[%s0 + $0x1d8] sm:$0xff]
  %v164 = vld [vmem:[%s0 + $0x1e0] sm:$0xff]
  %v165 = vld [vmem:[%s0 + $0x1e8] sm:$0xff]
  %v166 = vld [vmem:[%s0 + $0x1f0] sm:$0xff]
  %v167 = vld [vmem:[%s0 + $0x1f8] sm:$0xff]
  %168 = vst [vmem:[%s39 + $0x1] sm:$0xff] %v104
  %169 = vst [vmem:[%s39 + $0x9] sm:$0xff] %v105
  %170 = vst [vmem:[%s39 + $0x19] sm:$0xff] %v106
  %171 = vst [vmem:[%s39 + $0x21] sm:$0xff] %v107
  %172 = vst [vmem:[%s39 + $0x31] sm:$0xff] %v108
  %173 = vst [vmem:[%s39 + $0x39] sm:$0xff] %v109
  %174 = vst [vmem:[%s39 + $0x49] sm:$0xff] %v110
  %175 = vst [vmem:[%s39 + $0x51] sm:$0xff] %v111
  %176 = vst [vmem:[%s39 + $0x61] sm:$0xff] %v112
  %177 = vst [vmem:[%s39 + $0x69] sm:$0xff] %v113
  %178 = vst [vmem:[%s39 + $0x79] sm:$0xff] %v114
  %179 = vst [vmem:[%s39 + $0x81] sm:$0xff] %v115
  %180 = vst [vmem:[%s39 + $0x91] sm:$0xff] %v116
  %181 = vst [vmem:[%s39 + $0x99] sm:$0xff] %v117
  %182 = vst [vmem:[%s39 + $0xa9] sm:$0xff] %v118
  %183 = vst [vmem:[%s39 + $0xb1] sm:$0xff] %v119
  %184 = vst [vmem:[%s39 + $0xc1] sm:$0xff] %v120
  %185 = vst [vmem:[%s39 + $0xc9] sm:$0xff] %v121
  %186 = vst [vmem:[%s39 + $0xd9] sm:$0xff] %v122
  %187 = vst [vmem:[%s39 + $0xe1] sm:$0xff] %v123
  %188 = vst [vmem:[%s39 + $0xf1] sm:$0xff] %v124
  %189 = vst [vmem:[%s39 + $0xf9] sm:$0xff] %v125
  %190 = vst [vmem:[%s39 + $0x109] sm:$0xff] %v126
  %191 = vst [vmem:[%s39 + $0x111] sm:$0xff] %v127
  %192 = vst [vmem:[%s39 + $0x121] sm:$0xff] %v128
  %193 = vst [vmem:[%s39 + $0x129] sm:$0xff] %v129
  %194 = vst [vmem:[%s39 + $0x139] sm:$0xff] %v130
  %195 = vst [vmem:[%s39 + $0x141] sm:$0xff] %v131
  %196 = vst [vmem:[%s39 + $0x151] sm:$0xff] %v132
  %197 = vst [vmem:[%s39 + $0x159] sm:$0xff] %v133
  %198 = vst [vmem:[%s39 + $0x169] sm:$0xff] %v134
  %199 = vst [vmem:[%s39 + $0x171] sm:$0xff] %v135
  %200 = vst [vmem:[%s39 + $0x1b1] sm:$0xff] %v136
  %201 = vst [vmem:[%s39 + $0x1b9] sm:$0xff] %v137
  %202 = vst [vmem:[%s39 + $0x1c9] sm:$0xff] %v138
  %203 = vst [vmem:[%s39 + $0x1d1] sm:$0xff] %v139
  %204 = vst [vmem:[%s39 + $0x1e1] sm:$0xff] %v140
  %205 = vst [vmem:[%s39 + $0x1e9] sm:$0xff] %v141
  %206 = vst [vmem:[%s39 + $0x1f9] sm:$0xff] %v142
  %207 = vst [vmem:[%s39 + $0x201] sm:$0xff] %v143
  %208 = vst [vmem:[%s39 + $0x211] sm:$0xff] %v144
  %209 = vst [vmem:[%s39 + $0x219] sm:$0xff] %v145
  %210 = vst [vmem:[%s39 + $0x229] sm:$0xff] %v146
  %211 = vst [vmem:[%s39 + $0x231] sm:$0xff] %v147
  %212 = vst [vmem:[%s39 + $0x241] sm:$0xff] %v148
  %213 = vst [vmem:[%s39 + $0x249] sm:$0xff] %v149
  %214 = vst [vmem:[%s39 + $0x259] sm:$0xff] %v150
  %215 = vst [vmem:[%s39 + $0x261] sm:$0xff] %v151
  %216 = vst [vmem:[%s39 + $0x271] sm:$0xff] %v152
  %217 = vst [vmem:[%s39 + $0x279] sm:$0xff] %v153
  %218 = vst [vmem:[%s39 + $0x289] sm:$0xff] %v154
  %219 = vst [vmem:[%s39 + $0x291] sm:$0xff] %v155
  %220 = vst [vmem:[%s39 + $0x2a1] sm:$0xff] %v156
  %221 = vst [vmem:[%s39 + $0x2a9] sm:$0xff] %v157
  %222 = vst [vmem:[%s39 + $0x2b9] sm:$0xff] %v158
  %223 = vst [vmem:[%s39 + $0x2c1] sm:$0xff] %v159
  %224 = vst [vmem:[%s39 + $0x2d1] sm:$0xff] %v160
  %225 = vst [vmem:[%s39 + $0x2d9] sm:$0xff] %v161
  %226 = vst [vmem:[%s39 + $0x2e9] sm:$0xff] %v162
  %227 = vst [vmem:[%s39 + $0x2f1] sm:$0xff] %v163
  %228 = vst [vmem:[%s39 + $0x301] sm:$0xff] %v164
  %229 = vst [vmem:[%s39 + $0x309] sm:$0xff] %v165
  %230 = vst [vmem:[%s39 + $0x319] sm:$0xff] %v166
  %231 = vst [vmem:[%s39 + $0x321] sm:$0xff] %v167
  %v232 = vld [vmem:[#allocation2] sm:$0xff]
  %v233 = vld [vmem:[#allocation2 + $0x8] sm:$0xff]
  %v234 = vld [vmem:[#allocation2 + $0x18] sm:$0xff]
  %v235 = vld [vmem:[#allocation2 + $0x20] sm:$0xff]
  %v236 = vld [vmem:[#allocation2 + $0x30] sm:$0xff]
  %v237 = vld [vmem:[#allocation2 + $0x38] sm:$0xff]
  %v238 = vld [vmem:[#allocation2 + $0x48] sm:$0xff]
  %v239 = vld [vmem:[#allocation2 + $0x50] sm:$0xff]
  %v240 = vld [vmem:[#allocation2 + $0x60] sm:$0xff]
  %v241 = vld [vmem:[#allocation2 + $0x68] sm:$0xff]
  %v242 = vld [vmem:[#allocation2 + $0x78] sm:$0xff]
  %v243 = vld [vmem:[#allocation2 + $0x80] sm:$0xff]
  %v244 = vld [vmem:[#allocation2 + $0x90] sm:$0xff]
  %v245 = vld [vmem:[#allocation2 + $0x98] sm:$0xff]
  %v246 = vld [vmem:[#allocation2 + $0xa8] sm:$0xff]
  %v247 = vld [vmem:[#allocation2 + $0xb0] sm:$0xff]
  %v248 = vld [vmem:[#allocation2 + $0xc0] sm:$0xff]
  %v249 = vld [vmem:[#allocation2 + $0xc8] sm:$0xff]
  %v250 = vld [vmem:[#allocation2 + $0xd8] sm:$0xff]
  %v251 = vld [vmem:[#allocation2 + $0xe0] sm:$0xff]
  %v252 = vld [vmem:[#allocation2 + $0xf0] sm:$0xff]
  %v253 = vld [vmem:[#allocation2 + $0xf8] sm:$0xff]
  %v254 = vld [vmem:[#allocation2 + $0x108] sm:$0xff]
  %v255 = vld [vmem:[#allocation2 + $0x110] sm:$0xff]
  %v256 = vld [vmem:[#allocation2 + $0x120] sm:$0xff]
  %v257 = vld [vmem:[#allocation2 + $0x128] sm:$0xff]
  %v258 = vld [vmem:[#allocation2 + $0x138] sm:$0xff]
  %v259 = vld [vmem:[#allocation2 + $0x140] sm:$0xff]
  %v260 = vld [vmem:[#allocation2 + $0x150] sm:$0xff]
  %v261 = vld [vmem:[#allocation2 + $0x158] sm:$0xff]
  %v262 = vld [vmem:[#allocation2 + $0x168] sm:$0xff]
  %v263 = vld [vmem:[#allocation2 + $0x170] sm:$0xff]
  %v264 = vld [vmem:[#allocation2 + $0x1b0] sm:$0xff]
  %v265 = vld [vmem:[#allocation2 + $0x1b8] sm:$0xff]
  %v266 = vld [vmem:[#allocation2 + $0x1c8] sm:$0xff]
  %v267 = vld [vmem:[#allocation2 + $0x1d0] sm:$0xff]
  %v268 = vld [vmem:[#allocation2 + $0x1e0] sm:$0xff]
  %v269 = vld [vmem:[#allocation2 + $0x1e8] sm:$0xff]
  %v270 = vld [vmem:[#allocation2 + $0x1f8] sm:$0xff]
  %v271 = vld [vmem:[#allocation2 + $0x200] sm:$0xff]
  %v272 = vld [vmem:[#allocation2 + $0x210] sm:$0xff]
  %v273 = vld [vmem:[#allocation2 + $0x218] sm:$0xff]
  %v274 = vld [vmem:[#allocation2 + $0x228] sm:$0xff]
  %v275 = vld [vmem:[#allocation2 + $0x230] sm:$0xff]
  %v276 = vld [vmem:[#allocation2 + $0x240] sm:$0xff]
  %v277 = vld [vmem:[#allocation2 + $0x248] sm:$0xff]
  %v278 = vld [vmem:[#allocation2 + $0x258] sm:$0xff]
  %v279 = vld [vmem:[#allocation2 + $0x260] sm:$0xff]
  %v280 = vld [vmem:[#allocation2 + $0x270] sm:$0xff]
  %v281 = vld [vmem:[#allocation2 + $0x278] sm:$0xff]
  %v282 = vld [vmem:[#allocation2 + $0x288] sm:$0xff]
  %v283 = vld [vmem:[#allocation2 + $0x290] sm:$0xff]
  %v284 = vld [vmem:[#allocation2 + $0x2a0] sm:$0xff]
  %v285 = vld [vmem:[#allocation2 + $0x2a8] sm:$0xff]
  %v286 = vld [vmem:[#allocation2 + $0x2b8] sm:$0xff]
  %v287 = vld [vmem:[#allocation2 + $0x2c0] sm:$0xff]
  %v288 = vld [vmem:[#allocation2 + $0x2d0] sm:$0xff]
  %v289 = vld [vmem:[#allocation2 + $0x2d8] sm:$0xff]
  %v290 = vld [vmem:[#allocation2 + $0x2e8] sm:$0xff]
  %v291 = vld [vmem:[#allocation2 + $0x2f0] sm:$0xff]
  %v292 = vld [vmem:[#allocation2 + $0x300] sm:$0xff]
  %v293 = vld [vmem:[#allocation2 + $0x308] sm:$0xff]
  %v294 = vld [vmem:[#allocation2 + $0x318] sm:$0xff]
  %v295 = vld [vmem:[#allocation2 + $0x320] sm:$0xff]
  %v296 = vpack.c.bf16 %v232, %v232
  %v297 = vpack.c.bf16 %v233, %v233
  %v298 = vpack.c.bf16 %v234, %v234
  %v299 = vpack.c.bf16 %v235, %v235
  %v300 = vpack.c.bf16 %v236, %v236
  %v301 = vpack.c.bf16 %v237, %v237
  %v302 = vpack.c.bf16 %v238, %v238
  %v303 = vpack.c.bf16 %v239, %v239
  %v304 = vpack.c.bf16 %v240, %v240
  %v305 = vpack.c.bf16 %v241, %v241
  %v306 = vpack.c.bf16 %v242, %v242
  %v307 = vpack.c.bf16 %v243, %v243
  %v308 = vpack.c.bf16 %v244, %v244
  %v309 = vpack.c.bf16 %v245, %v245
  %v310 = vpack.c.bf16 %v246, %v246
  %v311 = vpack.c.bf16 %v247, %v247
  %v312 = vpack.c.bf16 %v248, %v248
  %v313 = vpack.c.bf16 %v249, %v249
  %v314 = vpack.c.bf16 %v250, %v250
  %v315 = vpack.c.bf16 %v251, %v251
  %v316 = vpack.c.bf16 %v252, %v252
  %v317 = vpack.c.bf16 %v253, %v253
  %v318 = vpack.c.bf16 %v254, %v254
  %v319 = vpack.c.bf16 %v255, %v255
  %v320 = vpack.c.bf16 %v256, %v256
  %v321 = vpack.c.bf16 %v257, %v257
  %v322 = vpack.c.bf16 %v258, %v258
  %v323 = vpack.c.bf16 %v259, %v259
  %v324 = vpack.c.bf16 %v260, %v260
  %v325 = vpack.c.bf16 %v261, %v261
  %v326 = vpack.c.bf16 %v262, %v262
  %v327 = vpack.c.bf16 %v263, %v263
  %v328 = vpack.c.bf16 %v264, %v264
  %v329 = vpack.c.bf16 %v265, %v265
  %v330 = vpack.c.bf16 %v266, %v266
  %v331 = vpack.c.bf16 %v267, %v267
  %v332 = vpack.c.bf16 %v268, %v268
  %v333 = vpack.c.bf16 %v269, %v269
  %v334 = vpack.c.bf16 %v270, %v270
  %v335 = vpack.c.bf16 %v271, %v271
  %v336 = vpack.c.bf16 %v272, %v272
  %v337 = vpack.c.bf16 %v273, %v273
  %v338 = vpack.c.bf16 %v274, %v274
  %v339 = vpack.c.bf16 %v275, %v275
  %v340 = vpack.c.bf16 %v276, %v276
  %v341 = vpack.c.bf16 %v277, %v277
  %v342 = vpack.c.bf16 %v278, %v278
  %v343 = vpack.c.bf16 %v279, %v279
  %v344 = vpack.c.bf16 %v280, %v280
  %v345 = vpack.c.bf16 %v281, %v281
  %v346 = vpack.c.bf16 %v282, %v282
  %v347 = vpack.c.bf16 %v283, %v283
  %v348 = vpack.c.bf16 %v284, %v284
  %v349 = vpack.c.bf16 %v285, %v285
  %v350 = vpack.c.bf16 %v286, %v286
  %v351 = vpack.c.bf16 %v287, %v287
  %v352 = vpack.c.bf16 %v288, %v288
  %v353 = vpack.c.bf16 %v289, %v289
  %v354 = vpack.c.bf16 %v290, %v290
  %v355 = vpack.c.bf16 %v291, %v291
  %v356 = vpack.c.bf16 %v292, %v292
  %v357 = vpack.c.bf16 %v293, %v293
  %v358 = vpack.c.bf16 %v294, %v294
  %v359 = vpack.c.bf16 %v295, %v295
  %v360 = vld [vmem:[#allocation2 + $0x1] sm:$0xff]
  %v361 = vld [vmem:[#allocation2 + $0x9] sm:$0xff]
  %v362 = vld [vmem:[#allocation2 + $0x19] sm:$0xff]
  %v363 = vld [vmem:[#allocation2 + $0x21] sm:$0xff]
  %v364 = vld [vmem:[#allocation2 + $0x31] sm:$0xff]
  %v365 = vld [vmem:[#allocation2 + $0x39] sm:$0xff]
  %v366 = vld [vmem:[#allocation2 + $0x49] sm:$0xff]
  %v367 = vld [vmem:[#allocation2 + $0x51] sm:$0xff]
  %v368 = vld [vmem:[#allocation2 + $0x61] sm:$0xff]
  %v369 = vld [vmem:[#allocation2 + $0x69] sm:$0xff]
  %v370 = vld [vmem:[#allocation2 + $0x79] sm:$0xff]
  %v371 = vld [vmem:[#allocation2 + $0x81] sm:$0xff]
  %v372 = vld [vmem:[#allocation2 + $0x91] sm:$0xff]
  %v373 = vld [vmem:[#allocation2 + $0x99] sm:$0xff]
  %v374 = vld [vmem:[#allocation2 + $0xa9] sm:$0xff]
  %v375 = vld [vmem:[#allocation2 + $0xb1] sm:$0xff]
  %v376 = vld [vmem:[#allocation2 + $0xc1] sm:$0xff]
  %v377 = vld [vmem:[#allocation2 + $0xc9] sm:$0xff]
  %v378 = vld [vmem:[#allocation2 + $0xd9] sm:$0xff]
  %v379 = vld [vmem:[#allocation2 + $0xe1] sm:$0xff]
  %v380 = vld [vmem:[#allocation2 + $0xf1] sm:$0xff]
  %v381 = vld [vmem:[#allocation2 + $0xf9] sm:$0xff]
  %v382 = vld [vmem:[#allocation2 + $0x109] sm:$0xff]
  %v383 = vld [vmem:[#allocation2 + $0x111] sm:$0xff]
  %v384 = vld [vmem:[#allocation2 + $0x121] sm:$0xff]
  %v385 = vld [vmem:[#allocation2 + $0x129] sm:$0xff]
  %v386 = vld [vmem:[#allocation2 + $0x139] sm:$0xff]
  %v387 = vld [vmem:[#allocation2 + $0x141] sm:$0xff]
  %v388 = vld [vmem:[#allocation2 + $0x151] sm:$0xff]
  %v389 = vld [vmem:[#allocation2 + $0x159] sm:$0xff]
  %v390 = vld [vmem:[#allocation2 + $0x169] sm:$0xff]
  %v391 = vld [vmem:[#allocation2 + $0x171] sm:$0xff]
  %v392 = vld [vmem:[#allocation2 + $0x1b1] sm:$0xff]
  %v393 = vld [vmem:[#allocation2 + $0x1b9] sm:$0xff]
  %v394 = vld [vmem:[#allocation2 + $0x1c9] sm:$0xff]
  %v395 = vld [vmem:[#allocation2 + $0x1d1] sm:$0xff]
  %v396 = vld [vmem:[#allocation2 + $0x1e1] sm:$0xff]
  %v397 = vld [vmem:[#allocation2 + $0x1e9] sm:$0xff]
  %v398 = vld [vmem:[#allocation2 + $0x1f9] sm:$0xff]
  %v399 = vld [vmem:[#allocation2 + $0x201] sm:$0xff]
  %v400 = vld [vmem:[#allocation2 + $0x211] sm:$0xff]
  %v401 = vld [vmem:[#allocation2 + $0x219] sm:$0xff]
  %v402 = vld [vmem:[#allocation2 + $0x229] sm:$0xff]
  %v403 = vld [vmem:[#allocation2 + $0x231] sm:$0xff]
  %v404 = vld [vmem:[#allocation2 + $0x241] sm:$0xff]
  %v405 = vld [vmem:[#allocation2 + $0x249] sm:$0xff]
  %v406 = vld [vmem:[#allocation2 + $0x259] sm:$0xff]
  %v407 = vld [vmem:[#allocation2 + $0x261] sm:$0xff]
  %v408 = vld [vmem:[#allocation2 + $0x271] sm:$0xff]
  %v409 = vld [vmem:[#allocation2 + $0x279] sm:$0xff]
  %v410 = vld [vmem:[#allocation2 + $0x289] sm:$0xff]
  %v411 = vld [vmem:[#allocation2 + $0x291] sm:$0xff]
  %v412 = vld [vmem:[#allocation2 + $0x2a1] sm:$0xff]
  %v413 = vld [vmem:[#allocation2 + $0x2a9] sm:$0xff]
  %v414 = vld [vmem:[#allocation2 + $0x2b9] sm:$0xff]
  %v415 = vld [vmem:[#allocation2 + $0x2c1] sm:$0xff]
  %v416 = vld [vmem:[#allocation2 + $0x2d1] sm:$0xff]
  %v417 = vld [vmem:[#allocation2 + $0x2d9] sm:$0xff]
  %v418 = vld [vmem:[#allocation2 + $0x2e9] sm:$0xff]
  %v419 = vld [vmem:[#allocation2 + $0x2f1] sm:$0xff]
  %v420 = vld [vmem:[#allocation2 + $0x301] sm:$0xff]
  %v421 = vld [vmem:[#allocation2 + $0x309] sm:$0xff]
  %v422 = vld [vmem:[#allocation2 + $0x319] sm:$0xff]
  %v423 = vld [vmem:[#allocation2 + $0x321] sm:$0xff]
  %v424 = vpack.c.bf16 %v360, %v360
  %v425 = vpack.c.bf16 %v361, %v361
  %v426 = vpack.c.bf16 %v362, %v362
  %v427 = vpack.c.bf16 %v363, %v363
  %v428 = vpack.c.bf16 %v364, %v364
  %v429 = vpack.c.bf16 %v365, %v365
  %v430 = vpack.c.bf16 %v366, %v366
  %v431 = vpack.c.bf16 %v367, %v367
  %v432 = vpack.c.bf16 %v368, %v368
  %v433 = vpack.c.bf16 %v369, %v369
  %v434 = vpack.c.bf16 %v370, %v370
  %v435 = vpack.c.bf16 %v371, %v371
  %v436 = vpack.c.bf16 %v372, %v372
  %v437 = vpack.c.bf16 %v373, %v373
  %v438 = vpack.c.bf16 %v374, %v374
  %v439 = vpack.c.bf16 %v375, %v375
  %v440 = vpack.c.bf16 %v376, %v376
  %v441 = vpack.c.bf16 %v377, %v377
  %v442 = vpack.c.bf16 %v378, %v378
  %v443 = vpack.c.bf16 %v379, %v379
  %v444 = vpack.c.bf16 %v380, %v380
  %v445 = vpack.c.bf16 %v381, %v381
  %v446 = vpack.c.bf16 %v382, %v382
  %v447 = vpack.c.bf16 %v383, %v383
  %v448 = vpack.c.bf16 %v384, %v384
  %v449 = vpack.c.bf16 %v385, %v385
  %v450 = vpack.c.bf16 %v386, %v386
  %v451 = vpack.c.bf16 %v387, %v387
  %v452 = vpack.c.bf16 %v388, %v388
  %v453 = vpack.c.bf16 %v389, %v389
  %v454 = vpack.c.bf16 %v390, %v390
  %v455 = vpack.c.bf16 %v391, %v391
  %v456 = vpack.c.bf16 %v392, %v392
  %v457 = vpack.c.bf16 %v393, %v393
  %v458 = vpack.c.bf16 %v394, %v394
  %v459 = vpack.c.bf16 %v395, %v395
  %v460 = vpack.c.bf16 %v396, %v396
  %v461 = vpack.c.bf16 %v397, %v397
  %v462 = vpack.c.bf16 %v398, %v398
  %v463 = vpack.c.bf16 %v399, %v399
  %v464 = vpack.c.bf16 %v400, %v400
  %v465 = vpack.c.bf16 %v401, %v401
  %v466 = vpack.c.bf16 %v402, %v402
  %v467 = vpack.c.bf16 %v403, %v403
  %v468 = vpack.c.bf16 %v404, %v404
  %v469 = vpack.c.bf16 %v405, %v405
  %v470 = vpack.c.bf16 %v406, %v406
  %v471 = vpack.c.bf16 %v407, %v407
  %v472 = vpack.c.bf16 %v408, %v408
  %v473 = vpack.c.bf16 %v409, %v409
  %v474 = vpack.c.bf16 %v410, %v410
  %v475 = vpack.c.bf16 %v411, %v411
  %v476 = vpack.c.bf16 %v412, %v412
  %v477 = vpack.c.bf16 %v413, %v413
  %v478 = vpack.c.bf16 %v414, %v414
  %v479 = vpack.c.bf16 %v415, %v415
  %v480 = vpack.c.bf16 %v416, %v416
  %v481 = vpack.c.bf16 %v417, %v417
  %v482 = vpack.c.bf16 %v418, %v418
  %v483 = vpack.c.bf16 %v419, %v419
  %v484 = vpack.c.bf16 %v420, %v420
  %v485 = vpack.c.bf16 %v421, %v421
  %v486 = vpack.c.bf16 %v422, %v422
  %v487 = vpack.c.bf16 %v423, %v423
  %v488 = vld [vmem:[#allocation2 + $0x2] sm:$0xff]
  %v489 = vld [vmem:[#allocation2 + $0xa] sm:$0xff]
  %v490 = vld [vmem:[#allocation2 + $0x1a] sm:$0xff]
  %v491 = vld [vmem:[#allocation2 + $0x22] sm:$0xff]
  %v492 = vld [vmem:[#allocation2 + $0x32] sm:$0xff]
  %v493 = vld [vmem:[#allocation2 + $0x3a] sm:$0xff]
  %v494 = vld [vmem:[#allocation2 + $0x4a] sm:$0xff]
  %v495 = vld [vmem:[#allocation2 + $0x52] sm:$0xff]
  %v496 = vld [vmem:[#allocation2 + $0x62] sm:$0xff]
  %v497 = vld [vmem:[#allocation2 + $0x6a] sm:$0xff]
  %v498 = vld [vmem:[#allocation2 + $0x7a] sm:$0xff]
  %v499 = vld [vmem:[#allocation2 + $0x82] sm:$0xff]
  %v500 = vld [vmem:[#allocation2 + $0x92] sm:$0xff]
  %v501 = vld [vmem:[#allocation2 + $0x9a] sm:$0xff]
  %v502 = vld [vmem:[#allocation2 + $0xaa] sm:$0xff]
  %v503 = vld [vmem:[#allocation2 + $0xb2] sm:$0xff]
  %v504 = vld [vmem:[#allocation2 + $0xc2] sm:$0xff]
  %v505 = vld [vmem:[#allocation2 + $0xca] sm:$0xff]
  %v506 = vld [vmem:[#allocation2 + $0xda] sm:$0xff]
  %v507 = vld [vmem:[#allocation2 + $0xe2] sm:$0xff]
  %v508 = vld [vmem:[#allocation2 + $0xf2] sm:$0xff]
  %v509 = vld [vmem:[#allocation2 + $0xfa] sm:$0xff]
  %v510 = vld [vmem:[#allocation2 + $0x10a] sm:$0xff]
  %v511 = vld [vmem:[#allocation2 + $0x112] sm:$0xff]
  %v512 = vld [vmem:[#allocation2 + $0x122] sm:$0xff]
  %v513 = vld [vmem:[#allocation2 + $0x12a] sm:$0xff]
  %v514 = vld [vmem:[#allocation2 + $0x13a] sm:$0xff]
  %v515 = vld [vmem:[#allocation2 + $0x142] sm:$0xff]
  %v516 = vld [vmem:[#allocation2 + $0x152] sm:$0xff]
  %v517 = vld [vmem:[#allocation2 + $0x15a] sm:$0xff]
  %v518 = vld [vmem:[#allocation2 + $0x16a] sm:$0xff]
  %v519 = vld [vmem:[#allocation2 + $0x172] sm:$0xff]
  %v520 = vld [vmem:[#allocation2 + $0x1b2] sm:$0xff]
  %v521 = vld [vmem:[#allocation2 + $0x1ba] sm:$0xff]
  %v522 = vld [vmem:[#allocation2 + $0x1ca] sm:$0xff]
  %v523 = vld [vmem:[#allocation2 + $0x1d2] sm:$0xff]
  %v524 = vld [vmem:[#allocation2 + $0x1e2] sm:$0xff]
  %v525 = vld [vmem:[#allocation2 + $0x1ea] sm:$0xff]
  %v526 = vld [vmem:[#allocation2 + $0x1fa] sm:$0xff]
  %v527 = vld [vmem:[#allocation2 + $0x202] sm:$0xff]
  %v528 = vld [vmem:[#allocation2 + $0x212] sm:$0xff]
  %v529 = vld [vmem:[#allocation2 + $0x21a] sm:$0xff]
  %v530 = vld [vmem:[#allocation2 + $0x22a] sm:$0xff]
  %v531 = vld [vmem:[#allocation2 + $0x232] sm:$0xff]
  %v532 = vld [vmem:[#allocation2 + $0x242] sm:$0xff]
  %v533 = vld [vmem:[#allocation2 + $0x24a] sm:$0xff]
  %v534 = vld [vmem:[#allocation2 + $0x25a] sm:$0xff]
  %v535 = vld [vmem:[#allocation2 + $0x262] sm:$0xff]
  %v536 = vld [vmem:[#allocation2 + $0x272] sm:$0xff]
  %v537 = vld [vmem:[#allocation2 + $0x27a] sm:$0xff]
  %v538 = vld [vmem:[#allocation2 + $0x28a] sm:$0xff]
  %v539 = vld [vmem:[#allocation2 + $0x292] sm:$0xff]
  %v540 = vld [vmem:[#allocation2 + $0x2a2] sm:$0xff]
  %v541 = vld [vmem:[#allocation2 + $0x2aa] sm:$0xff]
  %v542 = vld [vmem:[#allocation2 + $0x2ba] sm:$0xff]
  %v543 = vld [vmem:[#allocation2 + $0x2c2] sm:$0xff]
  %v544 = vld [vmem:[#allocation2 + $0x2d2] sm:$0xff]
  %v545 = vld [vmem:[#allocation2 + $0x2da] sm:$0xff]
  %v546 = vld [vmem:[#allocation2 + $0x2ea] sm:$0xff]
  %v547 = vld [vmem:[#allocation2 + $0x2f2] sm:$0xff]
  %v548 = vld [vmem:[#allocation2 + $0x302] sm:$0xff]
  %v549 = vld [vmem:[#allocation2 + $0x30a] sm:$0xff]
  %v550 = vld [vmem:[#allocation2 + $0x31a] sm:$0xff]
  %v551 = vld [vmem:[#allocation2 + $0x322] sm:$0xff]
  %v552 = vpack.c.bf16 %v488, %v488
  %v553 = vpack.c.bf16 %v489, %v489
  %v554 = vpack.c.bf16 %v490, %v490
  %v555 = vpack.c.bf16 %v491, %v491
  %v556 = vpack.c.bf16 %v492, %v492
  %v557 = vpack.c.bf16 %v493, %v493
  %v558 = vpack.c.bf16 %v494, %v494
  %v559 = vpack.c.bf16 %v495, %v495
  %v560 = vpack.c.bf16 %v496, %v496
  %v561 = vpack.c.bf16 %v497, %v497
  %v562 = vpack.c.bf16 %v498, %v498
  %v563 = vpack.c.bf16 %v499, %v499
  %v564 = vpack.c.bf16 %v500, %v500
  %v565 = vpack.c.bf16 %v501, %v501
  %v566 = vpack.c.bf16 %v502, %v502
  %v567 = vpack.c.bf16 %v503, %v503
  %v568 = vpack.c.bf16 %v504, %v504
  %v569 = vpack.c.bf16 %v505, %v505
  %v570 = vpack.c.bf16 %v506, %v506
  %v571 = vpack.c.bf16 %v507, %v507
  %v572 = vpack.c.bf16 %v508, %v508
  %v573 = vpack.c.bf16 %v509, %v509
  %v574 = vpack.c.bf16 %v510, %v510
  %v575 = vpack.c.bf16 %v511, %v511
  %v576 = vpack.c.bf16 %v512, %v512
  %v577 = vpack.c.bf16 %v513, %v513
  %v578 = vpack.c.bf16 %v514, %v514
  %v579 = vpack.c.bf16 %v515, %v515
  %v580 = vpack.c.bf16 %v516, %v516
  %v581 = vpack.c.bf16 %v517, %v517
  %v582 = vpack.c.bf16 %v518, %v518
  %v583 = vpack.c.bf16 %v519, %v519
  %v584 = vpack.c.bf16 %v520, %v520
  %v585 = vpack.c.bf16 %v521, %v521
  %v586 = vpack.c.bf16 %v522, %v522
  %v587 = vpack.c.bf16 %v523, %v523
  %v588 = vpack.c.bf16 %v524, %v524
  %v589 = vpack.c.bf16 %v525, %v525
  %v590 = vpack.c.bf16 %v526, %v526
  %v591 = vpack.c.bf16 %v527, %v527
  %v592 = vpack.c.bf16 %v528, %v528
  %v593 = vpack.c.bf16 %v529, %v529
  %v594 = vpack.c.bf16 %v530, %v530
  %v595 = vpack.c.bf16 %v531, %v531
  %v596 = vpack.c.bf16 %v532, %v532
  %v597 = vpack.c.bf16 %v533, %v533
  %v598 = vpack.c.bf16 %v534, %v534
  %v599 = vpack.c.bf16 %v535, %v535
  %v600 = vpack.c.bf16 %v536, %v536
  %v601 = vpack.c.bf16 %v537, %v537
  %v602 = vpack.c.bf16 %v538, %v538
  %v603 = vpack.c.bf16 %v539, %v539
  %v604 = vpack.c.bf16 %v540, %v540
  %v605 = vpack.c.bf16 %v541, %v541
  %v606 = vpack.c.bf16 %v542, %v542
  %v607 = vpack.c.bf16 %v543, %v543
  %v608 = vpack.c.bf16 %v544, %v544
  %v609 = vpack.c.bf16 %v545, %v545
  %v610 = vpack.c.bf16 %v546, %v546
  %v611 = vpack.c.bf16 %v547, %v547
  %v612 = vpack.c.bf16 %v548, %v548
  %v613 = vpack.c.bf16 %v549, %v549
  %v614 = vpack.c.bf16 %v550, %v550
  %v615 = vpack.c.bf16 %v551, %v551
  %v616 = vld [vmem:[%s39] sm:$0xff]
  %v617 = vld [vmem:[%s39 + $0x8] sm:$0xff]
  %v618 = vld [vmem:[%s39 + $0x18] sm:$0xff]
  %v619 = vld [vmem:[%s39 + $0x20] sm:$0xff]
  %v620 = vld [vmem:[%s39 + $0x30] sm:$0xff]
  %v621 = vld [vmem:[%s39 + $0x38] sm:$0xff]
  %v622 = vld [vmem:[%s39 + $0x48] sm:$0xff]
  %v623 = vld [vmem:[%s39 + $0x50] sm:$0xff]
  %v624 = vld [vmem:[%s39 + $0x60] sm:$0xff]
  %v625 = vld [vmem:[%s39 + $0x68] sm:$0xff]
  %v626 = vld [vmem:[%s39 + $0x78] sm:$0xff]
  %v627 = vld [vmem:[%s39 + $0x80] sm:$0xff]
  %v628 = vld [vmem:[%s39 + $0x90] sm:$0xff]
  %v629 = vld [vmem:[%s39 + $0x98] sm:$0xff]
  %v630 = vld [vmem:[%s39 + $0xa8] sm:$0xff]
  %v631 = vld [vmem:[%s39 + $0xb0] sm:$0xff]
  %v632 = vld [vmem:[%s39 + $0xc0] sm:$0xff]
  %v633 = vld [vmem:[%s39 + $0xc8] sm:$0xff]
  %v634 = vld [vmem:[%s39 + $0xd8] sm:$0xff]
  %v635 = vld [vmem:[%s39 + $0xe0] sm:$0xff]
  %v636 = vld [vmem:[%s39 + $0xf0] sm:$0xff]
  %v637 = vld [vmem:[%s39 + $0xf8] sm:$0xff]
  %v638 = vld [vmem:[%s39 + $0x108] sm:$0xff]
  %v639 = vld [vmem:[%s39 + $0x110] sm:$0xff]
  %v640 = vld [vmem:[%s39 + $0x120] sm:$0xff]
  %v641 = vld [vmem:[%s39 + $0x128] sm:$0xff]
  %v642 = vld [vmem:[%s39 + $0x138] sm:$0xff]
  %v643 = vld [vmem:[%s39 + $0x140] sm:$0xff]
  %v644 = vld [vmem:[%s39 + $0x150] sm:$0xff]
  %v645 = vld [vmem:[%s39 + $0x158] sm:$0xff]
  %v646 = vld [vmem:[%s39 + $0x168] sm:$0xff]
  %v647 = vld [vmem:[%s39 + $0x170] sm:$0xff]
  %v648 = vld [vmem:[%s39 + $0x1b0] sm:$0xff]
  %v649 = vld [vmem:[%s39 + $0x1b8] sm:$0xff]
  %v650 = vld [vmem:[%s39 + $0x1c8] sm:$0xff]
  %v651 = vld [vmem:[%s39 + $0x1d0] sm:$0xff]
  %v652 = vld [vmem:[%s39 + $0x1e0] sm:$0xff]
  %v653 = vld [vmem:[%s39 + $0x1e8] sm:$0xff]
  %v654 = vld [vmem:[%s39 + $0x1f8] sm:$0xff]
  %v655 = vld [vmem:[%s39 + $0x200] sm:$0xff]
  %v656 = vld [vmem:[%s39 + $0x210] sm:$0xff]
  %v657 = vld [vmem:[%s39 + $0x218] sm:$0xff]
  %v658 = vld [vmem:[%s39 + $0x228] sm:$0xff]
  %v659 = vld [vmem:[%s39 + $0x230] sm:$0xff]
  %v660 = vld [vmem:[%s39 + $0x240] sm:$0xff]
  %v661 = vld [vmem:[%s39 + $0x248] sm:$0xff]
  %v662 = vld [vmem:[%s39 + $0x258] sm:$0xff]
  %v663 = vld [vmem:[%s39 + $0x260] sm:$0xff]
  %v664 = vld [vmem:[%s39 + $0x270] sm:$0xff]
  %v665 = vld [vmem:[%s39 + $0x278] sm:$0xff]
  %v666 = vld [vmem:[%s39 + $0x288] sm:$0xff]
  %v667 = vld [vmem:[%s39 + $0x290] sm:$0xff]
  %v668 = vld [vmem:[%s39 + $0x2a0] sm:$0xff]
  %v669 = vld [vmem:[%s39 + $0x2a8] sm:$0xff]
  %v670 = vld [vmem:[%s39 + $0x2b8] sm:$0xff]
  %v671 = vld [vmem:[%s39 + $0x2c0] sm:$0xff]
  %v672 = vld [vmem:[%s39 + $0x2d0] sm:$0xff]
  %v673 = vld [vmem:[%s39 + $0x2d8] sm:$0xff]
  %v674 = vld [vmem:[%s39 + $0x2e8] sm:$0xff]
  %v675 = vld [vmem:[%s39 + $0x2f0] sm:$0xff]
  %v676 = vld [vmem:[%s39 + $0x300] sm:$0xff]
  %v677 = vld [vmem:[%s39 + $0x308] sm:$0xff]
  %v678 = vld [vmem:[%s39 + $0x318] sm:$0xff]
  %v679 = vld [vmem:[%s39 + $0x320] sm:$0xff]
  %v680 = vpack.c.bf16 %v616, %v616
  %v681 = vpack.c.bf16 %v617, %v617
  %v682 = vpack.c.bf16 %v618, %v618
  %v683 = vpack.c.bf16 %v619, %v619
  %v684 = vpack.c.bf16 %v620, %v620
  %v685 = vpack.c.bf16 %v621, %v621
  %v686 = vpack.c.bf16 %v622, %v622
  %v687 = vpack.c.bf16 %v623, %v623
  %v688 = vpack.c.bf16 %v624, %v624
  %v689 = vpack.c.bf16 %v625, %v625
  %v690 = vpack.c.bf16 %v626, %v626
  %v691 = vpack.c.bf16 %v627, %v627
  %v692 = vpack.c.bf16 %v628, %v628
  %v693 = vpack.c.bf16 %v629, %v629
  %v694 = vpack.c.bf16 %v630, %v630
  %v695 = vpack.c.bf16 %v631, %v631
  %v696 = vpack.c.bf16 %v632, %v632
  %v697 = vpack.c.bf16 %v633, %v633
  %v698 = vpack.c.bf16 %v634, %v634
  %v699 = vpack.c.bf16 %v635, %v635
  %v700 = vpack.c.bf16 %v636, %v636
  %v701 = vpack.c.bf16 %v637, %v637
  %v702 = vpack.c.bf16 %v638, %v638
  %v703 = vpack.c.bf16 %v639, %v639
  %v704 = vpack.c.bf16 %v640, %v640
  %v705 = vpack.c.bf16 %v641, %v641
  %v706 = vpack.c.bf16 %v642, %v642
  %v707 = vpack.c.bf16 %v643, %v643
  %v708 = vpack.c.bf16 %v644, %v644
  %v709 = vpack.c.bf16 %v645, %v645
  %v710 = vpack.c.bf16 %v646, %v646
  %v711 = vpack.c.bf16 %v647, %v647
  %v712 = vpack.c.bf16 %v648, %v648
  %v713 = vpack.c.bf16 %v649, %v649
  %v714 = vpack.c.bf16 %v650, %v650
  %v715 = vpack.c.bf16 %v651, %v651
  %v716 = vpack.c.bf16 %v652, %v652
  %v717 = vpack.c.bf16 %v653, %v653
  %v718 = vpack.c.bf16 %v654, %v654
  %v719 = vpack.c.bf16 %v655, %v655
  %v720 = vpack.c.bf16 %v656, %v656
  %v721 = vpack.c.bf16 %v657, %v657
  %v722 = vpack.c.bf16 %v658, %v658
  %v723 = vpack.c.bf16 %v659, %v659
  %v724 = vpack.c.bf16 %v660, %v660
  %v725 = vpack.c.bf16 %v661, %v661
  %v726 = vpack.c.bf16 %v662, %v662
  %v727 = vpack.c.bf16 %v663, %v663
  %v728 = vpack.c.bf16 %v664, %v664
  %v729 = vpack.c.bf16 %v665, %v665
  %v730 = vpack.c.bf16 %v666, %v666
  %v731 = vpack.c.bf16 %v667, %v667
  %v732 = vpack.c.bf16 %v668, %v668
  %v733 = vpack.c.bf16 %v669, %v669
  %v734 = vpack.c.bf16 %v670, %v670
  %v735 = vpack.c.bf16 %v671, %v671
  %v736 = vpack.c.bf16 %v672, %v672
  %v737 = vpack.c.bf16 %v673, %v673
  %v738 = vpack.c.bf16 %v674, %v674
  %v739 = vpack.c.bf16 %v675, %v675
  %v740 = vpack.c.bf16 %v676, %v676
  %v741 = vpack.c.bf16 %v677, %v677
  %v742 = vpack.c.bf16 %v678, %v678
  %v743 = vpack.c.bf16 %v679, %v679
  %v744 = vld [vmem:[%s39 + $0x1] sm:$0xff]
  %v745 = vld [vmem:[%s39 + $0x9] sm:$0xff]
  %v746 = vld [vmem:[%s39 + $0x19] sm:$0xff]
  %v747 = vld [vmem:[%s39 + $0x21] sm:$0xff]
  %v748 = vld [vmem:[%s39 + $0x31] sm:$0xff]
  %v749 = vld [vmem:[%s39 + $0x39] sm:$0xff]
  %v750 = vld [vmem:[%s39 + $0x49] sm:$0xff]
  %v751 = vld [vmem:[%s39 + $0x51] sm:$0xff]
  %v752 = vld [vmem:[%s39 + $0x61] sm:$0xff]
  %v753 = vld [vmem:[%s39 + $0x69] sm:$0xff]
  %v754 = vld [vmem:[%s39 + $0x79] sm:$0xff]
  %v755 = vld [vmem:[%s39 + $0x81] sm:$0xff]
  %v756 = vld [vmem:[%s39 + $0x91] sm:$0xff]
  %v757 = vld [vmem:[%s39 + $0x99] sm:$0xff]
  %v758 = vld [vmem:[%s39 + $0xa9] sm:$0xff]
  %v759 = vld [vmem:[%s39 + $0xb1] sm:$0xff]
  %v760 = vld [vmem:[%s39 + $0xc1] sm:$0xff]
  %v761 = vld [vmem:[%s39 + $0xc9] sm:$0xff]
  %v762 = vld [vmem:[%s39 + $0xd9] sm:$0xff]
  %v763 = vld [vmem:[%s39 + $0xe1] sm:$0xff]
  %v764 = vld [vmem:[%s39 + $0xf1] sm:$0xff]
  %v765 = vld [vmem:[%s39 + $0xf9] sm:$0xff]
  %v766 = vld [vmem:[%s39 + $0x109] sm:$0xff]
  %v767 = vld [vmem:[%s39 + $0x111] sm:$0xff]
  %v768 = vld [vmem:[%s39 + $0x121] sm:$0xff]
  %v769 = vld [vmem:[%s39 + $0x129] sm:$0xff]
  %v770 = vld [vmem:[%s39 + $0x139] sm:$0xff]
  %v771 = vld [vmem:[%s39 + $0x141] sm:$0xff]
  %v772 = vld [vmem:[%s39 + $0x151] sm:$0xff]
  %v773 = vld [vmem:[%s39 + $0x159] sm:$0xff]
  %v774 = vld [vmem:[%s39 + $0x169] sm:$0xff]
  %v775 = vld [vmem:[%s39 + $0x171] sm:$0xff]
  %v776 = vld [vmem:[%s39 + $0x1b1] sm:$0xff]
  %v777 = vld [vmem:[%s39 + $0x1b9] sm:$0xff]
  %v778 = vld [vmem:[%s39 + $0x1c9] sm:$0xff]
  %v779 = vld [vmem:[%s39 + $0x1d1] sm:$0xff]
  %v780 = vld [vmem:[%s39 + $0x1e1] sm:$0xff]
  %v781 = vld [vmem:[%s39 + $0x1e9] sm:$0xff]
  %v782 = vld [vmem:[%s39 + $0x1f9] sm:$0xff]
  %v783 = vld [vmem:[%s39 + $0x201] sm:$0xff]
  %v784 = vld [vmem:[%s39 + $0x211] sm:$0xff]
  %v785 = vld [vmem:[%s39 + $0x219] sm:$0xff]
  %v786 = vld [vmem:[%s39 + $0x229] sm:$0xff]
  %v787 = vld [vmem:[%s39 + $0x231] sm:$0xff]
  %v788 = vld [vmem:[%s39 + $0x241] sm:$0xff]
  %v789 = vld [vmem:[%s39 + $0x249] sm:$0xff]
  %v790 = vld [vmem:[%s39 + $0x259] sm:$0xff]
  %v791 = vld [vmem:[%s39 + $0x261] sm:$0xff]
  %v792 = vld [vmem:[%s39 + $0x271] sm:$0xff]
  %v793 = vld [vmem:[%s39 + $0x279] sm:$0xff]
  %v794 = vld [vmem:[%s39 + $0x289] sm:$0xff]
  %v795 = vld [vmem:[%s39 + $0x291] sm:$0xff]
  %v796 = vld [vmem:[%s39 + $0x2a1] sm:$0xff]
  %v797 = vld [vmem:[%s39 + $0x2a9] sm:$0xff]
  %v798 = vld [vmem:[%s39 + $0x2b9] sm:$0xff]
  %v799 = vld [vmem:[%s39 + $0x2c1] sm:$0xff]
  %v800 = vld [vmem:[%s39 + $0x2d1] sm:$0xff]
  %v801 = vld [vmem:[%s39 + $0x2d9] sm:$0xff]
  %v802 = vld [vmem:[%s39 + $0x2e9] sm:$0xff]
  %v803 = vld [vmem:[%s39 + $0x2f1] sm:$0xff]
  %v804 = vld [vmem:[%s39 + $0x301] sm:$0xff]
  %v805 = vld [vmem:[%s39 + $0x309] sm:$0xff]
  %v806 = vld [vmem:[%s39 + $0x319] sm:$0xff]
  %v807 = vld [vmem:[%s39 + $0x321] sm:$0xff]
  %v808 = vpack.c.bf16 %v744, %v744
  %v809 = vpack.c.bf16 %v745, %v745
  %v810 = vpack.c.bf16 %v746, %v746
  %v811 = vpack.c.bf16 %v747, %v747
  %v812 = vpack.c.bf16 %v748, %v748
  %v813 = vpack.c.bf16 %v749, %v749
  %v814 = vpack.c.bf16 %v750, %v750
  %v815 = vpack.c.bf16 %v751, %v751
  %v816 = vpack.c.bf16 %v752, %v752
  %v817 = vpack.c.bf16 %v753, %v753
  %v818 = vpack.c.bf16 %v754, %v754
  %v819 = vpack.c.bf16 %v755, %v755
  %v820 = vpack.c.bf16 %v756, %v756
  %v821 = vpack.c.bf16 %v757, %v757
  %v822 = vpack.c.bf16 %v758, %v758
  %v823 = vpack.c.bf16 %v759, %v759
  %v824 = vpack.c.bf16 %v760, %v760
  %v825 = vpack.c.bf16 %v761, %v761
  %v826 = vpack.c.bf16 %v762, %v762
  %v827 = vpack.c.bf16 %v763, %v763
  %v828 = vpack.c.bf16 %v764, %v764
  %v829 = vpack.c.bf16 %v765, %v765
  %v830 = vpack.c.bf16 %v766, %v766
  %v831 = vpack.c.bf16 %v767, %v767
  %v832 = vpack.c.bf16 %v768, %v768
  %v833 = vpack.c.bf16 %v769, %v769
  %v834 = vpack.c.bf16 %v770, %v770
  %v835 = vpack.c.bf16 %v771, %v771
  %v836 = vpack.c.bf16 %v772, %v772
  %v837 = vpack.c.bf16 %v773, %v773
  %v838 = vpack.c.bf16 %v774, %v774
  %v839 = vpack.c.bf16 %v775, %v775
  %v840 = vpack.c.bf16 %v776, %v776
  %v841 = vpack.c.bf16 %v777, %v777
  %v842 = vpack.c.bf16 %v778, %v778
  %v843 = vpack.c.bf16 %v779, %v779
  %v844 = vpack.c.bf16 %v780, %v780
  %v845 = vpack.c.bf16 %v781, %v781
  %v846 = vpack.c.bf16 %v782, %v782
  %v847 = vpack.c.bf16 %v783, %v783
  %v848 = vpack.c.bf16 %v784, %v784
  %v849 = vpack.c.bf16 %v785, %v785
  %v850 = vpack.c.bf16 %v786, %v786
  %v851 = vpack.c.bf16 %v787, %v787
  %v852 = vpack.c.bf16 %v788, %v788
  %v853 = vpack.c.bf16 %v789, %v789
  %v854 = vpack.c.bf16 %v790, %v790
  %v855 = vpack.c.bf16 %v791, %v791
  %v856 = vpack.c.bf16 %v792, %v792
  %v857 = vpack.c.bf16 %v793, %v793
  %v858 = vpack.c.bf16 %v794, %v794
  %v859 = vpack.c.bf16 %v795, %v795
  %v860 = vpack.c.bf16 %v796, %v796
  %v861 = vpack.c.bf16 %v797, %v797
  %v862 = vpack.c.bf16 %v798, %v798
  %v863 = vpack.c.bf16 %v799, %v799
  %v864 = vpack.c.bf16 %v800, %v800
  %v865 = vpack.c.bf16 %v801, %v801
  %v866 = vpack.c.bf16 %v802, %v802
  %v867 = vpack.c.bf16 %v803, %v803
  %v868 = vpack.c.bf16 %v804, %v804
  %v869 = vpack.c.bf16 %v805, %v805
  %v870 = vpack.c.bf16 %v806, %v806
  %v871 = vpack.c.bf16 %v807, %v807
  %v872 = vld [vmem:[%s39 + $0x2] sm:$0xff]
  %v873 = vld [vmem:[%s39 + $0xa] sm:$0xff]
  %v874 = vld [vmem:[%s39 + $0x1a] sm:$0xff]
  %v875 = vld [vmem:[%s39 + $0x22] sm:$0xff]
  %v876 = vld [vmem:[%s39 + $0x32] sm:$0xff]
  %v877 = vld [vmem:[%s39 + $0x3a] sm:$0xff]
  %v878 = vld [vmem:[%s39 + $0x4a] sm:$0xff]
  %v879 = vld [vmem:[%s39 + $0x52] sm:$0xff]
  %v880 = vld [vmem:[%s39 + $0x62] sm:$0xff]
  %v881 = vld [vmem:[%s39 + $0x6a] sm:$0xff]
  %v882 = vld [vmem:[%s39 + $0x7a] sm:$0xff]
  %v883 = vld [vmem:[%s39 + $0x82] sm:$0xff]
  %v884 = vld [vmem:[%s39 + $0x92] sm:$0xff]
  %v885 = vld [vmem:[%s39 + $0x9a] sm:$0xff]
  %v886 = vld [vmem:[%s39 + $0xaa] sm:$0xff]
  %v887 = vld [vmem:[%s39 + $0xb2] sm:$0xff]
  %v888 = vld [vmem:[%s39 + $0xc2] sm:$0xff]
  %v889 = vld [vmem:[%s39 + $0xca] sm:$0xff]
  %v890 = vld [vmem:[%s39 + $0xda] sm:$0xff]
  %v891 = vld [vmem:[%s39 + $0xe2] sm:$0xff]
  %v892 = vld [vmem:[%s39 + $0xf2] sm:$0xff]
  %v893 = vld [vmem:[%s39 + $0xfa] sm:$0xff]
  %v894 = vld [vmem:[%s39 + $0x10a] sm:$0xff]
  %v895 = vld [vmem:[%s39 + $0x112] sm:$0xff]
  %v896 = vld [vmem:[%s39 + $0x122] sm:$0xff]
  %v897 = vld [vmem:[%s39 + $0x12a] sm:$0xff]
  %v898 = vld [vmem:[%s39 + $0x13a] sm:$0xff]
  %v899 = vld [vmem:[%s39 + $0x142] sm:$0xff]
  %v900 = vld [vmem:[%s39 + $0x152] sm:$0xff]
  %v901 = vld [vmem:[%s39 + $0x15a] sm:$0xff]
  %v902 = vld [vmem:[%s39 + $0x16a] sm:$0xff]
  %v903 = vld [vmem:[%s39 + $0x172] sm:$0xff]
  %v904 = vld [vmem:[%s39 + $0x1b2] sm:$0xff]
  %v905 = vld [vmem:[%s39 + $0x1ba] sm:$0xff]
  %v906 = vld [vmem:[%s39 + $0x1ca] sm:$0xff]
  %v907 = vld [vmem:[%s39 + $0x1d2] sm:$0xff]
  %v908 = vld [vmem:[%s39 + $0x1e2] sm:$0xff]
  %v909 = vld [vmem:[%s39 + $0x1ea] sm:$0xff]
  %v910 = vld [vmem:[%s39 + $0x1fa] sm:$0xff]
  %v911 = vld [vmem:[%s39 + $0x202] sm:$0xff]
  %v912 = vld [vmem:[%s39 + $0x212] sm:$0xff]
  %v913 = vld [vmem:[%s39 + $0x21a] sm:$0xff]
  %v914 = vld [vmem:[%s39 + $0x22a] sm:$0xff]
  %v915 = vld [vmem:[%s39 + $0x232] sm:$0xff]
  %v916 = vld [vmem:[%s39 + $0x242] sm:$0xff]
  %v917 = vld [vmem:[%s39 + $0x24a] sm:$0xff]
  %v918 = vld [vmem:[%s39 + $0x25a] sm:$0xff]
  %v919 = vld [vmem:[%s39 + $0x262] sm:$0xff]
  %v920 = vld [vmem:[%s39 + $0x272] sm:$0xff]
  %v921 = vld [vmem:[%s39 + $0x27a] sm:$0xff]
  %v922 = vld [vmem:[%s39 + $0x28a] sm:$0xff]
  %v923 = vld [vmem:[%s39 + $0x292] sm:$0xff]
  %v924 = vld [vmem:[%s39 + $0x2a2] sm:$0xff]
  %v925 = vld [vmem:[%s39 + $0x2aa] sm:$0xff]
  %v926 = vld [vmem:[%s39 + $0x2ba] sm:$0xff]
  %v927 = vld [vmem:[%s39 + $0x2c2] sm:$0xff]
  %v928 = vld [vmem:[%s39 + $0x2d2] sm:$0xff]
  %v929 = vld [vmem:[%s39 + $0x2da] sm:$0xff]
  %v930 = vld [vmem:[%s39 + $0x2ea] sm:$0xff]
  %v931 = vld [vmem:[%s39 + $0x2f2] sm:$0xff]
  %v932 = vld [vmem:[%s39 + $0x302] sm:$0xff]
  %v933 = vld [vmem:[%s39 + $0x30a] sm:$0xff]
  %v934 = vld [vmem:[%s39 + $0x31a] sm:$0xff]
  %v935 = vld [vmem:[%s39 + $0x322] sm:$0xff]
  %v936 = vpack.c.bf16 %v872, %v872
  %v937 = vpack.c.bf16 %v873, %v873
  %v938 = vpack.c.bf16 %v874, %v874
  %v939 = vpack.c.bf16 %v875, %v875
  %v940 = vpack.c.bf16 %v876, %v876
  %v941 = vpack.c.bf16 %v877, %v877
  %v942 = vpack.c.bf16 %v878, %v878
  %v943 = vpack.c.bf16 %v879, %v879
  %v944 = vpack.c.bf16 %v880, %v880
  %v945 = vpack.c.bf16 %v881, %v881
  %v946 = vpack.c.bf16 %v882, %v882
  %v947 = vpack.c.bf16 %v883, %v883
  %v948 = vpack.c.bf16 %v884, %v884
  %v949 = vpack.c.bf16 %v885, %v885
  %v950 = vpack.c.bf16 %v886, %v886
  %v951 = vpack.c.bf16 %v887, %v887
  %v952 = vpack.c.bf16 %v888, %v888
  %v953 = vpack.c.bf16 %v889, %v889
  %v954 = vpack.c.bf16 %v890, %v890
  %v955 = vpack.c.bf16 %v891, %v891
  %v956 = vpack.c.bf16 %v892, %v892
  %v957 = vpack.c.bf16 %v893, %v893
  %v958 = vpack.c.bf16 %v894, %v894
  %v959 = vpack.c.bf16 %v895, %v895
  %v960 = vpack.c.bf16 %v896, %v896
  %v961 = vpack.c.bf16 %v897, %v897
  %v962 = vpack.c.bf16 %v898, %v898
  %v963 = vpack.c.bf16 %v899, %v899
  %v964 = vpack.c.bf16 %v900, %v900
  %v965 = vpack.c.bf16 %v901, %v901
  %v966 = vpack.c.bf16 %v902, %v902
  %v967 = vpack.c.bf16 %v903, %v903
  %v968 = vpack.c.bf16 %v904, %v904
  %v969 = vpack.c.bf16 %v905, %v905
  %v970 = vpack.c.bf16 %v906, %v906
  %v971 = vpack.c.bf16 %v907, %v907
  %v972 = vpack.c.bf16 %v908, %v908
  %v973 = vpack.c.bf16 %v909, %v909
  %v974 = vpack.c.bf16 %v910, %v910
  %v975 = vpack.c.bf16 %v911, %v911
  %v976 = vpack.c.bf16 %v912, %v912
  %v977 = vpack.c.bf16 %v913, %v913
  %v978 = vpack.c.bf16 %v914, %v914
  %v979 = vpack.c.bf16 %v915, %v915
  %v980 = vpack.c.bf16 %v916, %v916
  %v981 = vpack.c.bf16 %v917, %v917
  %v982 = vpack.c.bf16 %v918, %v918
  %v983 = vpack.c.bf16 %v919, %v919
  %v984 = vpack.c.bf16 %v920, %v920
  %v985 = vpack.c.bf16 %v921, %v921
  %v986 = vpack.c.bf16 %v922, %v922
  %v987 = vpack.c.bf16 %v923, %v923
  %v988 = vpack.c.bf16 %v924, %v924
  %v989 = vpack.c.bf16 %v925, %v925
  %v990 = vpack.c.bf16 %v926, %v926
  %v991 = vpack.c.bf16 %v927, %v927
  %v992 = vpack.c.bf16 %v928, %v928
  %v993 = vpack.c.bf16 %v929, %v929
  %v994 = vpack.c.bf16 %v930, %v930
  %v995 = vpack.c.bf16 %v931, %v931
  %v996 = vpack.c.bf16 %v932, %v932
  %v997 = vpack.c.bf16 %v933, %v933
  %v998 = vpack.c.bf16 %v934, %v934
  %v999 = vpack.c.bf16 %v935, %v935
  %s1000 = scalar_lea.vmem [#allocation2], 48
  %v1001 = vld [vmem:[%s1000] sm:$0xff]
  %v1002 = vld [vmem:[%s1000 + $0x8] sm:$0xff]
  %v1003 = vld [vmem:[%s1000 + $0x18] sm:$0xff]
  %v1004 = vld [vmem:[%s1000 + $0x20] sm:$0xff]
  %v1005 = vld [vmem:[%s1000 + $0x30] sm:$0xff]
  %v1006 = vld [vmem:[%s1000 + $0x38] sm:$0xff]
  %v1007 = vld [vmem:[%s1000 + $0x48] sm:$0xff]
  %v1008 = vld [vmem:[%s1000 + $0x50] sm:$0xff]
  %v1009 = vld [vmem:[%s1000 + $0x60] sm:$0xff]
  %v1010 = vld [vmem:[%s1000 + $0x68] sm:$0xff]
  %v1011 = vld [vmem:[%s1000 + $0x78] sm:$0xff]
  %v1012 = vld [vmem:[%s1000 + $0x80] sm:$0xff]
  %v1013 = vld [vmem:[%s1000 + $0x90] sm:$0xff]
  %v1014 = vld [vmem:[%s1000 + $0x98] sm:$0xff]
  %v1015 = vld [vmem:[%s1000 + $0xa8] sm:$0xff]
  %v1016 = vld [vmem:[%s1000 + $0xb0] sm:$0xff]
  %v1017 = vld [vmem:[%s1000 + $0xc0] sm:$0xff]
  %v1018 = vld [vmem:[%s1000 + $0xc8] sm:$0xff]
  %v1019 = vld [vmem:[%s1000 + $0xd8] sm:$0xff]
  %v1020 = vld [vmem:[%s1000 + $0xe0] sm:$0xff]
  %v1021 = vld [vmem:[%s1000 + $0xf0] sm:$0xff]
  %v1022 = vld [vmem:[%s1000 + $0xf8] sm:$0xff]
  %v1023 = vld [vmem:[%s1000 + $0x108] sm:$0xff]
  %v1024 = vld [vmem:[%s1000 + $0x110] sm:$0xff]
  %v1025 = vld [vmem:[%s1000 + $0x120] sm:$0xff]
  %v1026 = vld [vmem:[%s1000 + $0x128] sm:$0xff]
  %v1027 = vld [vmem:[%s1000 + $0x138] sm:$0xff]
  %v1028 = vld [vmem:[%s1000 + $0x140] sm:$0xff]
  %v1029 = vld [vmem:[%s1000 + $0x150] sm:$0xff]
  %v1030 = vld [vmem:[%s1000 + $0x158] sm:$0xff]
  %v1031 = vld [vmem:[%s1000 + $0x168] sm:$0xff]
  %v1032 = vld [vmem:[%s1000 + $0x170] sm:$0xff]
  %v1033 = vld [vmem:[%s1000 + $0x1b0] sm:$0xff]
  %v1034 = vld [vmem:[%s1000 + $0x1b8] sm:$0xff]
  %v1035 = vld [vmem:[%s1000 + $0x1c8] sm:$0xff]
  %v1036 = vld [vmem:[%s1000 + $0x1d0] sm:$0xff]
  %v1037 = vld [vmem:[%s1000 + $0x1e0] sm:$0xff]
  %v1038 = vld [vmem:[%s1000 + $0x1e8] sm:$0xff]
  %v1039 = vld [vmem:[%s1000 + $0x1f8] sm:$0xff]
  %v1040 = vld [vmem:[%s1000 + $0x200] sm:$0xff]
  %v1041 = vld [vmem:[%s1000 + $0x210] sm:$0xff]
  %v1042 = vld [vmem:[%s1000 + $0x218] sm:$0xff]
  %v1043 = vld [vmem:[%s1000 + $0x228] sm:$0xff]
  %v1044 = vld [vmem:[%s1000 + $0x230] sm:$0xff]
  %v1045 = vld [vmem:[%s1000 + $0x240] sm:$0xff]
  %v1046 = vld [vmem:[%s1000 + $0x248] sm:$0xff]
  %v1047 = vld [vmem:[%s1000 + $0x258] sm:$0xff]
  %v1048 = vld [vmem:[%s1000 + $0x260] sm:$0xff]
  %v1049 = vld [vmem:[%s1000 + $0x270] sm:$0xff]
  %v1050 = vld [vmem:[%s1000 + $0x278] sm:$0xff]
  %v1051 = vld [vmem:[%s1000 + $0x288] sm:$0xff]
  %v1052 = vld [vmem:[%s1000 + $0x290] sm:$0xff]
  %v1053 = vld [vmem:[%s1000 + $0x2a0] sm:$0xff]
  %v1054 = vld [vmem:[%s1000 + $0x2a8] sm:$0xff]
  %v1055 = vld [vmem:[%s1000 + $0x2b8] sm:$0xff]
  %v1056 = vld [vmem:[%s1000 + $0x2c0] sm:$0xff]
  %v1057 = vld [vmem:[%s1000 + $0x2d0] sm:$0xff]
  %v1058 = vld [vmem:[%s1000 + $0x2d8] sm:$0xff]
  %v1059 = vld [vmem:[%s1000 + $0x2e8] sm:$0xff]
  %v1060 = vld [vmem:[%s1000 + $0x2f0] sm:$0xff]
  %v1061 = vld [vmem:[%s1000 + $0x300] sm:$0xff]
  %v1062 = vld [vmem:[%s1000 + $0x308] sm:$0xff]
  %v1063 = vld [vmem:[%s1000 + $0x318] sm:$0xff]
  %v1064 = vld [vmem:[%s1000 + $0x320] sm:$0xff]
  %v1065 = vpack.c.bf16 %v1001, %v1001
  %v1066 = vpack.c.bf16 %v1002, %v1002
  %v1067 = vpack.c.bf16 %v1003, %v1003
  %v1068 = vpack.c.bf16 %v1004, %v1004
  %v1069 = vpack.c.bf16 %v1005, %v1005
  %v1070 = vpack.c.bf16 %v1006, %v1006
  %v1071 = vpack.c.bf16 %v1007, %v1007
  %v1072 = vpack.c.bf16 %v1008, %v1008
  %v1073 = vpack.c.bf16 %v1009, %v1009
  %v1074 = vpack.c.bf16 %v1010, %v1010
  %v1075 = vpack.c.bf16 %v1011, %v1011
  %v1076 = vpack.c.bf16 %v1012, %v1012
  %v1077 = vpack.c.bf16 %v1013, %v1013
  %v1078 = vpack.c.bf16 %v1014, %v1014
  %v1079 = vpack.c.bf16 %v1015, %v1015
  %v1080 = vpack.c.bf16 %v1016, %v1016
  %v1081 = vpack.c.bf16 %v1017, %v1017
  %v1082 = vpack.c.bf16 %v1018, %v1018
  %v1083 = vpack.c.bf16 %v1019, %v1019
  %v1084 = vpack.c.bf16 %v1020, %v1020
  %v1085 = vpack.c.bf16 %v1021, %v1021
  %v1086 = vpack.c.bf16 %v1022, %v1022
  %v1087 = vpack.c.bf16 %v1023, %v1023
  %v1088 = vpack.c.bf16 %v1024, %v1024
  %v1089 = vpack.c.bf16 %v1025, %v1025
  %v1090 = vpack.c.bf16 %v1026, %v1026
  %v1091 = vpack.c.bf16 %v1027, %v1027
  %v1092 = vpack.c.bf16 %v1028, %v1028
  %v1093 = vpack.c.bf16 %v1029, %v1029
  %v1094 = vpack.c.bf16 %v1030, %v1030
  %v1095 = vpack.c.bf16 %v1031, %v1031
  %v1096 = vpack.c.bf16 %v1032, %v1032
  %v1097 = vpack.c.bf16 %v1033, %v1033
  %v1098 = vpack.c.bf16 %v1034, %v1034
  %v1099 = vpack.c.bf16 %v1035, %v1035
  %v1100 = vpack.c.bf16 %v1036, %v1036
  %v1101 = vpack.c.bf16 %v1037, %v1037
  %v1102 = vpack.c.bf16 %v1038, %v1038
  %v1103 = vpack.c.bf16 %v1039, %v1039
  %v1104 = vpack.c.bf16 %v1040, %v1040
  %v1105 = vpack.c.bf16 %v1041, %v1041
  %v1106 = vpack.c.bf16 %v1042, %v1042
  %v1107 = vpack.c.bf16 %v1043, %v1043
  %v1108 = vpack.c.bf16 %v1044, %v1044
  %v1109 = vpack.c.bf16 %v1045, %v1045
  %v1110 = vpack.c.bf16 %v1046, %v1046
  %v1111 = vpack.c.bf16 %v1047, %v1047
  %v1112 = vpack.c.bf16 %v1048, %v1048
  %v1113 = vpack.c.bf16 %v1049, %v1049
  %v1114 = vpack.c.bf16 %v1050, %v1050
  %v1115 = vpack.c.bf16 %v1051, %v1051
  %v1116 = vpack.c.bf16 %v1052, %v1052
  %v1117 = vpack.c.bf16 %v1053, %v1053
  %v1118 = vpack.c.bf16 %v1054, %v1054
  %v1119 = vpack.c.bf16 %v1055, %v1055
  %v1120 = vpack.c.bf16 %v1056, %v1056
  %v1121 = vpack.c.bf16 %v1057, %v1057
  %v1122 = vpack.c.bf16 %v1058, %v1058
  %v1123 = vpack.c.bf16 %v1059, %v1059
  %v1124 = vpack.c.bf16 %v1060, %v1060
  %v1125 = vpack.c.bf16 %v1061, %v1061
  %v1126 = vpack.c.bf16 %v1062, %v1062
  %v1127 = vpack.c.bf16 %v1063, %v1063
  %v1128 = vpack.c.bf16 %v1064, %v1064
  %v1129 = vld [vmem:[%s1000 + $0x1] sm:$0xff]
  %v1130 = vld [vmem:[%s1000 + $0x9] sm:$0xff]
  %v1131 = vld [vmem:[%s1000 + $0x19] sm:$0xff]
  %v1132 = vld [vmem:[%s1000 + $0x21] sm:$0xff]
  %v1133 = vld [vmem:[%s1000 + $0x31] sm:$0xff]
  %v1134 = vld [vmem:[%s1000 + $0x39] sm:$0xff]
  %v1135 = vld [vmem:[%s1000 + $0x49] sm:$0xff]
  %v1136 = vld [vmem:[%s1000 + $0x51] sm:$0xff]
  %v1137 = vld [vmem:[%s1000 + $0x61] sm:$0xff]
  %v1138 = vld [vmem:[%s1000 + $0x69] sm:$0xff]
  %v1139 = vld [vmem:[%s1000 + $0x79] sm:$0xff]
  %v1140 = vld [vmem:[%s1000 + $0x81] sm:$0xff]
  %v1141 = vld [vmem:[%s1000 + $0x91] sm:$0xff]
  %v1142 = vld [vmem:[%s1000 + $0x99] sm:$0xff]
  %v1143 = vld [vmem:[%s1000 + $0xa9] sm:$0xff]
  %v1144 = vld [vmem:[%s1000 + $0xb1] sm:$0xff]
  %v1145 = vld [vmem:[%s1000 + $0xc1] sm:$0xff]
  %v1146 = vld [vmem:[%s1000 + $0xc9] sm:$0xff]
  %v1147 = vld [vmem:[%s1000 + $0xd9] sm:$0xff]
  %v1148 = vld [vmem:[%s1000 + $0xe1] sm:$0xff]
  %v1149 = vld [vmem:[%s1000 + $0xf1] sm:$0xff]
  %v1150 = vld [vmem:[%s1000 + $0xf9] sm:$0xff]
  %v1151 = vld [vmem:[%s1000 + $0x109] sm:$0xff]
  %v1152 = vld [vmem:[%s1000 + $0x111] sm:$0xff]
  %v1153 = vld [vmem:[%s1000 + $0x121] sm:$0xff]
  %v1154 = vld [vmem:[%s1000 + $0x129] sm:$0xff]
  %v1155 = vld [vmem:[%s1000 + $0x139] sm:$0xff]
  %v1156 = vld [vmem:[%s1000 + $0x141] sm:$0xff]
  %v1157 = vld [vmem:[%s1000 + $0x151] sm:$0xff]
  %v1158 = vld [vmem:[%s1000 + $0x159] sm:$0xff]
  %v1159 = vld [vmem:[%s1000 + $0x169] sm:$0xff]
  %v1160 = vld [vmem:[%s1000 + $0x171] sm:$0xff]
  %v1161 = vld [vmem:[%s1000 + $0x1b1] sm:$0xff]
  %v1162 = vld [vmem:[%s1000 + $0x1b9] sm:$0xff]
  %v1163 = vld [vmem:[%s1000 + $0x1c9] sm:$0xff]
  %v1164 = vld [vmem:[%s1000 + $0x1d1] sm:$0xff]
  %v1165 = vld [vmem:[%s1000 + $0x1e1] sm:$0xff]
  %v1166 = vld [vmem:[%s1000 + $0x1e9] sm:$0xff]
  %v1167 = vld [vmem:[%s1000 + $0x1f9] sm:$0xff]
  %v1168 = vld [vmem:[%s1000 + $0x201] sm:$0xff]
  %v1169 = vld [vmem:[%s1000 + $0x211] sm:$0xff]
  %v1170 = vld [vmem:[%s1000 + $0x219] sm:$0xff]
  %v1171 = vld [vmem:[%s1000 + $0x229] sm:$0xff]
  %v1172 = vld [vmem:[%s1000 + $0x231] sm:$0xff]
  %v1173 = vld [vmem:[%s1000 + $0x241] sm:$0xff]
  %v1174 = vld [vmem:[%s1000 + $0x249] sm:$0xff]
  %v1175 = vld [vmem:[%s1000 + $0x259] sm:$0xff]
  %v1176 = vld [vmem:[%s1000 + $0x261] sm:$0xff]
  %v1177 = vld [vmem:[%s1000 + $0x271] sm:$0xff]
  %v1178 = vld [vmem:[%s1000 + $0x279] sm:$0xff]
  %v1179 = vld [vmem:[%s1000 + $0x289] sm:$0xff]
  %v1180 = vld [vmem:[%s1000 + $0x291] sm:$0xff]
  %v1181 = vld [vmem:[%s1000 + $0x2a1] sm:$0xff]
  %v1182 = vld [vmem:[%s1000 + $0x2a9] sm:$0xff]
  %v1183 = vld [vmem:[%s1000 + $0x2b9] sm:$0xff]
  %v1184 = vld [vmem:[%s1000 + $0x2c1] sm:$0xff]
  %v1185 = vld [vmem:[%s1000 + $0x2d1] sm:$0xff]
  %v1186 = vld [vmem:[%s1000 + $0x2d9] sm:$0xff]
  %v1187 = vld [vmem:[%s1000 + $0x2e9] sm:$0xff]
  %v1188 = vld [vmem:[%s1000 + $0x2f1] sm:$0xff]
  %v1189 = vld [vmem:[%s1000 + $0x301] sm:$0xff]
  %v1190 = vld [vmem:[%s1000 + $0x309] sm:$0xff]
  %v1191 = vld [vmem:[%s1000 + $0x319] sm:$0xff]
  %v1192 = vld [vmem:[%s1000 + $0x321] sm:$0xff]
  %v1193 = vpack.c.bf16 %v1129, %v1129
  %v1194 = vpack.c.bf16 %v1130, %v1130
  %v1195 = vpack.c.bf16 %v1131, %v1131
  %v1196 = vpack.c.bf16 %v1132, %v1132
  %v1197 = vpack.c.bf16 %v1133, %v1133
  %v1198 = vpack.c.bf16 %v1134, %v1134
  %v1199 = vpack.c.bf16 %v1135, %v1135
  %v1200 = vpack.c.bf16 %v1136, %v1136
  %v1201 = vpack.c.bf16 %v1137, %v1137
  %v1202 = vpack.c.bf16 %v1138, %v1138
  %v1203 = vpack.c.bf16 %v1139, %v1139
  %v1204 = vpack.c.bf16 %v1140, %v1140
  %v1205 = vpack.c.bf16 %v1141, %v1141
  %v1206 = vpack.c.bf16 %v1142, %v1142
  %v1207 = vpack.c.bf16 %v1143, %v1143
  %v1208 = vpack.c.bf16 %v1144, %v1144
  %v1209 = vpack.c.bf16 %v1145, %v1145
  %v1210 = vpack.c.bf16 %v1146, %v1146
  %v1211 = vpack.c.bf16 %v1147, %v1147
  %v1212 = vpack.c.bf16 %v1148, %v1148
  %v1213 = vpack.c.bf16 %v1149, %v1149
  %v1214 = vpack.c.bf16 %v1150, %v1150
  %v1215 = vpack.c.bf16 %v1151, %v1151
  %v1216 = vpack.c.bf16 %v1152, %v1152
  %v1217 = vpack.c.bf16 %v1153, %v1153
  %v1218 = vpack.c.bf16 %v1154, %v1154
  %v1219 = vpack.c.bf16 %v1155, %v1155
  %v1220 = vpack.c.bf16 %v1156, %v1156
  %v1221 = vpack.c.bf16 %v1157, %v1157
  %v1222 = vpack.c.bf16 %v1158, %v1158
  %v1223 = vpack.c.bf16 %v1159, %v1159
  %v1224 = vpack.c.bf16 %v1160, %v1160
  %v1225 = vpack.c.bf16 %v1161, %v1161
  %v1226 = vpack.c.bf16 %v1162, %v1162
  %v1227 = vpack.c.bf16 %v1163, %v1163
  %v1228 = vpack.c.bf16 %v1164, %v1164
  %v1229 = vpack.c.bf16 %v1165, %v1165
  %v1230 = vpack.c.bf16 %v1166, %v1166
  %v1231 = vpack.c.bf16 %v1167, %v1167
  %v1232 = vpack.c.bf16 %v1168, %v1168
  %v1233 = vpack.c.bf16 %v1169, %v1169
  %v1234 = vpack.c.bf16 %v1170, %v1170
  %v1235 = vpack.c.bf16 %v1171, %v1171
  %v1236 = vpack.c.bf16 %v1172, %v1172
  %v1237 = vpack.c.bf16 %v1173, %v1173
  %v1238 = vpack.c.bf16 %v1174, %v1174
  %v1239 = vpack.c.bf16 %v1175, %v1175
  %v1240 = vpack.c.bf16 %v1176, %v1176
  %v1241 = vpack.c.bf16 %v1177, %v1177
  %v1242 = vpack.c.bf16 %v1178, %v1178
  %v1243 = vpack.c.bf16 %v1179, %v1179
  %v1244 = vpack.c.bf16 %v1180, %v1180
  %v1245 = vpack.c.bf16 %v1181, %v1181
  %v1246 = vpack.c.bf16 %v1182, %v1182
  %v1247 = vpack.c.bf16 %v1183, %v1183
  %v1248 = vpack.c.bf16 %v1184, %v1184
  %v1249 = vpack.c.bf16 %v1185, %v1185
  %v1250 = vpack.c.bf16 %v1186, %v1186
  %v1251 = vpack.c.bf16 %v1187, %v1187
  %v1252 = vpack.c.bf16 %v1188, %v1188
  %v1253 = vpack.c.bf16 %v1189, %v1189
  %v1254 = vpack.c.bf16 %v1190, %v1190
  %v1255 = vpack.c.bf16 %v1191, %v1191
  %v1256 = vpack.c.bf16 %v1192, %v1192
  %v1257 = vld [vmem:[%s1000 + $0x2] sm:$0xff]
  %v1258 = vld [vmem:[%s1000 + $0xa] sm:$0xff]
  %v1259 = vld [vmem:[%s1000 + $0x1a] sm:$0xff]
  %v1260 = vld [vmem:[%s1000 + $0x22] sm:$0xff]
  %v1261 = vld [vmem:[%s1000 + $0x32] sm:$0xff]
  %v1262 = vld [vmem:[%s1000 + $0x3a] sm:$0xff]
  %v1263 = vld [vmem:[%s1000 + $0x4a] sm:$0xff]
  %v1264 = vld [vmem:[%s1000 + $0x52] sm:$0xff]
  %v1265 = vld [vmem:[%s1000 + $0x62] sm:$0xff]
  %v1266 = vld [vmem:[%s1000 + $0x6a] sm:$0xff]
  %v1267 = vld [vmem:[%s1000 + $0x7a] sm:$0xff]
  %v1268 = vld [vmem:[%s1000 + $0x82] sm:$0xff]
  %v1269 = vld [vmem:[%s1000 + $0x92] sm:$0xff]
  %v1270 = vld [vmem:[%s1000 + $0x9a] sm:$0xff]
  %v1271 = vld [vmem:[%s1000 + $0xaa] sm:$0xff]
  %v1272 = vld [vmem:[%s1000 + $0xb2] sm:$0xff]
  %v1273 = vld [vmem:[%s1000 + $0xc2] sm:$0xff]
  %v1274 = vld [vmem:[%s1000 + $0xca] sm:$0xff]
  %v1275 = vld [vmem:[%s1000 + $0xda] sm:$0xff]
  %v1276 = vld [vmem:[%s1000 + $0xe2] sm:$0xff]
  %v1277 = vld [vmem:[%s1000 + $0xf2] sm:$0xff]
  %v1278 = vld [vmem:[%s1000 + $0xfa] sm:$0xff]
  %v1279 = vld [vmem:[%s1000 + $0x10a] sm:$0xff]
  %v1280 = vld [vmem:[%s1000 + $0x112] sm:$0xff]
  %v1281 = vld [vmem:[%s1000 + $0x122] sm:$0xff]
  %v1282 = vld [vmem:[%s1000 + $0x12a] sm:$0xff]
  %v1283 = vld [vmem:[%s1000 + $0x13a] sm:$0xff]
  %v1284 = vld [vmem:[%s1000 + $0x142] sm:$0xff]
  %v1285 = vld [vmem:[%s1000 + $0x152] sm:$0xff]
  %v1286 = vld [vmem:[%s1000 + $0x15a] sm:$0xff]
  %v1287 = vld [vmem:[%s1000 + $0x16a] sm:$0xff]
  %v1288 = vld [vmem:[%s1000 + $0x172] sm:$0xff]
  %v1289 = vld [vmem:[%s1000 + $0x1b2] sm:$0xff]
  %v1290 = vld [vmem:[%s1000 + $0x1ba] sm:$0xff]
  %v1291 = vld [vmem:[%s1000 + $0x1ca] sm:$0xff]
  %v1292 = vld [vmem:[%s1000 + $0x1d2] sm:$0xff]
  %v1293 = vld [vmem:[%s1000 + $0x1e2] sm:$0xff]
  %v1294 = vld [vmem:[%s1000 + $0x1ea] sm:$0xff]
  %v1295 = vld [vmem:[%s1000 + $0x1fa] sm:$0xff]
  %v1296 = vld [vmem:[%s1000 + $0x202] sm:$0xff]
  %v1297 = vld [vmem:[%s1000 + $0x212] sm:$0xff]
  %v1298 = vld [vmem:[%s1000 + $0x21a] sm:$0xff]
  %v1299 = vld [vmem:[%s1000 + $0x22a] sm:$0xff]
  %v1300 = vld [vmem:[%s1000 + $0x232] sm:$0xff]
  %v1301 = vld [vmem:[%s1000 + $0x242] sm:$0xff]
  %v1302 = vld [vmem:[%s1000 + $0x24a] sm:$0xff]
  %v1303 = vld [vmem:[%s1000 + $0x25a] sm:$0xff]
  %v1304 = vld [vmem:[%s1000 + $0x262] sm:$0xff]
  %v1305 = vld [vmem:[%s1000 + $0x272] sm:$0xff]
  %v1306 = vld [vmem:[%s1000 + $0x27a] sm:$0xff]
  %v1307 = vld [vmem:[%s1000 + $0x28a] sm:$0xff]
  %v1308 = vld [vmem:[%s1000 + $0x292] sm:$0xff]
  %v1309 = vld [vmem:[%s1000 + $0x2a2] sm:$0xff]
  %v1310 = vld [vmem:[%s1000 + $0x2aa] sm:$0xff]
  %v1311 = vld [vmem:[%s1000 + $0x2ba] sm:$0xff]
  %v1312 = vld [vmem:[%s1000 + $0x2c2] sm:$0xff]
  %v1313 = vld [vmem:[%s1000 + $0x2d2] sm:$0xff]
  %v1314 = vld [vmem:[%s1000 + $0x2da] sm:$0xff]
  %v1315 = vld [vmem:[%s1000 + $0x2ea] sm:$0xff]
  %v1316 = vld [vmem:[%s1000 + $0x2f2] sm:$0xff]
  %v1317 = vld [vmem:[%s1000 + $0x302] sm:$0xff]
  %v1318 = vld [vmem:[%s1000 + $0x30a] sm:$0xff]
  %v1319 = vld [vmem:[%s1000 + $0x31a] sm:$0xff]
  %v1320 = vld [vmem:[%s1000 + $0x322] sm:$0xff]
  %v1321 = vpack.c.bf16 %v1257, %v1257
  %v1322 = vpack.c.bf16 %v1258, %v1258
  %v1323 = vpack.c.bf16 %v1259, %v1259
  %v1324 = vpack.c.bf16 %v1260, %v1260
  %v1325 = vpack.c.bf16 %v1261, %v1261
  %v1326 = vpack.c.bf16 %v1262, %v1262
  %v1327 = vpack.c.bf16 %v1263, %v1263
  %v1328 = vpack.c.bf16 %v1264, %v1264
  %v1329 = vpack.c.bf16 %v1265, %v1265
  %v1330 = vpack.c.bf16 %v1266, %v1266
  %v1331 = vpack.c.bf16 %v1267, %v1267
  %v1332 = vpack.c.bf16 %v1268, %v1268
  %v1333 = vpack.c.bf16 %v1269, %v1269
  %v1334 = vpack.c.bf16 %v1270, %v1270
  %v1335 = vpack.c.bf16 %v1271, %v1271
  %v1336 = vpack.c.bf16 %v1272, %v1272
  %v1337 = vpack.c.bf16 %v1273, %v1273
  %v1338 = vpack.c.bf16 %v1274, %v1274
  %v1339 = vpack.c.bf16 %v1275, %v1275
  %v1340 = vpack.c.bf16 %v1276, %v1276
  %v1341 = vpack.c.bf16 %v1277, %v1277
  %v1342 = vpack.c.bf16 %v1278, %v1278
  %v1343 = vpack.c.bf16 %v1279, %v1279
  %v1344 = vpack.c.bf16 %v1280, %v1280
  %v1345 = vpack.c.bf16 %v1281, %v1281
  %v1346 = vpack.c.bf16 %v1282, %v1282
  %v1347 = vpack.c.bf16 %v1283, %v1283
  %v1348 = vpack.c.bf16 %v1284, %v1284
  %v1349 = vpack.c.bf16 %v1285, %v1285
  %v1350 = vpack.c.bf16 %v1286, %v1286
  %v1351 = vpack.c.bf16 %v1287, %v1287
  %v1352 = vpack.c.bf16 %v1288, %v1288
  %v1353 = vpack.c.bf16 %v1289, %v1289
  %v1354 = vpack.c.bf16 %v1290, %v1290
  %v1355 = vpack.c.bf16 %v1291, %v1291
  %v1356 = vpack.c.bf16 %v1292, %v1292
  %v1357 = vpack.c.bf16 %v1293, %v1293
  %v1358 = vpack.c.bf16 %v1294, %v1294
  %v1359 = vpack.c.bf16 %v1295, %v1295
  %v1360 = vpack.c.bf16 %v1296, %v1296
  %v1361 = vpack.c.bf16 %v1297, %v1297
  %v1362 = vpack.c.bf16 %v1298, %v1298
  %v1363 = vpack.c.bf16 %v1299, %v1299
  %v1364 = vpack.c.bf16 %v1300, %v1300
  %v1365 = vpack.c.bf16 %v1301, %v1301
  %v1366 = vpack.c.bf16 %v1302, %v1302
  %v1367 = vpack.c.bf16 %v1303, %v1303
  %v1368 = vpack.c.bf16 %v1304, %v1304
  %v1369 = vpack.c.bf16 %v1305, %v1305
  %v1370 = vpack.c.bf16 %v1306, %v1306
  %v1371 = vpack.c.bf16 %v1307, %v1307
  %v1372 = vpack.c.bf16 %v1308, %v1308
  %v1373 = vpack.c.bf16 %v1309, %v1309
  %v1374 = vpack.c.bf16 %v1310, %v1310
  %v1375 = vpack.c.bf16 %v1311, %v1311
  %v1376 = vpack.c.bf16 %v1312, %v1312
  %v1377 = vpack.c.bf16 %v1313, %v1313
  %v1378 = vpack.c.bf16 %v1314, %v1314
  %v1379 = vpack.c.bf16 %v1315, %v1315
  %v1380 = vpack.c.bf16 %v1316, %v1316
  %v1381 = vpack.c.bf16 %v1317, %v1317
  %v1382 = vpack.c.bf16 %v1318, %v1318
  %v1383 = vpack.c.bf16 %v1319, %v1319
  %v1384 = vpack.c.bf16 %v1320, %v1320
  %v1449 = vunpack.c.l.b16 %v296
  %v1450 = vunpack.c.l.b16 %v297
  %v1451 = vunpack.c.l.b16 %v298
  %v1452 = vunpack.c.l.b16 %v299
  %v1453 = vunpack.c.l.b16 %v300
  %v1454 = vunpack.c.l.b16 %v301
  %v1455 = vunpack.c.l.b16 %v302
  %v1456 = vunpack.c.l.b16 %v303
  %v1457 = vunpack.c.l.b16 %v304
  %v1458 = vunpack.c.l.b16 %v305
  %v1459 = vunpack.c.l.b16 %v306
  %v1460 = vunpack.c.l.b16 %v307
  %v1461 = vunpack.c.l.b16 %v308
  %v1462 = vunpack.c.l.b16 %v309
  %v1463 = vunpack.c.l.b16 %v310
  %v1464 = vunpack.c.l.b16 %v311
  %v1465 = vunpack.c.l.b16 %v312
  %v1466 = vunpack.c.l.b16 %v313
  %v1467 = vunpack.c.l.b16 %v314
  %v1468 = vunpack.c.l.b16 %v315
  %v1469 = vunpack.c.l.b16 %v316
  %v1470 = vunpack.c.l.b16 %v317
  %v1471 = vunpack.c.l.b16 %v318
  %v1472 = vunpack.c.l.b16 %v319
  %v1473 = vunpack.c.l.b16 %v320
  %v1474 = vunpack.c.l.b16 %v321
  %v1475 = vunpack.c.l.b16 %v322
  %v1476 = vunpack.c.l.b16 %v323
  %v1477 = vunpack.c.l.b16 %v324
  %v1478 = vunpack.c.l.b16 %v325
  %v1479 = vunpack.c.l.b16 %v326
  %v1480 = vunpack.c.l.b16 %v327
  %v1481 = vunpack.c.l.b16 %v328
  %v1482 = vunpack.c.l.b16 %v329
  %v1483 = vunpack.c.l.b16 %v330
  %v1484 = vunpack.c.l.b16 %v331
  %v1485 = vunpack.c.l.b16 %v332
  %v1486 = vunpack.c.l.b16 %v333
  %v1487 = vunpack.c.l.b16 %v334
  %v1488 = vunpack.c.l.b16 %v335
  %v1489 = vunpack.c.l.b16 %v336
  %v1490 = vunpack.c.l.b16 %v337
  %v1491 = vunpack.c.l.b16 %v338
  %v1492 = vunpack.c.l.b16 %v339
  %v1493 = vunpack.c.l.b16 %v340
  %v1494 = vunpack.c.l.b16 %v341
  %v1495 = vunpack.c.l.b16 %v342
  %v1496 = vunpack.c.l.b16 %v343
  %v1497 = vunpack.c.l.b16 %v344
  %v1498 = vunpack.c.l.b16 %v345
  %v1499 = vunpack.c.l.b16 %v346
  %v1500 = vunpack.c.l.b16 %v347
  %v1501 = vunpack.c.l.b16 %v348
  %v1502 = vunpack.c.l.b16 %v349
  %v1503 = vunpack.c.l.b16 %v350
  %v1504 = vunpack.c.l.b16 %v351
  %v1505 = vunpack.c.l.b16 %v352
  %v1506 = vunpack.c.l.b16 %v353
  %v1507 = vunpack.c.l.b16 %v354
  %v1508 = vunpack.c.l.b16 %v355
  %v1509 = vunpack.c.l.b16 %v356
  %v1510 = vunpack.c.l.b16 %v357
  %v1511 = vunpack.c.l.b16 %v358
  %v1512 = vunpack.c.l.b16 %v359
  %v1513 = vpack.c.b16 %v1450, %v1449
  %v1514 = vpack.c.b16 %v1452, %v1451
  %v1515 = vpack.c.b16 %v1454, %v1453
  %v1516 = vpack.c.b16 %v1456, %v1455
  %v1517 = vpack.c.b16 %v1458, %v1457
  %v1518 = vpack.c.b16 %v1460, %v1459
  %v1519 = vpack.c.b16 %v1462, %v1461
  %v1520 = vpack.c.b16 %v1464, %v1463
  %v1521 = vpack.c.b16 %v1466, %v1465
  %v1522 = vpack.c.b16 %v1468, %v1467
  %v1523 = vpack.c.b16 %v1470, %v1469
  %v1524 = vpack.c.b16 %v1472, %v1471
  %v1525 = vpack.c.b16 %v1474, %v1473
  %v1526 = vpack.c.b16 %v1476, %v1475
  %v1527 = vpack.c.b16 %v1478, %v1477
  %v1528 = vpack.c.b16 %v1480, %v1479
  %v1529 = vpack.c.b16 %v1482, %v1481
  %v1530 = vpack.c.b16 %v1484, %v1483
  %v1531 = vpack.c.b16 %v1486, %v1485
  %v1532 = vpack.c.b16 %v1488, %v1487
  %v1533 = vpack.c.b16 %v1490, %v1489
  %v1534 = vpack.c.b16 %v1492, %v1491
  %v1535 = vpack.c.b16 %v1494, %v1493
  %v1536 = vpack.c.b16 %v1496, %v1495
  %v1537 = vpack.c.b16 %v1498, %v1497
  %v1538 = vpack.c.b16 %v1500, %v1499
  %v1539 = vpack.c.b16 %v1502, %v1501
  %v1540 = vpack.c.b16 %v1504, %v1503
  %v1541 = vpack.c.b16 %v1506, %v1505
  %v1542 = vpack.c.b16 %v1508, %v1507
  %v1543 = vpack.c.b16 %v1510, %v1509
  %v1544 = vpack.c.b16 %v1512, %v1511
  %v1641 = vunpack.c.l.b16 %v424
  %v1642 = vunpack.c.l.b16 %v425
  %v1643 = vunpack.c.l.b16 %v426
  %v1644 = vunpack.c.l.b16 %v427
  %v1645 = vunpack.c.l.b16 %v428
  %v1646 = vunpack.c.l.b16 %v429
  %v1647 = vunpack.c.l.b16 %v430
  %v1648 = vunpack.c.l.b16 %v431
  %v1649 = vunpack.c.l.b16 %v432
  %v1650 = vunpack.c.l.b16 %v433
  %v1651 = vunpack.c.l.b16 %v434
  %v1652 = vunpack.c.l.b16 %v435
  %v1653 = vunpack.c.l.b16 %v436
  %v1654 = vunpack.c.l.b16 %v437
  %v1655 = vunpack.c.l.b16 %v438
  %v1656 = vunpack.c.l.b16 %v439
  %v1657 = vunpack.c.l.b16 %v440
  %v1658 = vunpack.c.l.b16 %v441
  %v1659 = vunpack.c.l.b16 %v442
  %v1660 = vunpack.c.l.b16 %v443
  %v1661 = vunpack.c.l.b16 %v444
  %v1662 = vunpack.c.l.b16 %v445
  %v1663 = vunpack.c.l.b16 %v446
  %v1664 = vunpack.c.l.b16 %v447
  %v1665 = vunpack.c.l.b16 %v448
  %v1666 = vunpack.c.l.b16 %v449
  %v1667 = vunpack.c.l.b16 %v450
  %v1668 = vunpack.c.l.b16 %v451
  %v1669 = vunpack.c.l.b16 %v452
  %v1670 = vunpack.c.l.b16 %v453
  %v1671 = vunpack.c.l.b16 %v454
  %v1672 = vunpack.c.l.b16 %v455
  %v1673 = vunpack.c.l.b16 %v456
  %v1674 = vunpack.c.l.b16 %v457
  %v1675 = vunpack.c.l.b16 %v458
  %v1676 = vunpack.c.l.b16 %v459
  %v1677 = vunpack.c.l.b16 %v460
  %v1678 = vunpack.c.l.b16 %v461
  %v1679 = vunpack.c.l.b16 %v462
  %v1680 = vunpack.c.l.b16 %v463
  %v1681 = vunpack.c.l.b16 %v464
  %v1682 = vunpack.c.l.b16 %v465
  %v1683 = vunpack.c.l.b16 %v466
  %v1684 = vunpack.c.l.b16 %v467
  %v1685 = vunpack.c.l.b16 %v468
  %v1686 = vunpack.c.l.b16 %v469
  %v1687 = vunpack.c.l.b16 %v470
  %v1688 = vunpack.c.l.b16 %v471
  %v1689 = vunpack.c.l.b16 %v472
  %v1690 = vunpack.c.l.b16 %v473
  %v1691 = vunpack.c.l.b16 %v474
  %v1692 = vunpack.c.l.b16 %v475
  %v1693 = vunpack.c.l.b16 %v476
  %v1694 = vunpack.c.l.b16 %v477
  %v1695 = vunpack.c.l.b16 %v478
  %v1696 = vunpack.c.l.b16 %v479
  %v1697 = vunpack.c.l.b16 %v480
  %v1698 = vunpack.c.l.b16 %v481
  %v1699 = vunpack.c.l.b16 %v482
  %v1700 = vunpack.c.l.b16 %v483
  %v1701 = vunpack.c.l.b16 %v484
  %v1702 = vunpack.c.l.b16 %v485
  %v1703 = vunpack.c.l.b16 %v486
  %v1704 = vunpack.c.l.b16 %v487
  %v1705 = vpack.c.b16 %v1642, %v1641
  %v1706 = vpack.c.b16 %v1644, %v1643
  %v1707 = vpack.c.b16 %v1646, %v1645
  %v1708 = vpack.c.b16 %v1648, %v1647
  %v1709 = vpack.c.b16 %v1650, %v1649
  %v1710 = vpack.c.b16 %v1652, %v1651
  %v1711 = vpack.c.b16 %v1654, %v1653
  %v1712 = vpack.c.b16 %v1656, %v1655
  %v1713 = vpack.c.b16 %v1658, %v1657
  %v1714 = vpack.c.b16 %v1660, %v1659
  %v1715 = vpack.c.b16 %v1662, %v1661
  %v1716 = vpack.c.b16 %v1664, %v1663
  %v1717 = vpack.c.b16 %v1666, %v1665
  %v1718 = vpack.c.b16 %v1668, %v1667
  %v1719 = vpack.c.b16 %v1670, %v1669
  %v1720 = vpack.c.b16 %v1672, %v1671
  %v1721 = vpack.c.b16 %v1674, %v1673
  %v1722 = vpack.c.b16 %v1676, %v1675
  %v1723 = vpack.c.b16 %v1678, %v1677
  %v1724 = vpack.c.b16 %v1680, %v1679
  %v1725 = vpack.c.b16 %v1682, %v1681
  %v1726 = vpack.c.b16 %v1684, %v1683
  %v1727 = vpack.c.b16 %v1686, %v1685
  %v1728 = vpack.c.b16 %v1688, %v1687
  %v1729 = vpack.c.b16 %v1690, %v1689
  %v1730 = vpack.c.b16 %v1692, %v1691
  %v1731 = vpack.c.b16 %v1694, %v1693
  %v1732 = vpack.c.b16 %v1696, %v1695
  %v1733 = vpack.c.b16 %v1698, %v1697
  %v1734 = vpack.c.b16 %v1700, %v1699
  %v1735 = vpack.c.b16 %v1702, %v1701
  %v1736 = vpack.c.b16 %v1704, %v1703
  %v1833 = vunpack.c.l.b16 %v552
  %v1834 = vunpack.c.l.b16 %v553
  %v1835 = vunpack.c.l.b16 %v554
  %v1836 = vunpack.c.l.b16 %v555
  %v1837 = vunpack.c.l.b16 %v556
  %v1838 = vunpack.c.l.b16 %v557
  %v1839 = vunpack.c.l.b16 %v558
  %v1840 = vunpack.c.l.b16 %v559
  %v1841 = vunpack.c.l.b16 %v560
  %v1842 = vunpack.c.l.b16 %v561
  %v1843 = vunpack.c.l.b16 %v562
  %v1844 = vunpack.c.l.b16 %v563
  %v1845 = vunpack.c.l.b16 %v564
  %v1846 = vunpack.c.l.b16 %v565
  %v1847 = vunpack.c.l.b16 %v566
  %v1848 = vunpack.c.l.b16 %v567
  %v1849 = vunpack.c.l.b16 %v568
  %v1850 = vunpack.c.l.b16 %v569
  %v1851 = vunpack.c.l.b16 %v570
  %v1852 = vunpack.c.l.b16 %v571
  %v1853 = vunpack.c.l.b16 %v572
  %v1854 = vunpack.c.l.b16 %v573
  %v1855 = vunpack.c.l.b16 %v574
  %v1856 = vunpack.c.l.b16 %v575
  %v1857 = vunpack.c.l.b16 %v576
  %v1858 = vunpack.c.l.b16 %v577
  %v1859 = vunpack.c.l.b16 %v578
  %v1860 = vunpack.c.l.b16 %v579
  %v1861 = vunpack.c.l.b16 %v580
  %v1862 = vunpack.c.l.b16 %v581
  %v1863 = vunpack.c.l.b16 %v582
  %v1864 = vunpack.c.l.b16 %v583
  %v1865 = vunpack.c.l.b16 %v584
  %v1866 = vunpack.c.l.b16 %v585
  %v1867 = vunpack.c.l.b16 %v586
  %v1868 = vunpack.c.l.b16 %v587
  %v1869 = vunpack.c.l.b16 %v588
  %v1870 = vunpack.c.l.b16 %v589
  %v1871 = vunpack.c.l.b16 %v590
  %v1872 = vunpack.c.l.b16 %v591
  %v1873 = vunpack.c.l.b16 %v592
  %v1874 = vunpack.c.l.b16 %v593
  %v1875 = vunpack.c.l.b16 %v594
  %v1876 = vunpack.c.l.b16 %v595
  %v1877 = vunpack.c.l.b16 %v596
  %v1878 = vunpack.c.l.b16 %v597
  %v1879 = vunpack.c.l.b16 %v598
  %v1880 = vunpack.c.l.b16 %v599
  %v1881 = vunpack.c.l.b16 %v600
  %v1882 = vunpack.c.l.b16 %v601
  %v1883 = vunpack.c.l.b16 %v602
  %v1884 = vunpack.c.l.b16 %v603
  %v1885 = vunpack.c.l.b16 %v604
  %v1886 = vunpack.c.l.b16 %v605
  %v1887 = vunpack.c.l.b16 %v606
  %v1888 = vunpack.c.l.b16 %v607
  %v1889 = vunpack.c.l.b16 %v608
  %v1890 = vunpack.c.l.b16 %v609
  %v1891 = vunpack.c.l.b16 %v610
  %v1892 = vunpack.c.l.b16 %v611
  %v1893 = vunpack.c.l.b16 %v612
  %v1894 = vunpack.c.l.b16 %v613
  %v1895 = vunpack.c.l.b16 %v614
  %v1896 = vunpack.c.l.b16 %v615
  %v1897 = vpack.c.b16 %v1834, %v1833
  %v1898 = vpack.c.b16 %v1836, %v1835
  %v1899 = vpack.c.b16 %v1838, %v1837
  %v1900 = vpack.c.b16 %v1840, %v1839
  %v1901 = vpack.c.b16 %v1842, %v1841
  %v1902 = vpack.c.b16 %v1844, %v1843
  %v1903 = vpack.c.b16 %v1846, %v1845
  %v1904 = vpack.c.b16 %v1848, %v1847
  %v1905 = vpack.c.b16 %v1850, %v1849
  %v1906 = vpack.c.b16 %v1852, %v1851
  %v1907 = vpack.c.b16 %v1854, %v1853
  %v1908 = vpack.c.b16 %v1856, %v1855
  %v1909 = vpack.c.b16 %v1858, %v1857
  %v1910 = vpack.c.b16 %v1860, %v1859
  %v1911 = vpack.c.b16 %v1862, %v1861
  %v1912 = vpack.c.b16 %v1864, %v1863
  %v1913 = vpack.c.b16 %v1866, %v1865
  %v1914 = vpack.c.b16 %v1868, %v1867
  %v1915 = vpack.c.b16 %v1870, %v1869
  %v1916 = vpack.c.b16 %v1872, %v1871
  %v1917 = vpack.c.b16 %v1874, %v1873
  %v1918 = vpack.c.b16 %v1876, %v1875
  %v1919 = vpack.c.b16 %v1878, %v1877
  %v1920 = vpack.c.b16 %v1880, %v1879
  %v1921 = vpack.c.b16 %v1882, %v1881
  %v1922 = vpack.c.b16 %v1884, %v1883
  %v1923 = vpack.c.b16 %v1886, %v1885
  %v1924 = vpack.c.b16 %v1888, %v1887
  %v1925 = vpack.c.b16 %v1890, %v1889
  %v1926 = vpack.c.b16 %v1892, %v1891
  %v1927 = vpack.c.b16 %v1894, %v1893
  %v1928 = vpack.c.b16 %v1896, %v1895
  %v2025 = vunpack.c.l.b16 %v680
  %v2026 = vunpack.c.l.b16 %v681
  %v2027 = vunpack.c.l.b16 %v682
  %v2028 = vunpack.c.l.b16 %v683
  %v2029 = vunpack.c.l.b16 %v684
  %v2030 = vunpack.c.l.b16 %v685
  %v2031 = vunpack.c.l.b16 %v686
  %v2032 = vunpack.c.l.b16 %v687
  %v2033 = vunpack.c.l.b16 %v688
  %v2034 = vunpack.c.l.b16 %v689
  %v2035 = vunpack.c.l.b16 %v690
  %v2036 = vunpack.c.l.b16 %v691
  %v2037 = vunpack.c.l.b16 %v692
  %v2038 = vunpack.c.l.b16 %v693
  %v2039 = vunpack.c.l.b16 %v694
  %v2040 = vunpack.c.l.b16 %v695
  %v2041 = vunpack.c.l.b16 %v696
  %v2042 = vunpack.c.l.b16 %v697
  %v2043 = vunpack.c.l.b16 %v698
  %v2044 = vunpack.c.l.b16 %v699
  %v2045 = vunpack.c.l.b16 %v700
  %v2046 = vunpack.c.l.b16 %v701
  %v2047 = vunpack.c.l.b16 %v702
  %v2048 = vunpack.c.l.b16 %v703
  %v2049 = vunpack.c.l.b16 %v704
  %v2050 = vunpack.c.l.b16 %v705
  %v2051 = vunpack.c.l.b16 %v706
  %v2052 = vunpack.c.l.b16 %v707
  %v2053 = vunpack.c.l.b16 %v708
  %v2054 = vunpack.c.l.b16 %v709
  %v2055 = vunpack.c.l.b16 %v710
  %v2056 = vunpack.c.l.b16 %v711
  %v2057 = vunpack.c.l.b16 %v712
  %v2058 = vunpack.c.l.b16 %v713
  %v2059 = vunpack.c.l.b16 %v714
  %v2060 = vunpack.c.l.b16 %v715
  %v2061 = vunpack.c.l.b16 %v716
  %v2062 = vunpack.c.l.b16 %v717
  %v2063 = vunpack.c.l.b16 %v718
  %v2064 = vunpack.c.l.b16 %v719
  %v2065 = vunpack.c.l.b16 %v720
  %v2066 = vunpack.c.l.b16 %v721
  %v2067 = vunpack.c.l.b16 %v722
  %v2068 = vunpack.c.l.b16 %v723
  %v2069 = vunpack.c.l.b16 %v724
  %v2070 = vunpack.c.l.b16 %v725
  %v2071 = vunpack.c.l.b16 %v726
  %v2072 = vunpack.c.l.b16 %v727
  %v2073 = vunpack.c.l.b16 %v728
  %v2074 = vunpack.c.l.b16 %v729
  %v2075 = vunpack.c.l.b16 %v730
  %v2076 = vunpack.c.l.b16 %v731
  %v2077 = vunpack.c.l.b16 %v732
  %v2078 = vunpack.c.l.b16 %v733
  %v2079 = vunpack.c.l.b16 %v734
  %v2080 = vunpack.c.l.b16 %v735
  %v2081 = vunpack.c.l.b16 %v736
  %v2082 = vunpack.c.l.b16 %v737
  %v2083 = vunpack.c.l.b16 %v738
  %v2084 = vunpack.c.l.b16 %v739
  %v2085 = vunpack.c.l.b16 %v740
  %v2086 = vunpack.c.l.b16 %v741
  %v2087 = vunpack.c.l.b16 %v742
  %v2088 = vunpack.c.l.b16 %v743
  %v2089 = vpack.c.b16 %v2026, %v2025
  %v2090 = vpack.c.b16 %v2028, %v2027
  %v2091 = vpack.c.b16 %v2030, %v2029
  %v2092 = vpack.c.b16 %v2032, %v2031
  %v2093 = vpack.c.b16 %v2034, %v2033
  %v2094 = vpack.c.b16 %v2036, %v2035
  %v2095 = vpack.c.b16 %v2038, %v2037
  %v2096 = vpack.c.b16 %v2040, %v2039
  %v2097 = vpack.c.b16 %v2042, %v2041
  %v2098 = vpack.c.b16 %v2044, %v2043
  %v2099 = vpack.c.b16 %v2046, %v2045
  %v2100 = vpack.c.b16 %v2048, %v2047
  %v2101 = vpack.c.b16 %v2050, %v2049
  %v2102 = vpack.c.b16 %v2052, %v2051
  %v2103 = vpack.c.b16 %v2054, %v2053
  %v2104 = vpack.c.b16 %v2056, %v2055
  %v2105 = vpack.c.b16 %v2058, %v2057
  %v2106 = vpack.c.b16 %v2060, %v2059
  %v2107 = vpack.c.b16 %v2062, %v2061
  %v2108 = vpack.c.b16 %v2064, %v2063
  %v2109 = vpack.c.b16 %v2066, %v2065
  %v2110 = vpack.c.b16 %v2068, %v2067
  %v2111 = vpack.c.b16 %v2070, %v2069
  %v2112 = vpack.c.b16 %v2072, %v2071
  %v2113 = vpack.c.b16 %v2074, %v2073
  %v2114 = vpack.c.b16 %v2076, %v2075
  %v2115 = vpack.c.b16 %v2078, %v2077
  %v2116 = vpack.c.b16 %v2080, %v2079
  %v2117 = vpack.c.b16 %v2082, %v2081
  %v2118 = vpack.c.b16 %v2084, %v2083
  %v2119 = vpack.c.b16 %v2086, %v2085
  %v2120 = vpack.c.b16 %v2088, %v2087
  %v2217 = vunpack.c.l.b16 %v808
  %v2218 = vunpack.c.l.b16 %v809
  %v2219 = vunpack.c.l.b16 %v810
  %v2220 = vunpack.c.l.b16 %v811
  %v2221 = vunpack.c.l.b16 %v812
  %v2222 = vunpack.c.l.b16 %v813
  %v2223 = vunpack.c.l.b16 %v814
  %v2224 = vunpack.c.l.b16 %v815
  %v2225 = vunpack.c.l.b16 %v816
  %v2226 = vunpack.c.l.b16 %v817
  %v2227 = vunpack.c.l.b16 %v818
  %v2228 = vunpack.c.l.b16 %v819
  %v2229 = vunpack.c.l.b16 %v820
  %v2230 = vunpack.c.l.b16 %v821
  %v2231 = vunpack.c.l.b16 %v822
  %v2232 = vunpack.c.l.b16 %v823
  %v2233 = vunpack.c.l.b16 %v824
  %v2234 = vunpack.c.l.b16 %v825
  %v2235 = vunpack.c.l.b16 %v826
  %v2236 = vunpack.c.l.b16 %v827
  %v2237 = vunpack.c.l.b16 %v828
  %v2238 = vunpack.c.l.b16 %v829
  %v2239 = vunpack.c.l.b16 %v830
  %v2240 = vunpack.c.l.b16 %v831
  %v2241 = vunpack.c.l.b16 %v832
  %v2242 = vunpack.c.l.b16 %v833
  %v2243 = vunpack.c.l.b16 %v834
  %v2244 = vunpack.c.l.b16 %v835
  %v2245 = vunpack.c.l.b16 %v836
  %v2246 = vunpack.c.l.b16 %v837
  %v2247 = vunpack.c.l.b16 %v838
  %v2248 = vunpack.c.l.b16 %v839
  %v2249 = vunpack.c.l.b16 %v840
  %v2250 = vunpack.c.l.b16 %v841
  %v2251 = vunpack.c.l.b16 %v842
  %v2252 = vunpack.c.l.b16 %v843
  %v2253 = vunpack.c.l.b16 %v844
  %v2254 = vunpack.c.l.b16 %v845
  %v2255 = vunpack.c.l.b16 %v846
  %v2256 = vunpack.c.l.b16 %v847
  %v2257 = vunpack.c.l.b16 %v848
  %v2258 = vunpack.c.l.b16 %v849
  %v2259 = vunpack.c.l.b16 %v850
  %v2260 = vunpack.c.l.b16 %v851
  %v2261 = vunpack.c.l.b16 %v852
  %v2262 = vunpack.c.l.b16 %v853
  %v2263 = vunpack.c.l.b16 %v854
  %v2264 = vunpack.c.l.b16 %v855
  %v2265 = vunpack.c.l.b16 %v856
  %v2266 = vunpack.c.l.b16 %v857
  %v2267 = vunpack.c.l.b16 %v858
  %v2268 = vunpack.c.l.b16 %v859
  %v2269 = vunpack.c.l.b16 %v860
  %v2270 = vunpack.c.l.b16 %v861
  %v2271 = vunpack.c.l.b16 %v862
  %v2272 = vunpack.c.l.b16 %v863
  %v2273 = vunpack.c.l.b16 %v864
  %v2274 = vunpack.c.l.b16 %v865
  %v2275 = vunpack.c.l.b16 %v866
  %v2276 = vunpack.c.l.b16 %v867
  %v2277 = vunpack.c.l.b16 %v868
  %v2278 = vunpack.c.l.b16 %v869
  %v2279 = vunpack.c.l.b16 %v870
  %v2280 = vunpack.c.l.b16 %v871
  %v2281 = vpack.c.b16 %v2218, %v2217
  %v2282 = vpack.c.b16 %v2220, %v2219
  %v2283 = vpack.c.b16 %v2222, %v2221
  %v2284 = vpack.c.b16 %v2224, %v2223
  %v2285 = vpack.c.b16 %v2226, %v2225
  %v2286 = vpack.c.b16 %v2228, %v2227
  %v2287 = vpack.c.b16 %v2230, %v2229
  %v2288 = vpack.c.b16 %v2232, %v2231
  %v2289 = vpack.c.b16 %v2234, %v2233
  %v2290 = vpack.c.b16 %v2236, %v2235
  %v2291 = vpack.c.b16 %v2238, %v2237
  %v2292 = vpack.c.b16 %v2240, %v2239
  %v2293 = vpack.c.b16 %v2242, %v2241
  %v2294 = vpack.c.b16 %v2244, %v2243
  %v2295 = vpack.c.b16 %v2246, %v2245
  %v2296 = vpack.c.b16 %v2248, %v2247
  %v2297 = vpack.c.b16 %v2250, %v2249
  %v2298 = vpack.c.b16 %v2252, %v2251
  %v2299 = vpack.c.b16 %v2254, %v2253
  %v2300 = vpack.c.b16 %v2256, %v2255
  %v2301 = vpack.c.b16 %v2258, %v2257
  %v2302 = vpack.c.b16 %v2260, %v2259
  %v2303 = vpack.c.b16 %v2262, %v2261
  %v2304 = vpack.c.b16 %v2264, %v2263
  %v2305 = vpack.c.b16 %v2266, %v2265
  %v2306 = vpack.c.b16 %v2268, %v2267
  %v2307 = vpack.c.b16 %v2270, %v2269
  %v2308 = vpack.c.b16 %v2272, %v2271
  %v2309 = vpack.c.b16 %v2274, %v2273
  %v2310 = vpack.c.b16 %v2276, %v2275
  %v2311 = vpack.c.b16 %v2278, %v2277
  %v2312 = vpack.c.b16 %v2280, %v2279
  %v2409 = vunpack.c.l.b16 %v936
  %v2410 = vunpack.c.l.b16 %v937
  %v2411 = vunpack.c.l.b16 %v938
  %v2412 = vunpack.c.l.b16 %v939
  %v2413 = vunpack.c.l.b16 %v940
  %v2414 = vunpack.c.l.b16 %v941
  %v2415 = vunpack.c.l.b16 %v942
  %v2416 = vunpack.c.l.b16 %v943
  %v2417 = vunpack.c.l.b16 %v944
  %v2418 = vunpack.c.l.b16 %v945
  %v2419 = vunpack.c.l.b16 %v946
  %v2420 = vunpack.c.l.b16 %v947
  %v2421 = vunpack.c.l.b16 %v948
  %v2422 = vunpack.c.l.b16 %v949
  %v2423 = vunpack.c.l.b16 %v950
  %v2424 = vunpack.c.l.b16 %v951
  %v2425 = vunpack.c.l.b16 %v952
  %v2426 = vunpack.c.l.b16 %v953
  %v2427 = vunpack.c.l.b16 %v954
  %v2428 = vunpack.c.l.b16 %v955
  %v2429 = vunpack.c.l.b16 %v956
  %v2430 = vunpack.c.l.b16 %v957
  %v2431 = vunpack.c.l.b16 %v958
  %v2432 = vunpack.c.l.b16 %v959
  %v2433 = vunpack.c.l.b16 %v960
  %v2434 = vunpack.c.l.b16 %v961
  %v2435 = vunpack.c.l.b16 %v962
  %v2436 = vunpack.c.l.b16 %v963
  %v2437 = vunpack.c.l.b16 %v964
  %v2438 = vunpack.c.l.b16 %v965
  %v2439 = vunpack.c.l.b16 %v966
  %v2440 = vunpack.c.l.b16 %v967
  %v2441 = vunpack.c.l.b16 %v968
  %v2442 = vunpack.c.l.b16 %v969
  %v2443 = vunpack.c.l.b16 %v970
  %v2444 = vunpack.c.l.b16 %v971
  %v2445 = vunpack.c.l.b16 %v972
  %v2446 = vunpack.c.l.b16 %v973
  %v2447 = vunpack.c.l.b16 %v974
  %v2448 = vunpack.c.l.b16 %v975
  %v2449 = vunpack.c.l.b16 %v976
  %v2450 = vunpack.c.l.b16 %v977
  %v2451 = vunpack.c.l.b16 %v978
  %v2452 = vunpack.c.l.b16 %v979
  %v2453 = vunpack.c.l.b16 %v980
  %v2454 = vunpack.c.l.b16 %v981
  %v2455 = vunpack.c.l.b16 %v982
  %v2456 = vunpack.c.l.b16 %v983
  %v2457 = vunpack.c.l.b16 %v984
  %v2458 = vunpack.c.l.b16 %v985
  %v2459 = vunpack.c.l.b16 %v986
  %v2460 = vunpack.c.l.b16 %v987
  %v2461 = vunpack.c.l.b16 %v988
  %v2462 = vunpack.c.l.b16 %v989
  %v2463 = vunpack.c.l.b16 %v990
  %v2464 = vunpack.c.l.b16 %v991
  %v2465 = vunpack.c.l.b16 %v992
  %v2466 = vunpack.c.l.b16 %v993
  %v2467 = vunpack.c.l.b16 %v994
  %v2468 = vunpack.c.l.b16 %v995
  %v2469 = vunpack.c.l.b16 %v996
  %v2470 = vunpack.c.l.b16 %v997
  %v2471 = vunpack.c.l.b16 %v998
  %v2472 = vunpack.c.l.b16 %v999
  %v2473 = vpack.c.b16 %v2410, %v2409
  %v2474 = vpack.c.b16 %v2412, %v2411
  %v2475 = vpack.c.b16 %v2414, %v2413
  %v2476 = vpack.c.b16 %v2416, %v2415
  %v2477 = vpack.c.b16 %v2418, %v2417
  %v2478 = vpack.c.b16 %v2420, %v2419
  %v2479 = vpack.c.b16 %v2422, %v2421
  %v2480 = vpack.c.b16 %v2424, %v2423
  %v2481 = vpack.c.b16 %v2426, %v2425
  %v2482 = vpack.c.b16 %v2428, %v2427
  %v2483 = vpack.c.b16 %v2430, %v2429
  %v2484 = vpack.c.b16 %v2432, %v2431
  %v2485 = vpack.c.b16 %v2434, %v2433
  %v2486 = vpack.c.b16 %v2436, %v2435
  %v2487 = vpack.c.b16 %v2438, %v2437
  %v2488 = vpack.c.b16 %v2440, %v2439
  %v2489 = vpack.c.b16 %v2442, %v2441
  %v2490 = vpack.c.b16 %v2444, %v2443
  %v2491 = vpack.c.b16 %v2446, %v2445
  %v2492 = vpack.c.b16 %v2448, %v2447
  %v2493 = vpack.c.b16 %v2450, %v2449
  %v2494 = vpack.c.b16 %v2452, %v2451
  %v2495 = vpack.c.b16 %v2454, %v2453
  %v2496 = vpack.c.b16 %v2456, %v2455
  %v2497 = vpack.c.b16 %v2458, %v2457
  %v2498 = vpack.c.b16 %v2460, %v2459
  %v2499 = vpack.c.b16 %v2462, %v2461
  %v2500 = vpack.c.b16 %v2464, %v2463
  %v2501 = vpack.c.b16 %v2466, %v2465
  %v2502 = vpack.c.b16 %v2468, %v2467
  %v2503 = vpack.c.b16 %v2470, %v2469
  %v2504 = vpack.c.b16 %v2472, %v2471
  %v2601 = vunpack.c.l.b16 %v1065
  %v2602 = vunpack.c.l.b16 %v1066
  %v2603 = vunpack.c.l.b16 %v1067
  %v2604 = vunpack.c.l.b16 %v1068
  %v2605 = vunpack.c.l.b16 %v1069
  %v2606 = vunpack.c.l.b16 %v1070
  %v2607 = vunpack.c.l.b16 %v1071
  %v2608 = vunpack.c.l.b16 %v1072
  %v2609 = vunpack.c.l.b16 %v1073
  %v2610 = vunpack.c.l.b16 %v1074
  %v2611 = vunpack.c.l.b16 %v1075
  %v2612 = vunpack.c.l.b16 %v1076
  %v2613 = vunpack.c.l.b16 %v1077
  %v2614 = vunpack.c.l.b16 %v1078
  %v2615 = vunpack.c.l.b16 %v1079
  %v2616 = vunpack.c.l.b16 %v1080
  %v2617 = vunpack.c.l.b16 %v1081
  %v2618 = vunpack.c.l.b16 %v1082
  %v2619 = vunpack.c.l.b16 %v1083
  %v2620 = vunpack.c.l.b16 %v1084
  %v2621 = vunpack.c.l.b16 %v1085
  %v2622 = vunpack.c.l.b16 %v1086
  %v2623 = vunpack.c.l.b16 %v1087
  %v2624 = vunpack.c.l.b16 %v1088
  %v2625 = vunpack.c.l.b16 %v1089
  %v2626 = vunpack.c.l.b16 %v1090
  %v2627 = vunpack.c.l.b16 %v1091
  %v2628 = vunpack.c.l.b16 %v1092
  %v2629 = vunpack.c.l.b16 %v1093
  %v2630 = vunpack.c.l.b16 %v1094
  %v2631 = vunpack.c.l.b16 %v1095
  %v2632 = vunpack.c.l.b16 %v1096
  %v2633 = vunpack.c.l.b16 %v1097
  %v2634 = vunpack.c.l.b16 %v1098
  %v2635 = vunpack.c.l.b16 %v1099
  %v2636 = vunpack.c.l.b16 %v1100
  %v2637 = vunpack.c.l.b16 %v1101
  %v2638 = vunpack.c.l.b16 %v1102
  %v2639 = vunpack.c.l.b16 %v1103
  %v2640 = vunpack.c.l.b16 %v1104
  %v2641 = vunpack.c.l.b16 %v1105
  %v2642 = vunpack.c.l.b16 %v1106
  %v2643 = vunpack.c.l.b16 %v1107
  %v2644 = vunpack.c.l.b16 %v1108
  %v2645 = vunpack.c.l.b16 %v1109
  %v2646 = vunpack.c.l.b16 %v1110
  %v2647 = vunpack.c.l.b16 %v1111
  %v2648 = vunpack.c.l.b16 %v1112
  %v2649 = vunpack.c.l.b16 %v1113
  %v2650 = vunpack.c.l.b16 %v1114
  %v2651 = vunpack.c.l.b16 %v1115
  %v2652 = vunpack.c.l.b16 %v1116
  %v2653 = vunpack.c.l.b16 %v1117
  %v2654 = vunpack.c.l.b16 %v1118
  %v2655 = vunpack.c.l.b16 %v1119
  %v2656 = vunpack.c.l.b16 %v1120
  %v2657 = vunpack.c.l.b16 %v1121
  %v2658 = vunpack.c.l.b16 %v1122
  %v2659 = vunpack.c.l.b16 %v1123
  %v2660 = vunpack.c.l.b16 %v1124
  %v2661 = vunpack.c.l.b16 %v1125
  %v2662 = vunpack.c.l.b16 %v1126
  %v2663 = vunpack.c.l.b16 %v1127
  %v2664 = vunpack.c.l.b16 %v1128
  %v2665 = vpack.c.b16 %v2602, %v2601
  %v2666 = vpack.c.b16 %v2604, %v2603
  %v2667 = vpack.c.b16 %v2606, %v2605
  %v2668 = vpack.c.b16 %v2608, %v2607
  %v2669 = vpack.c.b16 %v2610, %v2609
  %v2670 = vpack.c.b16 %v2612, %v2611
  %v2671 = vpack.c.b16 %v2614, %v2613
  %v2672 = vpack.c.b16 %v2616, %v2615
  %v2673 = vpack.c.b16 %v2618, %v2617
  %v2674 = vpack.c.b16 %v2620, %v2619
  %v2675 = vpack.c.b16 %v2622, %v2621
  %v2676 = vpack.c.b16 %v2624, %v2623
  %v2677 = vpack.c.b16 %v2626, %v2625
  %v2678 = vpack.c.b16 %v2628, %v2627
  %v2679 = vpack.c.b16 %v2630, %v2629
  %v2680 = vpack.c.b16 %v2632, %v2631
  %v2681 = vpack.c.b16 %v2634, %v2633
  %v2682 = vpack.c.b16 %v2636, %v2635
  %v2683 = vpack.c.b16 %v2638, %v2637
  %v2684 = vpack.c.b16 %v2640, %v2639
  %v2685 = vpack.c.b16 %v2642, %v2641
  %v2686 = vpack.c.b16 %v2644, %v2643
  %v2687 = vpack.c.b16 %v2646, %v2645
  %v2688 = vpack.c.b16 %v2648, %v2647
  %v2689 = vpack.c.b16 %v2650, %v2649
  %v2690 = vpack.c.b16 %v2652, %v2651
  %v2691 = vpack.c.b16 %v2654, %v2653
  %v2692 = vpack.c.b16 %v2656, %v2655
  %v2693 = vpack.c.b16 %v2658, %v2657
  %v2694 = vpack.c.b16 %v2660, %v2659
  %v2695 = vpack.c.b16 %v2662, %v2661
  %v2696 = vpack.c.b16 %v2664, %v2663
  %v2793 = vunpack.c.l.b16 %v1193
  %v2794 = vunpack.c.l.b16 %v1194
  %v2795 = vunpack.c.l.b16 %v1195
  %v2796 = vunpack.c.l.b16 %v1196
  %v2797 = vunpack.c.l.b16 %v1197
  %v2798 = vunpack.c.l.b16 %v1198
  %v2799 = vunpack.c.l.b16 %v1199
  %v2800 = vunpack.c.l.b16 %v1200
  %v2801 = vunpack.c.l.b16 %v1201
  %v2802 = vunpack.c.l.b16 %v1202
  %v2803 = vunpack.c.l.b16 %v1203
  %v2804 = vunpack.c.l.b16 %v1204
  %v2805 = vunpack.c.l.b16 %v1205
  %v2806 = vunpack.c.l.b16 %v1206
  %v2807 = vunpack.c.l.b16 %v1207
  %v2808 = vunpack.c.l.b16 %v1208
  %v2809 = vunpack.c.l.b16 %v1209
  %v2810 = vunpack.c.l.b16 %v1210
  %v2811 = vunpack.c.l.b16 %v1211
  %v2812 = vunpack.c.l.b16 %v1212
  %v2813 = vunpack.c.l.b16 %v1213
  %v2814 = vunpack.c.l.b16 %v1214
  %v2815 = vunpack.c.l.b16 %v1215
  %v2816 = vunpack.c.l.b16 %v1216
  %v2817 = vunpack.c.l.b16 %v1217
  %v2818 = vunpack.c.l.b16 %v1218
  %v2819 = vunpack.c.l.b16 %v1219
  %v2820 = vunpack.c.l.b16 %v1220
  %v2821 = vunpack.c.l.b16 %v1221
  %v2822 = vunpack.c.l.b16 %v1222
  %v2823 = vunpack.c.l.b16 %v1223
  %v2824 = vunpack.c.l.b16 %v1224
  %v2825 = vunpack.c.l.b16 %v1225
  %v2826 = vunpack.c.l.b16 %v1226
  %v2827 = vunpack.c.l.b16 %v1227
  %v2828 = vunpack.c.l.b16 %v1228
  %v2829 = vunpack.c.l.b16 %v1229
  %v2830 = vunpack.c.l.b16 %v1230
  %v2831 = vunpack.c.l.b16 %v1231
  %v2832 = vunpack.c.l.b16 %v1232
  %v2833 = vunpack.c.l.b16 %v1233
  %v2834 = vunpack.c.l.b16 %v1234
  %v2835 = vunpack.c.l.b16 %v1235
  %v2836 = vunpack.c.l.b16 %v1236
  %v2837 = vunpack.c.l.b16 %v1237
  %v2838 = vunpack.c.l.b16 %v1238
  %v2839 = vunpack.c.l.b16 %v1239
  %v2840 = vunpack.c.l.b16 %v1240
  %v2841 = vunpack.c.l.b16 %v1241
  %v2842 = vunpack.c.l.b16 %v1242
  %v2843 = vunpack.c.l.b16 %v1243
  %v2844 = vunpack.c.l.b16 %v1244
  %v2845 = vunpack.c.l.b16 %v1245
  %v2846 = vunpack.c.l.b16 %v1246
  %v2847 = vunpack.c.l.b16 %v1247
  %v2848 = vunpack.c.l.b16 %v1248
  %v2849 = vunpack.c.l.b16 %v1249
  %v2850 = vunpack.c.l.b16 %v1250
  %v2851 = vunpack.c.l.b16 %v1251
  %v2852 = vunpack.c.l.b16 %v1252
  %v2853 = vunpack.c.l.b16 %v1253
  %v2854 = vunpack.c.l.b16 %v1254
  %v2855 = vunpack.c.l.b16 %v1255
  %v2856 = vunpack.c.l.b16 %v1256
  %v2857 = vpack.c.b16 %v2794, %v2793
  %v2858 = vpack.c.b16 %v2796, %v2795
  %v2859 = vpack.c.b16 %v2798, %v2797
  %v2860 = vpack.c.b16 %v2800, %v2799
  %v2861 = vpack.c.b16 %v2802, %v2801
  %v2862 = vpack.c.b16 %v2804, %v2803
  %v2863 = vpack.c.b16 %v2806, %v2805
  %v2864 = vpack.c.b16 %v2808, %v2807
  %v2865 = vpack.c.b16 %v2810, %v2809
  %v2866 = vpack.c.b16 %v2812, %v2811
  %v2867 = vpack.c.b16 %v2814, %v2813
  %v2868 = vpack.c.b16 %v2816, %v2815
  %v2869 = vpack.c.b16 %v2818, %v2817
  %v2870 = vpack.c.b16 %v2820, %v2819
  %v2871 = vpack.c.b16 %v2822, %v2821
  %v2872 = vpack.c.b16 %v2824, %v2823
  %v2873 = vpack.c.b16 %v2826, %v2825
  %v2874 = vpack.c.b16 %v2828, %v2827
  %v2875 = vpack.c.b16 %v2830, %v2829
  %v2876 = vpack.c.b16 %v2832, %v2831
  %v2877 = vpack.c.b16 %v2834, %v2833
  %v2878 = vpack.c.b16 %v2836, %v2835
  %v2879 = vpack.c.b16 %v2838, %v2837
  %v2880 = vpack.c.b16 %v2840, %v2839
  %v2881 = vpack.c.b16 %v2842, %v2841
  %v2882 = vpack.c.b16 %v2844, %v2843
  %v2883 = vpack.c.b16 %v2846, %v2845
  %v2884 = vpack.c.b16 %v2848, %v2847
  %v2885 = vpack.c.b16 %v2850, %v2849
  %v2886 = vpack.c.b16 %v2852, %v2851
  %v2887 = vpack.c.b16 %v2854, %v2853
  %v2888 = vpack.c.b16 %v2856, %v2855
  %v2985 = vunpack.c.l.b16 %v1321
  %v2986 = vunpack.c.l.b16 %v1322
  %v2987 = vunpack.c.l.b16 %v1323
  %v2988 = vunpack.c.l.b16 %v1324
  %v2989 = vunpack.c.l.b16 %v1325
  %v2990 = vunpack.c.l.b16 %v1326
  %v2991 = vunpack.c.l.b16 %v1327
  %v2992 = vunpack.c.l.b16 %v1328
  %v2993 = vunpack.c.l.b16 %v1329
  %v2994 = vunpack.c.l.b16 %v1330
  %v2995 = vunpack.c.l.b16 %v1331
  %v2996 = vunpack.c.l.b16 %v1332
  %v2997 = vunpack.c.l.b16 %v1333
  %v2998 = vunpack.c.l.b16 %v1334
  %v2999 = vunpack.c.l.b16 %v1335
  %v3000 = vunpack.c.l.b16 %v1336
  %v3001 = vunpack.c.l.b16 %v1337
  %v3002 = vunpack.c.l.b16 %v1338
  %v3003 = vunpack.c.l.b16 %v1339
  %v3004 = vunpack.c.l.b16 %v1340
  %v3005 = vunpack.c.l.b16 %v1341
  %v3006 = vunpack.c.l.b16 %v1342
  %v3007 = vunpack.c.l.b16 %v1343
  %v3008 = vunpack.c.l.b16 %v1344
  %v3009 = vunpack.c.l.b16 %v1345
  %v3010 = vunpack.c.l.b16 %v1346
  %v3011 = vunpack.c.l.b16 %v1347
  %v3012 = vunpack.c.l.b16 %v1348
  %v3013 = vunpack.c.l.b16 %v1349
  %v3014 = vunpack.c.l.b16 %v1350
  %v3015 = vunpack.c.l.b16 %v1351
  %v3016 = vunpack.c.l.b16 %v1352
  %v3017 = vunpack.c.l.b16 %v1353
  %v3018 = vunpack.c.l.b16 %v1354
  %v3019 = vunpack.c.l.b16 %v1355
  %v3020 = vunpack.c.l.b16 %v1356
  %v3021 = vunpack.c.l.b16 %v1357
  %v3022 = vunpack.c.l.b16 %v1358
  %v3023 = vunpack.c.l.b16 %v1359
  %v3024 = vunpack.c.l.b16 %v1360
  %v3025 = vunpack.c.l.b16 %v1361
  %v3026 = vunpack.c.l.b16 %v1362
  %v3027 = vunpack.c.l.b16 %v1363
  %v3028 = vunpack.c.l.b16 %v1364
  %v3029 = vunpack.c.l.b16 %v1365
  %v3030 = vunpack.c.l.b16 %v1366
  %v3031 = vunpack.c.l.b16 %v1367
  %v3032 = vunpack.c.l.b16 %v1368
  %v3033 = vunpack.c.l.b16 %v1369
  %v3034 = vunpack.c.l.b16 %v1370
  %v3035 = vunpack.c.l.b16 %v1371
  %v3036 = vunpack.c.l.b16 %v1372
  %v3037 = vunpack.c.l.b16 %v1373
  %v3038 = vunpack.c.l.b16 %v1374
  %v3039 = vunpack.c.l.b16 %v1375
  %v3040 = vunpack.c.l.b16 %v1376
  %v3041 = vunpack.c.l.b16 %v1377
  %v3042 = vunpack.c.l.b16 %v1378
  %v3043 = vunpack.c.l.b16 %v1379
  %v3044 = vunpack.c.l.b16 %v1380
  %v3045 = vunpack.c.l.b16 %v1381
  %v3046 = vunpack.c.l.b16 %v1382
  %v3047 = vunpack.c.l.b16 %v1383
  %v3048 = vunpack.c.l.b16 %v1384
  %v3049 = vpack.c.b16 %v2986, %v2985
  %v3050 = vpack.c.b16 %v2988, %v2987
  %v3051 = vpack.c.b16 %v2990, %v2989
  %v3052 = vpack.c.b16 %v2992, %v2991
  %v3053 = vpack.c.b16 %v2994, %v2993
  %v3054 = vpack.c.b16 %v2996, %v2995
  %v3055 = vpack.c.b16 %v2998, %v2997
  %v3056 = vpack.c.b16 %v3000, %v2999
  %v3057 = vpack.c.b16 %v3002, %v3001
  %v3058 = vpack.c.b16 %v3004, %v3003
  %v3059 = vpack.c.b16 %v3006, %v3005
  %v3060 = vpack.c.b16 %v3008, %v3007
  %v3061 = vpack.c.b16 %v3010, %v3009
  %v3062 = vpack.c.b16 %v3012, %v3011
  %v3063 = vpack.c.b16 %v3014, %v3013
  %v3064 = vpack.c.b16 %v3016, %v3015
  %v3065 = vpack.c.b16 %v3018, %v3017
  %v3066 = vpack.c.b16 %v3020, %v3019
  %v3067 = vpack.c.b16 %v3022, %v3021
  %v3068 = vpack.c.b16 %v3024, %v3023
  %v3069 = vpack.c.b16 %v3026, %v3025
  %v3070 = vpack.c.b16 %v3028, %v3027
  %v3071 = vpack.c.b16 %v3030, %v3029
  %v3072 = vpack.c.b16 %v3032, %v3031
  %v3073 = vpack.c.b16 %v3034, %v3033
  %v3074 = vpack.c.b16 %v3036, %v3035
  %v3075 = vpack.c.b16 %v3038, %v3037
  %v3076 = vpack.c.b16 %v3040, %v3039
  %v3077 = vpack.c.b16 %v3042, %v3041
  %v3078 = vpack.c.b16 %v3044, %v3043
  %v3079 = vpack.c.b16 %v3046, %v3045
  %v3080 = vpack.c.b16 %v3048, %v3047
  %v3113 = vld [vmem:[%s1] sm:$0xf]
  %v3114 = vld [vmem:[%s1 + $0x4] sm:$0xf]
  %v3115 = vld [vmem:[%s1 + $0x8] sm:$0xf]
  %v3116 = vld [vmem:[%s1 + $0xc] sm:$0xf]
  %v3117 = vld [vmem:[%s1 + $0x10] sm:$0xf]
  %v3118 = vld [vmem:[%s1 + $0x14] sm:$0xf]
  %v3119 = vld [vmem:[%s1 + $0x18] sm:$0xf]
  %v3120 = vld [vmem:[%s1 + $0x1c] sm:$0xf]
  %v3121 = vld [vmem:[%s1 + $0x20] sm:$0xf]
  %v3122 = vld [vmem:[%s1 + $0x24] sm:$0xf]
  %v3123 = vld [vmem:[%s1 + $0x28] sm:$0xf]
  %v3124 = vld [vmem:[%s1 + $0x2c] sm:$0xf]
  %v3125 = vld [vmem:[%s1 + $0x30] sm:$0xf]
  %v3126 = vld [vmem:[%s1 + $0x34] sm:$0xf]
  %v3127 = vld [vmem:[%s1 + $0x38] sm:$0xf]
  %v3128 = vld [vmem:[%s1 + $0x3c] sm:$0xf]
  %v3129 = vld [vmem:[%s1 + $0x40] sm:$0xf]
  %v3130 = vld [vmem:[%s1 + $0x44] sm:$0xf]
  %v3131 = vld [vmem:[%s1 + $0x48] sm:$0xf]
  %v3132 = vld [vmem:[%s1 + $0x4c] sm:$0xf]
  %v3133 = vld [vmem:[%s1 + $0x50] sm:$0xf]
  %v3134 = vld [vmem:[%s1 + $0x54] sm:$0xf]
  %v3135 = vld [vmem:[%s1 + $0x58] sm:$0xf]
  %v3136 = vld [vmem:[%s1 + $0x5c] sm:$0xf]
  %v3137 = vld [vmem:[%s1 + $0x60] sm:$0xf]
  %v3138 = vld [vmem:[%s1 + $0x64] sm:$0xf]
  %v3139 = vld [vmem:[%s1 + $0x68] sm:$0xf]
  %v3140 = vld [vmem:[%s1 + $0x6c] sm:$0xf]
  %v3141 = vld [vmem:[%s1 + $0x70] sm:$0xf]
  %v3142 = vld [vmem:[%s1 + $0x74] sm:$0xf]
  %v3143 = vld [vmem:[%s1 + $0x78] sm:$0xf]
  %v3144 = vld [vmem:[%s1 + $0x7c] sm:$0xf]
  %v3145 = vld [vmem:[%s1 + $0x80] sm:$0xf]
  %v3146 = vld [vmem:[%s1 + $0x84] sm:$0xf]
  %v3147 = vld [vmem:[%s1 + $0x88] sm:$0xf]
  %v3148 = vld [vmem:[%s1 + $0x8c] sm:$0xf]
  %v3149 = vld [vmem:[%s1 + $0x90] sm:$0xf]
  %v3150 = vld [vmem:[%s1 + $0x94] sm:$0xf]
  %v3151 = vld [vmem:[%s1 + $0x98] sm:$0xf]
  %v3152 = vld [vmem:[%s1 + $0x9c] sm:$0xf]
  %v3153 = vld [vmem:[%s1 + $0xa0] sm:$0xf]
  %v3154 = vld [vmem:[%s1 + $0xa4] sm:$0xf]
  %v3155 = vld [vmem:[%s1 + $0xa8] sm:$0xf]
  %v3156 = vld [vmem:[%s1 + $0xac] sm:$0xf]
  %v3157 = vld [vmem:[%s1 + $0xb0] sm:$0xf]
  %v3158 = vld [vmem:[%s1 + $0xb4] sm:$0xf]
  %v3159 = vld [vmem:[%s1 + $0xb8] sm:$0xf]
  %v3160 = vld [vmem:[%s1 + $0xbc] sm:$0xf]
  %v3161 = vld [vmem:[%s1 + $0xc0] sm:$0xf]
  %v3162 = vld [vmem:[%s1 + $0xc4] sm:$0xf]
  %v3163 = vld [vmem:[%s1 + $0xc8] sm:$0xf]
  %v3164 = vld [vmem:[%s1 + $0xcc] sm:$0xf]
  %v3165 = vld [vmem:[%s1 + $0xd0] sm:$0xf]
  %v3166 = vld [vmem:[%s1 + $0xd4] sm:$0xf]
  %v3167 = vld [vmem:[%s1 + $0xd8] sm:$0xf]
  %v3168 = vld [vmem:[%s1 + $0xdc] sm:$0xf]
  %v3169 = vld [vmem:[%s1 + $0xe0] sm:$0xf]
  %v3170 = vld [vmem:[%s1 + $0xe4] sm:$0xf]
  %v3171 = vld [vmem:[%s1 + $0xe8] sm:$0xf]
  %v3172 = vld [vmem:[%s1 + $0xec] sm:$0xf]
  %v3173 = vld [vmem:[%s1 + $0xf0] sm:$0xf]
  %v3174 = vld [vmem:[%s1 + $0xf4] sm:$0xf]
  %v3175 = vld [vmem:[%s1 + $0xf8] sm:$0xf]
  %v3176 = vld [vmem:[%s1 + $0xfc] sm:$0xf]
  %v3177 = vld [vmem:[%s1 + $0x100] sm:$0xf]
  %v3178 = vld [vmem:[%s1 + $0x104] sm:$0xf]
  %v3179 = vld [vmem:[%s1 + $0x108] sm:$0xf]
  %v3180 = vld [vmem:[%s1 + $0x10c] sm:$0xf]
  %v3181 = vld [vmem:[%s1 + $0x110] sm:$0xf]
  %v3182 = vld [vmem:[%s1 + $0x114] sm:$0xf]
  %v3183 = vld [vmem:[%s1 + $0x118] sm:$0xf]
  %v3184 = vld [vmem:[%s1 + $0x11c] sm:$0xf]
  %v3185 = vld [vmem:[%s1 + $0x120] sm:$0xf]
  %v3186 = vld [vmem:[%s1 + $0x124] sm:$0xf]
  %v3187 = vld [vmem:[%s1 + $0x128] sm:$0xf]
  %v3188 = vld [vmem:[%s1 + $0x12c] sm:$0xf]
  %v3189 = vld [vmem:[%s1 + $0x130] sm:$0xf]
  %v3190 = vld [vmem:[%s1 + $0x134] sm:$0xf]
  %v3191 = vld [vmem:[%s1 + $0x138] sm:$0xf]
  %v3192 = vld [vmem:[%s1 + $0x13c] sm:$0xf]
  %v3193 = vld [vmem:[%s1 + $0x140] sm:$0xf]
  %v3194 = vld [vmem:[%s1 + $0x144] sm:$0xf]
  %v3195 = vld [vmem:[%s1 + $0x148] sm:$0xf]
  %v3196 = vld [vmem:[%s1 + $0x14c] sm:$0xf]
  %v3197 = vld [vmem:[%s1 + $0x150] sm:$0xf]
  %v3198 = vld [vmem:[%s1 + $0x154] sm:$0xf]
  %v3199 = vld [vmem:[%s1 + $0x158] sm:$0xf]
  %v3200 = vld [vmem:[%s1 + $0x15c] sm:$0xf]
  %v3201 = vld [vmem:[%s1 + $0x160] sm:$0xf]
  %v3202 = vld [vmem:[%s1 + $0x164] sm:$0xf]
  %v3203 = vld [vmem:[%s1 + $0x168] sm:$0xf]
  %v3204 = vld [vmem:[%s1 + $0x16c] sm:$0xf]
  %v3205 = vld [vmem:[%s1 + $0x170] sm:$0xf]
  %v3206 = vld [vmem:[%s1 + $0x174] sm:$0xf]
  %v3207 = vld [vmem:[%s1 + $0x178] sm:$0xf]
  %v3208 = vld [vmem:[%s1 + $0x17c] sm:$0xf]
  %v3209 = vld [vmem:[%s1 + $0x180] sm:$0xf]
  %v3210 = vld [vmem:[%s1 + $0x184] sm:$0xf]
  %v3211 = vld [vmem:[%s1 + $0x188] sm:$0xf]
  %v3212 = vld [vmem:[%s1 + $0x18c] sm:$0xf]
  %v3213 = vld [vmem:[%s1 + $0x190] sm:$0xf]
  %v3214 = vld [vmem:[%s1 + $0x194] sm:$0xf]
  %v3215 = vld [vmem:[%s1 + $0x198] sm:$0xf]
  %v3216 = vld [vmem:[%s1 + $0x19c] sm:$0xf]
  %v3217 = vld [vmem:[%s1 + $0x1a0] sm:$0xf]
  %v3218 = vld [vmem:[%s1 + $0x1a4] sm:$0xf]
  %v3219 = vld [vmem:[%s1 + $0x1a8] sm:$0xf]
  %v3220 = vld [vmem:[%s1 + $0x1ac] sm:$0xf]
  %v3221 = vld [vmem:[%s1 + $0x1b0] sm:$0xf]
  %v3222 = vld [vmem:[%s1 + $0x1b4] sm:$0xf]
  %v3223 = vld [vmem:[%s1 + $0x1b8] sm:$0xf]
  %v3224 = vld [vmem:[%s1 + $0x1bc] sm:$0xf]
  %v3225 = vld [vmem:[%s1 + $0x1c0] sm:$0xf]
  %v3226 = vld [vmem:[%s1 + $0x1c4] sm:$0xf]
  %v3227 = vld [vmem:[%s1 + $0x1c8] sm:$0xf]
  %v3228 = vld [vmem:[%s1 + $0x1cc] sm:$0xf]
  %v3229 = vld [vmem:[%s1 + $0x1d0] sm:$0xf]
  %v3230 = vld [vmem:[%s1 + $0x1d4] sm:$0xf]
  %v3231 = vld [vmem:[%s1 + $0x1d8] sm:$0xf]
  %v3232 = vld [vmem:[%s1 + $0x1dc] sm:$0xf]
  %v3233 = vld [vmem:[%s1 + $0x1e0] sm:$0xf]
  %v3234 = vld [vmem:[%s1 + $0x1e4] sm:$0xf]
  %v3235 = vld [vmem:[%s1 + $0x1e8] sm:$0xf]
  %v3236 = vld [vmem:[%s1 + $0x1ec] sm:$0xf]
  %v3237 = vld [vmem:[%s1 + $0x1f0] sm:$0xf]
  %v3238 = vld [vmem:[%s1 + $0x1f4] sm:$0xf]
  %v3239 = vld [vmem:[%s1 + $0x1f8] sm:$0xf]
  %v3240 = vld [vmem:[%s1 + $0x1fc] sm:$0xf]
  %v3241 = vld [vmem:[%s1 + $0x200] sm:$0xf]
  %v3242 = vld [vmem:[%s1 + $0x204] sm:$0xf]
  %v3243 = vld [vmem:[%s1 + $0x208] sm:$0xf]
  %v3244 = vld [vmem:[%s1 + $0x20c] sm:$0xf]
  %v3245 = vld [vmem:[%s1 + $0x210] sm:$0xf]
  %v3246 = vld [vmem:[%s1 + $0x214] sm:$0xf]
  %v3247 = vld [vmem:[%s1 + $0x218] sm:$0xf]
  %v3248 = vld [vmem:[%s1 + $0x21c] sm:$0xf]
  %v3249 = vld [vmem:[%s1 + $0x220] sm:$0xf]
  %v3250 = vld [vmem:[%s1 + $0x224] sm:$0xf]
  %v3251 = vld [vmem:[%s1 + $0x228] sm:$0xf]
  %v3252 = vld [vmem:[%s1 + $0x22c] sm:$0xf]
  %v3253 = vld [vmem:[%s1 + $0x230] sm:$0xf]
  %v3254 = vld [vmem:[%s1 + $0x234] sm:$0xf]
  %v3255 = vld [vmem:[%s1 + $0x238] sm:$0xf]
  %v3256 = vld [vmem:[%s1 + $0x23c] sm:$0xf]
  %v3401 = vunpack.c.l.b16 %v3113
  %v3402 = vunpack.c.l.b16 %v3114
  %v3403 = vunpack.c.l.b16 %v3115
  %v3404 = vunpack.c.l.b16 %v3116
  %v3405 = vunpack.c.l.b16 %v3117
  %v3406 = vunpack.c.l.b16 %v3118
  %v3407 = vunpack.c.l.b16 %v3119
  %v3408 = vunpack.c.l.b16 %v3120
  %v3409 = vunpack.c.l.b16 %v3121
  %v3410 = vunpack.c.l.b16 %v3122
  %v3411 = vunpack.c.l.b16 %v3123
  %v3412 = vunpack.c.l.b16 %v3124
  %v3413 = vunpack.c.l.b16 %v3125
  %v3414 = vunpack.c.l.b16 %v3126
  %v3415 = vunpack.c.l.b16 %v3127
  %v3416 = vunpack.c.l.b16 %v3128
  %v3417 = vunpack.c.l.b16 %v3129
  %v3418 = vunpack.c.l.b16 %v3130
  %v3419 = vunpack.c.l.b16 %v3131
  %v3420 = vunpack.c.l.b16 %v3132
  %v3421 = vunpack.c.l.b16 %v3133
  %v3422 = vunpack.c.l.b16 %v3134
  %v3423 = vunpack.c.l.b16 %v3135
  %v3424 = vunpack.c.l.b16 %v3136
  %v3425 = vunpack.c.l.b16 %v3137
  %v3426 = vunpack.c.l.b16 %v3138
  %v3427 = vunpack.c.l.b16 %v3139
  %v3428 = vunpack.c.l.b16 %v3140
  %v3429 = vunpack.c.l.b16 %v3141
  %v3430 = vunpack.c.l.b16 %v3142
  %v3431 = vunpack.c.l.b16 %v3143
  %v3432 = vunpack.c.l.b16 %v3144
  %v3433 = vunpack.c.l.b16 %v3145
  %v3434 = vunpack.c.l.b16 %v3146
  %v3435 = vunpack.c.l.b16 %v3147
  %v3436 = vunpack.c.l.b16 %v3148
  %v3437 = vunpack.c.l.b16 %v3149
  %v3438 = vunpack.c.l.b16 %v3150
  %v3439 = vunpack.c.l.b16 %v3151
  %v3440 = vunpack.c.l.b16 %v3152
  %v3441 = vunpack.c.l.b16 %v3153
  %v3442 = vunpack.c.l.b16 %v3154
  %v3443 = vunpack.c.l.b16 %v3155
  %v3444 = vunpack.c.l.b16 %v3156
  %v3445 = vunpack.c.l.b16 %v3157
  %v3446 = vunpack.c.l.b16 %v3158
  %v3447 = vunpack.c.l.b16 %v3159
  %v3448 = vunpack.c.l.b16 %v3160
  %v3449 = vunpack.c.l.b16 %v3161
  %v3450 = vunpack.c.l.b16 %v3162
  %v3451 = vunpack.c.l.b16 %v3163
  %v3452 = vunpack.c.l.b16 %v3164
  %v3453 = vunpack.c.l.b16 %v3165
  %v3454 = vunpack.c.l.b16 %v3166
  %v3455 = vunpack.c.l.b16 %v3167
  %v3456 = vunpack.c.l.b16 %v3168
  %v3457 = vunpack.c.l.b16 %v3169
  %v3458 = vunpack.c.l.b16 %v3170
  %v3459 = vunpack.c.l.b16 %v3171
  %v3460 = vunpack.c.l.b16 %v3172
  %v3461 = vunpack.c.l.b16 %v3173
  %v3462 = vunpack.c.l.b16 %v3174
  %v3463 = vunpack.c.l.b16 %v3175
  %v3464 = vunpack.c.l.b16 %v3176
  %v3465 = vunpack.c.l.b16 %v3177
  %v3466 = vunpack.c.l.b16 %v3178
  %v3467 = vunpack.c.l.b16 %v3179
  %v3468 = vunpack.c.l.b16 %v3180
  %v3469 = vunpack.c.l.b16 %v3181
  %v3470 = vunpack.c.l.b16 %v3182
  %v3471 = vunpack.c.l.b16 %v3183
  %v3472 = vunpack.c.l.b16 %v3184
  %v3473 = vunpack.c.l.b16 %v3185
  %v3474 = vunpack.c.l.b16 %v3186
  %v3475 = vunpack.c.l.b16 %v3187
  %v3476 = vunpack.c.l.b16 %v3188
  %v3477 = vunpack.c.l.b16 %v3189
  %v3478 = vunpack.c.l.b16 %v3190
  %v3479 = vunpack.c.l.b16 %v3191
  %v3480 = vunpack.c.l.b16 %v3192
  %v3481 = vunpack.c.l.b16 %v3193
  %v3482 = vunpack.c.l.b16 %v3194
  %v3483 = vunpack.c.l.b16 %v3195
  %v3484 = vunpack.c.l.b16 %v3196
  %v3485 = vunpack.c.l.b16 %v3197
  %v3486 = vunpack.c.l.b16 %v3198
  %v3487 = vunpack.c.l.b16 %v3199
  %v3488 = vunpack.c.l.b16 %v3200
  %v3489 = vunpack.c.l.b16 %v3201
  %v3490 = vunpack.c.l.b16 %v3202
  %v3491 = vunpack.c.l.b16 %v3203
  %v3492 = vunpack.c.l.b16 %v3204
  %v3493 = vunpack.c.l.b16 %v3205
  %v3494 = vunpack.c.l.b16 %v3206
  %v3495 = vunpack.c.l.b16 %v3207
  %v3496 = vunpack.c.l.b16 %v3208
  %v3497 = vunpack.c.l.b16 %v3209
  %v3498 = vunpack.c.l.b16 %v3210
  %v3499 = vunpack.c.l.b16 %v3211
  %v3500 = vunpack.c.l.b16 %v3212
  %v3501 = vunpack.c.l.b16 %v3213
  %v3502 = vunpack.c.l.b16 %v3214
  %v3503 = vunpack.c.l.b16 %v3215
  %v3504 = vunpack.c.l.b16 %v3216
  %v3505 = vunpack.c.l.b16 %v3217
  %v3506 = vunpack.c.l.b16 %v3218
  %v3507 = vunpack.c.l.b16 %v3219
  %v3508 = vunpack.c.l.b16 %v3220
  %v3509 = vunpack.c.l.b16 %v3221
  %v3510 = vunpack.c.l.b16 %v3222
  %v3511 = vunpack.c.l.b16 %v3223
  %v3512 = vunpack.c.l.b16 %v3224
  %v3513 = vunpack.c.l.b16 %v3225
  %v3514 = vunpack.c.l.b16 %v3226
  %v3515 = vunpack.c.l.b16 %v3227
  %v3516 = vunpack.c.l.b16 %v3228
  %v3517 = vunpack.c.l.b16 %v3229
  %v3518 = vunpack.c.l.b16 %v3230
  %v3519 = vunpack.c.l.b16 %v3231
  %v3520 = vunpack.c.l.b16 %v3232
  %v3521 = vunpack.c.l.b16 %v3233
  %v3522 = vunpack.c.l.b16 %v3234
  %v3523 = vunpack.c.l.b16 %v3235
  %v3524 = vunpack.c.l.b16 %v3236
  %v3525 = vunpack.c.l.b16 %v3237
  %v3526 = vunpack.c.l.b16 %v3238
  %v3527 = vunpack.c.l.b16 %v3239
  %v3528 = vunpack.c.l.b16 %v3240
  %v3529 = vunpack.c.l.b16 %v3241
  %v3530 = vunpack.c.l.b16 %v3242
  %v3531 = vunpack.c.l.b16 %v3243
  %v3532 = vunpack.c.l.b16 %v3244
  %v3533 = vunpack.c.l.b16 %v3245
  %v3534 = vunpack.c.l.b16 %v3246
  %v3535 = vunpack.c.l.b16 %v3247
  %v3536 = vunpack.c.l.b16 %v3248
  %v3537 = vunpack.c.l.b16 %v3249
  %v3538 = vunpack.c.l.b16 %v3250
  %v3539 = vunpack.c.l.b16 %v3251
  %v3540 = vunpack.c.l.b16 %v3252
  %v3541 = vunpack.c.l.b16 %v3253
  %v3542 = vunpack.c.l.b16 %v3254
  %v3543 = vunpack.c.l.b16 %v3255
  %v3544 = vunpack.c.l.b16 %v3256
  %v3545 = vpack.c.b16 %v3402, %v3401
  %v3546 = vpack.c.b16 %v3404, %v3403
  %v3547 = vpack.c.b16 %v3406, %v3405
  %v3548 = vpack.c.b16 %v3408, %v3407
  %v3549 = vpack.c.b16 %v3410, %v3409
  %v3550 = vpack.c.b16 %v3412, %v3411
  %v3551 = vpack.c.b16 %v3414, %v3413
  %v3552 = vpack.c.b16 %v3416, %v3415
  %v3553 = vpack.c.b16 %v3418, %v3417
  %v3554 = vpack.c.b16 %v3420, %v3419
  %v3555 = vpack.c.b16 %v3422, %v3421
  %v3556 = vpack.c.b16 %v3424, %v3423
  %v3557 = vpack.c.b16 %v3426, %v3425
  %v3558 = vpack.c.b16 %v3428, %v3427
  %v3559 = vpack.c.b16 %v3430, %v3429
  %v3560 = vpack.c.b16 %v3432, %v3431
  %v3561 = vpack.c.b16 %v3434, %v3433
  %v3562 = vpack.c.b16 %v3436, %v3435
  %v3563 = vpack.c.b16 %v3438, %v3437
  %v3564 = vpack.c.b16 %v3440, %v3439
  %v3565 = vpack.c.b16 %v3442, %v3441
  %v3566 = vpack.c.b16 %v3444, %v3443
  %v3567 = vpack.c.b16 %v3446, %v3445
  %v3568 = vpack.c.b16 %v3448, %v3447
  %v3569 = vpack.c.b16 %v3450, %v3449
  %v3570 = vpack.c.b16 %v3452, %v3451
  %v3571 = vpack.c.b16 %v3454, %v3453
  %v3572 = vpack.c.b16 %v3456, %v3455
  %v3573 = vpack.c.b16 %v3458, %v3457
  %v3574 = vpack.c.b16 %v3460, %v3459
  %v3575 = vpack.c.b16 %v3462, %v3461
  %v3576 = vpack.c.b16 %v3464, %v3463
  %v3577 = vpack.c.b16 %v3466, %v3465
  %v3578 = vpack.c.b16 %v3468, %v3467
  %v3579 = vpack.c.b16 %v3470, %v3469
  %v3580 = vpack.c.b16 %v3472, %v3471
  %v3581 = vpack.c.b16 %v3474, %v3473
  %v3582 = vpack.c.b16 %v3476, %v3475
  %v3583 = vpack.c.b16 %v3478, %v3477
  %v3584 = vpack.c.b16 %v3480, %v3479
  %v3585 = vpack.c.b16 %v3482, %v3481
  %v3586 = vpack.c.b16 %v3484, %v3483
  %v3587 = vpack.c.b16 %v3486, %v3485
  %v3588 = vpack.c.b16 %v3488, %v3487
  %v3589 = vpack.c.b16 %v3490, %v3489
  %v3590 = vpack.c.b16 %v3492, %v3491
  %v3591 = vpack.c.b16 %v3494, %v3493
  %v3592 = vpack.c.b16 %v3496, %v3495
  %v3593 = vpack.c.b16 %v3498, %v3497
  %v3594 = vpack.c.b16 %v3500, %v3499
  %v3595 = vpack.c.b16 %v3502, %v3501
  %v3596 = vpack.c.b16 %v3504, %v3503
  %v3597 = vpack.c.b16 %v3506, %v3505
  %v3598 = vpack.c.b16 %v3508, %v3507
  %v3599 = vpack.c.b16 %v3510, %v3509
  %v3600 = vpack.c.b16 %v3512, %v3511
  %v3601 = vpack.c.b16 %v3514, %v3513
  %v3602 = vpack.c.b16 %v3516, %v3515
  %v3603 = vpack.c.b16 %v3518, %v3517
  %v3604 = vpack.c.b16 %v3520, %v3519
  %v3605 = vpack.c.b16 %v3522, %v3521
  %v3606 = vpack.c.b16 %v3524, %v3523
  %v3607 = vpack.c.b16 %v3526, %v3525
  %v3608 = vpack.c.b16 %v3528, %v3527
  %v3609 = vpack.c.b16 %v3530, %v3529
  %v3610 = vpack.c.b16 %v3532, %v3531
  %v3611 = vpack.c.b16 %v3534, %v3533
  %v3612 = vpack.c.b16 %v3536, %v3535
  %v3613 = vpack.c.b16 %v3538, %v3537
  %v3614 = vpack.c.b16 %v3540, %v3539
  %v3615 = vpack.c.b16 %v3542, %v3541
  %v3616 = vpack.c.b16 %v3544, %v3543
  %3689 = vmatpush.bf16.msra.mxu0 %v3552
  %3690 = vmatpush.bf16.msra.mxu0 %v3551
  %3691 = vmatpush.bf16.msra.mxu0 %v3550
  %3692 = vmatpush.bf16.msra.mxu0 %v3549
  %3693 = vmatpush.bf16.msra.mxu0 %v3548
  %3694 = vmatpush.bf16.msra.mxu0 %v3547
  %3695 = vmatpush.bf16.msra.mxu0 %v3546
  %3696 = vmatpush.bf16.msra.mxu0 %v3545
  %3697 = vmatmul.bf16.gmra.mxu0 %v1513
  %v3698 = vpop.f32.mrf.mxu0
  %v3699 = vadd.f32 0.0, %v3698
  %v3700 = vpop.f32.mrf.mxu0
  %v3701 = vadd.f32 0.0, %v3700
  %3702 = vmatmul.bf16.gmra.mxu0 %v1514
  %v3703 = vpop.f32.mrf.mxu0
  %v3704 = vadd.f32 0.0, %v3703
  %v3705 = vpop.f32.mrf.mxu0
  %v3706 = vadd.f32 0.0, %v3705
  %3707 = vmatmul.bf16.gmra.mxu0 %v1515
  %v3708 = vpop.f32.mrf.mxu0
  %v3709 = vadd.f32 0.0, %v3708
  %v3710 = vpop.f32.mrf.mxu0
  %v3711 = vadd.f32 0.0, %v3710
  %3712 = vmatmul.bf16.gmra.mxu0 %v1516
  %v3713 = vpop.f32.mrf.mxu0
  %v3714 = vadd.f32 0.0, %v3713
  %v3715 = vpop.f32.mrf.mxu0
  %v3716 = vadd.f32 0.0, %v3715
  %3717 = vmatmul.bf16.gmra.mxu0 %v1517
  %v3718 = vpop.f32.mrf.mxu0
  %v3719 = vadd.f32 0.0, %v3718
  %v3720 = vpop.f32.mrf.mxu0
  %v3721 = vadd.f32 0.0, %v3720
  %3722 = vmatmul.bf16.gmra.mxu0 %v1518
  %v3723 = vpop.f32.mrf.mxu0
  %v3724 = vadd.f32 0.0, %v3723
  %v3725 = vpop.f32.mrf.mxu0
  %v3726 = vadd.f32 0.0, %v3725
  %3727 = vmatmul.bf16.gmra.mxu0 %v1519
  %v3728 = vpop.f32.mrf.mxu0
  %v3729 = vadd.f32 0.0, %v3728
  %v3730 = vpop.f32.mrf.mxu0
  %v3731 = vadd.f32 0.0, %v3730
  %3732 = vmatmul.bf16.gmra.mxu0 %v1520
  %v3733 = vpop.f32.mrf.mxu0
  %v3734 = vadd.f32 0.0, %v3733
  %v3735 = vpop.f32.mrf.mxu0
  %v3736 = vadd.f32 0.0, %v3735
  %3737 = vmatmul.bf16.gmra.mxu0 %v1521
  %v3738 = vpop.f32.mrf.mxu0
  %v3739 = vadd.f32 0.0, %v3738
  %v3740 = vpop.f32.mrf.mxu0
  %v3741 = vadd.f32 0.0, %v3740
  %3742 = vmatmul.bf16.gmra.mxu0 %v1522
  %v3743 = vpop.f32.mrf.mxu0
  %v3744 = vadd.f32 0.0, %v3743
  %v3745 = vpop.f32.mrf.mxu0
  %v3746 = vadd.f32 0.0, %v3745
  %3747 = vmatmul.bf16.gmra.mxu0 %v1523
  %v3748 = vpop.f32.mrf.mxu0
  %v3749 = vadd.f32 0.0, %v3748
  %v3750 = vpop.f32.mrf.mxu0
  %v3751 = vadd.f32 0.0, %v3750
  %3752 = vmatmul.bf16.gmra.mxu0 %v1524
  %v3753 = vpop.f32.mrf.mxu0
  %v3754 = vadd.f32 0.0, %v3753
  %v3755 = vpop.f32.mrf.mxu0
  %v3756 = vadd.f32 0.0, %v3755
  %3757 = vmatmul.bf16.gmra.mxu0 %v1525
  %v3758 = vpop.f32.mrf.mxu0
  %v3759 = vadd.f32 0.0, %v3758
  %v3760 = vpop.f32.mrf.mxu0
  %v3761 = vadd.f32 0.0, %v3760
  %3762 = vmatmul.bf16.gmra.mxu0 %v1526
  %v3763 = vpop.f32.mrf.mxu0
  %v3764 = vadd.f32 0.0, %v3763
  %v3765 = vpop.f32.mrf.mxu0
  %v3766 = vadd.f32 0.0, %v3765
  %3767 = vmatmul.bf16.gmra.mxu0 %v1527
  %v3768 = vpop.f32.mrf.mxu0
  %v3769 = vadd.f32 0.0, %v3768
  %v3770 = vpop.f32.mrf.mxu0
  %v3771 = vadd.f32 0.0, %v3770
  %3772 = vmatmul.bf16.gmra.mxu0 %v1528
  %v3773 = vpop.f32.mrf.mxu0
  %v3774 = vadd.f32 0.0, %v3773
  %v3775 = vpop.f32.mrf.mxu0
  %v3776 = vadd.f32 0.0, %v3775
  %3777 = vmatmul.bf16.gmra.mxu0 %v1529
  %v3778 = vpop.f32.mrf.mxu0
  %v3779 = vadd.f32 0.0, %v3778
  %v3780 = vpop.f32.mrf.mxu0
  %v3781 = vadd.f32 0.0, %v3780
  %3782 = vmatmul.bf16.gmra.mxu0 %v1530
  %v3783 = vpop.f32.mrf.mxu0
  %v3784 = vadd.f32 0.0, %v3783
  %v3785 = vpop.f32.mrf.mxu0
  %v3786 = vadd.f32 0.0, %v3785
  %3787 = vmatmul.bf16.gmra.mxu0 %v1531
  %v3788 = vpop.f32.mrf.mxu0
  %v3789 = vadd.f32 0.0, %v3788
  %v3790 = vpop.f32.mrf.mxu0
  %v3791 = vadd.f32 0.0, %v3790
  %3792 = vmatmul.bf16.gmra.mxu0 %v1532
  %v3793 = vpop.f32.mrf.mxu0
  %v3794 = vadd.f32 0.0, %v3793
  %v3795 = vpop.f32.mrf.mxu0
  %v3796 = vadd.f32 0.0, %v3795
  %3797 = vmatmul.bf16.gmra.mxu0 %v1533
  %v3798 = vpop.f32.mrf.mxu0
  %v3799 = vadd.f32 0.0, %v3798
  %v3800 = vpop.f32.mrf.mxu0
  %v3801 = vadd.f32 0.0, %v3800
  %3802 = vmatmul.bf16.gmra.mxu0 %v1534
  %v3803 = vpop.f32.mrf.mxu0
  %v3804 = vadd.f32 0.0, %v3803
  %v3805 = vpop.f32.mrf.mxu0
  %v3806 = vadd.f32 0.0, %v3805
  %3807 = vmatmul.bf16.gmra.mxu0 %v1535
  %v3808 = vpop.f32.mrf.mxu0
  %v3809 = vadd.f32 0.0, %v3808
  %v3810 = vpop.f32.mrf.mxu0
  %v3811 = vadd.f32 0.0, %v3810
  %3812 = vmatmul.bf16.gmra.mxu0 %v1536
  %v3813 = vpop.f32.mrf.mxu0
  %v3814 = vadd.f32 0.0, %v3813
  %v3815 = vpop.f32.mrf.mxu0
  %v3816 = vadd.f32 0.0, %v3815
  %3817 = vmatmul.bf16.gmra.mxu0 %v1537
  %v3818 = vpop.f32.mrf.mxu0
  %v3819 = vadd.f32 0.0, %v3818
  %v3820 = vpop.f32.mrf.mxu0
  %v3821 = vadd.f32 0.0, %v3820
  %3822 = vmatmul.bf16.gmra.mxu0 %v1538
  %v3823 = vpop.f32.mrf.mxu0
  %v3824 = vadd.f32 0.0, %v3823
  %v3825 = vpop.f32.mrf.mxu0
  %v3826 = vadd.f32 0.0, %v3825
  %3827 = vmatmul.bf16.gmra.mxu0 %v1539
  %v3828 = vpop.f32.mrf.mxu0
  %v3829 = vadd.f32 0.0, %v3828
  %v3830 = vpop.f32.mrf.mxu0
  %v3831 = vadd.f32 0.0, %v3830
  %3832 = vmatmul.bf16.gmra.mxu0 %v1540
  %v3833 = vpop.f32.mrf.mxu0
  %v3834 = vadd.f32 0.0, %v3833
  %v3835 = vpop.f32.mrf.mxu0
  %v3836 = vadd.f32 0.0, %v3835
  %3837 = vmatmul.bf16.gmra.mxu0 %v1541
  %v3838 = vpop.f32.mrf.mxu0
  %v3839 = vadd.f32 0.0, %v3838
  %v3840 = vpop.f32.mrf.mxu0
  %v3841 = vadd.f32 0.0, %v3840
  %3842 = vmatmul.bf16.gmra.mxu0 %v1542
  %v3843 = vpop.f32.mrf.mxu0
  %v3844 = vadd.f32 0.0, %v3843
  %v3845 = vpop.f32.mrf.mxu0
  %v3846 = vadd.f32 0.0, %v3845
  %3847 = vmatmul.bf16.gmra.mxu0 %v1543
  %v3848 = vpop.f32.mrf.mxu0
  %v3849 = vadd.f32 0.0, %v3848
  %v3850 = vpop.f32.mrf.mxu0
  %v3851 = vadd.f32 0.0, %v3850
  %3852 = vmatmul.bf16.gmra.mxu0 %v1544
  %v3853 = vpop.f32.mrf.mxu0
  %v3854 = vadd.f32 0.0, %v3853
  %v3855 = vpop.f32.mrf.mxu0
  %v3856 = vadd.f32 0.0, %v3855
  %3857 = vdwg.mxu0
  %3858 = vmatpush.bf16.msra.mxu0 %v3560
  %3859 = vmatpush.bf16.msra.mxu0 %v3559
  %3860 = vmatpush.bf16.msra.mxu0 %v3558
  %3861 = vmatpush.bf16.msra.mxu0 %v3557
  %3862 = vmatpush.bf16.msra.mxu0 %v3556
  %3863 = vmatpush.bf16.msra.mxu0 %v3555
  %3864 = vmatpush.bf16.msra.mxu0 %v3554
  %3865 = vmatpush.bf16.msra.mxu0 %v3553
  %3866 = vmatmul.bf16.gmra.mxu0 %v1705
  %v3867 = vpop.f32.mrf.mxu0
  %v3868 = vadd.f32 %v3699, %v3867
  %v3869 = vpop.f32.mrf.mxu0
  %v3870 = vadd.f32 %v3701, %v3869
  %3871 = vmatmul.bf16.gmra.mxu0 %v1706
  %v3872 = vpop.f32.mrf.mxu0
  %v3873 = vadd.f32 %v3704, %v3872
  %v3874 = vpop.f32.mrf.mxu0
  %v3875 = vadd.f32 %v3706, %v3874
  %3876 = vmatmul.bf16.gmra.mxu0 %v1707
  %v3877 = vpop.f32.mrf.mxu0
  %v3878 = vadd.f32 %v3709, %v3877
  %v3879 = vpop.f32.mrf.mxu0
  %v3880 = vadd.f32 %v3711, %v3879
  %3881 = vmatmul.bf16.gmra.mxu0 %v1708
  %v3882 = vpop.f32.mrf.mxu0
  %v3883 = vadd.f32 %v3714, %v3882
  %v3884 = vpop.f32.mrf.mxu0
  %v3885 = vadd.f32 %v3716, %v3884
  %3886 = vmatmul.bf16.gmra.mxu0 %v1709
  %v3887 = vpop.f32.mrf.mxu0
  %v3888 = vadd.f32 %v3719, %v3887
  %v3889 = vpop.f32.mrf.mxu0
  %v3890 = vadd.f32 %v3721, %v3889
  %3891 = vmatmul.bf16.gmra.mxu0 %v1710
  %v3892 = vpop.f32.mrf.mxu0
  %v3893 = vadd.f32 %v3724, %v3892
  %v3894 = vpop.f32.mrf.mxu0
  %v3895 = vadd.f32 %v3726, %v3894
  %3896 = vmatmul.bf16.gmra.mxu0 %v1711
  %v3897 = vpop.f32.mrf.mxu0
  %v3898 = vadd.f32 %v3729, %v3897
  %v3899 = vpop.f32.mrf.mxu0
  %v3900 = vadd.f32 %v3731, %v3899
  %3901 = vmatmul.bf16.gmra.mxu0 %v1712
  %v3902 = vpop.f32.mrf.mxu0
  %v3903 = vadd.f32 %v3734, %v3902
  %v3904 = vpop.f32.mrf.mxu0
  %v3905 = vadd.f32 %v3736, %v3904
  %3906 = vmatmul.bf16.gmra.mxu0 %v1713
  %v3907 = vpop.f32.mrf.mxu0
  %v3908 = vadd.f32 %v3739, %v3907
  %v3909 = vpop.f32.mrf.mxu0
  %v3910 = vadd.f32 %v3741, %v3909
  %3911 = vmatmul.bf16.gmra.mxu0 %v1714
  %v3912 = vpop.f32.mrf.mxu0
  %v3913 = vadd.f32 %v3744, %v3912
  %v3914 = vpop.f32.mrf.mxu0
  %v3915 = vadd.f32 %v3746, %v3914
  %3916 = vmatmul.bf16.gmra.mxu0 %v1715
  %v3917 = vpop.f32.mrf.mxu0
  %v3918 = vadd.f32 %v3749, %v3917
  %v3919 = vpop.f32.mrf.mxu0
  %v3920 = vadd.f32 %v3751, %v3919
  %3921 = vmatmul.bf16.gmra.mxu0 %v1716
  %v3922 = vpop.f32.mrf.mxu0
  %v3923 = vadd.f32 %v3754, %v3922
  %v3924 = vpop.f32.mrf.mxu0
  %v3925 = vadd.f32 %v3756, %v3924
  %3926 = vmatmul.bf16.gmra.mxu0 %v1717
  %v3927 = vpop.f32.mrf.mxu0
  %v3928 = vadd.f32 %v3759, %v3927
  %v3929 = vpop.f32.mrf.mxu0
  %v3930 = vadd.f32 %v3761, %v3929
  %3931 = vmatmul.bf16.gmra.mxu0 %v1718
  %v3932 = vpop.f32.mrf.mxu0
  %v3933 = vadd.f32 %v3764, %v3932
  %v3934 = vpop.f32.mrf.mxu0
  %v3935 = vadd.f32 %v3766, %v3934
  %3936 = vmatmul.bf16.gmra.mxu0 %v1719
  %v3937 = vpop.f32.mrf.mxu0
  %v3938 = vadd.f32 %v3769, %v3937
  %v3939 = vpop.f32.mrf.mxu0
  %v3940 = vadd.f32 %v3771, %v3939
  %3941 = vmatmul.bf16.gmra.mxu0 %v1720
  %v3942 = vpop.f32.mrf.mxu0
  %v3943 = vadd.f32 %v3774, %v3942
  %v3944 = vpop.f32.mrf.mxu0
  %v3945 = vadd.f32 %v3776, %v3944
  %3946 = vmatmul.bf16.gmra.mxu0 %v1721
  %v3947 = vpop.f32.mrf.mxu0
  %v3948 = vadd.f32 %v3779, %v3947
  %v3949 = vpop.f32.mrf.mxu0
  %v3950 = vadd.f32 %v3781, %v3949
  %3951 = vmatmul.bf16.gmra.mxu0 %v1722
  %v3952 = vpop.f32.mrf.mxu0
  %v3953 = vadd.f32 %v3784, %v3952
  %v3954 = vpop.f32.mrf.mxu0
  %v3955 = vadd.f32 %v3786, %v3954
  %3956 = vmatmul.bf16.gmra.mxu0 %v1723
  %v3957 = vpop.f32.mrf.mxu0
  %v3958 = vadd.f32 %v3789, %v3957
  %v3959 = vpop.f32.mrf.mxu0
  %v3960 = vadd.f32 %v3791, %v3959
  %3961 = vmatmul.bf16.gmra.mxu0 %v1724
  %v3962 = vpop.f32.mrf.mxu0
  %v3963 = vadd.f32 %v3794, %v3962
  %v3964 = vpop.f32.mrf.mxu0
  %v3965 = vadd.f32 %v3796, %v3964
  %3966 = vmatmul.bf16.gmra.mxu0 %v1725
  %v3967 = vpop.f32.mrf.mxu0
  %v3968 = vadd.f32 %v3799, %v3967
  %v3969 = vpop.f32.mrf.mxu0
  %v3970 = vadd.f32 %v3801, %v3969
  %3971 = vmatmul.bf16.gmra.mxu0 %v1726
  %v3972 = vpop.f32.mrf.mxu0
  %v3973 = vadd.f32 %v3804, %v3972
  %v3974 = vpop.f32.mrf.mxu0
  %v3975 = vadd.f32 %v3806, %v3974
  %3976 = vmatmul.bf16.gmra.mxu0 %v1727
  %v3977 = vpop.f32.mrf.mxu0
  %v3978 = vadd.f32 %v3809, %v3977
  %v3979 = vpop.f32.mrf.mxu0
  %v3980 = vadd.f32 %v3811, %v3979
  %3981 = vmatmul.bf16.gmra.mxu0 %v1728
  %v3982 = vpop.f32.mrf.mxu0
  %v3983 = vadd.f32 %v3814, %v3982
  %v3984 = vpop.f32.mrf.mxu0
  %v3985 = vadd.f32 %v3816, %v3984
  %3986 = vmatmul.bf16.gmra.mxu0 %v1729
  %v3987 = vpop.f32.mrf.mxu0
  %v3988 = vadd.f32 %v3819, %v3987
  %v3989 = vpop.f32.mrf.mxu0
  %v3990 = vadd.f32 %v3821, %v3989
  %3991 = vmatmul.bf16.gmra.mxu0 %v1730
  %v3992 = vpop.f32.mrf.mxu0
  %v3993 = vadd.f32 %v3824, %v3992
  %v3994 = vpop.f32.mrf.mxu0
  %v3995 = vadd.f32 %v3826, %v3994
  %3996 = vmatmul.bf16.gmra.mxu0 %v1731
  %v3997 = vpop.f32.mrf.mxu0
  %v3998 = vadd.f32 %v3829, %v3997
  %v3999 = vpop.f32.mrf.mxu0
  %v4000 = vadd.f32 %v3831, %v3999
  %4001 = vmatmul.bf16.gmra.mxu0 %v1732
  %v4002 = vpop.f32.mrf.mxu0
  %v4003 = vadd.f32 %v3834, %v4002
  %v4004 = vpop.f32.mrf.mxu0
  %v4005 = vadd.f32 %v3836, %v4004
  %4006 = vmatmul.bf16.gmra.mxu0 %v1733
  %v4007 = vpop.f32.mrf.mxu0
  %v4008 = vadd.f32 %v3839, %v4007
  %v4009 = vpop.f32.mrf.mxu0
  %v4010 = vadd.f32 %v3841, %v4009
  %4011 = vmatmul.bf16.gmra.mxu0 %v1734
  %v4012 = vpop.f32.mrf.mxu0
  %v4013 = vadd.f32 %v3844, %v4012
  %v4014 = vpop.f32.mrf.mxu0
  %v4015 = vadd.f32 %v3846, %v4014
  %4016 = vmatmul.bf16.gmra.mxu0 %v1735
  %v4017 = vpop.f32.mrf.mxu0
  %v4018 = vadd.f32 %v3849, %v4017
  %v4019 = vpop.f32.mrf.mxu0
  %v4020 = vadd.f32 %v3851, %v4019
  %4021 = vmatmul.bf16.gmra.mxu0 %v1736
  %v4022 = vpop.f32.mrf.mxu0
  %v4023 = vadd.f32 %v3854, %v4022
  %v4024 = vpop.f32.mrf.mxu0
  %v4025 = vadd.f32 %v3856, %v4024
  %4026 = vdwg.mxu0
  %4027 = vmatpush.bf16.msra.mxu0 %v3568
  %4028 = vmatpush.bf16.msra.mxu0 %v3567
  %4029 = vmatpush.bf16.msra.mxu0 %v3566
  %4030 = vmatpush.bf16.msra.mxu0 %v3565
  %4031 = vmatpush.bf16.msra.mxu0 %v3564
  %4032 = vmatpush.bf16.msra.mxu0 %v3563
  %4033 = vmatpush.bf16.msra.mxu0 %v3562
  %4034 = vmatpush.bf16.msra.mxu0 %v3561
  %4035 = vmatmul.bf16.gmra.mxu0 %v1897
  %v4036 = vpop.f32.mrf.mxu0
  %v4037 = vadd.f32 %v3868, %v4036
  %v4038 = vpop.f32.mrf.mxu0
  %v4039 = vadd.f32 %v3870, %v4038
  %4040 = vmatmul.bf16.gmra.mxu0 %v1898
  %v4041 = vpop.f32.mrf.mxu0
  %v4042 = vadd.f32 %v3873, %v4041
  %v4043 = vpop.f32.mrf.mxu0
  %v4044 = vadd.f32 %v3875, %v4043
  %4045 = vmatmul.bf16.gmra.mxu0 %v1899
  %v4046 = vpop.f32.mrf.mxu0
  %v4047 = vadd.f32 %v3878, %v4046
  %v4048 = vpop.f32.mrf.mxu0
  %v4049 = vadd.f32 %v3880, %v4048
  %4050 = vmatmul.bf16.gmra.mxu0 %v1900
  %v4051 = vpop.f32.mrf.mxu0
  %v4052 = vadd.f32 %v3883, %v4051
  %v4053 = vpop.f32.mrf.mxu0
  %v4054 = vadd.f32 %v3885, %v4053
  %4055 = vmatmul.bf16.gmra.mxu0 %v1901
  %v4056 = vpop.f32.mrf.mxu0
  %v4057 = vadd.f32 %v3888, %v4056
  %v4058 = vpop.f32.mrf.mxu0
  %v4059 = vadd.f32 %v3890, %v4058
  %4060 = vmatmul.bf16.gmra.mxu0 %v1902
  %v4061 = vpop.f32.mrf.mxu0
  %v4062 = vadd.f32 %v3893, %v4061
  %v4063 = vpop.f32.mrf.mxu0
  %v4064 = vadd.f32 %v3895, %v4063
  %4065 = vmatmul.bf16.gmra.mxu0 %v1903
  %v4066 = vpop.f32.mrf.mxu0
  %v4067 = vadd.f32 %v3898, %v4066
  %v4068 = vpop.f32.mrf.mxu0
  %v4069 = vadd.f32 %v3900, %v4068
  %4070 = vmatmul.bf16.gmra.mxu0 %v1904
  %v4071 = vpop.f32.mrf.mxu0
  %v4072 = vadd.f32 %v3903, %v4071
  %v4073 = vpop.f32.mrf.mxu0
  %v4074 = vadd.f32 %v3905, %v4073
  %4075 = vmatmul.bf16.gmra.mxu0 %v1905
  %v4076 = vpop.f32.mrf.mxu0
  %v4077 = vadd.f32 %v3908, %v4076
  %v4078 = vpop.f32.mrf.mxu0
  %v4079 = vadd.f32 %v3910, %v4078
  %4080 = vmatmul.bf16.gmra.mxu0 %v1906
  %v4081 = vpop.f32.mrf.mxu0
  %v4082 = vadd.f32 %v3913, %v4081
  %v4083 = vpop.f32.mrf.mxu0
  %v4084 = vadd.f32 %v3915, %v4083
  %4085 = vmatmul.bf16.gmra.mxu0 %v1907
  %v4086 = vpop.f32.mrf.mxu0
  %v4087 = vadd.f32 %v3918, %v4086
  %v4088 = vpop.f32.mrf.mxu0
  %v4089 = vadd.f32 %v3920, %v4088
  %4090 = vmatmul.bf16.gmra.mxu0 %v1908
  %v4091 = vpop.f32.mrf.mxu0
  %v4092 = vadd.f32 %v3923, %v4091
  %v4093 = vpop.f32.mrf.mxu0
  %v4094 = vadd.f32 %v3925, %v4093
  %4095 = vmatmul.bf16.gmra.mxu0 %v1909
  %v4096 = vpop.f32.mrf.mxu0
  %v4097 = vadd.f32 %v3928, %v4096
  %v4098 = vpop.f32.mrf.mxu0
  %v4099 = vadd.f32 %v3930, %v4098
  %4100 = vmatmul.bf16.gmra.mxu0 %v1910
  %v4101 = vpop.f32.mrf.mxu0
  %v4102 = vadd.f32 %v3933, %v4101
  %v4103 = vpop.f32.mrf.mxu0
  %v4104 = vadd.f32 %v3935, %v4103
  %4105 = vmatmul.bf16.gmra.mxu0 %v1911
  %v4106 = vpop.f32.mrf.mxu0
  %v4107 = vadd.f32 %v3938, %v4106
  %v4108 = vpop.f32.mrf.mxu0
  %v4109 = vadd.f32 %v3940, %v4108
  %4110 = vmatmul.bf16.gmra.mxu0 %v1912
  %v4111 = vpop.f32.mrf.mxu0
  %v4112 = vadd.f32 %v3943, %v4111
  %v4113 = vpop.f32.mrf.mxu0
  %v4114 = vadd.f32 %v3945, %v4113
  %4115 = vmatmul.bf16.gmra.mxu0 %v1913
  %v4116 = vpop.f32.mrf.mxu0
  %v4117 = vadd.f32 %v3948, %v4116
  %v4118 = vpop.f32.mrf.mxu0
  %v4119 = vadd.f32 %v3950, %v4118
  %4120 = vmatmul.bf16.gmra.mxu0 %v1914
  %v4121 = vpop.f32.mrf.mxu0
  %v4122 = vadd.f32 %v3953, %v4121
  %v4123 = vpop.f32.mrf.mxu0
  %v4124 = vadd.f32 %v3955, %v4123
  %4125 = vmatmul.bf16.gmra.mxu0 %v1915
  %v4126 = vpop.f32.mrf.mxu0
  %v4127 = vadd.f32 %v3958, %v4126
  %v4128 = vpop.f32.mrf.mxu0
  %v4129 = vadd.f32 %v3960, %v4128
  %4130 = vmatmul.bf16.gmra.mxu0 %v1916
  %v4131 = vpop.f32.mrf.mxu0
  %v4132 = vadd.f32 %v3963, %v4131
  %v4133 = vpop.f32.mrf.mxu0
  %v4134 = vadd.f32 %v3965, %v4133
  %4135 = vmatmul.bf16.gmra.mxu0 %v1917
  %v4136 = vpop.f32.mrf.mxu0
  %v4137 = vadd.f32 %v3968, %v4136
  %v4138 = vpop.f32.mrf.mxu0
  %v4139 = vadd.f32 %v3970, %v4138
  %4140 = vmatmul.bf16.gmra.mxu0 %v1918
  %v4141 = vpop.f32.mrf.mxu0
  %v4142 = vadd.f32 %v3973, %v4141
  %v4143 = vpop.f32.mrf.mxu0
  %v4144 = vadd.f32 %v3975, %v4143
  %4145 = vmatmul.bf16.gmra.mxu0 %v1919
  %v4146 = vpop.f32.mrf.mxu0
  %v4147 = vadd.f32 %v3978, %v4146
  %v4148 = vpop.f32.mrf.mxu0
  %v4149 = vadd.f32 %v3980, %v4148
  %4150 = vmatmul.bf16.gmra.mxu0 %v1920
  %v4151 = vpop.f32.mrf.mxu0
  %v4152 = vadd.f32 %v3983, %v4151
  %v4153 = vpop.f32.mrf.mxu0
  %v4154 = vadd.f32 %v3985, %v4153
  %4155 = vmatmul.bf16.gmra.mxu0 %v1921
  %v4156 = vpop.f32.mrf.mxu0
  %v4157 = vadd.f32 %v3988, %v4156
  %v4158 = vpop.f32.mrf.mxu0
  %v4159 = vadd.f32 %v3990, %v4158
  %4160 = vmatmul.bf16.gmra.mxu0 %v1922
  %v4161 = vpop.f32.mrf.mxu0
  %v4162 = vadd.f32 %v3993, %v4161
  %v4163 = vpop.f32.mrf.mxu0
  %v4164 = vadd.f32 %v3995, %v4163
  %4165 = vmatmul.bf16.gmra.mxu0 %v1923
  %v4166 = vpop.f32.mrf.mxu0
  %v4167 = vadd.f32 %v3998, %v4166
  %v4168 = vpop.f32.mrf.mxu0
  %v4169 = vadd.f32 %v4000, %v4168
  %4170 = vmatmul.bf16.gmra.mxu0 %v1924
  %v4171 = vpop.f32.mrf.mxu0
  %v4172 = vadd.f32 %v4003, %v4171
  %v4173 = vpop.f32.mrf.mxu0
  %v4174 = vadd.f32 %v4005, %v4173
  %4175 = vmatmul.bf16.gmra.mxu0 %v1925
  %v4176 = vpop.f32.mrf.mxu0
  %v4177 = vadd.f32 %v4008, %v4176
  %v4178 = vpop.f32.mrf.mxu0
  %v4179 = vadd.f32 %v4010, %v4178
  %4180 = vmatmul.bf16.gmra.mxu0 %v1926
  %v4181 = vpop.f32.mrf.mxu0
  %v4182 = vadd.f32 %v4013, %v4181
  %v4183 = vpop.f32.mrf.mxu0
  %v4184 = vadd.f32 %v4015, %v4183
  %4185 = vmatmul.bf16.gmra.mxu0 %v1927
  %v4186 = vpop.f32.mrf.mxu0
  %v4187 = vadd.f32 %v4018, %v4186
  %v4188 = vpop.f32.mrf.mxu0
  %v4189 = vadd.f32 %v4020, %v4188
  %4190 = vmatmul.bf16.gmra.mxu0 %v1928
  %v4191 = vpop.f32.mrf.mxu0
  %v4192 = vadd.f32 %v4023, %v4191
  %v4193 = vpop.f32.mrf.mxu0
  %v4194 = vadd.f32 %v4025, %v4193
  %4195 = vdwg.mxu0
  %4196 = vmatpush.bf16.msra.mxu0 %v3576
  %4197 = vmatpush.bf16.msra.mxu0 %v3575
  %4198 = vmatpush.bf16.msra.mxu0 %v3574
  %4199 = vmatpush.bf16.msra.mxu0 %v3573
  %4200 = vmatpush.bf16.msra.mxu0 %v3572
  %4201 = vmatpush.bf16.msra.mxu0 %v3571
  %4202 = vmatpush.bf16.msra.mxu0 %v3570
  %4203 = vmatpush.bf16.msra.mxu0 %v3569
  %4204 = vmatmul.bf16.gmra.mxu0 %v2089
  %v4205 = vpop.f32.mrf.mxu0
  %v4206 = vadd.f32 %v4037, %v4205
  %v4207 = vpop.f32.mrf.mxu0
  %v4208 = vadd.f32 %v4039, %v4207
  %4209 = vmatmul.bf16.gmra.mxu0 %v2090
  %v4210 = vpop.f32.mrf.mxu0
  %v4211 = vadd.f32 %v4042, %v4210
  %v4212 = vpop.f32.mrf.mxu0
  %v4213 = vadd.f32 %v4044, %v4212
  %4214 = vmatmul.bf16.gmra.mxu0 %v2091
  %v4215 = vpop.f32.mrf.mxu0
  %v4216 = vadd.f32 %v4047, %v4215
  %v4217 = vpop.f32.mrf.mxu0
  %v4218 = vadd.f32 %v4049, %v4217
  %4219 = vmatmul.bf16.gmra.mxu0 %v2092
  %v4220 = vpop.f32.mrf.mxu0
  %v4221 = vadd.f32 %v4052, %v4220
  %v4222 = vpop.f32.mrf.mxu0
  %v4223 = vadd.f32 %v4054, %v4222
  %4224 = vmatmul.bf16.gmra.mxu0 %v2093
  %v4225 = vpop.f32.mrf.mxu0
  %v4226 = vadd.f32 %v4057, %v4225
  %v4227 = vpop.f32.mrf.mxu0
  %v4228 = vadd.f32 %v4059, %v4227
  %4229 = vmatmul.bf16.gmra.mxu0 %v2094
  %v4230 = vpop.f32.mrf.mxu0
  %v4231 = vadd.f32 %v4062, %v4230
  %v4232 = vpop.f32.mrf.mxu0
  %v4233 = vadd.f32 %v4064, %v4232
  %4234 = vmatmul.bf16.gmra.mxu0 %v2095
  %v4235 = vpop.f32.mrf.mxu0
  %v4236 = vadd.f32 %v4067, %v4235
  %v4237 = vpop.f32.mrf.mxu0
  %v4238 = vadd.f32 %v4069, %v4237
  %4239 = vmatmul.bf16.gmra.mxu0 %v2096
  %v4240 = vpop.f32.mrf.mxu0
  %v4241 = vadd.f32 %v4072, %v4240
  %v4242 = vpop.f32.mrf.mxu0
  %v4243 = vadd.f32 %v4074, %v4242
  %4244 = vmatmul.bf16.gmra.mxu0 %v2097
  %v4245 = vpop.f32.mrf.mxu0
  %v4246 = vadd.f32 %v4077, %v4245
  %v4247 = vpop.f32.mrf.mxu0
  %v4248 = vadd.f32 %v4079, %v4247
  %4249 = vmatmul.bf16.gmra.mxu0 %v2098
  %v4250 = vpop.f32.mrf.mxu0
  %v4251 = vadd.f32 %v4082, %v4250
  %v4252 = vpop.f32.mrf.mxu0
  %v4253 = vadd.f32 %v4084, %v4252
  %4254 = vmatmul.bf16.gmra.mxu0 %v2099
  %v4255 = vpop.f32.mrf.mxu0
  %v4256 = vadd.f32 %v4087, %v4255
  %v4257 = vpop.f32.mrf.mxu0
  %v4258 = vadd.f32 %v4089, %v4257
  %4259 = vmatmul.bf16.gmra.mxu0 %v2100
  %v4260 = vpop.f32.mrf.mxu0
  %v4261 = vadd.f32 %v4092, %v4260
  %v4262 = vpop.f32.mrf.mxu0
  %v4263 = vadd.f32 %v4094, %v4262
  %4264 = vmatmul.bf16.gmra.mxu0 %v2101
  %v4265 = vpop.f32.mrf.mxu0
  %v4266 = vadd.f32 %v4097, %v4265
  %v4267 = vpop.f32.mrf.mxu0
  %v4268 = vadd.f32 %v4099, %v4267
  %4269 = vmatmul.bf16.gmra.mxu0 %v2102
  %v4270 = vpop.f32.mrf.mxu0
  %v4271 = vadd.f32 %v4102, %v4270
  %v4272 = vpop.f32.mrf.mxu0
  %v4273 = vadd.f32 %v4104, %v4272
  %4274 = vmatmul.bf16.gmra.mxu0 %v2103
  %v4275 = vpop.f32.mrf.mxu0
  %v4276 = vadd.f32 %v4107, %v4275
  %v4277 = vpop.f32.mrf.mxu0
  %v4278 = vadd.f32 %v4109, %v4277
  %4279 = vmatmul.bf16.gmra.mxu0 %v2104
  %v4280 = vpop.f32.mrf.mxu0
  %v4281 = vadd.f32 %v4112, %v4280
  %v4282 = vpop.f32.mrf.mxu0
  %v4283 = vadd.f32 %v4114, %v4282
  %4284 = vmatmul.bf16.gmra.mxu0 %v2105
  %v4285 = vpop.f32.mrf.mxu0
  %v4286 = vadd.f32 %v4117, %v4285
  %v4287 = vpop.f32.mrf.mxu0
  %v4288 = vadd.f32 %v4119, %v4287
  %4289 = vmatmul.bf16.gmra.mxu0 %v2106
  %v4290 = vpop.f32.mrf.mxu0
  %v4291 = vadd.f32 %v4122, %v4290
  %v4292 = vpop.f32.mrf.mxu0
  %v4293 = vadd.f32 %v4124, %v4292
  %4294 = vmatmul.bf16.gmra.mxu0 %v2107
  %v4295 = vpop.f32.mrf.mxu0
  %v4296 = vadd.f32 %v4127, %v4295
  %v4297 = vpop.f32.mrf.mxu0
  %v4298 = vadd.f32 %v4129, %v4297
  %4299 = vmatmul.bf16.gmra.mxu0 %v2108
  %v4300 = vpop.f32.mrf.mxu0
  %v4301 = vadd.f32 %v4132, %v4300
  %v4302 = vpop.f32.mrf.mxu0
  %v4303 = vadd.f32 %v4134, %v4302
  %4304 = vmatmul.bf16.gmra.mxu0 %v2109
  %v4305 = vpop.f32.mrf.mxu0
  %v4306 = vadd.f32 %v4137, %v4305
  %v4307 = vpop.f32.mrf.mxu0
  %v4308 = vadd.f32 %v4139, %v4307
  %4309 = vmatmul.bf16.gmra.mxu0 %v2110
  %v4310 = vpop.f32.mrf.mxu0
  %v4311 = vadd.f32 %v4142, %v4310
  %v4312 = vpop.f32.mrf.mxu0
  %v4313 = vadd.f32 %v4144, %v4312
  %4314 = vmatmul.bf16.gmra.mxu0 %v2111
  %v4315 = vpop.f32.mrf.mxu0
  %v4316 = vadd.f32 %v4147, %v4315
  %v4317 = vpop.f32.mrf.mxu0
  %v4318 = vadd.f32 %v4149, %v4317
  %4319 = vmatmul.bf16.gmra.mxu0 %v2112
  %v4320 = vpop.f32.mrf.mxu0
  %v4321 = vadd.f32 %v4152, %v4320
  %v4322 = vpop.f32.mrf.mxu0
  %v4323 = vadd.f32 %v4154, %v4322
  %4324 = vmatmul.bf16.gmra.mxu0 %v2113
  %v4325 = vpop.f32.mrf.mxu0
  %v4326 = vadd.f32 %v4157, %v4325
  %v4327 = vpop.f32.mrf.mxu0
  %v4328 = vadd.f32 %v4159, %v4327
  %4329 = vmatmul.bf16.gmra.mxu0 %v2114
  %v4330 = vpop.f32.mrf.mxu0
  %v4331 = vadd.f32 %v4162, %v4330
  %v4332 = vpop.f32.mrf.mxu0
  %v4333 = vadd.f32 %v4164, %v4332
  %4334 = vmatmul.bf16.gmra.mxu0 %v2115
  %v4335 = vpop.f32.mrf.mxu0
  %v4336 = vadd.f32 %v4167, %v4335
  %v4337 = vpop.f32.mrf.mxu0
  %v4338 = vadd.f32 %v4169, %v4337
  %4339 = vmatmul.bf16.gmra.mxu0 %v2116
  %v4340 = vpop.f32.mrf.mxu0
  %v4341 = vadd.f32 %v4172, %v4340
  %v4342 = vpop.f32.mrf.mxu0
  %v4343 = vadd.f32 %v4174, %v4342
  %4344 = vmatmul.bf16.gmra.mxu0 %v2117
  %v4345 = vpop.f32.mrf.mxu0
  %v4346 = vadd.f32 %v4177, %v4345
  %v4347 = vpop.f32.mrf.mxu0
  %v4348 = vadd.f32 %v4179, %v4347
  %4349 = vmatmul.bf16.gmra.mxu0 %v2118
  %v4350 = vpop.f32.mrf.mxu0
  %v4351 = vadd.f32 %v4182, %v4350
  %v4352 = vpop.f32.mrf.mxu0
  %v4353 = vadd.f32 %v4184, %v4352
  %4354 = vmatmul.bf16.gmra.mxu0 %v2119
  %v4355 = vpop.f32.mrf.mxu0
  %v4356 = vadd.f32 %v4187, %v4355
  %v4357 = vpop.f32.mrf.mxu0
  %v4358 = vadd.f32 %v4189, %v4357
  %4359 = vmatmul.bf16.gmra.mxu0 %v2120
  %v4360 = vpop.f32.mrf.mxu0
  %v4361 = vadd.f32 %v4192, %v4360
  %v4362 = vpop.f32.mrf.mxu0
  %v4363 = vadd.f32 %v4194, %v4362
  %4364 = vdwg.mxu0
  %4365 = vmatpush.bf16.msra.mxu0 %v3584
  %4366 = vmatpush.bf16.msra.mxu0 %v3583
  %4367 = vmatpush.bf16.msra.mxu0 %v3582
  %4368 = vmatpush.bf16.msra.mxu0 %v3581
  %4369 = vmatpush.bf16.msra.mxu0 %v3580
  %4370 = vmatpush.bf16.msra.mxu0 %v3579
  %4371 = vmatpush.bf16.msra.mxu0 %v3578
  %4372 = vmatpush.bf16.msra.mxu0 %v3577
  %4373 = vmatmul.bf16.gmra.mxu0 %v2281
  %v4374 = vpop.f32.mrf.mxu0
  %v4375 = vadd.f32 %v4206, %v4374
  %v4376 = vpop.f32.mrf.mxu0
  %v4377 = vadd.f32 %v4208, %v4376
  %4378 = vmatmul.bf16.gmra.mxu0 %v2282
  %v4379 = vpop.f32.mrf.mxu0
  %v4380 = vadd.f32 %v4211, %v4379
  %v4381 = vpop.f32.mrf.mxu0
  %v4382 = vadd.f32 %v4213, %v4381
  %4383 = vmatmul.bf16.gmra.mxu0 %v2283
  %v4384 = vpop.f32.mrf.mxu0
  %v4385 = vadd.f32 %v4216, %v4384
  %v4386 = vpop.f32.mrf.mxu0
  %v4387 = vadd.f32 %v4218, %v4386
  %4388 = vmatmul.bf16.gmra.mxu0 %v2284
  %v4389 = vpop.f32.mrf.mxu0
  %v4390 = vadd.f32 %v4221, %v4389
  %v4391 = vpop.f32.mrf.mxu0
  %v4392 = vadd.f32 %v4223, %v4391
  %4393 = vmatmul.bf16.gmra.mxu0 %v2285
  %v4394 = vpop.f32.mrf.mxu0
  %v4395 = vadd.f32 %v4226, %v4394
  %v4396 = vpop.f32.mrf.mxu0
  %v4397 = vadd.f32 %v4228, %v4396
  %4398 = vmatmul.bf16.gmra.mxu0 %v2286
  %v4399 = vpop.f32.mrf.mxu0
  %v4400 = vadd.f32 %v4231, %v4399
  %v4401 = vpop.f32.mrf.mxu0
  %v4402 = vadd.f32 %v4233, %v4401
  %4403 = vmatmul.bf16.gmra.mxu0 %v2287
  %v4404 = vpop.f32.mrf.mxu0
  %v4405 = vadd.f32 %v4236, %v4404
  %v4406 = vpop.f32.mrf.mxu0
  %v4407 = vadd.f32 %v4238, %v4406
  %4408 = vmatmul.bf16.gmra.mxu0 %v2288
  %v4409 = vpop.f32.mrf.mxu0
  %v4410 = vadd.f32 %v4241, %v4409
  %v4411 = vpop.f32.mrf.mxu0
  %v4412 = vadd.f32 %v4243, %v4411
  %4413 = vmatmul.bf16.gmra.mxu0 %v2289
  %v4414 = vpop.f32.mrf.mxu0
  %v4415 = vadd.f32 %v4246, %v4414
  %v4416 = vpop.f32.mrf.mxu0
  %v4417 = vadd.f32 %v4248, %v4416
  %4418 = vmatmul.bf16.gmra.mxu0 %v2290
  %v4419 = vpop.f32.mrf.mxu0
  %v4420 = vadd.f32 %v4251, %v4419
  %v4421 = vpop.f32.mrf.mxu0
  %v4422 = vadd.f32 %v4253, %v4421
  %4423 = vmatmul.bf16.gmra.mxu0 %v2291
  %v4424 = vpop.f32.mrf.mxu0
  %v4425 = vadd.f32 %v4256, %v4424
  %v4426 = vpop.f32.mrf.mxu0
  %v4427 = vadd.f32 %v4258, %v4426
  %4428 = vmatmul.bf16.gmra.mxu0 %v2292
  %v4429 = vpop.f32.mrf.mxu0
  %v4430 = vadd.f32 %v4261, %v4429
  %v4431 = vpop.f32.mrf.mxu0
  %v4432 = vadd.f32 %v4263, %v4431
  %4433 = vmatmul.bf16.gmra.mxu0 %v2293
  %v4434 = vpop.f32.mrf.mxu0
  %v4435 = vadd.f32 %v4266, %v4434
  %v4436 = vpop.f32.mrf.mxu0
  %v4437 = vadd.f32 %v4268, %v4436
  %4438 = vmatmul.bf16.gmra.mxu0 %v2294
  %v4439 = vpop.f32.mrf.mxu0
  %v4440 = vadd.f32 %v4271, %v4439
  %v4441 = vpop.f32.mrf.mxu0
  %v4442 = vadd.f32 %v4273, %v4441
  %4443 = vmatmul.bf16.gmra.mxu0 %v2295
  %v4444 = vpop.f32.mrf.mxu0
  %v4445 = vadd.f32 %v4276, %v4444
  %v4446 = vpop.f32.mrf.mxu0
  %v4447 = vadd.f32 %v4278, %v4446
  %4448 = vmatmul.bf16.gmra.mxu0 %v2296
  %v4449 = vpop.f32.mrf.mxu0
  %v4450 = vadd.f32 %v4281, %v4449
  %v4451 = vpop.f32.mrf.mxu0
  %v4452 = vadd.f32 %v4283, %v4451
  %4453 = vmatmul.bf16.gmra.mxu0 %v2297
  %v4454 = vpop.f32.mrf.mxu0
  %v4455 = vadd.f32 %v4286, %v4454
  %v4456 = vpop.f32.mrf.mxu0
  %v4457 = vadd.f32 %v4288, %v4456
  %4458 = vmatmul.bf16.gmra.mxu0 %v2298
  %v4459 = vpop.f32.mrf.mxu0
  %v4460 = vadd.f32 %v4291, %v4459
  %v4461 = vpop.f32.mrf.mxu0
  %v4462 = vadd.f32 %v4293, %v4461
  %4463 = vmatmul.bf16.gmra.mxu0 %v2299
  %v4464 = vpop.f32.mrf.mxu0
  %v4465 = vadd.f32 %v4296, %v4464
  %v4466 = vpop.f32.mrf.mxu0
  %v4467 = vadd.f32 %v4298, %v4466
  %4468 = vmatmul.bf16.gmra.mxu0 %v2300
  %v4469 = vpop.f32.mrf.mxu0
  %v4470 = vadd.f32 %v4301, %v4469
  %v4471 = vpop.f32.mrf.mxu0
  %v4472 = vadd.f32 %v4303, %v4471
  %4473 = vmatmul.bf16.gmra.mxu0 %v2301
  %v4474 = vpop.f32.mrf.mxu0
  %v4475 = vadd.f32 %v4306, %v4474
  %v4476 = vpop.f32.mrf.mxu0
  %v4477 = vadd.f32 %v4308, %v4476
  %4478 = vmatmul.bf16.gmra.mxu0 %v2302
  %v4479 = vpop.f32.mrf.mxu0
  %v4480 = vadd.f32 %v4311, %v4479
  %v4481 = vpop.f32.mrf.mxu0
  %v4482 = vadd.f32 %v4313, %v4481
  %4483 = vmatmul.bf16.gmra.mxu0 %v2303
  %v4484 = vpop.f32.mrf.mxu0
  %v4485 = vadd.f32 %v4316, %v4484
  %v4486 = vpop.f32.mrf.mxu0
  %v4487 = vadd.f32 %v4318, %v4486
  %4488 = vmatmul.bf16.gmra.mxu0 %v2304
  %v4489 = vpop.f32.mrf.mxu0
  %v4490 = vadd.f32 %v4321, %v4489
  %v4491 = vpop.f32.mrf.mxu0
  %v4492 = vadd.f32 %v4323, %v4491
  %4493 = vmatmul.bf16.gmra.mxu0 %v2305
  %v4494 = vpop.f32.mrf.mxu0
  %v4495 = vadd.f32 %v4326, %v4494
  %v4496 = vpop.f32.mrf.mxu0
  %v4497 = vadd.f32 %v4328, %v4496
  %4498 = vmatmul.bf16.gmra.mxu0 %v2306
  %v4499 = vpop.f32.mrf.mxu0
  %v4500 = vadd.f32 %v4331, %v4499
  %v4501 = vpop.f32.mrf.mxu0
  %v4502 = vadd.f32 %v4333, %v4501
  %4503 = vmatmul.bf16.gmra.mxu0 %v2307
  %v4504 = vpop.f32.mrf.mxu0
  %v4505 = vadd.f32 %v4336, %v4504
  %v4506 = vpop.f32.mrf.mxu0
  %v4507 = vadd.f32 %v4338, %v4506
  %4508 = vmatmul.bf16.gmra.mxu0 %v2308
  %v4509 = vpop.f32.mrf.mxu0
  %v4510 = vadd.f32 %v4341, %v4509
  %v4511 = vpop.f32.mrf.mxu0
  %v4512 = vadd.f32 %v4343, %v4511
  %4513 = vmatmul.bf16.gmra.mxu0 %v2309
  %v4514 = vpop.f32.mrf.mxu0
  %v4515 = vadd.f32 %v4346, %v4514
  %v4516 = vpop.f32.mrf.mxu0
  %v4517 = vadd.f32 %v4348, %v4516
  %4518 = vmatmul.bf16.gmra.mxu0 %v2310
  %v4519 = vpop.f32.mrf.mxu0
  %v4520 = vadd.f32 %v4351, %v4519
  %v4521 = vpop.f32.mrf.mxu0
  %v4522 = vadd.f32 %v4353, %v4521
  %4523 = vmatmul.bf16.gmra.mxu0 %v2311
  %v4524 = vpop.f32.mrf.mxu0
  %v4525 = vadd.f32 %v4356, %v4524
  %v4526 = vpop.f32.mrf.mxu0
  %v4527 = vadd.f32 %v4358, %v4526
  %4528 = vmatmul.bf16.gmra.mxu0 %v2312
  %v4529 = vpop.f32.mrf.mxu0
  %v4530 = vadd.f32 %v4361, %v4529
  %v4531 = vpop.f32.mrf.mxu0
  %v4532 = vadd.f32 %v4363, %v4531
  %4533 = vdwg.mxu0
  %4534 = vmatpush.bf16.msra.mxu0 %v3592
  %4535 = vmatpush.bf16.msra.mxu0 %v3591
  %4536 = vmatpush.bf16.msra.mxu0 %v3590
  %4537 = vmatpush.bf16.msra.mxu0 %v3589
  %4538 = vmatpush.bf16.msra.mxu0 %v3588
  %4539 = vmatpush.bf16.msra.mxu0 %v3587
  %4540 = vmatpush.bf16.msra.mxu0 %v3586
  %4541 = vmatpush.bf16.msra.mxu0 %v3585
  %4542 = vmatmul.bf16.gmra.mxu0 %v2473
  %v4543 = vpop.f32.mrf.mxu0
  %v4544 = vadd.f32 %v4375, %v4543
  %v4545 = vpop.f32.mrf.mxu0
  %v4546 = vadd.f32 %v4377, %v4545
  %4547 = vmatmul.bf16.gmra.mxu0 %v2474
  %v4548 = vpop.f32.mrf.mxu0
  %v4549 = vadd.f32 %v4380, %v4548
  %v4550 = vpop.f32.mrf.mxu0
  %v4551 = vadd.f32 %v4382, %v4550
  %4552 = vmatmul.bf16.gmra.mxu0 %v2475
  %v4553 = vpop.f32.mrf.mxu0
  %v4554 = vadd.f32 %v4385, %v4553
  %v4555 = vpop.f32.mrf.mxu0
  %v4556 = vadd.f32 %v4387, %v4555
  %4557 = vmatmul.bf16.gmra.mxu0 %v2476
  %v4558 = vpop.f32.mrf.mxu0
  %v4559 = vadd.f32 %v4390, %v4558
  %v4560 = vpop.f32.mrf.mxu0
  %v4561 = vadd.f32 %v4392, %v4560
  %4562 = vmatmul.bf16.gmra.mxu0 %v2477
  %v4563 = vpop.f32.mrf.mxu0
  %v4564 = vadd.f32 %v4395, %v4563
  %v4565 = vpop.f32.mrf.mxu0
  %v4566 = vadd.f32 %v4397, %v4565
  %4567 = vmatmul.bf16.gmra.mxu0 %v2478
  %v4568 = vpop.f32.mrf.mxu0
  %v4569 = vadd.f32 %v4400, %v4568
  %v4570 = vpop.f32.mrf.mxu0
  %v4571 = vadd.f32 %v4402, %v4570
  %4572 = vmatmul.bf16.gmra.mxu0 %v2479
  %v4573 = vpop.f32.mrf.mxu0
  %v4574 = vadd.f32 %v4405, %v4573
  %v4575 = vpop.f32.mrf.mxu0
  %v4576 = vadd.f32 %v4407, %v4575
  %4577 = vmatmul.bf16.gmra.mxu0 %v2480
  %v4578 = vpop.f32.mrf.mxu0
  %v4579 = vadd.f32 %v4410, %v4578
  %v4580 = vpop.f32.mrf.mxu0
  %v4581 = vadd.f32 %v4412, %v4580
  %4582 = vmatmul.bf16.gmra.mxu0 %v2481
  %v4583 = vpop.f32.mrf.mxu0
  %v4584 = vadd.f32 %v4415, %v4583
  %v4585 = vpop.f32.mrf.mxu0
  %v4586 = vadd.f32 %v4417, %v4585
  %4587 = vmatmul.bf16.gmra.mxu0 %v2482
  %v4588 = vpop.f32.mrf.mxu0
  %v4589 = vadd.f32 %v4420, %v4588
  %v4590 = vpop.f32.mrf.mxu0
  %v4591 = vadd.f32 %v4422, %v4590
  %4592 = vmatmul.bf16.gmra.mxu0 %v2483
  %v4593 = vpop.f32.mrf.mxu0
  %v4594 = vadd.f32 %v4425, %v4593
  %v4595 = vpop.f32.mrf.mxu0
  %v4596 = vadd.f32 %v4427, %v4595
  %4597 = vmatmul.bf16.gmra.mxu0 %v2484
  %v4598 = vpop.f32.mrf.mxu0
  %v4599 = vadd.f32 %v4430, %v4598
  %v4600 = vpop.f32.mrf.mxu0
  %v4601 = vadd.f32 %v4432, %v4600
  %4602 = vmatmul.bf16.gmra.mxu0 %v2485
  %v4603 = vpop.f32.mrf.mxu0
  %v4604 = vadd.f32 %v4435, %v4603
  %v4605 = vpop.f32.mrf.mxu0
  %v4606 = vadd.f32 %v4437, %v4605
  %4607 = vmatmul.bf16.gmra.mxu0 %v2486
  %v4608 = vpop.f32.mrf.mxu0
  %v4609 = vadd.f32 %v4440, %v4608
  %v4610 = vpop.f32.mrf.mxu0
  %v4611 = vadd.f32 %v4442, %v4610
  %4612 = vmatmul.bf16.gmra.mxu0 %v2487
  %v4613 = vpop.f32.mrf.mxu0
  %v4614 = vadd.f32 %v4445, %v4613
  %v4615 = vpop.f32.mrf.mxu0
  %v4616 = vadd.f32 %v4447, %v4615
  %4617 = vmatmul.bf16.gmra.mxu0 %v2488
  %v4618 = vpop.f32.mrf.mxu0
  %v4619 = vadd.f32 %v4450, %v4618
  %v4620 = vpop.f32.mrf.mxu0
  %v4621 = vadd.f32 %v4452, %v4620
  %4622 = vmatmul.bf16.gmra.mxu0 %v2489
  %v4623 = vpop.f32.mrf.mxu0
  %v4624 = vadd.f32 %v4455, %v4623
  %v4625 = vpop.f32.mrf.mxu0
  %v4626 = vadd.f32 %v4457, %v4625
  %4627 = vmatmul.bf16.gmra.mxu0 %v2490
  %v4628 = vpop.f32.mrf.mxu0
  %v4629 = vadd.f32 %v4460, %v4628
  %v4630 = vpop.f32.mrf.mxu0
  %v4631 = vadd.f32 %v4462, %v4630
  %4632 = vmatmul.bf16.gmra.mxu0 %v2491
  %v4633 = vpop.f32.mrf.mxu0
  %v4634 = vadd.f32 %v4465, %v4633
  %v4635 = vpop.f32.mrf.mxu0
  %v4636 = vadd.f32 %v4467, %v4635
  %4637 = vmatmul.bf16.gmra.mxu0 %v2492
  %v4638 = vpop.f32.mrf.mxu0
  %v4639 = vadd.f32 %v4470, %v4638
  %v4640 = vpop.f32.mrf.mxu0
  %v4641 = vadd.f32 %v4472, %v4640
  %4642 = vmatmul.bf16.gmra.mxu0 %v2493
  %v4643 = vpop.f32.mrf.mxu0
  %v4644 = vadd.f32 %v4475, %v4643
  %v4645 = vpop.f32.mrf.mxu0
  %v4646 = vadd.f32 %v4477, %v4645
  %4647 = vmatmul.bf16.gmra.mxu0 %v2494
  %v4648 = vpop.f32.mrf.mxu0
  %v4649 = vadd.f32 %v4480, %v4648
  %v4650 = vpop.f32.mrf.mxu0
  %v4651 = vadd.f32 %v4482, %v4650
  %4652 = vmatmul.bf16.gmra.mxu0 %v2495
  %v4653 = vpop.f32.mrf.mxu0
  %v4654 = vadd.f32 %v4485, %v4653
  %v4655 = vpop.f32.mrf.mxu0
  %v4656 = vadd.f32 %v4487, %v4655
  %4657 = vmatmul.bf16.gmra.mxu0 %v2496
  %v4658 = vpop.f32.mrf.mxu0
  %v4659 = vadd.f32 %v4490, %v4658
  %v4660 = vpop.f32.mrf.mxu0
  %v4661 = vadd.f32 %v4492, %v4660
  %4662 = vmatmul.bf16.gmra.mxu0 %v2497
  %v4663 = vpop.f32.mrf.mxu0
  %v4664 = vadd.f32 %v4495, %v4663
  %v4665 = vpop.f32.mrf.mxu0
  %v4666 = vadd.f32 %v4497, %v4665
  %4667 = vmatmul.bf16.gmra.mxu0 %v2498
  %v4668 = vpop.f32.mrf.mxu0
  %v4669 = vadd.f32 %v4500, %v4668
  %v4670 = vpop.f32.mrf.mxu0
  %v4671 = vadd.f32 %v4502, %v4670
  %4672 = vmatmul.bf16.gmra.mxu0 %v2499
  %v4673 = vpop.f32.mrf.mxu0
  %v4674 = vadd.f32 %v4505, %v4673
  %v4675 = vpop.f32.mrf.mxu0
  %v4676 = vadd.f32 %v4507, %v4675
  %4677 = vmatmul.bf16.gmra.mxu0 %v2500
  %v4678 = vpop.f32.mrf.mxu0
  %v4679 = vadd.f32 %v4510, %v4678
  %v4680 = vpop.f32.mrf.mxu0
  %v4681 = vadd.f32 %v4512, %v4680
  %4682 = vmatmul.bf16.gmra.mxu0 %v2501
  %v4683 = vpop.f32.mrf.mxu0
  %v4684 = vadd.f32 %v4515, %v4683
  %v4685 = vpop.f32.mrf.mxu0
  %v4686 = vadd.f32 %v4517, %v4685
  %4687 = vmatmul.bf16.gmra.mxu0 %v2502
  %v4688 = vpop.f32.mrf.mxu0
  %v4689 = vadd.f32 %v4520, %v4688
  %v4690 = vpop.f32.mrf.mxu0
  %v4691 = vadd.f32 %v4522, %v4690
  %4692 = vmatmul.bf16.gmra.mxu0 %v2503
  %v4693 = vpop.f32.mrf.mxu0
  %v4694 = vadd.f32 %v4525, %v4693
  %v4695 = vpop.f32.mrf.mxu0
  %v4696 = vadd.f32 %v4527, %v4695
  %4697 = vmatmul.bf16.gmra.mxu0 %v2504
  %v4698 = vpop.f32.mrf.mxu0
  %v4699 = vadd.f32 %v4530, %v4698
  %v4700 = vpop.f32.mrf.mxu0
  %v4701 = vadd.f32 %v4532, %v4700
  %4702 = vdwg.mxu0
  %4703 = vmatpush.bf16.msra.mxu0 %v3600
  %4704 = vmatpush.bf16.msra.mxu0 %v3599
  %4705 = vmatpush.bf16.msra.mxu0 %v3598
  %4706 = vmatpush.bf16.msra.mxu0 %v3597
  %4707 = vmatpush.bf16.msra.mxu0 %v3596
  %4708 = vmatpush.bf16.msra.mxu0 %v3595
  %4709 = vmatpush.bf16.msra.mxu0 %v3594
  %4710 = vmatpush.bf16.msra.mxu0 %v3593
  %4711 = vmatmul.bf16.gmra.mxu0 %v2665
  %v4712 = vpop.f32.mrf.mxu0
  %v4713 = vadd.f32 %v4544, %v4712
  %v4714 = vpop.f32.mrf.mxu0
  %v4715 = vadd.f32 %v4546, %v4714
  %4716 = vmatmul.bf16.gmra.mxu0 %v2666
  %v4717 = vpop.f32.mrf.mxu0
  %v4718 = vadd.f32 %v4549, %v4717
  %v4719 = vpop.f32.mrf.mxu0
  %v4720 = vadd.f32 %v4551, %v4719
  %4721 = vmatmul.bf16.gmra.mxu0 %v2667
  %v4722 = vpop.f32.mrf.mxu0
  %v4723 = vadd.f32 %v4554, %v4722
  %v4724 = vpop.f32.mrf.mxu0
  %v4725 = vadd.f32 %v4556, %v4724
  %4726 = vmatmul.bf16.gmra.mxu0 %v2668
  %v4727 = vpop.f32.mrf.mxu0
  %v4728 = vadd.f32 %v4559, %v4727
  %v4729 = vpop.f32.mrf.mxu0
  %v4730 = vadd.f32 %v4561, %v4729
  %4731 = vmatmul.bf16.gmra.mxu0 %v2669
  %v4732 = vpop.f32.mrf.mxu0
  %v4733 = vadd.f32 %v4564, %v4732
  %v4734 = vpop.f32.mrf.mxu0
  %v4735 = vadd.f32 %v4566, %v4734
  %4736 = vmatmul.bf16.gmra.mxu0 %v2670
  %v4737 = vpop.f32.mrf.mxu0
  %v4738 = vadd.f32 %v4569, %v4737
  %v4739 = vpop.f32.mrf.mxu0
  %v4740 = vadd.f32 %v4571, %v4739
  %4741 = vmatmul.bf16.gmra.mxu0 %v2671
  %v4742 = vpop.f32.mrf.mxu0
  %v4743 = vadd.f32 %v4574, %v4742
  %v4744 = vpop.f32.mrf.mxu0
  %v4745 = vadd.f32 %v4576, %v4744
  %4746 = vmatmul.bf16.gmra.mxu0 %v2672
  %v4747 = vpop.f32.mrf.mxu0
  %v4748 = vadd.f32 %v4579, %v4747
  %v4749 = vpop.f32.mrf.mxu0
  %v4750 = vadd.f32 %v4581, %v4749
  %4751 = vmatmul.bf16.gmra.mxu0 %v2673
  %v4752 = vpop.f32.mrf.mxu0
  %v4753 = vadd.f32 %v4584, %v4752
  %v4754 = vpop.f32.mrf.mxu0
  %v4755 = vadd.f32 %v4586, %v4754
  %4756 = vmatmul.bf16.gmra.mxu0 %v2674
  %v4757 = vpop.f32.mrf.mxu0
  %v4758 = vadd.f32 %v4589, %v4757
  %v4759 = vpop.f32.mrf.mxu0
  %v4760 = vadd.f32 %v4591, %v4759
  %4761 = vmatmul.bf16.gmra.mxu0 %v2675
  %v4762 = vpop.f32.mrf.mxu0
  %v4763 = vadd.f32 %v4594, %v4762
  %v4764 = vpop.f32.mrf.mxu0
  %v4765 = vadd.f32 %v4596, %v4764
  %4766 = vmatmul.bf16.gmra.mxu0 %v2676
  %v4767 = vpop.f32.mrf.mxu0
  %v4768 = vadd.f32 %v4599, %v4767
  %v4769 = vpop.f32.mrf.mxu0
  %v4770 = vadd.f32 %v4601, %v4769
  %4771 = vmatmul.bf16.gmra.mxu0 %v2677
  %v4772 = vpop.f32.mrf.mxu0
  %v4773 = vadd.f32 %v4604, %v4772
  %v4774 = vpop.f32.mrf.mxu0
  %v4775 = vadd.f32 %v4606, %v4774
  %4776 = vmatmul.bf16.gmra.mxu0 %v2678
  %v4777 = vpop.f32.mrf.mxu0
  %v4778 = vadd.f32 %v4609, %v4777
  %v4779 = vpop.f32.mrf.mxu0
  %v4780 = vadd.f32 %v4611, %v4779
  %4781 = vmatmul.bf16.gmra.mxu0 %v2679
  %v4782 = vpop.f32.mrf.mxu0
  %v4783 = vadd.f32 %v4614, %v4782
  %v4784 = vpop.f32.mrf.mxu0
  %v4785 = vadd.f32 %v4616, %v4784
  %4786 = vmatmul.bf16.gmra.mxu0 %v2680
  %v4787 = vpop.f32.mrf.mxu0
  %v4788 = vadd.f32 %v4619, %v4787
  %v4789 = vpop.f32.mrf.mxu0
  %v4790 = vadd.f32 %v4621, %v4789
  %4791 = vmatmul.bf16.gmra.mxu0 %v2681
  %v4792 = vpop.f32.mrf.mxu0
  %v4793 = vadd.f32 %v4624, %v4792
  %v4794 = vpop.f32.mrf.mxu0
  %v4795 = vadd.f32 %v4626, %v4794
  %4796 = vmatmul.bf16.gmra.mxu0 %v2682
  %v4797 = vpop.f32.mrf.mxu0
  %v4798 = vadd.f32 %v4629, %v4797
  %v4799 = vpop.f32.mrf.mxu0
  %v4800 = vadd.f32 %v4631, %v4799
  %4801 = vmatmul.bf16.gmra.mxu0 %v2683
  %v4802 = vpop.f32.mrf.mxu0
  %v4803 = vadd.f32 %v4634, %v4802
  %v4804 = vpop.f32.mrf.mxu0
  %v4805 = vadd.f32 %v4636, %v4804
  %4806 = vmatmul.bf16.gmra.mxu0 %v2684
  %v4807 = vpop.f32.mrf.mxu0
  %v4808 = vadd.f32 %v4639, %v4807
  %v4809 = vpop.f32.mrf.mxu0
  %v4810 = vadd.f32 %v4641, %v4809
  %4811 = vmatmul.bf16.gmra.mxu0 %v2685
  %v4812 = vpop.f32.mrf.mxu0
  %v4813 = vadd.f32 %v4644, %v4812
  %v4814 = vpop.f32.mrf.mxu0
  %v4815 = vadd.f32 %v4646, %v4814
  %4816 = vmatmul.bf16.gmra.mxu0 %v2686
  %v4817 = vpop.f32.mrf.mxu0
  %v4818 = vadd.f32 %v4649, %v4817
  %v4819 = vpop.f32.mrf.mxu0
  %v4820 = vadd.f32 %v4651, %v4819
  %4821 = vmatmul.bf16.gmra.mxu0 %v2687
  %v4822 = vpop.f32.mrf.mxu0
  %v4823 = vadd.f32 %v4654, %v4822
  %v4824 = vpop.f32.mrf.mxu0
  %v4825 = vadd.f32 %v4656, %v4824
  %4826 = vmatmul.bf16.gmra.mxu0 %v2688
  %v4827 = vpop.f32.mrf.mxu0
  %v4828 = vadd.f32 %v4659, %v4827
  %v4829 = vpop.f32.mrf.mxu0
  %v4830 = vadd.f32 %v4661, %v4829
  %4831 = vmatmul.bf16.gmra.mxu0 %v2689
  %v4832 = vpop.f32.mrf.mxu0
  %v4833 = vadd.f32 %v4664, %v4832
  %v4834 = vpop.f32.mrf.mxu0
  %v4835 = vadd.f32 %v4666, %v4834
  %4836 = vmatmul.bf16.gmra.mxu0 %v2690
  %v4837 = vpop.f32.mrf.mxu0
  %v4838 = vadd.f32 %v4669, %v4837
  %v4839 = vpop.f32.mrf.mxu0
  %v4840 = vadd.f32 %v4671, %v4839
  %4841 = vmatmul.bf16.gmra.mxu0 %v2691
  %v4842 = vpop.f32.mrf.mxu0
  %v4843 = vadd.f32 %v4674, %v4842
  %v4844 = vpop.f32.mrf.mxu0
  %v4845 = vadd.f32 %v4676, %v4844
  %4846 = vmatmul.bf16.gmra.mxu0 %v2692
  %v4847 = vpop.f32.mrf.mxu0
  %v4848 = vadd.f32 %v4679, %v4847
  %v4849 = vpop.f32.mrf.mxu0
  %v4850 = vadd.f32 %v4681, %v4849
  %4851 = vmatmul.bf16.gmra.mxu0 %v2693
  %v4852 = vpop.f32.mrf.mxu0
  %v4853 = vadd.f32 %v4684, %v4852
  %v4854 = vpop.f32.mrf.mxu0
  %v4855 = vadd.f32 %v4686, %v4854
  %4856 = vmatmul.bf16.gmra.mxu0 %v2694
  %v4857 = vpop.f32.mrf.mxu0
  %v4858 = vadd.f32 %v4689, %v4857
  %v4859 = vpop.f32.mrf.mxu0
  %v4860 = vadd.f32 %v4691, %v4859
  %4861 = vmatmul.bf16.gmra.mxu0 %v2695
  %v4862 = vpop.f32.mrf.mxu0
  %v4863 = vadd.f32 %v4694, %v4862
  %v4864 = vpop.f32.mrf.mxu0
  %v4865 = vadd.f32 %v4696, %v4864
  %4866 = vmatmul.bf16.gmra.mxu0 %v2696
  %v4867 = vpop.f32.mrf.mxu0
  %v4868 = vadd.f32 %v4699, %v4867
  %v4869 = vpop.f32.mrf.mxu0
  %v4870 = vadd.f32 %v4701, %v4869
  %4871 = vdwg.mxu0
  %4872 = vmatpush.bf16.msra.mxu0 %v3608
  %4873 = vmatpush.bf16.msra.mxu0 %v3607
  %4874 = vmatpush.bf16.msra.mxu0 %v3606
  %4875 = vmatpush.bf16.msra.mxu0 %v3605
  %4876 = vmatpush.bf16.msra.mxu0 %v3604
  %4877 = vmatpush.bf16.msra.mxu0 %v3603
  %4878 = vmatpush.bf16.msra.mxu0 %v3602
  %4879 = vmatpush.bf16.msra.mxu0 %v3601
  %4880 = vmatmul.bf16.gmra.mxu0 %v2857
  %v4881 = vpop.f32.mrf.mxu0
  %v4882 = vadd.f32 %v4713, %v4881
  %v4883 = vpop.f32.mrf.mxu0
  %v4884 = vadd.f32 %v4715, %v4883
  %4885 = vmatmul.bf16.gmra.mxu0 %v2858
  %v4886 = vpop.f32.mrf.mxu0
  %v4887 = vadd.f32 %v4718, %v4886
  %v4888 = vpop.f32.mrf.mxu0
  %v4889 = vadd.f32 %v4720, %v4888
  %4890 = vmatmul.bf16.gmra.mxu0 %v2859
  %v4891 = vpop.f32.mrf.mxu0
  %v4892 = vadd.f32 %v4723, %v4891
  %v4893 = vpop.f32.mrf.mxu0
  %v4894 = vadd.f32 %v4725, %v4893
  %4895 = vmatmul.bf16.gmra.mxu0 %v2860
  %v4896 = vpop.f32.mrf.mxu0
  %v4897 = vadd.f32 %v4728, %v4896
  %v4898 = vpop.f32.mrf.mxu0
  %v4899 = vadd.f32 %v4730, %v4898
  %4900 = vmatmul.bf16.gmra.mxu0 %v2861
  %v4901 = vpop.f32.mrf.mxu0
  %v4902 = vadd.f32 %v4733, %v4901
  %v4903 = vpop.f32.mrf.mxu0
  %v4904 = vadd.f32 %v4735, %v4903
  %4905 = vmatmul.bf16.gmra.mxu0 %v2862
  %v4906 = vpop.f32.mrf.mxu0
  %v4907 = vadd.f32 %v4738, %v4906
  %v4908 = vpop.f32.mrf.mxu0
  %v4909 = vadd.f32 %v4740, %v4908
  %4910 = vmatmul.bf16.gmra.mxu0 %v2863
  %v4911 = vpop.f32.mrf.mxu0
  %v4912 = vadd.f32 %v4743, %v4911
  %v4913 = vpop.f32.mrf.mxu0
  %v4914 = vadd.f32 %v4745, %v4913
  %4915 = vmatmul.bf16.gmra.mxu0 %v2864
  %v4916 = vpop.f32.mrf.mxu0
  %v4917 = vadd.f32 %v4748, %v4916
  %v4918 = vpop.f32.mrf.mxu0
  %v4919 = vadd.f32 %v4750, %v4918
  %4920 = vmatmul.bf16.gmra.mxu0 %v2865
  %v4921 = vpop.f32.mrf.mxu0
  %v4922 = vadd.f32 %v4753, %v4921
  %v4923 = vpop.f32.mrf.mxu0
  %v4924 = vadd.f32 %v4755, %v4923
  %4925 = vmatmul.bf16.gmra.mxu0 %v2866
  %v4926 = vpop.f32.mrf.mxu0
  %v4927 = vadd.f32 %v4758, %v4926
  %v4928 = vpop.f32.mrf.mxu0
  %v4929 = vadd.f32 %v4760, %v4928
  %4930 = vmatmul.bf16.gmra.mxu0 %v2867
  %v4931 = vpop.f32.mrf.mxu0
  %v4932 = vadd.f32 %v4763, %v4931
  %v4933 = vpop.f32.mrf.mxu0
  %v4934 = vadd.f32 %v4765, %v4933
  %4935 = vmatmul.bf16.gmra.mxu0 %v2868
  %v4936 = vpop.f32.mrf.mxu0
  %v4937 = vadd.f32 %v4768, %v4936
  %v4938 = vpop.f32.mrf.mxu0
  %v4939 = vadd.f32 %v4770, %v4938
  %4940 = vmatmul.bf16.gmra.mxu0 %v2869
  %v4941 = vpop.f32.mrf.mxu0
  %v4942 = vadd.f32 %v4773, %v4941
  %v4943 = vpop.f32.mrf.mxu0
  %v4944 = vadd.f32 %v4775, %v4943
  %4945 = vmatmul.bf16.gmra.mxu0 %v2870
  %v4946 = vpop.f32.mrf.mxu0
  %v4947 = vadd.f32 %v4778, %v4946
  %v4948 = vpop.f32.mrf.mxu0
  %v4949 = vadd.f32 %v4780, %v4948
  %4950 = vmatmul.bf16.gmra.mxu0 %v2871
  %v4951 = vpop.f32.mrf.mxu0
  %v4952 = vadd.f32 %v4783, %v4951
  %v4953 = vpop.f32.mrf.mxu0
  %v4954 = vadd.f32 %v4785, %v4953
  %4955 = vmatmul.bf16.gmra.mxu0 %v2872
  %v4956 = vpop.f32.mrf.mxu0
  %v4957 = vadd.f32 %v4788, %v4956
  %v4958 = vpop.f32.mrf.mxu0
  %v4959 = vadd.f32 %v4790, %v4958
  %4960 = vmatmul.bf16.gmra.mxu0 %v2873
  %v4961 = vpop.f32.mrf.mxu0
  %v4962 = vadd.f32 %v4793, %v4961
  %v4963 = vpop.f32.mrf.mxu0
  %v4964 = vadd.f32 %v4795, %v4963
  %4965 = vmatmul.bf16.gmra.mxu0 %v2874
  %v4966 = vpop.f32.mrf.mxu0
  %v4967 = vadd.f32 %v4798, %v4966
  %v4968 = vpop.f32.mrf.mxu0
  %v4969 = vadd.f32 %v4800, %v4968
  %4970 = vmatmul.bf16.gmra.mxu0 %v2875
  %v4971 = vpop.f32.mrf.mxu0
  %v4972 = vadd.f32 %v4803, %v4971
  %v4973 = vpop.f32.mrf.mxu0
  %v4974 = vadd.f32 %v4805, %v4973
  %4975 = vmatmul.bf16.gmra.mxu0 %v2876
  %v4976 = vpop.f32.mrf.mxu0
  %v4977 = vadd.f32 %v4808, %v4976
  %v4978 = vpop.f32.mrf.mxu0
  %v4979 = vadd.f32 %v4810, %v4978
  %4980 = vmatmul.bf16.gmra.mxu0 %v2877
  %v4981 = vpop.f32.mrf.mxu0
  %v4982 = vadd.f32 %v4813, %v4981
  %v4983 = vpop.f32.mrf.mxu0
  %v4984 = vadd.f32 %v4815, %v4983
  %4985 = vmatmul.bf16.gmra.mxu0 %v2878
  %v4986 = vpop.f32.mrf.mxu0
  %v4987 = vadd.f32 %v4818, %v4986
  %v4988 = vpop.f32.mrf.mxu0
  %v4989 = vadd.f32 %v4820, %v4988
  %4990 = vmatmul.bf16.gmra.mxu0 %v2879
  %v4991 = vpop.f32.mrf.mxu0
  %v4992 = vadd.f32 %v4823, %v4991
  %v4993 = vpop.f32.mrf.mxu0
  %v4994 = vadd.f32 %v4825, %v4993
  %4995 = vmatmul.bf16.gmra.mxu0 %v2880
  %v4996 = vpop.f32.mrf.mxu0
  %v4997 = vadd.f32 %v4828, %v4996
  %v4998 = vpop.f32.mrf.mxu0
  %v4999 = vadd.f32 %v4830, %v4998
  %5000 = vmatmul.bf16.gmra.mxu0 %v2881
  %v5001 = vpop.f32.mrf.mxu0
  %v5002 = vadd.f32 %v4833, %v5001
  %v5003 = vpop.f32.mrf.mxu0
  %v5004 = vadd.f32 %v4835, %v5003
  %5005 = vmatmul.bf16.gmra.mxu0 %v2882
  %v5006 = vpop.f32.mrf.mxu0
  %v5007 = vadd.f32 %v4838, %v5006
  %v5008 = vpop.f32.mrf.mxu0
  %v5009 = vadd.f32 %v4840, %v5008
  %5010 = vmatmul.bf16.gmra.mxu0 %v2883
  %v5011 = vpop.f32.mrf.mxu0
  %v5012 = vadd.f32 %v4843, %v5011
  %v5013 = vpop.f32.mrf.mxu0
  %v5014 = vadd.f32 %v4845, %v5013
  %5015 = vmatmul.bf16.gmra.mxu0 %v2884
  %v5016 = vpop.f32.mrf.mxu0
  %v5017 = vadd.f32 %v4848, %v5016
  %v5018 = vpop.f32.mrf.mxu0
  %v5019 = vadd.f32 %v4850, %v5018
  %5020 = vmatmul.bf16.gmra.mxu0 %v2885
  %v5021 = vpop.f32.mrf.mxu0
  %v5022 = vadd.f32 %v4853, %v5021
  %v5023 = vpop.f32.mrf.mxu0
  %v5024 = vadd.f32 %v4855, %v5023
  %5025 = vmatmul.bf16.gmra.mxu0 %v2886
  %v5026 = vpop.f32.mrf.mxu0
  %v5027 = vadd.f32 %v4858, %v5026
  %v5028 = vpop.f32.mrf.mxu0
  %v5029 = vadd.f32 %v4860, %v5028
  %5030 = vmatmul.bf16.gmra.mxu0 %v2887
  %v5031 = vpop.f32.mrf.mxu0
  %v5032 = vadd.f32 %v4863, %v5031
  %v5033 = vpop.f32.mrf.mxu0
  %v5034 = vadd.f32 %v4865, %v5033
  %5035 = vmatmul.bf16.gmra.mxu0 %v2888
  %v5036 = vpop.f32.mrf.mxu0
  %v5037 = vadd.f32 %v4868, %v5036
  %v5038 = vpop.f32.mrf.mxu0
  %v5039 = vadd.f32 %v4870, %v5038
  %5040 = vdwg.mxu0
  %5041 = vmatpush.bf16.msra.mxu0 %v3616
  %5042 = vmatpush.bf16.msra.mxu0 %v3615
  %5043 = vmatpush.bf16.msra.mxu0 %v3614
  %5044 = vmatpush.bf16.msra.mxu0 %v3613
  %5045 = vmatpush.bf16.msra.mxu0 %v3612
  %5046 = vmatpush.bf16.msra.mxu0 %v3611
  %5047 = vmatpush.bf16.msra.mxu0 %v3610
  %5048 = vmatpush.bf16.msra.mxu0 %v3609
  %5049 = vmatmul.bf16.gmra.mxu0 %v3049
  %v5050 = vpop.f32.mrf.mxu0
  %v5051 = vadd.f32 %v4882, %v5050
  %v5052 = vpop.f32.mrf.mxu0
  %v5053 = vadd.f32 %v4884, %v5052
  %5054 = vmatmul.bf16.gmra.mxu0 %v3050
  %v5055 = vpop.f32.mrf.mxu0
  %v5056 = vadd.f32 %v4887, %v5055
  %v5057 = vpop.f32.mrf.mxu0
  %v5058 = vadd.f32 %v4889, %v5057
  %5059 = vmatmul.bf16.gmra.mxu0 %v3051
  %v5060 = vpop.f32.mrf.mxu0
  %v5061 = vadd.f32 %v4892, %v5060
  %v5062 = vpop.f32.mrf.mxu0
  %v5063 = vadd.f32 %v4894, %v5062
  %5064 = vmatmul.bf16.gmra.mxu0 %v3052
  %v5065 = vpop.f32.mrf.mxu0
  %v5066 = vadd.f32 %v4897, %v5065
  %v5067 = vpop.f32.mrf.mxu0
  %v5068 = vadd.f32 %v4899, %v5067
  %5069 = vmatmul.bf16.gmra.mxu0 %v3053
  %v5070 = vpop.f32.mrf.mxu0
  %v5071 = vadd.f32 %v4902, %v5070
  %v5072 = vpop.f32.mrf.mxu0
  %v5073 = vadd.f32 %v4904, %v5072
  %5074 = vmatmul.bf16.gmra.mxu0 %v3054
  %v5075 = vpop.f32.mrf.mxu0
  %v5076 = vadd.f32 %v4907, %v5075
  %v5077 = vpop.f32.mrf.mxu0
  %v5078 = vadd.f32 %v4909, %v5077
  %5079 = vmatmul.bf16.gmra.mxu0 %v3055
  %v5080 = vpop.f32.mrf.mxu0
  %v5081 = vadd.f32 %v4912, %v5080
  %v5082 = vpop.f32.mrf.mxu0
  %v5083 = vadd.f32 %v4914, %v5082
  %5084 = vmatmul.bf16.gmra.mxu0 %v3056
  %v5085 = vpop.f32.mrf.mxu0
  %v5086 = vadd.f32 %v4917, %v5085
  %v5087 = vpop.f32.mrf.mxu0
  %v5088 = vadd.f32 %v4919, %v5087
  %5089 = vmatmul.bf16.gmra.mxu0 %v3057
  %v5090 = vpop.f32.mrf.mxu0
  %v5091 = vadd.f32 %v4922, %v5090
  %v5092 = vpop.f32.mrf.mxu0
  %v5093 = vadd.f32 %v4924, %v5092
  %5094 = vmatmul.bf16.gmra.mxu0 %v3058
  %v5095 = vpop.f32.mrf.mxu0
  %v5096 = vadd.f32 %v4927, %v5095
  %v5097 = vpop.f32.mrf.mxu0
  %v5098 = vadd.f32 %v4929, %v5097
  %5099 = vmatmul.bf16.gmra.mxu0 %v3059
  %v5100 = vpop.f32.mrf.mxu0
  %v5101 = vadd.f32 %v4932, %v5100
  %v5102 = vpop.f32.mrf.mxu0
  %v5103 = vadd.f32 %v4934, %v5102
  %5104 = vmatmul.bf16.gmra.mxu0 %v3060
  %v5105 = vpop.f32.mrf.mxu0
  %v5106 = vadd.f32 %v4937, %v5105
  %v5107 = vpop.f32.mrf.mxu0
  %v5108 = vadd.f32 %v4939, %v5107
  %5109 = vmatmul.bf16.gmra.mxu0 %v3061
  %v5110 = vpop.f32.mrf.mxu0
  %v5111 = vadd.f32 %v4942, %v5110
  %v5112 = vpop.f32.mrf.mxu0
  %v5113 = vadd.f32 %v4944, %v5112
  %5114 = vmatmul.bf16.gmra.mxu0 %v3062
  %v5115 = vpop.f32.mrf.mxu0
  %v5116 = vadd.f32 %v4947, %v5115
  %v5117 = vpop.f32.mrf.mxu0
  %v5118 = vadd.f32 %v4949, %v5117
  %5119 = vmatmul.bf16.gmra.mxu0 %v3063
  %v5120 = vpop.f32.mrf.mxu0
  %v5121 = vadd.f32 %v4952, %v5120
  %v5122 = vpop.f32.mrf.mxu0
  %v5123 = vadd.f32 %v4954, %v5122
  %5124 = vmatmul.bf16.gmra.mxu0 %v3064
  %v5125 = vpop.f32.mrf.mxu0
  %v5126 = vadd.f32 %v4957, %v5125
  %v5127 = vpop.f32.mrf.mxu0
  %v5128 = vadd.f32 %v4959, %v5127
  %5129 = vmatmul.bf16.gmra.mxu0 %v3065
  %v5130 = vpop.f32.mrf.mxu0
  %v5131 = vadd.f32 %v4962, %v5130
  %v5132 = vpop.f32.mrf.mxu0
  %v5133 = vadd.f32 %v4964, %v5132
  %5134 = vmatmul.bf16.gmra.mxu0 %v3066
  %v5135 = vpop.f32.mrf.mxu0
  %v5136 = vadd.f32 %v4967, %v5135
  %v5137 = vpop.f32.mrf.mxu0
  %v5138 = vadd.f32 %v4969, %v5137
  %5139 = vmatmul.bf16.gmra.mxu0 %v3067
  %v5140 = vpop.f32.mrf.mxu0
  %v5141 = vadd.f32 %v4972, %v5140
  %v5142 = vpop.f32.mrf.mxu0
  %v5143 = vadd.f32 %v4974, %v5142
  %5144 = vmatmul.bf16.gmra.mxu0 %v3068
  %v5145 = vpop.f32.mrf.mxu0
  %v5146 = vadd.f32 %v4977, %v5145
  %v5147 = vpop.f32.mrf.mxu0
  %v5148 = vadd.f32 %v4979, %v5147
  %5149 = vmatmul.bf16.gmra.mxu0 %v3069
  %v5150 = vpop.f32.mrf.mxu0
  %v5151 = vadd.f32 %v4982, %v5150
  %v5152 = vpop.f32.mrf.mxu0
  %v5153 = vadd.f32 %v4984, %v5152
  %5154 = vmatmul.bf16.gmra.mxu0 %v3070
  %v5155 = vpop.f32.mrf.mxu0
  %v5156 = vadd.f32 %v4987, %v5155
  %v5157 = vpop.f32.mrf.mxu0
  %v5158 = vadd.f32 %v4989, %v5157
  %5159 = vmatmul.bf16.gmra.mxu0 %v3071
  %v5160 = vpop.f32.mrf.mxu0
  %v5161 = vadd.f32 %v4992, %v5160
  %v5162 = vpop.f32.mrf.mxu0
  %v5163 = vadd.f32 %v4994, %v5162
  %5164 = vmatmul.bf16.gmra.mxu0 %v3072
  %v5165 = vpop.f32.mrf.mxu0
  %v5166 = vadd.f32 %v4997, %v5165
  %v5167 = vpop.f32.mrf.mxu0
  %v5168 = vadd.f32 %v4999, %v5167
  %5169 = vmatmul.bf16.gmra.mxu0 %v3073
  %v5170 = vpop.f32.mrf.mxu0
  %v5171 = vadd.f32 %v5002, %v5170
  %v5172 = vpop.f32.mrf.mxu0
  %v5173 = vadd.f32 %v5004, %v5172
  %5174 = vmatmul.bf16.gmra.mxu0 %v3074
  %v5175 = vpop.f32.mrf.mxu0
  %v5176 = vadd.f32 %v5007, %v5175
  %v5177 = vpop.f32.mrf.mxu0
  %v5178 = vadd.f32 %v5009, %v5177
  %5179 = vmatmul.bf16.gmra.mxu0 %v3075
  %v5180 = vpop.f32.mrf.mxu0
  %v5181 = vadd.f32 %v5012, %v5180
  %v5182 = vpop.f32.mrf.mxu0
  %v5183 = vadd.f32 %v5014, %v5182
  %5184 = vmatmul.bf16.gmra.mxu0 %v3076
  %v5185 = vpop.f32.mrf.mxu0
  %v5186 = vadd.f32 %v5017, %v5185
  %v5187 = vpop.f32.mrf.mxu0
  %v5188 = vadd.f32 %v5019, %v5187
  %5189 = vmatmul.bf16.gmra.mxu0 %v3077
  %v5190 = vpop.f32.mrf.mxu0
  %v5191 = vadd.f32 %v5022, %v5190
  %v5192 = vpop.f32.mrf.mxu0
  %v5193 = vadd.f32 %v5024, %v5192
  %5194 = vmatmul.bf16.gmra.mxu0 %v3078
  %v5195 = vpop.f32.mrf.mxu0
  %v5196 = vadd.f32 %v5027, %v5195
  %v5197 = vpop.f32.mrf.mxu0
  %v5198 = vadd.f32 %v5029, %v5197
  %5199 = vmatmul.bf16.gmra.mxu0 %v3079
  %v5200 = vpop.f32.mrf.mxu0
  %v5201 = vadd.f32 %v5032, %v5200
  %v5202 = vpop.f32.mrf.mxu0
  %v5203 = vadd.f32 %v5034, %v5202
  %5204 = vmatmul.bf16.gmra.mxu0 %v3080
  %v5205 = vpop.f32.mrf.mxu0
  %v5206 = vadd.f32 %v5037, %v5205
  %v5207 = vpop.f32.mrf.mxu0
  %v5208 = vadd.f32 %v5039, %v5207
  %5209 = vdwg.mxu0
  %v5210 = vld [vmem:[%s3] sm:$0x1]
  %v5211 = vld [vmem:[%s4] sm:$0x1]
  %v5212 = vadd.f32 %v5051, %v5053
  %v5213 = vadd.f32 %v5212, %v5056
  %v5214 = vadd.f32 %v5213, %v5058
  %v5215 = vadd.f32 %v5214, %v5061
  %v5216 = vadd.f32 %v5215, %v5063
  %v5217 = vadd.f32 %v5216, %v5066
  %v5218 = vadd.f32 %v5217, %v5068
  %v5219 = vadd.f32 %v5218, %v5071
  %v5220 = vadd.f32 %v5219, %v5073
  %v5221 = vadd.f32 %v5220, %v5076
  %v5222 = vadd.f32 %v5221, %v5078
  %v5223 = vadd.f32 %v5222, %v5081
  %v5224 = vadd.f32 %v5223, %v5083
  %v5225 = vadd.f32 %v5224, %v5086
  %v5226 = vadd.f32 %v5225, %v5088
  %v5227 = vadd.f32 %v5226, %v5091
  %v5228 = vadd.f32 %v5227, %v5093
  %v5229 = vadd.f32 %v5228, %v5096
  %v5230 = vadd.f32 %v5229, %v5098
  %v5231 = vadd.f32 %v5230, %v5101
  %v5232 = vadd.f32 %v5231, %v5103
  %v5233 = vadd.f32 %v5232, %v5106
  %v5234 = vadd.f32 %v5233, %v5108
  %v5235 = vadd.f32 %v5234, %v5111
  %v5236 = vadd.f32 %v5235, %v5113
  %v5237 = vadd.f32 %v5236, %v5116
  %v5238 = vadd.f32 %v5237, %v5118
  %v5239 = vadd.f32 %v5238, %v5121
  %v5240 = vadd.f32 %v5239, %v5123
  %v5241 = vadd.f32 %v5240, %v5126
  %v5242 = vadd.f32 %v5241, %v5128
  %v5243 = vadd.f32 %v5242, %v5131
  %v5244 = vadd.f32 %v5243, %v5133
  %v5245 = vadd.f32 %v5244, %v5136
  %v5246 = vadd.f32 %v5245, %v5138
  %v5247 = vadd.f32 %v5246, %v5141
  %v5248 = vadd.f32 %v5247, %v5143
  %v5249 = vadd.f32 %v5248, %v5146
  %v5250 = vadd.f32 %v5249, %v5148
  %v5251 = vadd.f32 %v5250, %v5151
  %v5252 = vadd.f32 %v5251, %v5153
  %v5253 = vadd.f32 %v5252, %v5156
  %v5254 = vadd.f32 %v5253, %v5158
  %v5255 = vadd.f32 %v5254, %v5161
  %v5256 = vadd.f32 %v5255, %v5163
  %v5257 = vadd.f32 %v5256, %v5166
  %v5258 = vadd.f32 %v5257, %v5168
  %v5259 = vadd.f32 %v5258, %v5171
  %v5260 = vadd.f32 %v5259, %v5173
  %v5261 = vadd.f32 %v5260, %v5176
  %v5262 = vadd.f32 %v5261, %v5178
  %v5263 = vadd.f32 %v5262, %v5181
  %v5264 = vadd.f32 %v5263, %v5183
  %v5265 = vadd.f32 %v5264, %v5186
  %v5266 = vadd.f32 %v5265, %v5188
  %v5267 = vadd.f32 %v5266, %v5191
  %v5268 = vadd.f32 %v5267, %v5193
  %v5269 = vadd.f32 %v5268, %v5196
  %v5270 = vadd.f32 %v5269, %v5198
  %v5271 = vadd.f32 %v5270, %v5201
  %v5272 = vadd.f32 %v5271, %v5203
  %v5273 = vadd.f32 %v5272, %v5206
  %v5274 = vadd.f32 %v5273, %v5208
  %v5275 = vrot.slane %v5274, 4
  %v5276 = vadd.f32 %v5274, %v5275
  %v5277 = vrot.slane %v5276, 2
  %v5278 = vadd.f32 %v5276, %v5277
  %v5279 = vrot.slane %v5278, 1
  %v5280 = vadd.f32 %v5278, %v5279
  %v5281 = vmul.f32 %v5051, %v5051
  %v5282 = vmul.f32 %v5053, %v5053
  %v5283 = vmul.f32 %v5056, %v5056
  %v5284 = vmul.f32 %v5058, %v5058
  %v5285 = vmul.f32 %v5061, %v5061
  %v5286 = vmul.f32 %v5063, %v5063
  %v5287 = vmul.f32 %v5066, %v5066
  %v5288 = vmul.f32 %v5068, %v5068
  %v5289 = vmul.f32 %v5071, %v5071
  %v5290 = vmul.f32 %v5073, %v5073
  %v5291 = vmul.f32 %v5076, %v5076
  %v5292 = vmul.f32 %v5078, %v5078
  %v5293 = vmul.f32 %v5081, %v5081
  %v5294 = vmul.f32 %v5083, %v5083
  %v5295 = vmul.f32 %v5086, %v5086
  %v5296 = vmul.f32 %v5088, %v5088
  %v5297 = vmul.f32 %v5091, %v5091
  %v5298 = vmul.f32 %v5093, %v5093
  %v5299 = vmul.f32 %v5096, %v5096
  %v5300 = vmul.f32 %v5098, %v5098
  %v5301 = vmul.f32 %v5101, %v5101
  %v5302 = vmul.f32 %v5103, %v5103
  %v5303 = vmul.f32 %v5106, %v5106
  %v5304 = vmul.f32 %v5108, %v5108
  %v5305 = vmul.f32 %v5111, %v5111
  %v5306 = vmul.f32 %v5113, %v5113
  %v5307 = vmul.f32 %v5116, %v5116
  %v5308 = vmul.f32 %v5118, %v5118
  %v5309 = vmul.f32 %v5121, %v5121
  %v5310 = vmul.f32 %v5123, %v5123
  %v5311 = vmul.f32 %v5126, %v5126
  %v5312 = vmul.f32 %v5128, %v5128
  %v5313 = vmul.f32 %v5131, %v5131
  %v5314 = vmul.f32 %v5133, %v5133
  %v5315 = vmul.f32 %v5136, %v5136
  %v5316 = vmul.f32 %v5138, %v5138
  %v5317 = vmul.f32 %v5141, %v5141
  %v5318 = vmul.f32 %v5143, %v5143
  %v5319 = vmul.f32 %v5146, %v5146
  %v5320 = vmul.f32 %v5148, %v5148
  %v5321 = vmul.f32 %v5151, %v5151
  %v5322 = vmul.f32 %v5153, %v5153
  %v5323 = vmul.f32 %v5156, %v5156
  %v5324 = vmul.f32 %v5158, %v5158
  %v5325 = vmul.f32 %v5161, %v5161
  %v5326 = vmul.f32 %v5163, %v5163
  %v5327 = vmul.f32 %v5166, %v5166
  %v5328 = vmul.f32 %v5168, %v5168
  %v5329 = vmul.f32 %v5171, %v5171
  %v5330 = vmul.f32 %v5173, %v5173
  %v5331 = vmul.f32 %v5176, %v5176
  %v5332 = vmul.f32 %v5178, %v5178
  %v5333 = vmul.f32 %v5181, %v5181
  %v5334 = vmul.f32 %v5183, %v5183
  %v5335 = vmul.f32 %v5186, %v5186
  %v5336 = vmul.f32 %v5188, %v5188
  %v5337 = vmul.f32 %v5191, %v5191
  %v5338 = vmul.f32 %v5193, %v5193
  %v5339 = vmul.f32 %v5196, %v5196
  %v5340 = vmul.f32 %v5198, %v5198
  %v5341 = vmul.f32 %v5201, %v5201
  %v5342 = vmul.f32 %v5203, %v5203
  %v5343 = vmul.f32 %v5206, %v5206
  %v5344 = vmul.f32 %v5208, %v5208
  %v5345 = vadd.f32 %v5281, %v5282
  %v5346 = vadd.f32 %v5345, %v5283
  %v5347 = vadd.f32 %v5346, %v5284
  %v5348 = vadd.f32 %v5347, %v5285
  %v5349 = vadd.f32 %v5348, %v5286
  %v5350 = vadd.f32 %v5349, %v5287
  %v5351 = vadd.f32 %v5350, %v5288
  %v5352 = vadd.f32 %v5351, %v5289
  %v5353 = vadd.f32 %v5352, %v5290
  %v5354 = vadd.f32 %v5353, %v5291
  %v5355 = vadd.f32 %v5354, %v5292
  %v5356 = vadd.f32 %v5355, %v5293
  %v5357 = vadd.f32 %v5356, %v5294
  %v5358 = vadd.f32 %v5357, %v5295
  %v5359 = vadd.f32 %v5358, %v5296
  %v5360 = vadd.f32 %v5359, %v5297
  %v5361 = vadd.f32 %v5360, %v5298
  %v5362 = vadd.f32 %v5361, %v5299
  %v5363 = vadd.f32 %v5362, %v5300
  %v5364 = vadd.f32 %v5363, %v5301
  %v5365 = vadd.f32 %v5364, %v5302
  %v5366 = vadd.f32 %v5365, %v5303
  %v5367 = vadd.f32 %v5366, %v5304
  %v5368 = vadd.f32 %v5367, %v5305
  %v5369 = vadd.f32 %v5368, %v5306
  %v5370 = vadd.f32 %v5369, %v5307
  %v5371 = vadd.f32 %v5370, %v5308
  %v5372 = vadd.f32 %v5371, %v5309
  %v5373 = vadd.f32 %v5372, %v5310
  %v5374 = vadd.f32 %v5373, %v5311
  %v5375 = vadd.f32 %v5374, %v5312
  %v5376 = vadd.f32 %v5375, %v5313
  %v5377 = vadd.f32 %v5376, %v5314
  %v5378 = vadd.f32 %v5377, %v5315
  %v5379 = vadd.f32 %v5378, %v5316
  %v5380 = vadd.f32 %v5379, %v5317
  %v5381 = vadd.f32 %v5380, %v5318
  %v5382 = vadd.f32 %v5381, %v5319
  %v5383 = vadd.f32 %v5382, %v5320
  %v5384 = vadd.f32 %v5383, %v5321
  %v5385 = vadd.f32 %v5384, %v5322
  %v5386 = vadd.f32 %v5385, %v5323
  %v5387 = vadd.f32 %v5386, %v5324
  %v5388 = vadd.f32 %v5387, %v5325
  %v5389 = vadd.f32 %v5388, %v5326
  %v5390 = vadd.f32 %v5389, %v5327
  %v5391 = vadd.f32 %v5390, %v5328
  %v5392 = vadd.f32 %v5391, %v5329
  %v5393 = vadd.f32 %v5392, %v5330
  %v5394 = vadd.f32 %v5393, %v5331
  %v5395 = vadd.f32 %v5394, %v5332
  %v5396 = vadd.f32 %v5395, %v5333
  %v5397 = vadd.f32 %v5396, %v5334
  %v5398 = vadd.f32 %v5397, %v5335
  %v5399 = vadd.f32 %v5398, %v5336
  %v5400 = vadd.f32 %v5399, %v5337
  %v5401 = vadd.f32 %v5400, %v5338
  %v5402 = vadd.f32 %v5401, %v5339
  %v5403 = vadd.f32 %v5402, %v5340
  %v5404 = vadd.f32 %v5403, %v5341
  %v5405 = vadd.f32 %v5404, %v5342
  %v5406 = vadd.f32 %v5405, %v5343
  %v5407 = vadd.f32 %v5406, %v5344
  %v5408 = vrot.slane %v5407, 4
  %v5409 = vadd.f32 %v5407, %v5408
  %v5410 = vrot.slane %v5409, 2
  %v5411 = vadd.f32 %v5409, %v5410
  %v5412 = vrot.slane %v5411, 1
  %v5413 = vadd.f32 %v5411, %v5412
  %v5414 = vmul.f32 %v5280, 0.001953125
  %v5415 = vmul.f32 %v5413, 0.001953125
  %v5416 = vmul.f32 %v5414, %v5414
  %v5417 = vsub.f32 %v5415, %v5416
  %v5418 = vadd.f32 %v5417, 1e-05
  %v5419 = vrsqrt.pop %v5418
  %v5420 = vmul.f32 %v5419, %v5418
  %v5421 = vmul.f32 %v5420, %v5419
  %v5422 = vmul.f32 0.5, %v5421
  %v5423 = vsub.f32 1.5, %v5422
  %v5424 = vmul.f32 %v5419, %v5423
  %vm5425 = vweird.f32 %v5418
  %vm5426 = vweird.f32 %v5419
  %vm5427 = vmor %vm5425, %vm5426
  %v5428 = vsel %vm5427, %v5419, %v5424
  %v5429 = vmul.f32 %v5210, %v5428
  %v5430 = vmul.f32 %v5414, %v5429
  %v5431 = vsub.f32 %v5211, %v5430
  %v5433 = vperm.slane %v5429, 0
  %v5435 = vmul.f32 %v5051, %v5433
  %v5436 = vmul.f32 %v5053, %v5433
  %v5437 = vmul.f32 %v5056, %v5433
  %v5438 = vmul.f32 %v5058, %v5433
  %v5439 = vmul.f32 %v5061, %v5433
  %v5440 = vmul.f32 %v5063, %v5433
  %v5441 = vmul.f32 %v5066, %v5433
  %v5442 = vmul.f32 %v5068, %v5433
  %v5443 = vmul.f32 %v5071, %v5433
  %v5444 = vmul.f32 %v5073, %v5433
  %v5445 = vmul.f32 %v5076, %v5433
  %v5446 = vmul.f32 %v5078, %v5433
  %v5447 = vmul.f32 %v5081, %v5433
  %v5448 = vmul.f32 %v5083, %v5433
  %v5449 = vmul.f32 %v5086, %v5433
  %v5450 = vmul.f32 %v5088, %v5433
  %v5451 = vmul.f32 %v5091, %v5433
  %v5452 = vmul.f32 %v5093, %v5433
  %v5453 = vmul.f32 %v5096, %v5433
  %v5454 = vmul.f32 %v5098, %v5433
  %v5455 = vmul.f32 %v5101, %v5433
  %v5456 = vmul.f32 %v5103, %v5433
  %v5457 = vmul.f32 %v5106, %v5433
  %v5458 = vmul.f32 %v5108, %v5433
  %v5459 = vmul.f32 %v5111, %v5433
  %v5460 = vmul.f32 %v5113, %v5433
  %v5461 = vmul.f32 %v5116, %v5433
  %v5462 = vmul.f32 %v5118, %v5433
  %v5463 = vmul.f32 %v5121, %v5433
  %v5464 = vmul.f32 %v5123, %v5433
  %v5465 = vmul.f32 %v5126, %v5433
  %v5466 = vmul.f32 %v5128, %v5433
  %v5467 = vmul.f32 %v5131, %v5433
  %v5468 = vmul.f32 %v5133, %v5433
  %v5469 = vmul.f32 %v5136, %v5433
  %v5470 = vmul.f32 %v5138, %v5433
  %v5471 = vmul.f32 %v5141, %v5433
  %v5472 = vmul.f32 %v5143, %v5433
  %v5473 = vmul.f32 %v5146, %v5433
  %v5474 = vmul.f32 %v5148, %v5433
  %v5475 = vmul.f32 %v5151, %v5433
  %v5476 = vmul.f32 %v5153, %v5433
  %v5477 = vmul.f32 %v5156, %v5433
  %v5478 = vmul.f32 %v5158, %v5433
  %v5479 = vmul.f32 %v5161, %v5433
  %v5480 = vmul.f32 %v5163, %v5433
  %v5481 = vmul.f32 %v5166, %v5433
  %v5482 = vmul.f32 %v5168, %v5433
  %v5483 = vmul.f32 %v5171, %v5433
  %v5484 = vmul.f32 %v5173, %v5433
  %v5485 = vmul.f32 %v5176, %v5433
  %v5486 = vmul.f32 %v5178, %v5433
  %v5487 = vmul.f32 %v5181, %v5433
  %v5488 = vmul.f32 %v5183, %v5433
  %v5489 = vmul.f32 %v5186, %v5433
  %v5490 = vmul.f32 %v5188, %v5433
  %v5491 = vmul.f32 %v5191, %v5433
  %v5492 = vmul.f32 %v5193, %v5433
  %v5493 = vmul.f32 %v5196, %v5433
  %v5494 = vmul.f32 %v5198, %v5433
  %v5495 = vmul.f32 %v5201, %v5433
  %v5496 = vmul.f32 %v5203, %v5433
  %v5497 = vmul.f32 %v5206, %v5433
  %v5498 = vmul.f32 %v5208, %v5433
  %v5500 = vperm.slane %v5431, 0
  %v5502 = vadd.f32 %v5435, %v5500
  %v5503 = vadd.f32 %v5436, %v5500
  %v5504 = vadd.f32 %v5437, %v5500
  %v5505 = vadd.f32 %v5438, %v5500
  %v5506 = vadd.f32 %v5439, %v5500
  %v5507 = vadd.f32 %v5440, %v5500
  %v5508 = vadd.f32 %v5441, %v5500
  %v5509 = vadd.f32 %v5442, %v5500
  %v5510 = vadd.f32 %v5443, %v5500
  %v5511 = vadd.f32 %v5444, %v5500
  %v5512 = vadd.f32 %v5445, %v5500
  %v5513 = vadd.f32 %v5446, %v5500
  %v5514 = vadd.f32 %v5447, %v5500
  %v5515 = vadd.f32 %v5448, %v5500
  %v5516 = vadd.f32 %v5449, %v5500
  %v5517 = vadd.f32 %v5450, %v5500
  %v5518 = vadd.f32 %v5451, %v5500
  %v5519 = vadd.f32 %v5452, %v5500
  %v5520 = vadd.f32 %v5453, %v5500
  %v5521 = vadd.f32 %v5454, %v5500
  %v5522 = vadd.f32 %v5455, %v5500
  %v5523 = vadd.f32 %v5456, %v5500
  %v5524 = vadd.f32 %v5457, %v5500
  %v5525 = vadd.f32 %v5458, %v5500
  %v5526 = vadd.f32 %v5459, %v5500
  %v5527 = vadd.f32 %v5460, %v5500
  %v5528 = vadd.f32 %v5461, %v5500
  %v5529 = vadd.f32 %v5462, %v5500
  %v5530 = vadd.f32 %v5463, %v5500
  %v5531 = vadd.f32 %v5464, %v5500
  %v5532 = vadd.f32 %v5465, %v5500
  %v5533 = vadd.f32 %v5466, %v5500
  %v5534 = vadd.f32 %v5467, %v5500
  %v5535 = vadd.f32 %v5468, %v5500
  %v5536 = vadd.f32 %v5469, %v5500
  %v5537 = vadd.f32 %v5470, %v5500
  %v5538 = vadd.f32 %v5471, %v5500
  %v5539 = vadd.f32 %v5472, %v5500
  %v5540 = vadd.f32 %v5473, %v5500
  %v5541 = vadd.f32 %v5474, %v5500
  %v5542 = vadd.f32 %v5475, %v5500
  %v5543 = vadd.f32 %v5476, %v5500
  %v5544 = vadd.f32 %v5477, %v5500
  %v5545 = vadd.f32 %v5478, %v5500
  %v5546 = vadd.f32 %v5479, %v5500
  %v5547 = vadd.f32 %v5480, %v5500
  %v5548 = vadd.f32 %v5481, %v5500
  %v5549 = vadd.f32 %v5482, %v5500
  %v5550 = vadd.f32 %v5483, %v5500
  %v5551 = vadd.f32 %v5484, %v5500
  %v5552 = vadd.f32 %v5485, %v5500
  %v5553 = vadd.f32 %v5486, %v5500
  %v5554 = vadd.f32 %v5487, %v5500
  %v5555 = vadd.f32 %v5488, %v5500
  %v5556 = vadd.f32 %v5489, %v5500
  %v5557 = vadd.f32 %v5490, %v5500
  %v5558 = vadd.f32 %v5491, %v5500
  %v5559 = vadd.f32 %v5492, %v5500
  %v5560 = vadd.f32 %v5493, %v5500
  %v5561 = vadd.f32 %v5494, %v5500
  %v5562 = vadd.f32 %v5495, %v5500
  %v5563 = vadd.f32 %v5496, %v5500
  %v5564 = vadd.f32 %v5497, %v5500
  %v5565 = vadd.f32 %v5498, %v5500
  %v5566 = vmax.f32 %v5502, 0.0
  %v5567 = vmax.f32 %v5503, 0.0
  %v5568 = vmax.f32 %v5504, 0.0
  %v5569 = vmax.f32 %v5505, 0.0
  %v5570 = vmax.f32 %v5506, 0.0
  %v5571 = vmax.f32 %v5507, 0.0
  %v5572 = vmax.f32 %v5508, 0.0
  %v5573 = vmax.f32 %v5509, 0.0
  %v5574 = vmax.f32 %v5510, 0.0
  %v5575 = vmax.f32 %v5511, 0.0
  %v5576 = vmax.f32 %v5512, 0.0
  %v5577 = vmax.f32 %v5513, 0.0
  %v5578 = vmax.f32 %v5514, 0.0
  %v5579 = vmax.f32 %v5515, 0.0
  %v5580 = vmax.f32 %v5516, 0.0
  %v5581 = vmax.f32 %v5517, 0.0
  %v5582 = vmax.f32 %v5518, 0.0
  %v5583 = vmax.f32 %v5519, 0.0
  %v5584 = vmax.f32 %v5520, 0.0
  %v5585 = vmax.f32 %v5521, 0.0
  %v5586 = vmax.f32 %v5522, 0.0
  %v5587 = vmax.f32 %v5523, 0.0
  %v5588 = vmax.f32 %v5524, 0.0
  %v5589 = vmax.f32 %v5525, 0.0
  %v5590 = vmax.f32 %v5526, 0.0
  %v5591 = vmax.f32 %v5527, 0.0
  %v5592 = vmax.f32 %v5528, 0.0
  %v5593 = vmax.f32 %v5529, 0.0
  %v5594 = vmax.f32 %v5530, 0.0
  %v5595 = vmax.f32 %v5531, 0.0
  %v5596 = vmax.f32 %v5532, 0.0
  %v5597 = vmax.f32 %v5533, 0.0
  %v5598 = vmax.f32 %v5534, 0.0
  %v5599 = vmax.f32 %v5535, 0.0
  %v5600 = vmax.f32 %v5536, 0.0
  %v5601 = vmax.f32 %v5537, 0.0
  %v5602 = vmax.f32 %v5538, 0.0
  %v5603 = vmax.f32 %v5539, 0.0
  %v5604 = vmax.f32 %v5540, 0.0
  %v5605 = vmax.f32 %v5541, 0.0
  %v5606 = vmax.f32 %v5542, 0.0
  %v5607 = vmax.f32 %v5543, 0.0
  %v5608 = vmax.f32 %v5544, 0.0
  %v5609 = vmax.f32 %v5545, 0.0
  %v5610 = vmax.f32 %v5546, 0.0
  %v5611 = vmax.f32 %v5547, 0.0
  %v5612 = vmax.f32 %v5548, 0.0
  %v5613 = vmax.f32 %v5549, 0.0
  %v5614 = vmax.f32 %v5550, 0.0
  %v5615 = vmax.f32 %v5551, 0.0
  %v5616 = vmax.f32 %v5552, 0.0
  %v5617 = vmax.f32 %v5553, 0.0
  %v5618 = vmax.f32 %v5554, 0.0
  %v5619 = vmax.f32 %v5555, 0.0
  %v5620 = vmax.f32 %v5556, 0.0
  %v5621 = vmax.f32 %v5557, 0.0
  %v5622 = vmax.f32 %v5558, 0.0
  %v5623 = vmax.f32 %v5559, 0.0
  %v5624 = vmax.f32 %v5560, 0.0
  %v5625 = vmax.f32 %v5561, 0.0
  %v5626 = vmax.f32 %v5562, 0.0
  %v5627 = vmax.f32 %v5563, 0.0
  %v5628 = vmax.f32 %v5564, 0.0
  %v5629 = vmax.f32 %v5565, 0.0
  %5630 = vst [vmem:[%s39 + $0x1] sm:$0xff] %v5566
  %5631 = vst [vmem:[%s39 + $0x9] sm:$0xff] %v5567
  %5632 = vst [vmem:[%s39 + $0x19] sm:$0xff] %v5568
  %5633 = vst [vmem:[%s39 + $0x21] sm:$0xff] %v5569
  %5634 = vst [vmem:[%s39 + $0x31] sm:$0xff] %v5570
  %5635 = vst [vmem:[%s39 + $0x39] sm:$0xff] %v5571
  %5636 = vst [vmem:[%s39 + $0x49] sm:$0xff] %v5572
  %5637 = vst [vmem:[%s39 + $0x51] sm:$0xff] %v5573
  %5638 = vst [vmem:[%s39 + $0x61] sm:$0xff] %v5574
  %5639 = vst [vmem:[%s39 + $0x69] sm:$0xff] %v5575
  %5640 = vst [vmem:[%s39 + $0x79] sm:$0xff] %v5576
  %5641 = vst [vmem:[%s39 + $0x81] sm:$0xff] %v5577
  %5642 = vst [vmem:[%s39 + $0x91] sm:$0xff] %v5578
  %5643 = vst [vmem:[%s39 + $0x99] sm:$0xff] %v5579
  %5644 = vst [vmem:[%s39 + $0xa9] sm:$0xff] %v5580
  %5645 = vst [vmem:[%s39 + $0xb1] sm:$0xff] %v5581
  %5646 = vst [vmem:[%s39 + $0xc1] sm:$0xff] %v5582
  %5647 = vst [vmem:[%s39 + $0xc9] sm:$0xff] %v5583
  %5648 = vst [vmem:[%s39 + $0xd9] sm:$0xff] %v5584
  %5649 = vst [vmem:[%s39 + $0xe1] sm:$0xff] %v5585
  %5650 = vst [vmem:[%s39 + $0xf1] sm:$0xff] %v5586
  %5651 = vst [vmem:[%s39 + $0xf9] sm:$0xff] %v5587
  %5652 = vst [vmem:[%s39 + $0x109] sm:$0xff] %v5588
  %5653 = vst [vmem:[%s39 + $0x111] sm:$0xff] %v5589
  %5654 = vst [vmem:[%s39 + $0x121] sm:$0xff] %v5590
  %5655 = vst [vmem:[%s39 + $0x129] sm:$0xff] %v5591
  %5656 = vst [vmem:[%s39 + $0x139] sm:$0xff] %v5592
  %5657 = vst [vmem:[%s39 + $0x141] sm:$0xff] %v5593
  %5658 = vst [vmem:[%s39 + $0x151] sm:$0xff] %v5594
  %5659 = vst [vmem:[%s39 + $0x159] sm:$0xff] %v5595
  %5660 = vst [vmem:[%s39 + $0x169] sm:$0xff] %v5596
  %5661 = vst [vmem:[%s39 + $0x171] sm:$0xff] %v5597
  %5662 = vst [vmem:[%s39 + $0x1b1] sm:$0xff] %v5598
  %5663 = vst [vmem:[%s39 + $0x1b9] sm:$0xff] %v5599
  %5664 = vst [vmem:[%s39 + $0x1c9] sm:$0xff] %v5600
  %5665 = vst [vmem:[%s39 + $0x1d1] sm:$0xff] %v5601
  %5666 = vst [vmem:[%s39 + $0x1e1] sm:$0xff] %v5602
  %5667 = vst [vmem:[%s39 + $0x1e9] sm:$0xff] %v5603
  %5668 = vst [vmem:[%s39 + $0x1f9] sm:$0xff] %v5604
  %5669 = vst [vmem:[%s39 + $0x201] sm:$0xff] %v5605
  %5670 = vst [vmem:[%s39 + $0x211] sm:$0xff] %v5606
  %5671 = vst [vmem:[%s39 + $0x219] sm:$0xff] %v5607
  %5672 = vst [vmem:[%s39 + $0x229] sm:$0xff] %v5608
  %5673 = vst [vmem:[%s39 + $0x231] sm:$0xff] %v5609
  %5674 = vst [vmem:[%s39 + $0x241] sm:$0xff] %v5610
  %5675 = vst [vmem:[%s39 + $0x249] sm:$0xff] %v5611
  %5676 = vst [vmem:[%s39 + $0x259] sm:$0xff] %v5612
  %5677 = vst [vmem:[%s39 + $0x261] sm:$0xff] %v5613
  %5678 = vst [vmem:[%s39 + $0x271] sm:$0xff] %v5614
  %5679 = vst [vmem:[%s39 + $0x279] sm:$0xff] %v5615
  %5680 = vst [vmem:[%s39 + $0x289] sm:$0xff] %v5616
  %5681 = vst [vmem:[%s39 + $0x291] sm:$0xff] %v5617
  %5682 = vst [vmem:[%s39 + $0x2a1] sm:$0xff] %v5618
  %5683 = vst [vmem:[%s39 + $0x2a9] sm:$0xff] %v5619
  %5684 = vst [vmem:[%s39 + $0x2b9] sm:$0xff] %v5620
  %5685 = vst [vmem:[%s39 + $0x2c1] sm:$0xff] %v5621
  %5686 = vst [vmem:[%s39 + $0x2d1] sm:$0xff] %v5622
  %5687 = vst [vmem:[%s39 + $0x2d9] sm:$0xff] %v5623
  %5688 = vst [vmem:[%s39 + $0x2e9] sm:$0xff] %v5624
  %5689 = vst [vmem:[%s39 + $0x2f1] sm:$0xff] %v5625
  %5690 = vst [vmem:[%s39 + $0x301] sm:$0xff] %v5626
  %5691 = vst [vmem:[%s39 + $0x309] sm:$0xff] %v5627
  %5692 = vst [vmem:[%s39 + $0x319] sm:$0xff] %v5628
  %5693 = vst [vmem:[%s39 + $0x321] sm:$0xff] %v5629
  %v5694 = vld [vmem:[#allocation2] sm:$0xff]
  %v5695 = vld [vmem:[#allocation2 + $0x8] sm:$0xff]
  %v5696 = vld [vmem:[#allocation2 + $0x18] sm:$0xff]
  %v5697 = vld [vmem:[#allocation2 + $0x20] sm:$0xff]
  %v5698 = vld [vmem:[#allocation2 + $0x30] sm:$0xff]
  %v5699 = vld [vmem:[#allocation2 + $0x38] sm:$0xff]
  %v5700 = vld [vmem:[#allocation2 + $0x48] sm:$0xff]
  %v5701 = vld [vmem:[#allocation2 + $0x50] sm:$0xff]
  %v5702 = vld [vmem:[#allocation2 + $0x60] sm:$0xff]
  %v5703 = vld [vmem:[#allocation2 + $0x68] sm:$0xff]
  %v5704 = vld [vmem:[#allocation2 + $0x78] sm:$0xff]
  %v5705 = vld [vmem:[#allocation2 + $0x80] sm:$0xff]
  %v5706 = vld [vmem:[#allocation2 + $0x90] sm:$0xff]
  %v5707 = vld [vmem:[#allocation2 + $0x98] sm:$0xff]
  %v5708 = vld [vmem:[#allocation2 + $0xa8] sm:$0xff]
  %v5709 = vld [vmem:[#allocation2 + $0xb0] sm:$0xff]
  %v5710 = vld [vmem:[#allocation2 + $0xc0] sm:$0xff]
  %v5711 = vld [vmem:[#allocation2 + $0xc8] sm:$0xff]
  %v5712 = vld [vmem:[#allocation2 + $0xd8] sm:$0xff]
  %v5713 = vld [vmem:[#allocation2 + $0xe0] sm:$0xff]
  %v5714 = vld [vmem:[#allocation2 + $0xf0] sm:$0xff]
  %v5715 = vld [vmem:[#allocation2 + $0xf8] sm:$0xff]
  %v5716 = vld [vmem:[#allocation2 + $0x108] sm:$0xff]
  %v5717 = vld [vmem:[#allocation2 + $0x110] sm:$0xff]
  %v5718 = vld [vmem:[#allocation2 + $0x120] sm:$0xff]
  %v5719 = vld [vmem:[#allocation2 + $0x128] sm:$0xff]
  %v5720 = vld [vmem:[#allocation2 + $0x138] sm:$0xff]
  %v5721 = vld [vmem:[#allocation2 + $0x140] sm:$0xff]
  %v5722 = vld [vmem:[#allocation2 + $0x150] sm:$0xff]
  %v5723 = vld [vmem:[#allocation2 + $0x158] sm:$0xff]
  %v5724 = vld [vmem:[#allocation2 + $0x168] sm:$0xff]
  %v5725 = vld [vmem:[#allocation2 + $0x170] sm:$0xff]
  %v5726 = vld [vmem:[#allocation2 + $0x1b0] sm:$0xff]
  %v5727 = vld [vmem:[#allocation2 + $0x1b8] sm:$0xff]
  %v5728 = vld [vmem:[#allocation2 + $0x1c8] sm:$0xff]
  %v5729 = vld [vmem:[#allocation2 + $0x1d0] sm:$0xff]
  %v5730 = vld [vmem:[#allocation2 + $0x1e0] sm:$0xff]
  %v5731 = vld [vmem:[#allocation2 + $0x1e8] sm:$0xff]
  %v5732 = vld [vmem:[#allocation2 + $0x1f8] sm:$0xff]
  %v5733 = vld [vmem:[#allocation2 + $0x200] sm:$0xff]
  %v5734 = vld [vmem:[#allocation2 + $0x210] sm:$0xff]
  %v5735 = vld [vmem:[#allocation2 + $0x218] sm:$0xff]
  %v5736 = vld [vmem:[#allocation2 + $0x228] sm:$0xff]
  %v5737 = vld [vmem:[#allocation2 + $0x230] sm:$0xff]
  %v5738 = vld [vmem:[#allocation2 + $0x240] sm:$0xff]
  %v5739 = vld [vmem:[#allocation2 + $0x248] sm:$0xff]
  %v5740 = vld [vmem:[#allocation2 + $0x258] sm:$0xff]
  %v5741 = vld [vmem:[#allocation2 + $0x260] sm:$0xff]
  %v5742 = vld [vmem:[#allocation2 + $0x270] sm:$0xff]
  %v5743 = vld [vmem:[#allocation2 + $0x278] sm:$0xff]
  %v5744 = vld [vmem:[#allocation2 + $0x288] sm:$0xff]
  %v5745 = vld [vmem:[#allocation2 + $0x290] sm:$0xff]
  %v5746 = vld [vmem:[#allocation2 + $0x2a0] sm:$0xff]
  %v5747 = vld [vmem:[#allocation2 + $0x2a8] sm:$0xff]
  %v5748 = vld [vmem:[#allocation2 + $0x2b8] sm:$0xff]
  %v5749 = vld [vmem:[#allocation2 + $0x2c0] sm:$0xff]
  %v5750 = vld [vmem:[#allocation2 + $0x2d0] sm:$0xff]
  %v5751 = vld [vmem:[#allocation2 + $0x2d8] sm:$0xff]
  %v5752 = vld [vmem:[#allocation2 + $0x2e8] sm:$0xff]
  %v5753 = vld [vmem:[#allocation2 + $0x2f0] sm:$0xff]
  %v5754 = vld [vmem:[#allocation2 + $0x300] sm:$0xff]
  %v5755 = vld [vmem:[#allocation2 + $0x308] sm:$0xff]
  %v5756 = vld [vmem:[#allocation2 + $0x318] sm:$0xff]
  %v5757 = vld [vmem:[#allocation2 + $0x320] sm:$0xff]
  %v5758 = vpack.c.bf16 %v5694, %v5694
  %v5759 = vpack.c.bf16 %v5695, %v5695
  %v5760 = vpack.c.bf16 %v5696, %v5696
  %v5761 = vpack.c.bf16 %v5697, %v5697
  %v5762 = vpack.c.bf16 %v5698, %v5698
  %v5763 = vpack.c.bf16 %v5699, %v5699
  %v5764 = vpack.c.bf16 %v5700, %v5700
  %v5765 = vpack.c.bf16 %v5701, %v5701
  %v5766 = vpack.c.bf16 %v5702, %v5702
  %v5767 = vpack.c.bf16 %v5703, %v5703
  %v5768 = vpack.c.bf16 %v5704, %v5704
  %v5769 = vpack.c.bf16 %v5705, %v5705
  %v5770 = vpack.c.bf16 %v5706, %v5706
  %v5771 = vpack.c.bf16 %v5707, %v5707
  %v5772 = vpack.c.bf16 %v5708, %v5708
  %v5773 = vpack.c.bf16 %v5709, %v5709
  %v5774 = vpack.c.bf16 %v5710, %v5710
  %v5775 = vpack.c.bf16 %v5711, %v5711
  %v5776 = vpack.c.bf16 %v5712, %v5712
  %v5777 = vpack.c.bf16 %v5713, %v5713
  %v5778 = vpack.c.bf16 %v5714, %v5714
  %v5779 = vpack.c.bf16 %v5715, %v5715
  %v5780 = vpack.c.bf16 %v5716, %v5716
  %v5781 = vpack.c.bf16 %v5717, %v5717
  %v5782 = vpack.c.bf16 %v5718, %v5718
  %v5783 = vpack.c.bf16 %v5719, %v5719
  %v5784 = vpack.c.bf16 %v5720, %v5720
  %v5785 = vpack.c.bf16 %v5721, %v5721
  %v5786 = vpack.c.bf16 %v5722, %v5722
  %v5787 = vpack.c.bf16 %v5723, %v5723
  %v5788 = vpack.c.bf16 %v5724, %v5724
  %v5789 = vpack.c.bf16 %v5725, %v5725
  %v5790 = vpack.c.bf16 %v5726, %v5726
  %v5791 = vpack.c.bf16 %v5727, %v5727
  %v5792 = vpack.c.bf16 %v5728, %v5728
  %v5793 = vpack.c.bf16 %v5729, %v5729
  %v5794 = vpack.c.bf16 %v5730, %v5730
  %v5795 = vpack.c.bf16 %v5731, %v5731
  %v5796 = vpack.c.bf16 %v5732, %v5732
  %v5797 = vpack.c.bf16 %v5733, %v5733
  %v5798 = vpack.c.bf16 %v5734, %v5734
  %v5799 = vpack.c.bf16 %v5735, %v5735
  %v5800 = vpack.c.bf16 %v5736, %v5736
  %v5801 = vpack.c.bf16 %v5737, %v5737
  %v5802 = vpack.c.bf16 %v5738, %v5738
  %v5803 = vpack.c.bf16 %v5739, %v5739
  %v5804 = vpack.c.bf16 %v5740, %v5740
  %v5805 = vpack.c.bf16 %v5741, %v5741
  %v5806 = vpack.c.bf16 %v5742, %v5742
  %v5807 = vpack.c.bf16 %v5743, %v5743
  %v5808 = vpack.c.bf16 %v5744, %v5744
  %v5809 = vpack.c.bf16 %v5745, %v5745
  %v5810 = vpack.c.bf16 %v5746, %v5746
  %v5811 = vpack.c.bf16 %v5747, %v5747
  %v5812 = vpack.c.bf16 %v5748, %v5748
  %v5813 = vpack.c.bf16 %v5749, %v5749
  %v5814 = vpack.c.bf16 %v5750, %v5750
  %v5815 = vpack.c.bf16 %v5751, %v5751
  %v5816 = vpack.c.bf16 %v5752, %v5752
  %v5817 = vpack.c.bf16 %v5753, %v5753
  %v5818 = vpack.c.bf16 %v5754, %v5754
  %v5819 = vpack.c.bf16 %v5755, %v5755
  %v5820 = vpack.c.bf16 %v5756, %v5756
  %v5821 = vpack.c.bf16 %v5757, %v5757
  %v5822 = vld [vmem:[#allocation2 + $0x1] sm:$0xff]
  %v5823 = vld [vmem:[#allocation2 + $0x9] sm:$0xff]
  %v5824 = vld [vmem:[#allocation2 + $0x19] sm:$0xff]
  %v5825 = vld [vmem:[#allocation2 + $0x21] sm:$0xff]
  %v5826 = vld [vmem:[#allocation2 + $0x31] sm:$0xff]
  %v5827 = vld [vmem:[#allocation2 + $0x39] sm:$0xff]
  %v5828 = vld [vmem:[#allocation2 + $0x49] sm:$0xff]
  %v5829 = vld [vmem:[#allocation2 + $0x51] sm:$0xff]
  %v5830 = vld [vmem:[#allocation2 + $0x61] sm:$0xff]
  %v5831 = vld [vmem:[#allocation2 + $0x69] sm:$0xff]
  %v5832 = vld [vmem:[#allocation2 + $0x79] sm:$0xff]
  %v5833 = vld [vmem:[#allocation2 + $0x81] sm:$0xff]
  %v5834 = vld [vmem:[#allocation2 + $0x91] sm:$0xff]
  %v5835 = vld [vmem:[#allocation2 + $0x99] sm:$0xff]
  %v5836 = vld [vmem:[#allocation2 + $0xa9] sm:$0xff]
  %v5837 = vld [vmem:[#allocation2 + $0xb1] sm:$0xff]
  %v5838 = vld [vmem:[#allocation2 + $0xc1] sm:$0xff]
  %v5839 = vld [vmem:[#allocation2 + $0xc9] sm:$0xff]
  %v5840 = vld [vmem:[#allocation2 + $0xd9] sm:$0xff]
  %v5841 = vld [vmem:[#allocation2 + $0xe1] sm:$0xff]
  %v5842 = vld [vmem:[#allocation2 + $0xf1] sm:$0xff]
  %v5843 = vld [vmem:[#allocation2 + $0xf9] sm:$0xff]
  %v5844 = vld [vmem:[#allocation2 + $0x109] sm:$0xff]
  %v5845 = vld [vmem:[#allocation2 + $0x111] sm:$0xff]
  %v5846 = vld [vmem:[#allocation2 + $0x121] sm:$0xff]
  %v5847 = vld [vmem:[#allocation2 + $0x129] sm:$0xff]
  %v5848 = vld [vmem:[#allocation2 + $0x139] sm:$0xff]
  %v5849 = vld [vmem:[#allocation2 + $0x141] sm:$0xff]
  %v5850 = vld [vmem:[#allocation2 + $0x151] sm:$0xff]
  %v5851 = vld [vmem:[#allocation2 + $0x159] sm:$0xff]
  %v5852 = vld [vmem:[#allocation2 + $0x169] sm:$0xff]
  %v5853 = vld [vmem:[#allocation2 + $0x171] sm:$0xff]
  %v5854 = vld [vmem:[#allocation2 + $0x1b1] sm:$0xff]
  %v5855 = vld [vmem:[#allocation2 + $0x1b9] sm:$0xff]
  %v5856 = vld [vmem:[#allocation2 + $0x1c9] sm:$0xff]
  %v5857 = vld [vmem:[#allocation2 + $0x1d1] sm:$0xff]
  %v5858 = vld [vmem:[#allocation2 + $0x1e1] sm:$0xff]
  %v5859 = vld [vmem:[#allocation2 + $0x1e9] sm:$0xff]
  %v5860 = vld [vmem:[#allocation2 + $0x1f9] sm:$0xff]
  %v5861 = vld [vmem:[#allocation2 + $0x201] sm:$0xff]
  %v5862 = vld [vmem:[#allocation2 + $0x211] sm:$0xff]
  %v5863 = vld [vmem:[#allocation2 + $0x219] sm:$0xff]
  %v5864 = vld [vmem:[#allocation2 + $0x229] sm:$0xff]
  %v5865 = vld [vmem:[#allocation2 + $0x231] sm:$0xff]
  %v5866 = vld [vmem:[#allocation2 + $0x241] sm:$0xff]
  %v5867 = vld [vmem:[#allocation2 + $0x249] sm:$0xff]
  %v5868 = vld [vmem:[#allocation2 + $0x259] sm:$0xff]
  %v5869 = vld [vmem:[#allocation2 + $0x261] sm:$0xff]
  %v5870 = vld [vmem:[#allocation2 + $0x271] sm:$0xff]
  %v5871 = vld [vmem:[#allocation2 + $0x279] sm:$0xff]
  %v5872 = vld [vmem:[#allocation2 + $0x289] sm:$0xff]
  %v5873 = vld [vmem:[#allocation2 + $0x291] sm:$0xff]
  %v5874 = vld [vmem:[#allocation2 + $0x2a1] sm:$0xff]
  %v5875 = vld [vmem:[#allocation2 + $0x2a9] sm:$0xff]
  %v5876 = vld [vmem:[#allocation2 + $0x2b9] sm:$0xff]
  %v5877 = vld [vmem:[#allocation2 + $0x2c1] sm:$0xff]
  %v5878 = vld [vmem:[#allocation2 + $0x2d1] sm:$0xff]
  %v5879 = vld [vmem:[#allocation2 + $0x2d9] sm:$0xff]
  %v5880 = vld [vmem:[#allocation2 + $0x2e9] sm:$0xff]
  %v5881 = vld [vmem:[#allocation2 + $0x2f1] sm:$0xff]
  %v5882 = vld [vmem:[#allocation2 + $0x301] sm:$0xff]
  %v5883 = vld [vmem:[#allocation2 + $0x309] sm:$0xff]
  %v5884 = vld [vmem:[#allocation2 + $0x319] sm:$0xff]
  %v5885 = vld [vmem:[#allocation2 + $0x321] sm:$0xff]
  %v5886 = vpack.c.bf16 %v5822, %v5822
  %v5887 = vpack.c.bf16 %v5823, %v5823
  %v5888 = vpack.c.bf16 %v5824, %v5824
  %v5889 = vpack.c.bf16 %v5825, %v5825
  %v5890 = vpack.c.bf16 %v5826, %v5826
  %v5891 = vpack.c.bf16 %v5827, %v5827
  %v5892 = vpack.c.bf16 %v5828, %v5828
  %v5893 = vpack.c.bf16 %v5829, %v5829
  %v5894 = vpack.c.bf16 %v5830, %v5830
  %v5895 = vpack.c.bf16 %v5831, %v5831
  %v5896 = vpack.c.bf16 %v5832, %v5832
  %v5897 = vpack.c.bf16 %v5833, %v5833
  %v5898 = vpack.c.bf16 %v5834, %v5834
  %v5899 = vpack.c.bf16 %v5835, %v5835
  %v5900 = vpack.c.bf16 %v5836, %v5836
  %v5901 = vpack.c.bf16 %v5837, %v5837
  %v5902 = vpack.c.bf16 %v5838, %v5838
  %v5903 = vpack.c.bf16 %v5839, %v5839
  %v5904 = vpack.c.bf16 %v5840, %v5840
  %v5905 = vpack.c.bf16 %v5841, %v5841
  %v5906 = vpack.c.bf16 %v5842, %v5842
  %v5907 = vpack.c.bf16 %v5843, %v5843
  %v5908 = vpack.c.bf16 %v5844, %v5844
  %v5909 = vpack.c.bf16 %v5845, %v5845
  %v5910 = vpack.c.bf16 %v5846, %v5846
  %v5911 = vpack.c.bf16 %v5847, %v5847
  %v5912 = vpack.c.bf16 %v5848, %v5848
  %v5913 = vpack.c.bf16 %v5849, %v5849
  %v5914 = vpack.c.bf16 %v5850, %v5850
  %v5915 = vpack.c.bf16 %v5851, %v5851
  %v5916 = vpack.c.bf16 %v5852, %v5852
  %v5917 = vpack.c.bf16 %v5853, %v5853
  %v5918 = vpack.c.bf16 %v5854, %v5854
  %v5919 = vpack.c.bf16 %v5855, %v5855
  %v5920 = vpack.c.bf16 %v5856, %v5856
  %v5921 = vpack.c.bf16 %v5857, %v5857
  %v5922 = vpack.c.bf16 %v5858, %v5858
  %v5923 = vpack.c.bf16 %v5859, %v5859
  %v5924 = vpack.c.bf16 %v5860, %v5860
  %v5925 = vpack.c.bf16 %v5861, %v5861
  %v5926 = vpack.c.bf16 %v5862, %v5862
  %v5927 = vpack.c.bf16 %v5863, %v5863
  %v5928 = vpack.c.bf16 %v5864, %v5864
  %v5929 = vpack.c.bf16 %v5865, %v5865
  %v5930 = vpack.c.bf16 %v5866, %v5866
  %v5931 = vpack.c.bf16 %v5867, %v5867
  %v5932 = vpack.c.bf16 %v5868, %v5868
  %v5933 = vpack.c.bf16 %v5869, %v5869
  %v5934 = vpack.c.bf16 %v5870, %v5870
  %v5935 = vpack.c.bf16 %v5871, %v5871
  %v5936 = vpack.c.bf16 %v5872, %v5872
  %v5937 = vpack.c.bf16 %v5873, %v5873
  %v5938 = vpack.c.bf16 %v5874, %v5874
  %v5939 = vpack.c.bf16 %v5875, %v5875
  %v5940 = vpack.c.bf16 %v5876, %v5876
  %v5941 = vpack.c.bf16 %v5877, %v5877
  %v5942 = vpack.c.bf16 %v5878, %v5878
  %v5943 = vpack.c.bf16 %v5879, %v5879
  %v5944 = vpack.c.bf16 %v5880, %v5880
  %v5945 = vpack.c.bf16 %v5881, %v5881
  %v5946 = vpack.c.bf16 %v5882, %v5882
  %v5947 = vpack.c.bf16 %v5883, %v5883
  %v5948 = vpack.c.bf16 %v5884, %v5884
  %v5949 = vpack.c.bf16 %v5885, %v5885
  %v5950 = vld [vmem:[#allocation2 + $0x2] sm:$0xff]
  %v5951 = vld [vmem:[#allocation2 + $0xa] sm:$0xff]
  %v5952 = vld [vmem:[#allocation2 + $0x1a] sm:$0xff]
  %v5953 = vld [vmem:[#allocation2 + $0x22] sm:$0xff]
  %v5954 = vld [vmem:[#allocation2 + $0x32] sm:$0xff]
  %v5955 = vld [vmem:[#allocation2 + $0x3a] sm:$0xff]
  %v5956 = vld [vmem:[#allocation2 + $0x4a] sm:$0xff]
  %v5957 = vld [vmem:[#allocation2 + $0x52] sm:$0xff]
  %v5958 = vld [vmem:[#allocation2 + $0x62] sm:$0xff]
  %v5959 = vld [vmem:[#allocation2 + $0x6a] sm:$0xff]
  %v5960 = vld [vmem:[#allocation2 + $0x7a] sm:$0xff]
  %v5961 = vld [vmem:[#allocation2 + $0x82] sm:$0xff]
  %v5962 = vld [vmem:[#allocation2 + $0x92] sm:$0xff]
  %v5963 = vld [vmem:[#allocation2 + $0x9a] sm:$0xff]
  %v5964 = vld [vmem:[#allocation2 + $0xaa] sm:$0xff]
  %v5965 = vld [vmem:[#allocation2 + $0xb2] sm:$0xff]
  %v5966 = vld [vmem:[#allocation2 + $0xc2] sm:$0xff]
  %v5967 = vld [vmem:[#allocation2 + $0xca] sm:$0xff]
  %v5968 = vld [vmem:[#allocation2 + $0xda] sm:$0xff]
  %v5969 = vld [vmem:[#allocation2 + $0xe2] sm:$0xff]
  %v5970 = vld [vmem:[#allocation2 + $0xf2] sm:$0xff]
  %v5971 = vld [vmem:[#allocation2 + $0xfa] sm:$0xff]
  %v5972 = vld [vmem:[#allocation2 + $0x10a] sm:$0xff]
  %v5973 = vld [vmem:[#allocation2 + $0x112] sm:$0xff]
  %v5974 = vld [vmem:[#allocation2 + $0x122] sm:$0xff]
  %v5975 = vld [vmem:[#allocation2 + $0x12a] sm:$0xff]
  %v5976 = vld [vmem:[#allocation2 + $0x13a] sm:$0xff]
  %v5977 = vld [vmem:[#allocation2 + $0x142] sm:$0xff]
  %v5978 = vld [vmem:[#allocation2 + $0x152] sm:$0xff]
  %v5979 = vld [vmem:[#allocation2 + $0x15a] sm:$0xff]
  %v5980 = vld [vmem:[#allocation2 + $0x16a] sm:$0xff]
  %v5981 = vld [vmem:[#allocation2 + $0x172] sm:$0xff]
  %v5982 = vld [vmem:[#allocation2 + $0x1b2] sm:$0xff]
  %v5983 = vld [vmem:[#allocation2 + $0x1ba] sm:$0xff]
  %v5984 = vld [vmem:[#allocation2 + $0x1ca] sm:$0xff]
  %v5985 = vld [vmem:[#allocation2 + $0x1d2] sm:$0xff]
  %v5986 = vld [vmem:[#allocation2 + $0x1e2] sm:$0xff]
  %v5987 = vld [vmem:[#allocation2 + $0x1ea] sm:$0xff]
  %v5988 = vld [vmem:[#allocation2 + $0x1fa] sm:$0xff]
  %v5989 = vld [vmem:[#allocation2 + $0x202] sm:$0xff]
  %v5990 = vld [vmem:[#allocation2 + $0x212] sm:$0xff]
  %v5991 = vld [vmem:[#allocation2 + $0x21a] sm:$0xff]
  %v5992 = vld [vmem:[#allocation2 + $0x22a] sm:$0xff]
  %v5993 = vld [vmem:[#allocation2 + $0x232] sm:$0xff]
  %v5994 = vld [vmem:[#allocation2 + $0x242] sm:$0xff]
  %v5995 = vld [vmem:[#allocation2 + $0x24a] sm:$0xff]
  %v5996 = vld [vmem:[#allocation2 + $0x25a] sm:$0xff]
  %v5997 = vld [vmem:[#allocation2 + $0x262] sm:$0xff]
  %v5998 = vld [vmem:[#allocation2 + $0x272] sm:$0xff]
  %v5999 = vld [vmem:[#allocation2 + $0x27a] sm:$0xff]
  %v6000 = vld [vmem:[#allocation2 + $0x28a] sm:$0xff]
  %v6001 = vld [vmem:[#allocation2 + $0x292] sm:$0xff]
  %v6002 = vld [vmem:[#allocation2 + $0x2a2] sm:$0xff]
  %v6003 = vld [vmem:[#allocation2 + $0x2aa] sm:$0xff]
  %v6004 = vld [vmem:[#allocation2 + $0x2ba] sm:$0xff]
  %v6005 = vld [vmem:[#allocation2 + $0x2c2] sm:$0xff]
  %v6006 = vld [vmem:[#allocation2 + $0x2d2] sm:$0xff]
  %v6007 = vld [vmem:[#allocation2 + $0x2da] sm:$0xff]
  %v6008 = vld [vmem:[#allocation2 + $0x2ea] sm:$0xff]
  %v6009 = vld [vmem:[#allocation2 + $0x2f2] sm:$0xff]
  %v6010 = vld [vmem:[#allocation2 + $0x302] sm:$0xff]
  %v6011 = vld [vmem:[#allocation2 + $0x30a] sm:$0xff]
  %v6012 = vld [vmem:[#allocation2 + $0x31a] sm:$0xff]
  %v6013 = vld [vmem:[#allocation2 + $0x322] sm:$0xff]
  %v6014 = vpack.c.bf16 %v5950, %v5950
  %v6015 = vpack.c.bf16 %v5951, %v5951
  %v6016 = vpack.c.bf16 %v5952, %v5952
  %v6017 = vpack.c.bf16 %v5953, %v5953
  %v6018 = vpack.c.bf16 %v5954, %v5954
  %v6019 = vpack.c.bf16 %v5955, %v5955
  %v6020 = vpack.c.bf16 %v5956, %v5956
  %v6021 = vpack.c.bf16 %v5957, %v5957
  %v6022 = vpack.c.bf16 %v5958, %v5958
  %v6023 = vpack.c.bf16 %v5959, %v5959
  %v6024 = vpack.c.bf16 %v5960, %v5960
  %v6025 = vpack.c.bf16 %v5961, %v5961
  %v6026 = vpack.c.bf16 %v5962, %v5962
  %v6027 = vpack.c.bf16 %v5963, %v5963
  %v6028 = vpack.c.bf16 %v5964, %v5964
  %v6029 = vpack.c.bf16 %v5965, %v5965
  %v6030 = vpack.c.bf16 %v5966, %v5966
  %v6031 = vpack.c.bf16 %v5967, %v5967
  %v6032 = vpack.c.bf16 %v5968, %v5968
  %v6033 = vpack.c.bf16 %v5969, %v5969
  %v6034 = vpack.c.bf16 %v5970, %v5970
  %v6035 = vpack.c.bf16 %v5971, %v5971
  %v6036 = vpack.c.bf16 %v5972, %v5972
  %v6037 = vpack.c.bf16 %v5973, %v5973
  %v6038 = vpack.c.bf16 %v5974, %v5974
  %v6039 = vpack.c.bf16 %v5975, %v5975
  %v6040 = vpack.c.bf16 %v5976, %v5976
  %v6041 = vpack.c.bf16 %v5977, %v5977
  %v6042 = vpack.c.bf16 %v5978, %v5978
  %v6043 = vpack.c.bf16 %v5979, %v5979
  %v6044 = vpack.c.bf16 %v5980, %v5980
  %v6045 = vpack.c.bf16 %v5981, %v5981
  %v6046 = vpack.c.bf16 %v5982, %v5982
  %v6047 = vpack.c.bf16 %v5983, %v5983
  %v6048 = vpack.c.bf16 %v5984, %v5984
  %v6049 = vpack.c.bf16 %v5985, %v5985
  %v6050 = vpack.c.bf16 %v5986, %v5986
  %v6051 = vpack.c.bf16 %v5987, %v5987
  %v6052 = vpack.c.bf16 %v5988, %v5988
  %v6053 = vpack.c.bf16 %v5989, %v5989
  %v6054 = vpack.c.bf16 %v5990, %v5990
  %v6055 = vpack.c.bf16 %v5991, %v5991
  %v6056 = vpack.c.bf16 %v5992, %v5992
  %v6057 = vpack.c.bf16 %v5993, %v5993
  %v6058 = vpack.c.bf16 %v5994, %v5994
  %v6059 = vpack.c.bf16 %v5995, %v5995
  %v6060 = vpack.c.bf16 %v5996, %v5996
  %v6061 = vpack.c.bf16 %v5997, %v5997
  %v6062 = vpack.c.bf16 %v5998, %v5998
  %v6063 = vpack.c.bf16 %v5999, %v5999
  %v6064 = vpack.c.bf16 %v6000, %v6000
  %v6065 = vpack.c.bf16 %v6001, %v6001
  %v6066 = vpack.c.bf16 %v6002, %v6002
  %v6067 = vpack.c.bf16 %v6003, %v6003
  %v6068 = vpack.c.bf16 %v6004, %v6004
  %v6069 = vpack.c.bf16 %v6005, %v6005
  %v6070 = vpack.c.bf16 %v6006, %v6006
  %v6071 = vpack.c.bf16 %v6007, %v6007
  %v6072 = vpack.c.bf16 %v6008, %v6008
  %v6073 = vpack.c.bf16 %v6009, %v6009
  %v6074 = vpack.c.bf16 %v6010, %v6010
  %v6075 = vpack.c.bf16 %v6011, %v6011
  %v6076 = vpack.c.bf16 %v6012, %v6012
  %v6077 = vpack.c.bf16 %v6013, %v6013
  %v6078 = vld [vmem:[%s39] sm:$0xff]
  %v6079 = vld [vmem:[%s39 + $0x8] sm:$0xff]
  %v6080 = vld [vmem:[%s39 + $0x18] sm:$0xff]
  %v6081 = vld [vmem:[%s39 + $0x20] sm:$0xff]
  %v6082 = vld [vmem:[%s39 + $0x30] sm:$0xff]
  %v6083 = vld [vmem:[%s39 + $0x38] sm:$0xff]
  %v6084 = vld [vmem:[%s39 + $0x48] sm:$0xff]
  %v6085 = vld [vmem:[%s39 + $0x50] sm:$0xff]
  %v6086 = vld [vmem:[%s39 + $0x60] sm:$0xff]
  %v6087 = vld [vmem:[%s39 + $0x68] sm:$0xff]
  %v6088 = vld [vmem:[%s39 + $0x78] sm:$0xff]
  %v6089 = vld [vmem:[%s39 + $0x80] sm:$0xff]
  %v6090 = vld [vmem:[%s39 + $0x90] sm:$0xff]
  %v6091 = vld [vmem:[%s39 + $0x98] sm:$0xff]
  %v6092 = vld [vmem:[%s39 + $0xa8] sm:$0xff]
  %v6093 = vld [vmem:[%s39 + $0xb0] sm:$0xff]
  %v6094 = vld [vmem:[%s39 + $0xc0] sm:$0xff]
  %v6095 = vld [vmem:[%s39 + $0xc8] sm:$0xff]
  %v6096 = vld [vmem:[%s39 + $0xd8] sm:$0xff]
  %v6097 = vld [vmem:[%s39 + $0xe0] sm:$0xff]
  %v6098 = vld [vmem:[%s39 + $0xf0] sm:$0xff]
  %v6099 = vld [vmem:[%s39 + $0xf8] sm:$0xff]
  %v6100 = vld [vmem:[%s39 + $0x108] sm:$0xff]
  %v6101 = vld [vmem:[%s39 + $0x110] sm:$0xff]
  %v6102 = vld [vmem:[%s39 + $0x120] sm:$0xff]
  %v6103 = vld [vmem:[%s39 + $0x128] sm:$0xff]
  %v6104 = vld [vmem:[%s39 + $0x138] sm:$0xff]
  %v6105 = vld [vmem:[%s39 + $0x140] sm:$0xff]
  %v6106 = vld [vmem:[%s39 + $0x150] sm:$0xff]
  %v6107 = vld [vmem:[%s39 + $0x158] sm:$0xff]
  %v6108 = vld [vmem:[%s39 + $0x168] sm:$0xff]
  %v6109 = vld [vmem:[%s39 + $0x170] sm:$0xff]
  %v6110 = vld [vmem:[%s39 + $0x1b0] sm:$0xff]
  %v6111 = vld [vmem:[%s39 + $0x1b8] sm:$0xff]
  %v6112 = vld [vmem:[%s39 + $0x1c8] sm:$0xff]
  %v6113 = vld [vmem:[%s39 + $0x1d0] sm:$0xff]
  %v6114 = vld [vmem:[%s39 + $0x1e0] sm:$0xff]
  %v6115 = vld [vmem:[%s39 + $0x1e8] sm:$0xff]
  %v6116 = vld [vmem:[%s39 + $0x1f8] sm:$0xff]
  %v6117 = vld [vmem:[%s39 + $0x200] sm:$0xff]
  %v6118 = vld [vmem:[%s39 + $0x210] sm:$0xff]
  %v6119 = vld [vmem:[%s39 + $0x218] sm:$0xff]
  %v6120 = vld [vmem:[%s39 + $0x228] sm:$0xff]
  %v6121 = vld [vmem:[%s39 + $0x230] sm:$0xff]
  %v6122 = vld [vmem:[%s39 + $0x240] sm:$0xff]
  %v6123 = vld [vmem:[%s39 + $0x248] sm:$0xff]
  %v6124 = vld [vmem:[%s39 + $0x258] sm:$0xff]
  %v6125 = vld [vmem:[%s39 + $0x260] sm:$0xff]
  %v6126 = vld [vmem:[%s39 + $0x270] sm:$0xff]
  %v6127 = vld [vmem:[%s39 + $0x278] sm:$0xff]
  %v6128 = vld [vmem:[%s39 + $0x288] sm:$0xff]
  %v6129 = vld [vmem:[%s39 + $0x290] sm:$0xff]
  %v6130 = vld [vmem:[%s39 + $0x2a0] sm:$0xff]
  %v6131 = vld [vmem:[%s39 + $0x2a8] sm:$0xff]
  %v6132 = vld [vmem:[%s39 + $0x2b8] sm:$0xff]
  %v6133 = vld [vmem:[%s39 + $0x2c0] sm:$0xff]
  %v6134 = vld [vmem:[%s39 + $0x2d0] sm:$0xff]
  %v6135 = vld [vmem:[%s39 + $0x2d8] sm:$0xff]
  %v6136 = vld [vmem:[%s39 + $0x2e8] sm:$0xff]
  %v6137 = vld [vmem:[%s39 + $0x2f0] sm:$0xff]
  %v6138 = vld [vmem:[%s39 + $0x300] sm:$0xff]
  %v6139 = vld [vmem:[%s39 + $0x308] sm:$0xff]
  %v6140 = vld [vmem:[%s39 + $0x318] sm:$0xff]
  %v6141 = vld [vmem:[%s39 + $0x320] sm:$0xff]
  %v6142 = vpack.c.bf16 %v6078, %v6078
  %v6143 = vpack.c.bf16 %v6079, %v6079
  %v6144 = vpack.c.bf16 %v6080, %v6080
  %v6145 = vpack.c.bf16 %v6081, %v6081
  %v6146 = vpack.c.bf16 %v6082, %v6082
  %v6147 = vpack.c.bf16 %v6083, %v6083
  %v6148 = vpack.c.bf16 %v6084, %v6084
  %v6149 = vpack.c.bf16 %v6085, %v6085
  %v6150 = vpack.c.bf16 %v6086, %v6086
  %v6151 = vpack.c.bf16 %v6087, %v6087
  %v6152 = vpack.c.bf16 %v6088, %v6088
  %v6153 = vpack.c.bf16 %v6089, %v6089
  %v6154 = vpack.c.bf16 %v6090, %v6090
  %v6155 = vpack.c.bf16 %v6091, %v6091
  %v6156 = vpack.c.bf16 %v6092, %v6092
  %v6157 = vpack.c.bf16 %v6093, %v6093
  %v6158 = vpack.c.bf16 %v6094, %v6094
  %v6159 = vpack.c.bf16 %v6095, %v6095
  %v6160 = vpack.c.bf16 %v6096, %v6096
  %v6161 = vpack.c.bf16 %v6097, %v6097
  %v6162 = vpack.c.bf16 %v6098, %v6098
  %v6163 = vpack.c.bf16 %v6099, %v6099
  %v6164 = vpack.c.bf16 %v6100, %v6100
  %v6165 = vpack.c.bf16 %v6101, %v6101
  %v6166 = vpack.c.bf16 %v6102, %v6102
  %v6167 = vpack.c.bf16 %v6103, %v6103
  %v6168 = vpack.c.bf16 %v6104, %v6104
  %v6169 = vpack.c.bf16 %v6105, %v6105
  %v6170 = vpack.c.bf16 %v6106, %v6106
  %v6171 = vpack.c.bf16 %v6107, %v6107
  %v6172 = vpack.c.bf16 %v6108, %v6108
  %v6173 = vpack.c.bf16 %v6109, %v6109
  %v6174 = vpack.c.bf16 %v6110, %v6110
  %v6175 = vpack.c.bf16 %v6111, %v6111
  %v6176 = vpack.c.bf16 %v6112, %v6112
  %v6177 = vpack.c.bf16 %v6113, %v6113
  %v6178 = vpack.c.bf16 %v6114, %v6114
  %v6179 = vpack.c.bf16 %v6115, %v6115
  %v6180 = vpack.c.bf16 %v6116, %v6116
  %v6181 = vpack.c.bf16 %v6117, %v6117
  %v6182 = vpack.c.bf16 %v6118, %v6118
  %v6183 = vpack.c.bf16 %v6119, %v6119
  %v6184 = vpack.c.bf16 %v6120, %v6120
  %v6185 = vpack.c.bf16 %v6121, %v6121
  %v6186 = vpack.c.bf16 %v6122, %v6122
  %v6187 = vpack.c.bf16 %v6123, %v6123
  %v6188 = vpack.c.bf16 %v6124, %v6124
  %v6189 = vpack.c.bf16 %v6125, %v6125
  %v6190 = vpack.c.bf16 %v6126, %v6126
  %v6191 = vpack.c.bf16 %v6127, %v6127
  %v6192 = vpack.c.bf16 %v6128, %v6128
  %v6193 = vpack.c.bf16 %v6129, %v6129
  %v6194 = vpack.c.bf16 %v6130, %v6130
  %v6195 = vpack.c.bf16 %v6131, %v6131
  %v6196 = vpack.c.bf16 %v6132, %v6132
  %v6197 = vpack.c.bf16 %v6133, %v6133
  %v6198 = vpack.c.bf16 %v6134, %v6134
  %v6199 = vpack.c.bf16 %v6135, %v6135
  %v6200 = vpack.c.bf16 %v6136, %v6136
  %v6201 = vpack.c.bf16 %v6137, %v6137
  %v6202 = vpack.c.bf16 %v6138, %v6138
  %v6203 = vpack.c.bf16 %v6139, %v6139
  %v6204 = vpack.c.bf16 %v6140, %v6140
  %v6205 = vpack.c.bf16 %v6141, %v6141
  %v6206 = vld [vmem:[%s39 + $0x1] sm:$0xff]
  %v6207 = vld [vmem:[%s39 + $0x9] sm:$0xff]
  %v6208 = vld [vmem:[%s39 + $0x19] sm:$0xff]
  %v6209 = vld [vmem:[%s39 + $0x21] sm:$0xff]
  %v6210 = vld [vmem:[%s39 + $0x31] sm:$0xff]
  %v6211 = vld [vmem:[%s39 + $0x39] sm:$0xff]
  %v6212 = vld [vmem:[%s39 + $0x49] sm:$0xff]
  %v6213 = vld [vmem:[%s39 + $0x51] sm:$0xff]
  %v6214 = vld [vmem:[%s39 + $0x61] sm:$0xff]
  %v6215 = vld [vmem:[%s39 + $0x69] sm:$0xff]
  %v6216 = vld [vmem:[%s39 + $0x79] sm:$0xff]
  %v6217 = vld [vmem:[%s39 + $0x81] sm:$0xff]
  %v6218 = vld [vmem:[%s39 + $0x91] sm:$0xff]
  %v6219 = vld [vmem:[%s39 + $0x99] sm:$0xff]
  %v6220 = vld [vmem:[%s39 + $0xa9] sm:$0xff]
  %v6221 = vld [vmem:[%s39 + $0xb1] sm:$0xff]
  %v6222 = vld [vmem:[%s39 + $0xc1] sm:$0xff]
  %v6223 = vld [vmem:[%s39 + $0xc9] sm:$0xff]
  %v6224 = vld [vmem:[%s39 + $0xd9] sm:$0xff]
  %v6225 = vld [vmem:[%s39 + $0xe1] sm:$0xff]
  %v6226 = vld [vmem:[%s39 + $0xf1] sm:$0xff]
  %v6227 = vld [vmem:[%s39 + $0xf9] sm:$0xff]
  %v6228 = vld [vmem:[%s39 + $0x109] sm:$0xff]
  %v6229 = vld [vmem:[%s39 + $0x111] sm:$0xff]
  %v6230 = vld [vmem:[%s39 + $0x121] sm:$0xff]
  %v6231 = vld [vmem:[%s39 + $0x129] sm:$0xff]
  %v6232 = vld [vmem:[%s39 + $0x139] sm:$0xff]
  %v6233 = vld [vmem:[%s39 + $0x141] sm:$0xff]
  %v6234 = vld [vmem:[%s39 + $0x151] sm:$0xff]
  %v6235 = vld [vmem:[%s39 + $0x159] sm:$0xff]
  %v6236 = vld [vmem:[%s39 + $0x169] sm:$0xff]
  %v6237 = vld [vmem:[%s39 + $0x171] sm:$0xff]
  %v6238 = vld [vmem:[%s39 + $0x1b1] sm:$0xff]
  %v6239 = vld [vmem:[%s39 + $0x1b9] sm:$0xff]
  %v6240 = vld [vmem:[%s39 + $0x1c9] sm:$0xff]
  %v6241 = vld [vmem:[%s39 + $0x1d1] sm:$0xff]
  %v6242 = vld [vmem:[%s39 + $0x1e1] sm:$0xff]
  %v6243 = vld [vmem:[%s39 + $0x1e9] sm:$0xff]
  %v6244 = vld [vmem:[%s39 + $0x1f9] sm:$0xff]
  %v6245 = vld [vmem:[%s39 + $0x201] sm:$0xff]
  %v6246 = vld [vmem:[%s39 + $0x211] sm:$0xff]
  %v6247 = vld [vmem:[%s39 + $0x219] sm:$0xff]
  %v6248 = vld [vmem:[%s39 + $0x229] sm:$0xff]
  %v6249 = vld [vmem:[%s39 + $0x231] sm:$0xff]
  %v6250 = vld [vmem:[%s39 + $0x241] sm:$0xff]
  %v6251 = vld [vmem:[%s39 + $0x249] sm:$0xff]
  %v6252 = vld [vmem:[%s39 + $0x259] sm:$0xff]
  %v6253 = vld [vmem:[%s39 + $0x261] sm:$0xff]
  %v6254 = vld [vmem:[%s39 + $0x271] sm:$0xff]
  %v6255 = vld [vmem:[%s39 + $0x279] sm:$0xff]
  %v6256 = vld [vmem:[%s39 + $0x289] sm:$0xff]
  %v6257 = vld [vmem:[%s39 + $0x291] sm:$0xff]
  %v6258 = vld [vmem:[%s39 + $0x2a1] sm:$0xff]
  %v6259 = vld [vmem:[%s39 + $0x2a9] sm:$0xff]
  %v6260 = vld [vmem:[%s39 + $0x2b9] sm:$0xff]
  %v6261 = vld [vmem:[%s39 + $0x2c1] sm:$0xff]
  %v6262 = vld [vmem:[%s39 + $0x2d1] sm:$0xff]
  %v6263 = vld [vmem:[%s39 + $0x2d9] sm:$0xff]
  %v6264 = vld [vmem:[%s39 + $0x2e9] sm:$0xff]
  %v6265 = vld [vmem:[%s39 + $0x2f1] sm:$0xff]
  %v6266 = vld [vmem:[%s39 + $0x301] sm:$0xff]
  %v6267 = vld [vmem:[%s39 + $0x309] sm:$0xff]
  %v6268 = vld [vmem:[%s39 + $0x319] sm:$0xff]
  %v6269 = vld [vmem:[%s39 + $0x321] sm:$0xff]
  %v6270 = vpack.c.bf16 %v6206, %v6206
  %v6271 = vpack.c.bf16 %v6207, %v6207
  %v6272 = vpack.c.bf16 %v6208, %v6208
  %v6273 = vpack.c.bf16 %v6209, %v6209
  %v6274 = vpack.c.bf16 %v6210, %v6210
  %v6275 = vpack.c.bf16 %v6211, %v6211
  %v6276 = vpack.c.bf16 %v6212, %v6212
  %v6277 = vpack.c.bf16 %v6213, %v6213
  %v6278 = vpack.c.bf16 %v6214, %v6214
  %v6279 = vpack.c.bf16 %v6215, %v6215
  %v6280 = vpack.c.bf16 %v6216, %v6216
  %v6281 = vpack.c.bf16 %v6217, %v6217
  %v6282 = vpack.c.bf16 %v6218, %v6218
  %v6283 = vpack.c.bf16 %v6219, %v6219
  %v6284 = vpack.c.bf16 %v6220, %v6220
  %v6285 = vpack.c.bf16 %v6221, %v6221
  %v6286 = vpack.c.bf16 %v6222, %v6222
  %v6287 = vpack.c.bf16 %v6223, %v6223
  %v6288 = vpack.c.bf16 %v6224, %v6224
  %v6289 = vpack.c.bf16 %v6225, %v6225
  %v6290 = vpack.c.bf16 %v6226, %v6226
  %v6291 = vpack.c.bf16 %v6227, %v6227
  %v6292 = vpack.c.bf16 %v6228, %v6228
  %v6293 = vpack.c.bf16 %v6229, %v6229
  %v6294 = vpack.c.bf16 %v6230, %v6230
  %v6295 = vpack.c.bf16 %v6231, %v6231
  %v6296 = vpack.c.bf16 %v6232, %v6232
  %v6297 = vpack.c.bf16 %v6233, %v6233
  %v6298 = vpack.c.bf16 %v6234, %v6234
  %v6299 = vpack.c.bf16 %v6235, %v6235
  %v6300 = vpack.c.bf16 %v6236, %v6236
  %v6301 = vpack.c.bf16 %v6237, %v6237
  %v6302 = vpack.c.bf16 %v6238, %v6238
  %v6303 = vpack.c.bf16 %v6239, %v6239
  %v6304 = vpack.c.bf16 %v6240, %v6240
  %v6305 = vpack.c.bf16 %v6241, %v6241
  %v6306 = vpack.c.bf16 %v6242, %v6242
  %v6307 = vpack.c.bf16 %v6243, %v6243
  %v6308 = vpack.c.bf16 %v6244, %v6244
  %v6309 = vpack.c.bf16 %v6245, %v6245
  %v6310 = vpack.c.bf16 %v6246, %v6246
  %v6311 = vpack.c.bf16 %v6247, %v6247
  %v6312 = vpack.c.bf16 %v6248, %v6248
  %v6313 = vpack.c.bf16 %v6249, %v6249
  %v6314 = vpack.c.bf16 %v6250, %v6250
  %v6315 = vpack.c.bf16 %v6251, %v6251
  %v6316 = vpack.c.bf16 %v6252, %v6252
  %v6317 = vpack.c.bf16 %v6253, %v6253
  %v6318 = vpack.c.bf16 %v6254, %v6254
  %v6319 = vpack.c.bf16 %v6255, %v6255
  %v6320 = vpack.c.bf16 %v6256, %v6256
  %v6321 = vpack.c.bf16 %v6257, %v6257
  %v6322 = vpack.c.bf16 %v6258, %v6258
  %v6323 = vpack.c.bf16 %v6259, %v6259
  %v6324 = vpack.c.bf16 %v6260, %v6260
  %v6325 = vpack.c.bf16 %v6261, %v6261
  %v6326 = vpack.c.bf16 %v6262, %v6262
  %v6327 = vpack.c.bf16 %v6263, %v6263
  %v6328 = vpack.c.bf16 %v6264, %v6264
  %v6329 = vpack.c.bf16 %v6265, %v6265
  %v6330 = vpack.c.bf16 %v6266, %v6266
  %v6331 = vpack.c.bf16 %v6267, %v6267
  %v6332 = vpack.c.bf16 %v6268, %v6268
  %v6333 = vpack.c.bf16 %v6269, %v6269
  %v6334 = vld [vmem:[%s39 + $0x2] sm:$0xff]
  %v6335 = vld [vmem:[%s39 + $0xa] sm:$0xff]
  %v6336 = vld [vmem:[%s39 + $0x1a] sm:$0xff]
  %v6337 = vld [vmem:[%s39 + $0x22] sm:$0xff]
  %v6338 = vld [vmem:[%s39 + $0x32] sm:$0xff]
  %v6339 = vld [vmem:[%s39 + $0x3a] sm:$0xff]
  %v6340 = vld [vmem:[%s39 + $0x4a] sm:$0xff]
  %v6341 = vld [vmem:[%s39 + $0x52] sm:$0xff]
  %v6342 = vld [vmem:[%s39 + $0x62] sm:$0xff]
  %v6343 = vld [vmem:[%s39 + $0x6a] sm:$0xff]
  %v6344 = vld [vmem:[%s39 + $0x7a] sm:$0xff]
  %v6345 = vld [vmem:[%s39 + $0x82] sm:$0xff]
  %v6346 = vld [vmem:[%s39 + $0x92] sm:$0xff]
  %v6347 = vld [vmem:[%s39 + $0x9a] sm:$0xff]
  %v6348 = vld [vmem:[%s39 + $0xaa] sm:$0xff]
  %v6349 = vld [vmem:[%s39 + $0xb2] sm:$0xff]
  %v6350 = vld [vmem:[%s39 + $0xc2] sm:$0xff]
  %v6351 = vld [vmem:[%s39 + $0xca] sm:$0xff]
  %v6352 = vld [vmem:[%s39 + $0xda] sm:$0xff]
  %v6353 = vld [vmem:[%s39 + $0xe2] sm:$0xff]
  %v6354 = vld [vmem:[%s39 + $0xf2] sm:$0xff]
  %v6355 = vld [vmem:[%s39 + $0xfa] sm:$0xff]
  %v6356 = vld [vmem:[%s39 + $0x10a] sm:$0xff]
  %v6357 = vld [vmem:[%s39 + $0x112] sm:$0xff]
  %v6358 = vld [vmem:[%s39 + $0x122] sm:$0xff]
  %v6359 = vld [vmem:[%s39 + $0x12a] sm:$0xff]
  %v6360 = vld [vmem:[%s39 + $0x13a] sm:$0xff]
  %v6361 = vld [vmem:[%s39 + $0x142] sm:$0xff]
  %v6362 = vld [vmem:[%s39 + $0x152] sm:$0xff]
  %v6363 = vld [vmem:[%s39 + $0x15a] sm:$0xff]
  %v6364 = vld [vmem:[%s39 + $0x16a] sm:$0xff]
  %v6365 = vld [vmem:[%s39 + $0x172] sm:$0xff]
  %v6366 = vld [vmem:[%s39 + $0x1b2] sm:$0xff]
  %v6367 = vld [vmem:[%s39 + $0x1ba] sm:$0xff]
  %v6368 = vld [vmem:[%s39 + $0x1ca] sm:$0xff]
  %v6369 = vld [vmem:[%s39 + $0x1d2] sm:$0xff]
  %v6370 = vld [vmem:[%s39 + $0x1e2] sm:$0xff]
  %v6371 = vld [vmem:[%s39 + $0x1ea] sm:$0xff]
  %v6372 = vld [vmem:[%s39 + $0x1fa] sm:$0xff]
  %v6373 = vld [vmem:[%s39 + $0x202] sm:$0xff]
  %v6374 = vld [vmem:[%s39 + $0x212] sm:$0xff]
  %v6375 = vld [vmem:[%s39 + $0x21a] sm:$0xff]
  %v6376 = vld [vmem:[%s39 + $0x22a] sm:$0xff]
  %v6377 = vld [vmem:[%s39 + $0x232] sm:$0xff]
  %v6378 = vld [vmem:[%s39 + $0x242] sm:$0xff]
  %v6379 = vld [vmem:[%s39 + $0x24a] sm:$0xff]
  %v6380 = vld [vmem:[%s39 + $0x25a] sm:$0xff]
  %v6381 = vld [vmem:[%s39 + $0x262] sm:$0xff]
  %v6382 = vld [vmem:[%s39 + $0x272] sm:$0xff]
  %v6383 = vld [vmem:[%s39 + $0x27a] sm:$0xff]
  %v6384 = vld [vmem:[%s39 + $0x28a] sm:$0xff]
  %v6385 = vld [vmem:[%s39 + $0x292] sm:$0xff]
  %v6386 = vld [vmem:[%s39 + $0x2a2] sm:$0xff]
  %v6387 = vld [vmem:[%s39 + $0x2aa] sm:$0xff]
  %v6388 = vld [vmem:[%s39 + $0x2ba] sm:$0xff]
  %v6389 = vld [vmem:[%s39 + $0x2c2] sm:$0xff]
  %v6390 = vld [vmem:[%s39 + $0x2d2] sm:$0xff]
  %v6391 = vld [vmem:[%s39 + $0x2da] sm:$0xff]
  %v6392 = vld [vmem:[%s39 + $0x2ea] sm:$0xff]
  %v6393 = vld [vmem:[%s39 + $0x2f2] sm:$0xff]
  %v6394 = vld [vmem:[%s39 + $0x302] sm:$0xff]
  %v6395 = vld [vmem:[%s39 + $0x30a] sm:$0xff]
  %v6396 = vld [vmem:[%s39 + $0x31a] sm:$0xff]
  %v6397 = vld [vmem:[%s39 + $0x322] sm:$0xff]
  %v6398 = vpack.c.bf16 %v6334, %v6334
  %v6399 = vpack.c.bf16 %v6335, %v6335
  %v6400 = vpack.c.bf16 %v6336, %v6336
  %v6401 = vpack.c.bf16 %v6337, %v6337
  %v6402 = vpack.c.bf16 %v6338, %v6338
  %v6403 = vpack.c.bf16 %v6339, %v6339
  %v6404 = vpack.c.bf16 %v6340, %v6340
  %v6405 = vpack.c.bf16 %v6341, %v6341
  %v6406 = vpack.c.bf16 %v6342, %v6342
  %v6407 = vpack.c.bf16 %v6343, %v6343
  %v6408 = vpack.c.bf16 %v6344, %v6344
  %v6409 = vpack.c.bf16 %v6345, %v6345
  %v6410 = vpack.c.bf16 %v6346, %v6346
  %v6411 = vpack.c.bf16 %v6347, %v6347
  %v6412 = vpack.c.bf16 %v6348, %v6348
  %v6413 = vpack.c.bf16 %v6349, %v6349
  %v6414 = vpack.c.bf16 %v6350, %v6350
  %v6415 = vpack.c.bf16 %v6351, %v6351
  %v6416 = vpack.c.bf16 %v6352, %v6352
  %v6417 = vpack.c.bf16 %v6353, %v6353
  %v6418 = vpack.c.bf16 %v6354, %v6354
  %v6419 = vpack.c.bf16 %v6355, %v6355
  %v6420 = vpack.c.bf16 %v6356, %v6356
  %v6421 = vpack.c.bf16 %v6357, %v6357
  %v6422 = vpack.c.bf16 %v6358, %v6358
  %v6423 = vpack.c.bf16 %v6359, %v6359
  %v6424 = vpack.c.bf16 %v6360, %v6360
  %v6425 = vpack.c.bf16 %v6361, %v6361
  %v6426 = vpack.c.bf16 %v6362, %v6362
  %v6427 = vpack.c.bf16 %v6363, %v6363
  %v6428 = vpack.c.bf16 %v6364, %v6364
  %v6429 = vpack.c.bf16 %v6365, %v6365
  %v6430 = vpack.c.bf16 %v6366, %v6366
  %v6431 = vpack.c.bf16 %v6367, %v6367
  %v6432 = vpack.c.bf16 %v6368, %v6368
  %v6433 = vpack.c.bf16 %v6369, %v6369
  %v6434 = vpack.c.bf16 %v6370, %v6370
  %v6435 = vpack.c.bf16 %v6371, %v6371
  %v6436 = vpack.c.bf16 %v6372, %v6372
  %v6437 = vpack.c.bf16 %v6373, %v6373
  %v6438 = vpack.c.bf16 %v6374, %v6374
  %v6439 = vpack.c.bf16 %v6375, %v6375
  %v6440 = vpack.c.bf16 %v6376, %v6376
  %v6441 = vpack.c.bf16 %v6377, %v6377
  %v6442 = vpack.c.bf16 %v6378, %v6378
  %v6443 = vpack.c.bf16 %v6379, %v6379
  %v6444 = vpack.c.bf16 %v6380, %v6380
  %v6445 = vpack.c.bf16 %v6381, %v6381
  %v6446 = vpack.c.bf16 %v6382, %v6382
  %v6447 = vpack.c.bf16 %v6383, %v6383
  %v6448 = vpack.c.bf16 %v6384, %v6384
  %v6449 = vpack.c.bf16 %v6385, %v6385
  %v6450 = vpack.c.bf16 %v6386, %v6386
  %v6451 = vpack.c.bf16 %v6387, %v6387
  %v6452 = vpack.c.bf16 %v6388, %v6388
  %v6453 = vpack.c.bf16 %v6389, %v6389
  %v6454 = vpack.c.bf16 %v6390, %v6390
  %v6455 = vpack.c.bf16 %v6391, %v6391
  %v6456 = vpack.c.bf16 %v6392, %v6392
  %v6457 = vpack.c.bf16 %v6393, %v6393
  %v6458 = vpack.c.bf16 %v6394, %v6394
  %v6459 = vpack.c.bf16 %v6395, %v6395
  %v6460 = vpack.c.bf16 %v6396, %v6396
  %v6461 = vpack.c.bf16 %v6397, %v6397
  %v6462 = vld [vmem:[%s1000] sm:$0xff]
  %v6463 = vld [vmem:[%s1000 + $0x8] sm:$0xff]
  %v6464 = vld [vmem:[%s1000 + $0x18] sm:$0xff]
  %v6465 = vld [vmem:[%s1000 + $0x20] sm:$0xff]
  %v6466 = vld [vmem:[%s1000 + $0x30] sm:$0xff]
  %v6467 = vld [vmem:[%s1000 + $0x38] sm:$0xff]
  %v6468 = vld [vmem:[%s1000 + $0x48] sm:$0xff]
  %v6469 = vld [vmem:[%s1000 + $0x50] sm:$0xff]
  %v6470 = vld [vmem:[%s1000 + $0x60] sm:$0xff]
  %v6471 = vld [vmem:[%s1000 + $0x68] sm:$0xff]
  %v6472 = vld [vmem:[%s1000 + $0x78] sm:$0xff]
  %v6473 = vld [vmem:[%s1000 + $0x80] sm:$0xff]
  %v6474 = vld [vmem:[%s1000 + $0x90] sm:$0xff]
  %v6475 = vld [vmem:[%s1000 + $0x98] sm:$0xff]
  %v6476 = vld [vmem:[%s1000 + $0xa8] sm:$0xff]
  %v6477 = vld [vmem:[%s1000 + $0xb0] sm:$0xff]
  %v6478 = vld [vmem:[%s1000 + $0xc0] sm:$0xff]
  %v6479 = vld [vmem:[%s1000 + $0xc8] sm:$0xff]
  %v6480 = vld [vmem:[%s1000 + $0xd8] sm:$0xff]
  %v6481 = vld [vmem:[%s1000 + $0xe0] sm:$0xff]
  %v6482 = vld [vmem:[%s1000 + $0xf0] sm:$0xff]
  %v6483 = vld [vmem:[%s1000 + $0xf8] sm:$0xff]
  %v6484 = vld [vmem:[%s1000 + $0x108] sm:$0xff]
  %v6485 = vld [vmem:[%s1000 + $0x110] sm:$0xff]
  %v6486 = vld [vmem:[%s1000 + $0x120] sm:$0xff]
  %v6487 = vld [vmem:[%s1000 + $0x128] sm:$0xff]
  %v6488 = vld [vmem:[%s1000 + $0x138] sm:$0xff]
  %v6489 = vld [vmem:[%s1000 + $0x140] sm:$0xff]
  %v6490 = vld [vmem:[%s1000 + $0x150] sm:$0xff]
  %v6491 = vld [vmem:[%s1000 + $0x158] sm:$0xff]
  %v6492 = vld [vmem:[%s1000 + $0x168] sm:$0xff]
  %v6493 = vld [vmem:[%s1000 + $0x170] sm:$0xff]
  %v6494 = vld [vmem:[%s1000 + $0x1b0] sm:$0xff]
  %v6495 = vld [vmem:[%s1000 + $0x1b8] sm:$0xff]
  %v6496 = vld [vmem:[%s1000 + $0x1c8] sm:$0xff]
  %v6497 = vld [vmem:[%s1000 + $0x1d0] sm:$0xff]
  %v6498 = vld [vmem:[%s1000 + $0x1e0] sm:$0xff]
  %v6499 = vld [vmem:[%s1000 + $0x1e8] sm:$0xff]
  %v6500 = vld [vmem:[%s1000 + $0x1f8] sm:$0xff]
  %v6501 = vld [vmem:[%s1000 + $0x200] sm:$0xff]
  %v6502 = vld [vmem:[%s1000 + $0x210] sm:$0xff]
  %v6503 = vld [vmem:[%s1000 + $0x218] sm:$0xff]
  %v6504 = vld [vmem:[%s1000 + $0x228] sm:$0xff]
  %v6505 = vld [vmem:[%s1000 + $0x230] sm:$0xff]
  %v6506 = vld [vmem:[%s1000 + $0x240] sm:$0xff]
  %v6507 = vld [vmem:[%s1000 + $0x248] sm:$0xff]
  %v6508 = vld [vmem:[%s1000 + $0x258] sm:$0xff]
  %v6509 = vld [vmem:[%s1000 + $0x260] sm:$0xff]
  %v6510 = vld [vmem:[%s1000 + $0x270] sm:$0xff]
  %v6511 = vld [vmem:[%s1000 + $0x278] sm:$0xff]
  %v6512 = vld [vmem:[%s1000 + $0x288] sm:$0xff]
  %v6513 = vld [vmem:[%s1000 + $0x290] sm:$0xff]
  %v6514 = vld [vmem:[%s1000 + $0x2a0] sm:$0xff]
  %v6515 = vld [vmem:[%s1000 + $0x2a8] sm:$0xff]
  %v6516 = vld [vmem:[%s1000 + $0x2b8] sm:$0xff]
  %v6517 = vld [vmem:[%s1000 + $0x2c0] sm:$0xff]
  %v6518 = vld [vmem:[%s1000 + $0x2d0] sm:$0xff]
  %v6519 = vld [vmem:[%s1000 + $0x2d8] sm:$0xff]
  %v6520 = vld [vmem:[%s1000 + $0x2e8] sm:$0xff]
  %v6521 = vld [vmem:[%s1000 + $0x2f0] sm:$0xff]
  %v6522 = vld [vmem:[%s1000 + $0x300] sm:$0xff]
  %v6523 = vld [vmem:[%s1000 + $0x308] sm:$0xff]
  %v6524 = vld [vmem:[%s1000 + $0x318] sm:$0xff]
  %v6525 = vld [vmem:[%s1000 + $0x320] sm:$0xff]
  %v6526 = vpack.c.bf16 %v6462, %v6462
  %v6527 = vpack.c.bf16 %v6463, %v6463
  %v6528 = vpack.c.bf16 %v6464, %v6464
  %v6529 = vpack.c.bf16 %v6465, %v6465
  %v6530 = vpack.c.bf16 %v6466, %v6466
  %v6531 = vpack.c.bf16 %v6467, %v6467
  %v6532 = vpack.c.bf16 %v6468, %v6468
  %v6533 = vpack.c.bf16 %v6469, %v6469
  %v6534 = vpack.c.bf16 %v6470, %v6470
  %v6535 = vpack.c.bf16 %v6471, %v6471
  %v6536 = vpack.c.bf16 %v6472, %v6472
  %v6537 = vpack.c.bf16 %v6473, %v6473
  %v6538 = vpack.c.bf16 %v6474, %v6474
  %v6539 = vpack.c.bf16 %v6475, %v6475
  %v6540 = vpack.c.bf16 %v6476, %v6476
  %v6541 = vpack.c.bf16 %v6477, %v6477
  %v6542 = vpack.c.bf16 %v6478, %v6478
  %v6543 = vpack.c.bf16 %v6479, %v6479
  %v6544 = vpack.c.bf16 %v6480, %v6480
  %v6545 = vpack.c.bf16 %v6481, %v6481
  %v6546 = vpack.c.bf16 %v6482, %v6482
  %v6547 = vpack.c.bf16 %v6483, %v6483
  %v6548 = vpack.c.bf16 %v6484, %v6484
  %v6549 = vpack.c.bf16 %v6485, %v6485
  %v6550 = vpack.c.bf16 %v6486, %v6486
  %v6551 = vpack.c.bf16 %v6487, %v6487
  %v6552 = vpack.c.bf16 %v6488, %v6488
  %v6553 = vpack.c.bf16 %v6489, %v6489
  %v6554 = vpack.c.bf16 %v6490, %v6490
  %v6555 = vpack.c.bf16 %v6491, %v6491
  %v6556 = vpack.c.bf16 %v6492, %v6492
  %v6557 = vpack.c.bf16 %v6493, %v6493
  %v6558 = vpack.c.bf16 %v6494, %v6494
  %v6559 = vpack.c.bf16 %v6495, %v6495
  %v6560 = vpack.c.bf16 %v6496, %v6496
  %v6561 = vpack.c.bf16 %v6497, %v6497
  %v6562 = vpack.c.bf16 %v6498, %v6498
  %v6563 = vpack.c.bf16 %v6499, %v6499
  %v6564 = vpack.c.bf16 %v6500, %v6500
  %v6565 = vpack.c.bf16 %v6501, %v6501
  %v6566 = vpack.c.bf16 %v6502, %v6502
  %v6567 = vpack.c.bf16 %v6503, %v6503
  %v6568 = vpack.c.bf16 %v6504, %v6504
  %v6569 = vpack.c.bf16 %v6505, %v6505
  %v6570 = vpack.c.bf16 %v6506, %v6506
  %v6571 = vpack.c.bf16 %v6507, %v6507
  %v6572 = vpack.c.bf16 %v6508, %v6508
  %v6573 = vpack.c.bf16 %v6509, %v6509
  %v6574 = vpack.c.bf16 %v6510, %v6510
  %v6575 = vpack.c.bf16 %v6511, %v6511
  %v6576 = vpack.c.bf16 %v6512, %v6512
  %v6577 = vpack.c.bf16 %v6513, %v6513
  %v6578 = vpack.c.bf16 %v6514, %v6514
  %v6579 = vpack.c.bf16 %v6515, %v6515
  %v6580 = vpack.c.bf16 %v6516, %v6516
  %v6581 = vpack.c.bf16 %v6517, %v6517
  %v6582 = vpack.c.bf16 %v6518, %v6518
  %v6583 = vpack.c.bf16 %v6519, %v6519
  %v6584 = vpack.c.bf16 %v6520, %v6520
  %v6585 = vpack.c.bf16 %v6521, %v6521
  %v6586 = vpack.c.bf16 %v6522, %v6522
  %v6587 = vpack.c.bf16 %v6523, %v6523
  %v6588 = vpack.c.bf16 %v6524, %v6524
  %v6589 = vpack.c.bf16 %v6525, %v6525
  %v6590 = vld [vmem:[%s1000 + $0x1] sm:$0xff]
  %v6591 = vld [vmem:[%s1000 + $0x9] sm:$0xff]
  %v6592 = vld [vmem:[%s1000 + $0x19] sm:$0xff]
  %v6593 = vld [vmem:[%s1000 + $0x21] sm:$0xff]
  %v6594 = vld [vmem:[%s1000 + $0x31] sm:$0xff]
  %v6595 = vld [vmem:[%s1000 + $0x39] sm:$0xff]
  %v6596 = vld [vmem:[%s1000 + $0x49] sm:$0xff]
  %v6597 = vld [vmem:[%s1000 + $0x51] sm:$0xff]
  %v6598 = vld [vmem:[%s1000 + $0x61] sm:$0xff]
  %v6599 = vld [vmem:[%s1000 + $0x69] sm:$0xff]
  %v6600 = vld [vmem:[%s1000 + $0x79] sm:$0xff]
  %v6601 = vld [vmem:[%s1000 + $0x81] sm:$0xff]
  %v6602 = vld [vmem:[%s1000 + $0x91] sm:$0xff]
  %v6603 = vld [vmem:[%s1000 + $0x99] sm:$0xff]
  %v6604 = vld [vmem:[%s1000 + $0xa9] sm:$0xff]
  %v6605 = vld [vmem:[%s1000 + $0xb1] sm:$0xff]
  %v6606 = vld [vmem:[%s1000 + $0xc1] sm:$0xff]
  %v6607 = vld [vmem:[%s1000 + $0xc9] sm:$0xff]
  %v6608 = vld [vmem:[%s1000 + $0xd9] sm:$0xff]
  %v6609 = vld [vmem:[%s1000 + $0xe1] sm:$0xff]
  %v6610 = vld [vmem:[%s1000 + $0xf1] sm:$0xff]
  %v6611 = vld [vmem:[%s1000 + $0xf9] sm:$0xff]
  %v6612 = vld [vmem:[%s1000 + $0x109] sm:$0xff]
  %v6613 = vld [vmem:[%s1000 + $0x111] sm:$0xff]
  %v6614 = vld [vmem:[%s1000 + $0x121] sm:$0xff]
  %v6615 = vld [vmem:[%s1000 + $0x129] sm:$0xff]
  %v6616 = vld [vmem:[%s1000 + $0x139] sm:$0xff]
  %v6617 = vld [vmem:[%s1000 + $0x141] sm:$0xff]
  %v6618 = vld [vmem:[%s1000 + $0x151] sm:$0xff]
  %v6619 = vld [vmem:[%s1000 + $0x159] sm:$0xff]
  %v6620 = vld [vmem:[%s1000 + $0x169] sm:$0xff]
  %v6621 = vld [vmem:[%s1000 + $0x171] sm:$0xff]
  %v6622 = vld [vmem:[%s1000 + $0x1b1] sm:$0xff]
  %v6623 = vld [vmem:[%s1000 + $0x1b9] sm:$0xff]
  %v6624 = vld [vmem:[%s1000 + $0x1c9] sm:$0xff]
  %v6625 = vld [vmem:[%s1000 + $0x1d1] sm:$0xff]
  %v6626 = vld [vmem:[%s1000 + $0x1e1] sm:$0xff]
  %v6627 = vld [vmem:[%s1000 + $0x1e9] sm:$0xff]
  %v6628 = vld [vmem:[%s1000 + $0x1f9] sm:$0xff]
  %v6629 = vld [vmem:[%s1000 + $0x201] sm:$0xff]
  %v6630 = vld [vmem:[%s1000 + $0x211] sm:$0xff]
  %v6631 = vld [vmem:[%s1000 + $0x219] sm:$0xff]
  %v6632 = vld [vmem:[%s1000 + $0x229] sm:$0xff]
  %v6633 = vld [vmem:[%s1000 + $0x231] sm:$0xff]
  %v6634 = vld [vmem:[%s1000 + $0x241] sm:$0xff]
  %v6635 = vld [vmem:[%s1000 + $0x249] sm:$0xff]
  %v6636 = vld [vmem:[%s1000 + $0x259] sm:$0xff]
  %v6637 = vld [vmem:[%s1000 + $0x261] sm:$0xff]
  %v6638 = vld [vmem:[%s1000 + $0x271] sm:$0xff]
  %v6639 = vld [vmem:[%s1000 + $0x279] sm:$0xff]
  %v6640 = vld [vmem:[%s1000 + $0x289] sm:$0xff]
  %v6641 = vld [vmem:[%s1000 + $0x291] sm:$0xff]
  %v6642 = vld [vmem:[%s1000 + $0x2a1] sm:$0xff]
  %v6643 = vld [vmem:[%s1000 + $0x2a9] sm:$0xff]
  %v6644 = vld [vmem:[%s1000 + $0x2b9] sm:$0xff]
  %v6645 = vld [vmem:[%s1000 + $0x2c1] sm:$0xff]
  %v6646 = vld [vmem:[%s1000 + $0x2d1] sm:$0xff]
  %v6647 = vld [vmem:[%s1000 + $0x2d9] sm:$0xff]
  %v6648 = vld [vmem:[%s1000 + $0x2e9] sm:$0xff]
  %v6649 = vld [vmem:[%s1000 + $0x2f1] sm:$0xff]
  %v6650 = vld [vmem:[%s1000 + $0x301] sm:$0xff]
  %v6651 = vld [vmem:[%s1000 + $0x309] sm:$0xff]
  %v6652 = vld [vmem:[%s1000 + $0x319] sm:$0xff]
  %v6653 = vld [vmem:[%s1000 + $0x321] sm:$0xff]
  %v6654 = vpack.c.bf16 %v6590, %v6590
  %v6655 = vpack.c.bf16 %v6591, %v6591
  %v6656 = vpack.c.bf16 %v6592, %v6592
  %v6657 = vpack.c.bf16 %v6593, %v6593
  %v6658 = vpack.c.bf16 %v6594, %v6594
  %v6659 = vpack.c.bf16 %v6595, %v6595
  %v6660 = vpack.c.bf16 %v6596, %v6596
  %v6661 = vpack.c.bf16 %v6597, %v6597
  %v6662 = vpack.c.bf16 %v6598, %v6598
  %v6663 = vpack.c.bf16 %v6599, %v6599
  %v6664 = vpack.c.bf16 %v6600, %v6600
  %v6665 = vpack.c.bf16 %v6601, %v6601
  %v6666 = vpack.c.bf16 %v6602, %v6602
  %v6667 = vpack.c.bf16 %v6603, %v6603
  %v6668 = vpack.c.bf16 %v6604, %v6604
  %v6669 = vpack.c.bf16 %v6605, %v6605
  %v6670 = vpack.c.bf16 %v6606, %v6606
  %v6671 = vpack.c.bf16 %v6607, %v6607
  %v6672 = vpack.c.bf16 %v6608, %v6608
  %v6673 = vpack.c.bf16 %v6609, %v6609
  %v6674 = vpack.c.bf16 %v6610, %v6610
  %v6675 = vpack.c.bf16 %v6611, %v6611
  %v6676 = vpack.c.bf16 %v6612, %v6612
  %v6677 = vpack.c.bf16 %v6613, %v6613
  %v6678 = vpack.c.bf16 %v6614, %v6614
  %v6679 = vpack.c.bf16 %v6615, %v6615
  %v6680 = vpack.c.bf16 %v6616, %v6616
  %v6681 = vpack.c.bf16 %v6617, %v6617
  %v6682 = vpack.c.bf16 %v6618, %v6618
  %v6683 = vpack.c.bf16 %v6619, %v6619
  %v6684 = vpack.c.bf16 %v6620, %v6620
  %v6685 = vpack.c.bf16 %v6621, %v6621
  %v6686 = vpack.c.bf16 %v6622, %v6622
  %v6687 = vpack.c.bf16 %v6623, %v6623
  %v6688 = vpack.c.bf16 %v6624, %v6624
  %v6689 = vpack.c.bf16 %v6625, %v6625
  %v6690 = vpack.c.bf16 %v6626, %v6626
  %v6691 = vpack.c.bf16 %v6627, %v6627
  %v6692 = vpack.c.bf16 %v6628, %v6628
  %v6693 = vpack.c.bf16 %v6629, %v6629
  %v6694 = vpack.c.bf16 %v6630, %v6630
  %v6695 = vpack.c.bf16 %v6631, %v6631
  %v6696 = vpack.c.bf16 %v6632, %v6632
  %v6697 = vpack.c.bf16 %v6633, %v6633
  %v6698 = vpack.c.bf16 %v6634, %v6634
  %v6699 = vpack.c.bf16 %v6635, %v6635
  %v6700 = vpack.c.bf16 %v6636, %v6636
  %v6701 = vpack.c.bf16 %v6637, %v6637
  %v6702 = vpack.c.bf16 %v6638, %v6638
  %v6703 = vpack.c.bf16 %v6639, %v6639
  %v6704 = vpack.c.bf16 %v6640, %v6640
  %v6705 = vpack.c.bf16 %v6641, %v6641
  %v6706 = vpack.c.bf16 %v6642, %v6642
  %v6707 = vpack.c.bf16 %v6643, %v6643
  %v6708 = vpack.c.bf16 %v6644, %v6644
  %v6709 = vpack.c.bf16 %v6645, %v6645
  %v6710 = vpack.c.bf16 %v6646, %v6646
  %v6711 = vpack.c.bf16 %v6647, %v6647
  %v6712 = vpack.c.bf16 %v6648, %v6648
  %v6713 = vpack.c.bf16 %v6649, %v6649
  %v6714 = vpack.c.bf16 %v6650, %v6650
  %v6715 = vpack.c.bf16 %v6651, %v6651
  %v6716 = vpack.c.bf16 %v6652, %v6652
  %v6717 = vpack.c.bf16 %v6653, %v6653
  %v6718 = vld [vmem:[%s1000 + $0x2] sm:$0xff]
  %v6719 = vld [vmem:[%s1000 + $0xa] sm:$0xff]
  %v6720 = vld [vmem:[%s1000 + $0x1a] sm:$0xff]
  %v6721 = vld [vmem:[%s1000 + $0x22] sm:$0xff]
  %v6722 = vld [vmem:[%s1000 + $0x32] sm:$0xff]
  %v6723 = vld [vmem:[%s1000 + $0x3a] sm:$0xff]
  %v6724 = vld [vmem:[%s1000 + $0x4a] sm:$0xff]
  %v6725 = vld [vmem:[%s1000 + $0x52] sm:$0xff]
  %v6726 = vld [vmem:[%s1000 + $0x62] sm:$0xff]
  %v6727 = vld [vmem:[%s1000 + $0x6a] sm:$0xff]
  %v6728 = vld [vmem:[%s1000 + $0x7a] sm:$0xff]
  %v6729 = vld [vmem:[%s1000 + $0x82] sm:$0xff]
  %v6730 = vld [vmem:[%s1000 + $0x92] sm:$0xff]
  %v6731 = vld [vmem:[%s1000 + $0x9a] sm:$0xff]
  %v6732 = vld [vmem:[%s1000 + $0xaa] sm:$0xff]
  %v6733 = vld [vmem:[%s1000 + $0xb2] sm:$0xff]
  %v6734 = vld [vmem:[%s1000 + $0xc2] sm:$0xff]
  %v6735 = vld [vmem:[%s1000 + $0xca] sm:$0xff]
  %v6736 = vld [vmem:[%s1000 + $0xda] sm:$0xff]
  %v6737 = vld [vmem:[%s1000 + $0xe2] sm:$0xff]
  %v6738 = vld [vmem:[%s1000 + $0xf2] sm:$0xff]
  %v6739 = vld [vmem:[%s1000 + $0xfa] sm:$0xff]
  %v6740 = vld [vmem:[%s1000 + $0x10a] sm:$0xff]
  %v6741 = vld [vmem:[%s1000 + $0x112] sm:$0xff]
  %v6742 = vld [vmem:[%s1000 + $0x122] sm:$0xff]
  %v6743 = vld [vmem:[%s1000 + $0x12a] sm:$0xff]
  %v6744 = vld [vmem:[%s1000 + $0x13a] sm:$0xff]
  %v6745 = vld [vmem:[%s1000 + $0x142] sm:$0xff]
  %v6746 = vld [vmem:[%s1000 + $0x152] sm:$0xff]
  %v6747 = vld [vmem:[%s1000 + $0x15a] sm:$0xff]
  %v6748 = vld [vmem:[%s1000 + $0x16a] sm:$0xff]
  %v6749 = vld [vmem:[%s1000 + $0x172] sm:$0xff]
  %v6750 = vld [vmem:[%s1000 + $0x1b2] sm:$0xff]
  %v6751 = vld [vmem:[%s1000 + $0x1ba] sm:$0xff]
  %v6752 = vld [vmem:[%s1000 + $0x1ca] sm:$0xff]
  %v6753 = vld [vmem:[%s1000 + $0x1d2] sm:$0xff]
  %v6754 = vld [vmem:[%s1000 + $0x1e2] sm:$0xff]
  %v6755 = vld [vmem:[%s1000 + $0x1ea] sm:$0xff]
  %v6756 = vld [vmem:[%s1000 + $0x1fa] sm:$0xff]
  %v6757 = vld [vmem:[%s1000 + $0x202] sm:$0xff]
  %v6758 = vld [vmem:[%s1000 + $0x212] sm:$0xff]
  %v6759 = vld [vmem:[%s1000 + $0x21a] sm:$0xff]
  %v6760 = vld [vmem:[%s1000 + $0x22a] sm:$0xff]
  %v6761 = vld [vmem:[%s1000 + $0x232] sm:$0xff]
  %v6762 = vld [vmem:[%s1000 + $0x242] sm:$0xff]
  %v6763 = vld [vmem:[%s1000 + $0x24a] sm:$0xff]
  %v6764 = vld [vmem:[%s1000 + $0x25a] sm:$0xff]
  %v6765 = vld [vmem:[%s1000 + $0x262] sm:$0xff]
  %v6766 = vld [vmem:[%s1000 + $0x272] sm:$0xff]
  %v6767 = vld [vmem:[%s1000 + $0x27a] sm:$0xff]
  %v6768 = vld [vmem:[%s1000 + $0x28a] sm:$0xff]
  %v6769 = vld [vmem:[%s1000 + $0x292] sm:$0xff]
  %v6770 = vld [vmem:[%s1000 + $0x2a2] sm:$0xff]
  %v6771 = vld [vmem:[%s1000 + $0x2aa] sm:$0xff]
  %v6772 = vld [vmem:[%s1000 + $0x2ba] sm:$0xff]
  %v6773 = vld [vmem:[%s1000 + $0x2c2] sm:$0xff]
  %v6774 = vld [vmem:[%s1000 + $0x2d2] sm:$0xff]
  %v6775 = vld [vmem:[%s1000 + $0x2da] sm:$0xff]
  %v6776 = vld [vmem:[%s1000 + $0x2ea] sm:$0xff]
  %v6777 = vld [vmem:[%s1000 + $0x2f2] sm:$0xff]
  %v6778 = vld [vmem:[%s1000 + $0x302] sm:$0xff]
  %v6779 = vld [vmem:[%s1000 + $0x30a] sm:$0xff]
  %v6780 = vld [vmem:[%s1000 + $0x31a] sm:$0xff]
  %v6781 = vld [vmem:[%s1000 + $0x322] sm:$0xff]
  %v6782 = vpack.c.bf16 %v6718, %v6718
  %v6783 = vpack.c.bf16 %v6719, %v6719
  %v6784 = vpack.c.bf16 %v6720, %v6720
  %v6785 = vpack.c.bf16 %v6721, %v6721
  %v6786 = vpack.c.bf16 %v6722, %v6722
  %v6787 = vpack.c.bf16 %v6723, %v6723
  %v6788 = vpack.c.bf16 %v6724, %v6724
  %v6789 = vpack.c.bf16 %v6725, %v6725
  %v6790 = vpack.c.bf16 %v6726, %v6726
  %v6791 = vpack.c.bf16 %v6727, %v6727
  %v6792 = vpack.c.bf16 %v6728, %v6728
  %v6793 = vpack.c.bf16 %v6729, %v6729
  %v6794 = vpack.c.bf16 %v6730, %v6730
  %v6795 = vpack.c.bf16 %v6731, %v6731
  %v6796 = vpack.c.bf16 %v6732, %v6732
  %v6797 = vpack.c.bf16 %v6733, %v6733
  %v6798 = vpack.c.bf16 %v6734, %v6734
  %v6799 = vpack.c.bf16 %v6735, %v6735
  %v6800 = vpack.c.bf16 %v6736, %v6736
  %v6801 = vpack.c.bf16 %v6737, %v6737
  %v6802 = vpack.c.bf16 %v6738, %v6738
  %v6803 = vpack.c.bf16 %v6739, %v6739
  %v6804 = vpack.c.bf16 %v6740, %v6740
  %v6805 = vpack.c.bf16 %v6741, %v6741
  %v6806 = vpack.c.bf16 %v6742, %v6742
  %v6807 = vpack.c.bf16 %v6743, %v6743
  %v6808 = vpack.c.bf16 %v6744, %v6744
  %v6809 = vpack.c.bf16 %v6745, %v6745
  %v6810 = vpack.c.bf16 %v6746, %v6746
  %v6811 = vpack.c.bf16 %v6747, %v6747
  %v6812 = vpack.c.bf16 %v6748, %v6748
  %v6813 = vpack.c.bf16 %v6749, %v6749
  %v6814 = vpack.c.bf16 %v6750, %v6750
  %v6815 = vpack.c.bf16 %v6751, %v6751
  %v6816 = vpack.c.bf16 %v6752, %v6752
  %v6817 = vpack.c.bf16 %v6753, %v6753
  %v6818 = vpack.c.bf16 %v6754, %v6754
  %v6819 = vpack.c.bf16 %v6755, %v6755
  %v6820 = vpack.c.bf16 %v6756, %v6756
  %v6821 = vpack.c.bf16 %v6757, %v6757
  %v6822 = vpack.c.bf16 %v6758, %v6758
  %v6823 = vpack.c.bf16 %v6759, %v6759
  %v6824 = vpack.c.bf16 %v6760, %v6760
  %v6825 = vpack.c.bf16 %v6761, %v6761
  %v6826 = vpack.c.bf16 %v6762, %v6762
  %v6827 = vpack.c.bf16 %v6763, %v6763
  %v6828 = vpack.c.bf16 %v6764, %v6764
  %v6829 = vpack.c.bf16 %v6765, %v6765
  %v6830 = vpack.c.bf16 %v6766, %v6766
  %v6831 = vpack.c.bf16 %v6767, %v6767
  %v6832 = vpack.c.bf16 %v6768, %v6768
  %v6833 = vpack.c.bf16 %v6769, %v6769
  %v6834 = vpack.c.bf16 %v6770, %v6770
  %v6835 = vpack.c.bf16 %v6771, %v6771
  %v6836 = vpack.c.bf16 %v6772, %v6772
  %v6837 = vpack.c.bf16 %v6773, %v6773
  %v6838 = vpack.c.bf16 %v6774, %v6774
  %v6839 = vpack.c.bf16 %v6775, %v6775
  %v6840 = vpack.c.bf16 %v6776, %v6776
  %v6841 = vpack.c.bf16 %v6777, %v6777
  %v6842 = vpack.c.bf16 %v6778, %v6778
  %v6843 = vpack.c.bf16 %v6779, %v6779
  %v6844 = vpack.c.bf16 %v6780, %v6780
  %v6845 = vpack.c.bf16 %v6781, %v6781
  %v6910 = vunpack.c.l.b16 %v5758
  %v6911 = vunpack.c.l.b16 %v5759
  %v6912 = vunpack.c.l.b16 %v5760
  %v6913 = vunpack.c.l.b16 %v5761
  %v6914 = vunpack.c.l.b16 %v5762
  %v6915 = vunpack.c.l.b16 %v5763
  %v6916 = vunpack.c.l.b16 %v5764
  %v6917 = vunpack.c.l.b16 %v5765
  %v6918 = vunpack.c.l.b16 %v5766
  %v6919 = vunpack.c.l.b16 %v5767
  %v6920 = vunpack.c.l.b16 %v5768
  %v6921 = vunpack.c.l.b16 %v5769
  %v6922 = vunpack.c.l.b16 %v5770
  %v6923 = vunpack.c.l.b16 %v5771
  %v6924 = vunpack.c.l.b16 %v5772
  %v6925 = vunpack.c.l.b16 %v5773
  %v6926 = vunpack.c.l.b16 %v5774
  %v6927 = vunpack.c.l.b16 %v5775
  %v6928 = vunpack.c.l.b16 %v5776
  %v6929 = vunpack.c.l.b16 %v5777
  %v6930 = vunpack.c.l.b16 %v5778
  %v6931 = vunpack.c.l.b16 %v5779
  %v6932 = vunpack.c.l.b16 %v5780
  %v6933 = vunpack.c.l.b16 %v5781
  %v6934 = vunpack.c.l.b16 %v5782
  %v6935 = vunpack.c.l.b16 %v5783
  %v6936 = vunpack.c.l.b16 %v5784
  %v6937 = vunpack.c.l.b16 %v5785
  %v6938 = vunpack.c.l.b16 %v5786
  %v6939 = vunpack.c.l.b16 %v5787
  %v6940 = vunpack.c.l.b16 %v5788
  %v6941 = vunpack.c.l.b16 %v5789
  %v6942 = vunpack.c.l.b16 %v5790
  %v6943 = vunpack.c.l.b16 %v5791
  %v6944 = vunpack.c.l.b16 %v5792
  %v6945 = vunpack.c.l.b16 %v5793
  %v6946 = vunpack.c.l.b16 %v5794
  %v6947 = vunpack.c.l.b16 %v5795
  %v6948 = vunpack.c.l.b16 %v5796
  %v6949 = vunpack.c.l.b16 %v5797
  %v6950 = vunpack.c.l.b16 %v5798
  %v6951 = vunpack.c.l.b16 %v5799
  %v6952 = vunpack.c.l.b16 %v5800
  %v6953 = vunpack.c.l.b16 %v5801
  %v6954 = vunpack.c.l.b16 %v5802
  %v6955 = vunpack.c.l.b16 %v5803
  %v6956 = vunpack.c.l.b16 %v5804
  %v6957 = vunpack.c.l.b16 %v5805
  %v6958 = vunpack.c.l.b16 %v5806
  %v6959 = vunpack.c.l.b16 %v5807
  %v6960 = vunpack.c.l.b16 %v5808
  %v6961 = vunpack.c.l.b16 %v5809
  %v6962 = vunpack.c.l.b16 %v5810
  %v6963 = vunpack.c.l.b16 %v5811
  %v6964 = vunpack.c.l.b16 %v5812
  %v6965 = vunpack.c.l.b16 %v5813
  %v6966 = vunpack.c.l.b16 %v5814
  %v6967 = vunpack.c.l.b16 %v5815
  %v6968 = vunpack.c.l.b16 %v5816
  %v6969 = vunpack.c.l.b16 %v5817
  %v6970 = vunpack.c.l.b16 %v5818
  %v6971 = vunpack.c.l.b16 %v5819
  %v6972 = vunpack.c.l.b16 %v5820
  %v6973 = vunpack.c.l.b16 %v5821
  %v6974 = vpack.c.b16 %v6911, %v6910
  %v6975 = vpack.c.b16 %v6913, %v6912
  %v6976 = vpack.c.b16 %v6915, %v6914
  %v6977 = vpack.c.b16 %v6917, %v6916
  %v6978 = vpack.c.b16 %v6919, %v6918
  %v6979 = vpack.c.b16 %v6921, %v6920
  %v6980 = vpack.c.b16 %v6923, %v6922
  %v6981 = vpack.c.b16 %v6925, %v6924
  %v6982 = vpack.c.b16 %v6927, %v6926
  %v6983 = vpack.c.b16 %v6929, %v6928
  %v6984 = vpack.c.b16 %v6931, %v6930
  %v6985 = vpack.c.b16 %v6933, %v6932
  %v6986 = vpack.c.b16 %v6935, %v6934
  %v6987 = vpack.c.b16 %v6937, %v6936
  %v6988 = vpack.c.b16 %v6939, %v6938
  %v6989 = vpack.c.b16 %v6941, %v6940
  %v6990 = vpack.c.b16 %v6943, %v6942
  %v6991 = vpack.c.b16 %v6945, %v6944
  %v6992 = vpack.c.b16 %v6947, %v6946
  %v6993 = vpack.c.b16 %v6949, %v6948
  %v6994 = vpack.c.b16 %v6951, %v6950
  %v6995 = vpack.c.b16 %v6953, %v6952
  %v6996 = vpack.c.b16 %v6955, %v6954
  %v6997 = vpack.c.b16 %v6957, %v6956
  %v6998 = vpack.c.b16 %v6959, %v6958
  %v6999 = vpack.c.b16 %v6961, %v6960
  %v7000 = vpack.c.b16 %v6963, %v6962
  %v7001 = vpack.c.b16 %v6965, %v6964
  %v7002 = vpack.c.b16 %v6967, %v6966
  %v7003 = vpack.c.b16 %v6969, %v6968
  %v7004 = vpack.c.b16 %v6971, %v6970
  %v7005 = vpack.c.b16 %v6973, %v6972
  %v7102 = vunpack.c.l.b16 %v5886
  %v7103 = vunpack.c.l.b16 %v5887
  %v7104 = vunpack.c.l.b16 %v5888
  %v7105 = vunpack.c.l.b16 %v5889
  %v7106 = vunpack.c.l.b16 %v5890
  %v7107 = vunpack.c.l.b16 %v5891
  %v7108 = vunpack.c.l.b16 %v5892
  %v7109 = vunpack.c.l.b16 %v5893
  %v7110 = vunpack.c.l.b16 %v5894
  %v7111 = vunpack.c.l.b16 %v5895
  %v7112 = vunpack.c.l.b16 %v5896
  %v7113 = vunpack.c.l.b16 %v5897
  %v7114 = vunpack.c.l.b16 %v5898
  %v7115 = vunpack.c.l.b16 %v5899
  %v7116 = vunpack.c.l.b16 %v5900
  %v7117 = vunpack.c.l.b16 %v5901
  %v7118 = vunpack.c.l.b16 %v5902
  %v7119 = vunpack.c.l.b16 %v5903
  %v7120 = vunpack.c.l.b16 %v5904
  %v7121 = vunpack.c.l.b16 %v5905
  %v7122 = vunpack.c.l.b16 %v5906
  %v7123 = vunpack.c.l.b16 %v5907
  %v7124 = vunpack.c.l.b16 %v5908
  %v7125 = vunpack.c.l.b16 %v5909
  %v7126 = vunpack.c.l.b16 %v5910
  %v7127 = vunpack.c.l.b16 %v5911
  %v7128 = vunpack.c.l.b16 %v5912
  %v7129 = vunpack.c.l.b16 %v5913
  %v7130 = vunpack.c.l.b16 %v5914
  %v7131 = vunpack.c.l.b16 %v5915
  %v7132 = vunpack.c.l.b16 %v5916
  %v7133 = vunpack.c.l.b16 %v5917
  %v7134 = vunpack.c.l.b16 %v5918
  %v7135 = vunpack.c.l.b16 %v5919
  %v7136 = vunpack.c.l.b16 %v5920
  %v7137 = vunpack.c.l.b16 %v5921
  %v7138 = vunpack.c.l.b16 %v5922
  %v7139 = vunpack.c.l.b16 %v5923
  %v7140 = vunpack.c.l.b16 %v5924
  %v7141 = vunpack.c.l.b16 %v5925
  %v7142 = vunpack.c.l.b16 %v5926
  %v7143 = vunpack.c.l.b16 %v5927
  %v7144 = vunpack.c.l.b16 %v5928
  %v7145 = vunpack.c.l.b16 %v5929
  %v7146 = vunpack.c.l.b16 %v5930
  %v7147 = vunpack.c.l.b16 %v5931
  %v7148 = vunpack.c.l.b16 %v5932
  %v7149 = vunpack.c.l.b16 %v5933
  %v7150 = vunpack.c.l.b16 %v5934
  %v7151 = vunpack.c.l.b16 %v5935
  %v7152 = vunpack.c.l.b16 %v5936
  %v7153 = vunpack.c.l.b16 %v5937
  %v7154 = vunpack.c.l.b16 %v5938
  %v7155 = vunpack.c.l.b16 %v5939
  %v7156 = vunpack.c.l.b16 %v5940
  %v7157 = vunpack.c.l.b16 %v5941
  %v7158 = vunpack.c.l.b16 %v5942
  %v7159 = vunpack.c.l.b16 %v5943
  %v7160 = vunpack.c.l.b16 %v5944
  %v7161 = vunpack.c.l.b16 %v5945
  %v7162 = vunpack.c.l.b16 %v5946
  %v7163 = vunpack.c.l.b16 %v5947
  %v7164 = vunpack.c.l.b16 %v5948
  %v7165 = vunpack.c.l.b16 %v5949
  %v7166 = vpack.c.b16 %v7103, %v7102
  %v7167 = vpack.c.b16 %v7105, %v7104
  %v7168 = vpack.c.b16 %v7107, %v7106
  %v7169 = vpack.c.b16 %v7109, %v7108
  %v7170 = vpack.c.b16 %v7111, %v7110
  %v7171 = vpack.c.b16 %v7113, %v7112
  %v7172 = vpack.c.b16 %v7115, %v7114
  %v7173 = vpack.c.b16 %v7117, %v7116
  %v7174 = vpack.c.b16 %v7119, %v7118
  %v7175 = vpack.c.b16 %v7121, %v7120
  %v7176 = vpack.c.b16 %v7123, %v7122
  %v7177 = vpack.c.b16 %v7125, %v7124
  %v7178 = vpack.c.b16 %v7127, %v7126
  %v7179 = vpack.c.b16 %v7129, %v7128
  %v7180 = vpack.c.b16 %v7131, %v7130
  %v7181 = vpack.c.b16 %v7133, %v7132
  %v7182 = vpack.c.b16 %v7135, %v7134
  %v7183 = vpack.c.b16 %v7137, %v7136
  %v7184 = vpack.c.b16 %v7139, %v7138
  %v7185 = vpack.c.b16 %v7141, %v7140
  %v7186 = vpack.c.b16 %v7143, %v7142
  %v7187 = vpack.c.b16 %v7145, %v7144
  %v7188 = vpack.c.b16 %v7147, %v7146
  %v7189 = vpack.c.b16 %v7149, %v7148
  %v7190 = vpack.c.b16 %v7151, %v7150
  %v7191 = vpack.c.b16 %v7153, %v7152
  %v7192 = vpack.c.b16 %v7155, %v7154
  %v7193 = vpack.c.b16 %v7157, %v7156
  %v7194 = vpack.c.b16 %v7159, %v7158
  %v7195 = vpack.c.b16 %v7161, %v7160
  %v7196 = vpack.c.b16 %v7163, %v7162
  %v7197 = vpack.c.b16 %v7165, %v7164
  %v7294 = vunpack.c.l.b16 %v6014
  %v7295 = vunpack.c.l.b16 %v6015
  %v7296 = vunpack.c.l.b16 %v6016
  %v7297 = vunpack.c.l.b16 %v6017
  %v7298 = vunpack.c.l.b16 %v6018
  %v7299 = vunpack.c.l.b16 %v6019
  %v7300 = vunpack.c.l.b16 %v6020
  %v7301 = vunpack.c.l.b16 %v6021
  %v7302 = vunpack.c.l.b16 %v6022
  %v7303 = vunpack.c.l.b16 %v6023
  %v7304 = vunpack.c.l.b16 %v6024
  %v7305 = vunpack.c.l.b16 %v6025
  %v7306 = vunpack.c.l.b16 %v6026
  %v7307 = vunpack.c.l.b16 %v6027
  %v7308 = vunpack.c.l.b16 %v6028
  %v7309 = vunpack.c.l.b16 %v6029
  %v7310 = vunpack.c.l.b16 %v6030
  %v7311 = vunpack.c.l.b16 %v6031
  %v7312 = vunpack.c.l.b16 %v6032
  %v7313 = vunpack.c.l.b16 %v6033
  %v7314 = vunpack.c.l.b16 %v6034
  %v7315 = vunpack.c.l.b16 %v6035
  %v7316 = vunpack.c.l.b16 %v6036
  %v7317 = vunpack.c.l.b16 %v6037
  %v7318 = vunpack.c.l.b16 %v6038
  %v7319 = vunpack.c.l.b16 %v6039
  %v7320 = vunpack.c.l.b16 %v6040
  %v7321 = vunpack.c.l.b16 %v6041
  %v7322 = vunpack.c.l.b16 %v6042
  %v7323 = vunpack.c.l.b16 %v6043
  %v7324 = vunpack.c.l.b16 %v6044
  %v7325 = vunpack.c.l.b16 %v6045
  %v7326 = vunpack.c.l.b16 %v6046
  %v7327 = vunpack.c.l.b16 %v6047
  %v7328 = vunpack.c.l.b16 %v6048
  %v7329 = vunpack.c.l.b16 %v6049
  %v7330 = vunpack.c.l.b16 %v6050
  %v7331 = vunpack.c.l.b16 %v6051
  %v7332 = vunpack.c.l.b16 %v6052
  %v7333 = vunpack.c.l.b16 %v6053
  %v7334 = vunpack.c.l.b16 %v6054
  %v7335 = vunpack.c.l.b16 %v6055
  %v7336 = vunpack.c.l.b16 %v6056
  %v7337 = vunpack.c.l.b16 %v6057
  %v7338 = vunpack.c.l.b16 %v6058
  %v7339 = vunpack.c.l.b16 %v6059
  %v7340 = vunpack.c.l.b16 %v6060
  %v7341 = vunpack.c.l.b16 %v6061
  %v7342 = vunpack.c.l.b16 %v6062
  %v7343 = vunpack.c.l.b16 %v6063
  %v7344 = vunpack.c.l.b16 %v6064
  %v7345 = vunpack.c.l.b16 %v6065
  %v7346 = vunpack.c.l.b16 %v6066
  %v7347 = vunpack.c.l.b16 %v6067
  %v7348 = vunpack.c.l.b16 %v6068
  %v7349 = vunpack.c.l.b16 %v6069
  %v7350 = vunpack.c.l.b16 %v6070
  %v7351 = vunpack.c.l.b16 %v6071
  %v7352 = vunpack.c.l.b16 %v6072
  %v7353 = vunpack.c.l.b16 %v6073
  %v7354 = vunpack.c.l.b16 %v6074
  %v7355 = vunpack.c.l.b16 %v6075
  %v7356 = vunpack.c.l.b16 %v6076
  %v7357 = vunpack.c.l.b16 %v6077
  %v7358 = vpack.c.b16 %v7295, %v7294
  %v7359 = vpack.c.b16 %v7297, %v7296
  %v7360 = vpack.c.b16 %v7299, %v7298
  %v7361 = vpack.c.b16 %v7301, %v7300
  %v7362 = vpack.c.b16 %v7303, %v7302
  %v7363 = vpack.c.b16 %v7305, %v7304
  %v7364 = vpack.c.b16 %v7307, %v7306
  %v7365 = vpack.c.b16 %v7309, %v7308
  %v7366 = vpack.c.b16 %v7311, %v7310
  %v7367 = vpack.c.b16 %v7313, %v7312
  %v7368 = vpack.c.b16 %v7315, %v7314
  %v7369 = vpack.c.b16 %v7317, %v7316
  %v7370 = vpack.c.b16 %v7319, %v7318
  %v7371 = vpack.c.b16 %v7321, %v7320
  %v7372 = vpack.c.b16 %v7323, %v7322
  %v7373 = vpack.c.b16 %v7325, %v7324
  %v7374 = vpack.c.b16 %v7327, %v7326
  %v7375 = vpack.c.b16 %v7329, %v7328
  %v7376 = vpack.c.b16 %v7331, %v7330
  %v7377 = vpack.c.b16 %v7333, %v7332
  %v7378 = vpack.c.b16 %v7335, %v7334
  %v7379 = vpack.c.b16 %v7337, %v7336
  %v7380 = vpack.c.b16 %v7339, %v7338
  %v7381 = vpack.c.b16 %v7341, %v7340
  %v7382 = vpack.c.b16 %v7343, %v7342
  %v7383 = vpack.c.b16 %v7345, %v7344
  %v7384 = vpack.c.b16 %v7347, %v7346
  %v7385 = vpack.c.b16 %v7349, %v7348
  %v7386 = vpack.c.b16 %v7351, %v7350
  %v7387 = vpack.c.b16 %v7353, %v7352
  %v7388 = vpack.c.b16 %v7355, %v7354
  %v7389 = vpack.c.b16 %v7357, %v7356
  %v7486 = vunpack.c.l.b16 %v6142
  %v7487 = vunpack.c.l.b16 %v6143
  %v7488 = vunpack.c.l.b16 %v6144
  %v7489 = vunpack.c.l.b16 %v6145
  %v7490 = vunpack.c.l.b16 %v6146
  %v7491 = vunpack.c.l.b16 %v6147
  %v7492 = vunpack.c.l.b16 %v6148
  %v7493 = vunpack.c.l.b16 %v6149
  %v7494 = vunpack.c.l.b16 %v6150
  %v7495 = vunpack.c.l.b16 %v6151
  %v7496 = vunpack.c.l.b16 %v6152
  %v7497 = vunpack.c.l.b16 %v6153
  %v7498 = vunpack.c.l.b16 %v6154
  %v7499 = vunpack.c.l.b16 %v6155
  %v7500 = vunpack.c.l.b16 %v6156
  %v7501 = vunpack.c.l.b16 %v6157
  %v7502 = vunpack.c.l.b16 %v6158
  %v7503 = vunpack.c.l.b16 %v6159
  %v7504 = vunpack.c.l.b16 %v6160
  %v7505 = vunpack.c.l.b16 %v6161
  %v7506 = vunpack.c.l.b16 %v6162
  %v7507 = vunpack.c.l.b16 %v6163
  %v7508 = vunpack.c.l.b16 %v6164
  %v7509 = vunpack.c.l.b16 %v6165
  %v7510 = vunpack.c.l.b16 %v6166
  %v7511 = vunpack.c.l.b16 %v6167
  %v7512 = vunpack.c.l.b16 %v6168
  %v7513 = vunpack.c.l.b16 %v6169
  %v7514 = vunpack.c.l.b16 %v6170
  %v7515 = vunpack.c.l.b16 %v6171
  %v7516 = vunpack.c.l.b16 %v6172
  %v7517 = vunpack.c.l.b16 %v6173
  %v7518 = vunpack.c.l.b16 %v6174
  %v7519 = vunpack.c.l.b16 %v6175
  %v7520 = vunpack.c.l.b16 %v6176
  %v7521 = vunpack.c.l.b16 %v6177
  %v7522 = vunpack.c.l.b16 %v6178
  %v7523 = vunpack.c.l.b16 %v6179
  %v7524 = vunpack.c.l.b16 %v6180
  %v7525 = vunpack.c.l.b16 %v6181
  %v7526 = vunpack.c.l.b16 %v6182
  %v7527 = vunpack.c.l.b16 %v6183
  %v7528 = vunpack.c.l.b16 %v6184
  %v7529 = vunpack.c.l.b16 %v6185
  %v7530 = vunpack.c.l.b16 %v6186
  %v7531 = vunpack.c.l.b16 %v6187
  %v7532 = vunpack.c.l.b16 %v6188
  %v7533 = vunpack.c.l.b16 %v6189
  %v7534 = vunpack.c.l.b16 %v6190
  %v7535 = vunpack.c.l.b16 %v6191
  %v7536 = vunpack.c.l.b16 %v6192
  %v7537 = vunpack.c.l.b16 %v6193
  %v7538 = vunpack.c.l.b16 %v6194
  %v7539 = vunpack.c.l.b16 %v6195
  %v7540 = vunpack.c.l.b16 %v6196
  %v7541 = vunpack.c.l.b16 %v6197
  %v7542 = vunpack.c.l.b16 %v6198
  %v7543 = vunpack.c.l.b16 %v6199
  %v7544 = vunpack.c.l.b16 %v6200
  %v7545 = vunpack.c.l.b16 %v6201
  %v7546 = vunpack.c.l.b16 %v6202
  %v7547 = vunpack.c.l.b16 %v6203
  %v7548 = vunpack.c.l.b16 %v6204
  %v7549 = vunpack.c.l.b16 %v6205
  %v7550 = vpack.c.b16 %v7487, %v7486
  %v7551 = vpack.c.b16 %v7489, %v7488
  %v7552 = vpack.c.b16 %v7491, %v7490
  %v7553 = vpack.c.b16 %v7493, %v7492
  %v7554 = vpack.c.b16 %v7495, %v7494
  %v7555 = vpack.c.b16 %v7497, %v7496
  %v7556 = vpack.c.b16 %v7499, %v7498
  %v7557 = vpack.c.b16 %v7501, %v7500
  %v7558 = vpack.c.b16 %v7503, %v7502
  %v7559 = vpack.c.b16 %v7505, %v7504
  %v7560 = vpack.c.b16 %v7507, %v7506
  %v7561 = vpack.c.b16 %v7509, %v7508
  %v7562 = vpack.c.b16 %v7511, %v7510
  %v7563 = vpack.c.b16 %v7513, %v7512
  %v7564 = vpack.c.b16 %v7515, %v7514
  %v7565 = vpack.c.b16 %v7517, %v7516
  %v7566 = vpack.c.b16 %v7519, %v7518
  %v7567 = vpack.c.b16 %v7521, %v7520
  %v7568 = vpack.c.b16 %v7523, %v7522
  %v7569 = vpack.c.b16 %v7525, %v7524
  %v7570 = vpack.c.b16 %v7527, %v7526
  %v7571 = vpack.c.b16 %v7529, %v7528
  %v7572 = vpack.c.b16 %v7531, %v7530
  %v7573 = vpack.c.b16 %v7533, %v7532
  %v7574 = vpack.c.b16 %v7535, %v7534
  %v7575 = vpack.c.b16 %v7537, %v7536
  %v7576 = vpack.c.b16 %v7539, %v7538
  %v7577 = vpack.c.b16 %v7541, %v7540
  %v7578 = vpack.c.b16 %v7543, %v7542
  %v7579 = vpack.c.b16 %v7545, %v7544
  %v7580 = vpack.c.b16 %v7547, %v7546
  %v7581 = vpack.c.b16 %v7549, %v7548
  %v7678 = vunpack.c.l.b16 %v6270
  %v7679 = vunpack.c.l.b16 %v6271
  %v7680 = vunpack.c.l.b16 %v6272
  %v7681 = vunpack.c.l.b16 %v6273
  %v7682 = vunpack.c.l.b16 %v6274
  %v7683 = vunpack.c.l.b16 %v6275
  %v7684 = vunpack.c.l.b16 %v6276
  %v7685 = vunpack.c.l.b16 %v6277
  %v7686 = vunpack.c.l.b16 %v6278
  %v7687 = vunpack.c.l.b16 %v6279
  %v7688 = vunpack.c.l.b16 %v6280
  %v7689 = vunpack.c.l.b16 %v6281
  %v7690 = vunpack.c.l.b16 %v6282
  %v7691 = vunpack.c.l.b16 %v6283
  %v7692 = vunpack.c.l.b16 %v6284
  %v7693 = vunpack.c.l.b16 %v6285
  %v7694 = vunpack.c.l.b16 %v6286
  %v7695 = vunpack.c.l.b16 %v6287
  %v7696 = vunpack.c.l.b16 %v6288
  %v7697 = vunpack.c.l.b16 %v6289
  %v7698 = vunpack.c.l.b16 %v6290
  %v7699 = vunpack.c.l.b16 %v6291
  %v7700 = vunpack.c.l.b16 %v6292
  %v7701 = vunpack.c.l.b16 %v6293
  %v7702 = vunpack.c.l.b16 %v6294
  %v7703 = vunpack.c.l.b16 %v6295
  %v7704 = vunpack.c.l.b16 %v6296
  %v7705 = vunpack.c.l.b16 %v6297
  %v7706 = vunpack.c.l.b16 %v6298
  %v7707 = vunpack.c.l.b16 %v6299
  %v7708 = vunpack.c.l.b16 %v6300
  %v7709 = vunpack.c.l.b16 %v6301
  %v7710 = vunpack.c.l.b16 %v6302
  %v7711 = vunpack.c.l.b16 %v6303
  %v7712 = vunpack.c.l.b16 %v6304
  %v7713 = vunpack.c.l.b16 %v6305
  %v7714 = vunpack.c.l.b16 %v6306
  %v7715 = vunpack.c.l.b16 %v6307
  %v7716 = vunpack.c.l.b16 %v6308
  %v7717 = vunpack.c.l.b16 %v6309
  %v7718 = vunpack.c.l.b16 %v6310
  %v7719 = vunpack.c.l.b16 %v6311
  %v7720 = vunpack.c.l.b16 %v6312
  %v7721 = vunpack.c.l.b16 %v6313
  %v7722 = vunpack.c.l.b16 %v6314
  %v7723 = vunpack.c.l.b16 %v6315
  %v7724 = vunpack.c.l.b16 %v6316
  %v7725 = vunpack.c.l.b16 %v6317
  %v7726 = vunpack.c.l.b16 %v6318
  %v7727 = vunpack.c.l.b16 %v6319
  %v7728 = vunpack.c.l.b16 %v6320
  %v7729 = vunpack.c.l.b16 %v6321
  %v7730 = vunpack.c.l.b16 %v6322
  %v7731 = vunpack.c.l.b16 %v6323
  %v7732 = vunpack.c.l.b16 %v6324
  %v7733 = vunpack.c.l.b16 %v6325
  %v7734 = vunpack.c.l.b16 %v6326
  %v7735 = vunpack.c.l.b16 %v6327
  %v7736 = vunpack.c.l.b16 %v6328
  %v7737 = vunpack.c.l.b16 %v6329
  %v7738 = vunpack.c.l.b16 %v6330
  %v7739 = vunpack.c.l.b16 %v6331
  %v7740 = vunpack.c.l.b16 %v6332
  %v7741 = vunpack.c.l.b16 %v6333
  %v7742 = vpack.c.b16 %v7679, %v7678
  %v7743 = vpack.c.b16 %v7681, %v7680
  %v7744 = vpack.c.b16 %v7683, %v7682
  %v7745 = vpack.c.b16 %v7685, %v7684
  %v7746 = vpack.c.b16 %v7687, %v7686
  %v7747 = vpack.c.b16 %v7689, %v7688
  %v7748 = vpack.c.b16 %v7691, %v7690
  %v7749 = vpack.c.b16 %v7693, %v7692
  %v7750 = vpack.c.b16 %v7695, %v7694
  %v7751 = vpack.c.b16 %v7697, %v7696
  %v7752 = vpack.c.b16 %v7699, %v7698
  %v7753 = vpack.c.b16 %v7701, %v7700
  %v7754 = vpack.c.b16 %v7703, %v7702
  %v7755 = vpack.c.b16 %v7705, %v7704
  %v7756 = vpack.c.b16 %v7707, %v7706
  %v7757 = vpack.c.b16 %v7709, %v7708
  %v7758 = vpack.c.b16 %v7711, %v7710
  %v7759 = vpack.c.b16 %v7713, %v7712
  %v7760 = vpack.c.b16 %v7715, %v7714
  %v7761 = vpack.c.b16 %v7717, %v7716
  %v7762 = vpack.c.b16 %v7719, %v7718
  %v7763 = vpack.c.b16 %v7721, %v7720
  %v7764 = vpack.c.b16 %v7723, %v7722
  %v7765 = vpack.c.b16 %v7725, %v7724
  %v7766 = vpack.c.b16 %v7727, %v7726
  %v7767 = vpack.c.b16 %v7729, %v7728
  %v7768 = vpack.c.b16 %v7731, %v7730
  %v7769 = vpack.c.b16 %v7733, %v7732
  %v7770 = vpack.c.b16 %v7735, %v7734
  %v7771 = vpack.c.b16 %v7737, %v7736
  %v7772 = vpack.c.b16 %v7739, %v7738
  %v7773 = vpack.c.b16 %v7741, %v7740
  %v7870 = vunpack.c.l.b16 %v6398
  %v7871 = vunpack.c.l.b16 %v6399
  %v7872 = vunpack.c.l.b16 %v6400
  %v7873 = vunpack.c.l.b16 %v6401
  %v7874 = vunpack.c.l.b16 %v6402
  %v7875 = vunpack.c.l.b16 %v6403
  %v7876 = vunpack.c.l.b16 %v6404
  %v7877 = vunpack.c.l.b16 %v6405
  %v7878 = vunpack.c.l.b16 %v6406
  %v7879 = vunpack.c.l.b16 %v6407
  %v7880 = vunpack.c.l.b16 %v6408
  %v7881 = vunpack.c.l.b16 %v6409
  %v7882 = vunpack.c.l.b16 %v6410
  %v7883 = vunpack.c.l.b16 %v6411
  %v7884 = vunpack.c.l.b16 %v6412
  %v7885 = vunpack.c.l.b16 %v6413
  %v7886 = vunpack.c.l.b16 %v6414
  %v7887 = vunpack.c.l.b16 %v6415
  %v7888 = vunpack.c.l.b16 %v6416
  %v7889 = vunpack.c.l.b16 %v6417
  %v7890 = vunpack.c.l.b16 %v6418
  %v7891 = vunpack.c.l.b16 %v6419
  %v7892 = vunpack.c.l.b16 %v6420
  %v7893 = vunpack.c.l.b16 %v6421
  %v7894 = vunpack.c.l.b16 %v6422
  %v7895 = vunpack.c.l.b16 %v6423
  %v7896 = vunpack.c.l.b16 %v6424
  %v7897 = vunpack.c.l.b16 %v6425
  %v7898 = vunpack.c.l.b16 %v6426
  %v7899 = vunpack.c.l.b16 %v6427
  %v7900 = vunpack.c.l.b16 %v6428
  %v7901 = vunpack.c.l.b16 %v6429
  %v7902 = vunpack.c.l.b16 %v6430
  %v7903 = vunpack.c.l.b16 %v6431
  %v7904 = vunpack.c.l.b16 %v6432
  %v7905 = vunpack.c.l.b16 %v6433
  %v7906 = vunpack.c.l.b16 %v6434
  %v7907 = vunpack.c.l.b16 %v6435
  %v7908 = vunpack.c.l.b16 %v6436
  %v7909 = vunpack.c.l.b16 %v6437
  %v7910 = vunpack.c.l.b16 %v6438
  %v7911 = vunpack.c.l.b16 %v6439
  %v7912 = vunpack.c.l.b16 %v6440
  %v7913 = vunpack.c.l.b16 %v6441
  %v7914 = vunpack.c.l.b16 %v6442
  %v7915 = vunpack.c.l.b16 %v6443
  %v7916 = vunpack.c.l.b16 %v6444
  %v7917 = vunpack.c.l.b16 %v6445
  %v7918 = vunpack.c.l.b16 %v6446
  %v7919 = vunpack.c.l.b16 %v6447
  %v7920 = vunpack.c.l.b16 %v6448
  %v7921 = vunpack.c.l.b16 %v6449
  %v7922 = vunpack.c.l.b16 %v6450
  %v7923 = vunpack.c.l.b16 %v6451
  %v7924 = vunpack.c.l.b16 %v6452
  %v7925 = vunpack.c.l.b16 %v6453
  %v7926 = vunpack.c.l.b16 %v6454
  %v7927 = vunpack.c.l.b16 %v6455
  %v7928 = vunpack.c.l.b16 %v6456
  %v7929 = vunpack.c.l.b16 %v6457
  %v7930 = vunpack.c.l.b16 %v6458
  %v7931 = vunpack.c.l.b16 %v6459
  %v7932 = vunpack.c.l.b16 %v6460
  %v7933 = vunpack.c.l.b16 %v6461
  %v7934 = vpack.c.b16 %v7871, %v7870
  %v7935 = vpack.c.b16 %v7873, %v7872
  %v7936 = vpack.c.b16 %v7875, %v7874
  %v7937 = vpack.c.b16 %v7877, %v7876
  %v7938 = vpack.c.b16 %v7879, %v7878
  %v7939 = vpack.c.b16 %v7881, %v7880
  %v7940 = vpack.c.b16 %v7883, %v7882
  %v7941 = vpack.c.b16 %v7885, %v7884
  %v7942 = vpack.c.b16 %v7887, %v7886
  %v7943 = vpack.c.b16 %v7889, %v7888
  %v7944 = vpack.c.b16 %v7891, %v7890
  %v7945 = vpack.c.b16 %v7893, %v7892
  %v7946 = vpack.c.b16 %v7895, %v7894
  %v7947 = vpack.c.b16 %v7897, %v7896
  %v7948 = vpack.c.b16 %v7899, %v7898
  %v7949 = vpack.c.b16 %v7901, %v7900
  %v7950 = vpack.c.b16 %v7903, %v7902
  %v7951 = vpack.c.b16 %v7905, %v7904
  %v7952 = vpack.c.b16 %v7907, %v7906
  %v7953 = vpack.c.b16 %v7909, %v7908
  %v7954 = vpack.c.b16 %v7911, %v7910
  %v7955 = vpack.c.b16 %v7913, %v7912
  %v7956 = vpack.c.b16 %v7915, %v7914
  %v7957 = vpack.c.b16 %v7917, %v7916
  %v7958 = vpack.c.b16 %v7919, %v7918
  %v7959 = vpack.c.b16 %v7921, %v7920
  %v7960 = vpack.c.b16 %v7923, %v7922
  %v7961 = vpack.c.b16 %v7925, %v7924
  %v7962 = vpack.c.b16 %v7927, %v7926
  %v7963 = vpack.c.b16 %v7929, %v7928
  %v7964 = vpack.c.b16 %v7931, %v7930
  %v7965 = vpack.c.b16 %v7933, %v7932
  %v8062 = vunpack.c.l.b16 %v6526
  %v8063 = vunpack.c.l.b16 %v6527
  %v8064 = vunpack.c.l.b16 %v6528
  %v8065 = vunpack.c.l.b16 %v6529
  %v8066 = vunpack.c.l.b16 %v6530
  %v8067 = vunpack.c.l.b16 %v6531
  %v8068 = vunpack.c.l.b16 %v6532
  %v8069 = vunpack.c.l.b16 %v6533
  %v8070 = vunpack.c.l.b16 %v6534
  %v8071 = vunpack.c.l.b16 %v6535
  %v8072 = vunpack.c.l.b16 %v6536
  %v8073 = vunpack.c.l.b16 %v6537
  %v8074 = vunpack.c.l.b16 %v6538
  %v8075 = vunpack.c.l.b16 %v6539
  %v8076 = vunpack.c.l.b16 %v6540
  %v8077 = vunpack.c.l.b16 %v6541
  %v8078 = vunpack.c.l.b16 %v6542
  %v8079 = vunpack.c.l.b16 %v6543
  %v8080 = vunpack.c.l.b16 %v6544
  %v8081 = vunpack.c.l.b16 %v6545
  %v8082 = vunpack.c.l.b16 %v6546
  %v8083 = vunpack.c.l.b16 %v6547
  %v8084 = vunpack.c.l.b16 %v6548
  %v8085 = vunpack.c.l.b16 %v6549
  %v8086 = vunpack.c.l.b16 %v6550
  %v8087 = vunpack.c.l.b16 %v6551
  %v8088 = vunpack.c.l.b16 %v6552
  %v8089 = vunpack.c.l.b16 %v6553
  %v8090 = vunpack.c.l.b16 %v6554
  %v8091 = vunpack.c.l.b16 %v6555
  %v8092 = vunpack.c.l.b16 %v6556
  %v8093 = vunpack.c.l.b16 %v6557
  %v8094 = vunpack.c.l.b16 %v6558
  %v8095 = vunpack.c.l.b16 %v6559
  %v8096 = vunpack.c.l.b16 %v6560
  %v8097 = vunpack.c.l.b16 %v6561
  %v8098 = vunpack.c.l.b16 %v6562
  %v8099 = vunpack.c.l.b16 %v6563
  %v8100 = vunpack.c.l.b16 %v6564
  %v8101 = vunpack.c.l.b16 %v6565
  %v8102 = vunpack.c.l.b16 %v6566
  %v8103 = vunpack.c.l.b16 %v6567
  %v8104 = vunpack.c.l.b16 %v6568
  %v8105 = vunpack.c.l.b16 %v6569
  %v8106 = vunpack.c.l.b16 %v6570
  %v8107 = vunpack.c.l.b16 %v6571
  %v8108 = vunpack.c.l.b16 %v6572
  %v8109 = vunpack.c.l.b16 %v6573
  %v8110 = vunpack.c.l.b16 %v6574
  %v8111 = vunpack.c.l.b16 %v6575
  %v8112 = vunpack.c.l.b16 %v6576
  %v8113 = vunpack.c.l.b16 %v6577
  %v8114 = vunpack.c.l.b16 %v6578
  %v8115 = vunpack.c.l.b16 %v6579
  %v8116 = vunpack.c.l.b16 %v6580
  %v8117 = vunpack.c.l.b16 %v6581
  %v8118 = vunpack.c.l.b16 %v6582
  %v8119 = vunpack.c.l.b16 %v6583
  %v8120 = vunpack.c.l.b16 %v6584
  %v8121 = vunpack.c.l.b16 %v6585
  %v8122 = vunpack.c.l.b16 %v6586
  %v8123 = vunpack.c.l.b16 %v6587
  %v8124 = vunpack.c.l.b16 %v6588
  %v8125 = vunpack.c.l.b16 %v6589
  %v8126 = vpack.c.b16 %v8063, %v8062
  %v8127 = vpack.c.b16 %v8065, %v8064
  %v8128 = vpack.c.b16 %v8067, %v8066
  %v8129 = vpack.c.b16 %v8069, %v8068
  %v8130 = vpack.c.b16 %v8071, %v8070
  %v8131 = vpack.c.b16 %v8073, %v8072
  %v8132 = vpack.c.b16 %v8075, %v8074
  %v8133 = vpack.c.b16 %v8077, %v8076
  %v8134 = vpack.c.b16 %v8079, %v8078
  %v8135 = vpack.c.b16 %v8081, %v8080
  %v8136 = vpack.c.b16 %v8083, %v8082
  %v8137 = vpack.c.b16 %v8085, %v8084
  %v8138 = vpack.c.b16 %v8087, %v8086
  %v8139 = vpack.c.b16 %v8089, %v8088
  %v8140 = vpack.c.b16 %v8091, %v8090
  %v8141 = vpack.c.b16 %v8093, %v8092
  %v8142 = vpack.c.b16 %v8095, %v8094
  %v8143 = vpack.c.b16 %v8097, %v8096
  %v8144 = vpack.c.b16 %v8099, %v8098
  %v8145 = vpack.c.b16 %v8101, %v8100
  %v8146 = vpack.c.b16 %v8103, %v8102
  %v8147 = vpack.c.b16 %v8105, %v8104
  %v8148 = vpack.c.b16 %v8107, %v8106
  %v8149 = vpack.c.b16 %v8109, %v8108
  %v8150 = vpack.c.b16 %v8111, %v8110
  %v8151 = vpack.c.b16 %v8113, %v8112
  %v8152 = vpack.c.b16 %v8115, %v8114
  %v8153 = vpack.c.b16 %v8117, %v8116
  %v8154 = vpack.c.b16 %v8119, %v8118
  %v8155 = vpack.c.b16 %v8121, %v8120
  %v8156 = vpack.c.b16 %v8123, %v8122
  %v8157 = vpack.c.b16 %v8125, %v8124
  %v8254 = vunpack.c.l.b16 %v6654
  %v8255 = vunpack.c.l.b16 %v6655
  %v8256 = vunpack.c.l.b16 %v6656
  %v8257 = vunpack.c.l.b16 %v6657
  %v8258 = vunpack.c.l.b16 %v6658
  %v8259 = vunpack.c.l.b16 %v6659
  %v8260 = vunpack.c.l.b16 %v6660
  %v8261 = vunpack.c.l.b16 %v6661
  %v8262 = vunpack.c.l.b16 %v6662
  %v8263 = vunpack.c.l.b16 %v6663
  %v8264 = vunpack.c.l.b16 %v6664
  %v8265 = vunpack.c.l.b16 %v6665
  %v8266 = vunpack.c.l.b16 %v6666
  %v8267 = vunpack.c.l.b16 %v6667
  %v8268 = vunpack.c.l.b16 %v6668
  %v8269 = vunpack.c.l.b16 %v6669
  %v8270 = vunpack.c.l.b16 %v6670
  %v8271 = vunpack.c.l.b16 %v6671
  %v8272 = vunpack.c.l.b16 %v6672
  %v8273 = vunpack.c.l.b16 %v6673
  %v8274 = vunpack.c.l.b16 %v6674
  %v8275 = vunpack.c.l.b16 %v6675
  %v8276 = vunpack.c.l.b16 %v6676
  %v8277 = vunpack.c.l.b16 %v6677
  %v8278 = vunpack.c.l.b16 %v6678
  %v8279 = vunpack.c.l.b16 %v6679
  %v8280 = vunpack.c.l.b16 %v6680
  %v8281 = vunpack.c.l.b16 %v6681
  %v8282 = vunpack.c.l.b16 %v6682
  %v8283 = vunpack.c.l.b16 %v6683
  %v8284 = vunpack.c.l.b16 %v6684
  %v8285 = vunpack.c.l.b16 %v6685
  %v8286 = vunpack.c.l.b16 %v6686
  %v8287 = vunpack.c.l.b16 %v6687
  %v8288 = vunpack.c.l.b16 %v6688
  %v8289 = vunpack.c.l.b16 %v6689
  %v8290 = vunpack.c.l.b16 %v6690
  %v8291 = vunpack.c.l.b16 %v6691
  %v8292 = vunpack.c.l.b16 %v6692
  %v8293 = vunpack.c.l.b16 %v6693
  %v8294 = vunpack.c.l.b16 %v6694
  %v8295 = vunpack.c.l.b16 %v6695
  %v8296 = vunpack.c.l.b16 %v6696
  %v8297 = vunpack.c.l.b16 %v6697
  %v8298 = vunpack.c.l.b16 %v6698
  %v8299 = vunpack.c.l.b16 %v6699
  %v8300 = vunpack.c.l.b16 %v6700
  %v8301 = vunpack.c.l.b16 %v6701
  %v8302 = vunpack.c.l.b16 %v6702
  %v8303 = vunpack.c.l.b16 %v6703
  %v8304 = vunpack.c.l.b16 %v6704
  %v8305 = vunpack.c.l.b16 %v6705
  %v8306 = vunpack.c.l.b16 %v6706
  %v8307 = vunpack.c.l.b16 %v6707
  %v8308 = vunpack.c.l.b16 %v6708
  %v8309 = vunpack.c.l.b16 %v6709
  %v8310 = vunpack.c.l.b16 %v6710
  %v8311 = vunpack.c.l.b16 %v6711
  %v8312 = vunpack.c.l.b16 %v6712
  %v8313 = vunpack.c.l.b16 %v6713
  %v8314 = vunpack.c.l.b16 %v6714
  %v8315 = vunpack.c.l.b16 %v6715
  %v8316 = vunpack.c.l.b16 %v6716
  %v8317 = vunpack.c.l.b16 %v6717
  %v8318 = vpack.c.b16 %v8255, %v8254
  %v8319 = vpack.c.b16 %v8257, %v8256
  %v8320 = vpack.c.b16 %v8259, %v8258
  %v8321 = vpack.c.b16 %v8261, %v8260
  %v8322 = vpack.c.b16 %v8263, %v8262
  %v8323 = vpack.c.b16 %v8265, %v8264
  %v8324 = vpack.c.b16 %v8267, %v8266
  %v8325 = vpack.c.b16 %v8269, %v8268
  %v8326 = vpack.c.b16 %v8271, %v8270
  %v8327 = vpack.c.b16 %v8273, %v8272
  %v8328 = vpack.c.b16 %v8275, %v8274
  %v8329 = vpack.c.b16 %v8277, %v8276
  %v8330 = vpack.c.b16 %v8279, %v8278
  %v8331 = vpack.c.b16 %v8281, %v8280
  %v8332 = vpack.c.b16 %v8283, %v8282
  %v8333 = vpack.c.b16 %v8285, %v8284
  %v8334 = vpack.c.b16 %v8287, %v8286
  %v8335 = vpack.c.b16 %v8289, %v8288
  %v8336 = vpack.c.b16 %v8291, %v8290
  %v8337 = vpack.c.b16 %v8293, %v8292
  %v8338 = vpack.c.b16 %v8295, %v8294
  %v8339 = vpack.c.b16 %v8297, %v8296
  %v8340 = vpack.c.b16 %v8299, %v8298
  %v8341 = vpack.c.b16 %v8301, %v8300
  %v8342 = vpack.c.b16 %v8303, %v8302
  %v8343 = vpack.c.b16 %v8305, %v8304
  %v8344 = vpack.c.b16 %v8307, %v8306
  %v8345 = vpack.c.b16 %v8309, %v8308
  %v8346 = vpack.c.b16 %v8311, %v8310
  %v8347 = vpack.c.b16 %v8313, %v8312
  %v8348 = vpack.c.b16 %v8315, %v8314
  %v8349 = vpack.c.b16 %v8317, %v8316
  %v8446 = vunpack.c.l.b16 %v6782
  %v8447 = vunpack.c.l.b16 %v6783
  %v8448 = vunpack.c.l.b16 %v6784
  %v8449 = vunpack.c.l.b16 %v6785
  %v8450 = vunpack.c.l.b16 %v6786
  %v8451 = vunpack.c.l.b16 %v6787
  %v8452 = vunpack.c.l.b16 %v6788
  %v8453 = vunpack.c.l.b16 %v6789
  %v8454 = vunpack.c.l.b16 %v6790
  %v8455 = vunpack.c.l.b16 %v6791
  %v8456 = vunpack.c.l.b16 %v6792
  %v8457 = vunpack.c.l.b16 %v6793
  %v8458 = vunpack.c.l.b16 %v6794
  %v8459 = vunpack.c.l.b16 %v6795
  %v8460 = vunpack.c.l.b16 %v6796
  %v8461 = vunpack.c.l.b16 %v6797
  %v8462 = vunpack.c.l.b16 %v6798
  %v8463 = vunpack.c.l.b16 %v6799
  %v8464 = vunpack.c.l.b16 %v6800
  %v8465 = vunpack.c.l.b16 %v6801
  %v8466 = vunpack.c.l.b16 %v6802
  %v8467 = vunpack.c.l.b16 %v6803
  %v8468 = vunpack.c.l.b16 %v6804
  %v8469 = vunpack.c.l.b16 %v6805
  %v8470 = vunpack.c.l.b16 %v6806
  %v8471 = vunpack.c.l.b16 %v6807
  %v8472 = vunpack.c.l.b16 %v6808
  %v8473 = vunpack.c.l.b16 %v6809
  %v8474 = vunpack.c.l.b16 %v6810
  %v8475 = vunpack.c.l.b16 %v6811
  %v8476 = vunpack.c.l.b16 %v6812
  %v8477 = vunpack.c.l.b16 %v6813
  %v8478 = vunpack.c.l.b16 %v6814
  %v8479 = vunpack.c.l.b16 %v6815
  %v8480 = vunpack.c.l.b16 %v6816
  %v8481 = vunpack.c.l.b16 %v6817
  %v8482 = vunpack.c.l.b16 %v6818
  %v8483 = vunpack.c.l.b16 %v6819
  %v8484 = vunpack.c.l.b16 %v6820
  %v8485 = vunpack.c.l.b16 %v6821
  %v8486 = vunpack.c.l.b16 %v6822
  %v8487 = vunpack.c.l.b16 %v6823
  %v8488 = vunpack.c.l.b16 %v6824
  %v8489 = vunpack.c.l.b16 %v6825
  %v8490 = vunpack.c.l.b16 %v6826
  %v8491 = vunpack.c.l.b16 %v6827
  %v8492 = vunpack.c.l.b16 %v6828
  %v8493 = vunpack.c.l.b16 %v6829
  %v8494 = vunpack.c.l.b16 %v6830
  %v8495 = vunpack.c.l.b16 %v6831
  %v8496 = vunpack.c.l.b16 %v6832
  %v8497 = vunpack.c.l.b16 %v6833
  %v8498 = vunpack.c.l.b16 %v6834
  %v8499 = vunpack.c.l.b16 %v6835
  %v8500 = vunpack.c.l.b16 %v6836
  %v8501 = vunpack.c.l.b16 %v6837
  %v8502 = vunpack.c.l.b16 %v6838
  %v8503 = vunpack.c.l.b16 %v6839
  %v8504 = vunpack.c.l.b16 %v6840
  %v8505 = vunpack.c.l.b16 %v6841
  %v8506 = vunpack.c.l.b16 %v6842
  %v8507 = vunpack.c.l.b16 %v6843
  %v8508 = vunpack.c.l.b16 %v6844
  %v8509 = vunpack.c.l.b16 %v6845
  %v8510 = vpack.c.b16 %v8447, %v8446
  %v8511 = vpack.c.b16 %v8449, %v8448
  %v8512 = vpack.c.b16 %v8451, %v8450
  %v8513 = vpack.c.b16 %v8453, %v8452
  %v8514 = vpack.c.b16 %v8455, %v8454
  %v8515 = vpack.c.b16 %v8457, %v8456
  %v8516 = vpack.c.b16 %v8459, %v8458
  %v8517 = vpack.c.b16 %v8461, %v8460
  %v8518 = vpack.c.b16 %v8463, %v8462
  %v8519 = vpack.c.b16 %v8465, %v8464
  %v8520 = vpack.c.b16 %v8467, %v8466
  %v8521 = vpack.c.b16 %v8469, %v8468
  %v8522 = vpack.c.b16 %v8471, %v8470
  %v8523 = vpack.c.b16 %v8473, %v8472
  %v8524 = vpack.c.b16 %v8475, %v8474
  %v8525 = vpack.c.b16 %v8477, %v8476
  %v8526 = vpack.c.b16 %v8479, %v8478
  %v8527 = vpack.c.b16 %v8481, %v8480
  %v8528 = vpack.c.b16 %v8483, %v8482
  %v8529 = vpack.c.b16 %v8485, %v8484
  %v8530 = vpack.c.b16 %v8487, %v8486
  %v8531 = vpack.c.b16 %v8489, %v8488
  %v8532 = vpack.c.b16 %v8491, %v8490
  %v8533 = vpack.c.b16 %v8493, %v8492
  %v8534 = vpack.c.b16 %v8495, %v8494
  %v8535 = vpack.c.b16 %v8497, %v8496
  %v8536 = vpack.c.b16 %v8499, %v8498
  %v8537 = vpack.c.b16 %v8501, %v8500
  %v8538 = vpack.c.b16 %v8503, %v8502
  %v8539 = vpack.c.b16 %v8505, %v8504
  %v8540 = vpack.c.b16 %v8507, %v8506
  %v8541 = vpack.c.b16 %v8509, %v8508
  %v8574 = vld [vmem:[%s2] sm:$0xf]
  %v8575 = vld [vmem:[%s2 + $0x4] sm:$0xf]
  %v8576 = vld [vmem:[%s2 + $0x8] sm:$0xf]
  %v8577 = vld [vmem:[%s2 + $0xc] sm:$0xf]
  %v8578 = vld [vmem:[%s2 + $0x10] sm:$0xf]
  %v8579 = vld [vmem:[%s2 + $0x14] sm:$0xf]
  %v8580 = vld [vmem:[%s2 + $0x18] sm:$0xf]
  %v8581 = vld [vmem:[%s2 + $0x1c] sm:$0xf]
  %v8582 = vld [vmem:[%s2 + $0x20] sm:$0xf]
  %v8583 = vld [vmem:[%s2 + $0x24] sm:$0xf]
  %v8584 = vld [vmem:[%s2 + $0x28] sm:$0xf]
  %v8585 = vld [vmem:[%s2 + $0x2c] sm:$0xf]
  %v8586 = vld [vmem:[%s2 + $0x30] sm:$0xf]
  %v8587 = vld [vmem:[%s2 + $0x34] sm:$0xf]
  %v8588 = vld [vmem:[%s2 + $0x38] sm:$0xf]
  %v8589 = vld [vmem:[%s2 + $0x3c] sm:$0xf]
  %v8590 = vld [vmem:[%s2 + $0x40] sm:$0xf]
  %v8591 = vld [vmem:[%s2 + $0x44] sm:$0xf]
  %v8592 = vld [vmem:[%s2 + $0x48] sm:$0xf]
  %v8593 = vld [vmem:[%s2 + $0x4c] sm:$0xf]
  %v8594 = vld [vmem:[%s2 + $0x50] sm:$0xf]
  %v8595 = vld [vmem:[%s2 + $0x54] sm:$0xf]
  %v8596 = vld [vmem:[%s2 + $0x58] sm:$0xf]
  %v8597 = vld [vmem:[%s2 + $0x5c] sm:$0xf]
  %v8598 = vld [vmem:[%s2 + $0x60] sm:$0xf]
  %v8599 = vld [vmem:[%s2 + $0x64] sm:$0xf]
  %v8600 = vld [vmem:[%s2 + $0x68] sm:$0xf]
  %v8601 = vld [vmem:[%s2 + $0x6c] sm:$0xf]
  %v8602 = vld [vmem:[%s2 + $0x70] sm:$0xf]
  %v8603 = vld [vmem:[%s2 + $0x74] sm:$0xf]
  %v8604 = vld [vmem:[%s2 + $0x78] sm:$0xf]
  %v8605 = vld [vmem:[%s2 + $0x7c] sm:$0xf]
  %v8606 = vld [vmem:[%s2 + $0x80] sm:$0xf]
  %v8607 = vld [vmem:[%s2 + $0x84] sm:$0xf]
  %v8608 = vld [vmem:[%s2 + $0x88] sm:$0xf]
  %v8609 = vld [vmem:[%s2 + $0x8c] sm:$0xf]
  %v8610 = vld [vmem:[%s2 + $0x90] sm:$0xf]
  %v8611 = vld [vmem:[%s2 + $0x94] sm:$0xf]
  %v8612 = vld [vmem:[%s2 + $0x98] sm:$0xf]
  %v8613 = vld [vmem:[%s2 + $0x9c] sm:$0xf]
  %v8614 = vld [vmem:[%s2 + $0xa0] sm:$0xf]
  %v8615 = vld [vmem:[%s2 + $0xa4] sm:$0xf]
  %v8616 = vld [vmem:[%s2 + $0xa8] sm:$0xf]
  %v8617 = vld [vmem:[%s2 + $0xac] sm:$0xf]
  %v8618 = vld [vmem:[%s2 + $0xb0] sm:$0xf]
  %v8619 = vld [vmem:[%s2 + $0xb4] sm:$0xf]
  %v8620 = vld [vmem:[%s2 + $0xb8] sm:$0xf]
  %v8621 = vld [vmem:[%s2 + $0xbc] sm:$0xf]
  %v8622 = vld [vmem:[%s2 + $0xc0] sm:$0xf]
  %v8623 = vld [vmem:[%s2 + $0xc4] sm:$0xf]
  %v8624 = vld [vmem:[%s2 + $0xc8] sm:$0xf]
  %v8625 = vld [vmem:[%s2 + $0xcc] sm:$0xf]
  %v8626 = vld [vmem:[%s2 + $0xd0] sm:$0xf]
  %v8627 = vld [vmem:[%s2 + $0xd4] sm:$0xf]
  %v8628 = vld [vmem:[%s2 + $0xd8] sm:$0xf]
  %v8629 = vld [vmem:[%s2 + $0xdc] sm:$0xf]
  %v8630 = vld [vmem:[%s2 + $0xe0] sm:$0xf]
  %v8631 = vld [vmem:[%s2 + $0xe4] sm:$0xf]
  %v8632 = vld [vmem:[%s2 + $0xe8] sm:$0xf]
  %v8633 = vld [vmem:[%s2 + $0xec] sm:$0xf]
  %v8634 = vld [vmem:[%s2 + $0xf0] sm:$0xf]
  %v8635 = vld [vmem:[%s2 + $0xf4] sm:$0xf]
  %v8636 = vld [vmem:[%s2 + $0xf8] sm:$0xf]
  %v8637 = vld [vmem:[%s2 + $0xfc] sm:$0xf]
  %v8638 = vld [vmem:[%s2 + $0x100] sm:$0xf]
  %v8639 = vld [vmem:[%s2 + $0x104] sm:$0xf]
  %v8640 = vld [vmem:[%s2 + $0x108] sm:$0xf]
  %v8641 = vld [vmem:[%s2 + $0x10c] sm:$0xf]
  %v8642 = vld [vmem:[%s2 + $0x110] sm:$0xf]
  %v8643 = vld [vmem:[%s2 + $0x114] sm:$0xf]
  %v8644 = vld [vmem:[%s2 + $0x118] sm:$0xf]
  %v8645 = vld [vmem:[%s2 + $0x11c] sm:$0xf]
  %v8646 = vld [vmem:[%s2 + $0x120] sm:$0xf]
  %v8647 = vld [vmem:[%s2 + $0x124] sm:$0xf]
  %v8648 = vld [vmem:[%s2 + $0x128] sm:$0xf]
  %v8649 = vld [vmem:[%s2 + $0x12c] sm:$0xf]
  %v8650 = vld [vmem:[%s2 + $0x130] sm:$0xf]
  %v8651 = vld [vmem:[%s2 + $0x134] sm:$0xf]
  %v8652 = vld [vmem:[%s2 + $0x138] sm:$0xf]
  %v8653 = vld [vmem:[%s2 + $0x13c] sm:$0xf]
  %v8654 = vld [vmem:[%s2 + $0x140] sm:$0xf]
  %v8655 = vld [vmem:[%s2 + $0x144] sm:$0xf]
  %v8656 = vld [vmem:[%s2 + $0x148] sm:$0xf]
  %v8657 = vld [vmem:[%s2 + $0x14c] sm:$0xf]
  %v8658 = vld [vmem:[%s2 + $0x150] sm:$0xf]
  %v8659 = vld [vmem:[%s2 + $0x154] sm:$0xf]
  %v8660 = vld [vmem:[%s2 + $0x158] sm:$0xf]
  %v8661 = vld [vmem:[%s2 + $0x15c] sm:$0xf]
  %v8662 = vld [vmem:[%s2 + $0x160] sm:$0xf]
  %v8663 = vld [vmem:[%s2 + $0x164] sm:$0xf]
  %v8664 = vld [vmem:[%s2 + $0x168] sm:$0xf]
  %v8665 = vld [vmem:[%s2 + $0x16c] sm:$0xf]
  %v8666 = vld [vmem:[%s2 + $0x170] sm:$0xf]
  %v8667 = vld [vmem:[%s2 + $0x174] sm:$0xf]
  %v8668 = vld [vmem:[%s2 + $0x178] sm:$0xf]
  %v8669 = vld [vmem:[%s2 + $0x17c] sm:$0xf]
  %v8670 = vld [vmem:[%s2 + $0x180] sm:$0xf]
  %v8671 = vld [vmem:[%s2 + $0x184] sm:$0xf]
  %v8672 = vld [vmem:[%s2 + $0x188] sm:$0xf]
  %v8673 = vld [vmem:[%s2 + $0x18c] sm:$0xf]
  %v8674 = vld [vmem:[%s2 + $0x190] sm:$0xf]
  %v8675 = vld [vmem:[%s2 + $0x194] sm:$0xf]
  %v8676 = vld [vmem:[%s2 + $0x198] sm:$0xf]
  %v8677 = vld [vmem:[%s2 + $0x19c] sm:$0xf]
  %v8678 = vld [vmem:[%s2 + $0x1a0] sm:$0xf]
  %v8679 = vld [vmem:[%s2 + $0x1a4] sm:$0xf]
  %v8680 = vld [vmem:[%s2 + $0x1a8] sm:$0xf]
  %v8681 = vld [vmem:[%s2 + $0x1ac] sm:$0xf]
  %v8682 = vld [vmem:[%s2 + $0x1b0] sm:$0xf]
  %v8683 = vld [vmem:[%s2 + $0x1b4] sm:$0xf]
  %v8684 = vld [vmem:[%s2 + $0x1b8] sm:$0xf]
  %v8685 = vld [vmem:[%s2 + $0x1bc] sm:$0xf]
  %v8686 = vld [vmem:[%s2 + $0x1c0] sm:$0xf]
  %v8687 = vld [vmem:[%s2 + $0x1c4] sm:$0xf]
  %v8688 = vld [vmem:[%s2 + $0x1c8] sm:$0xf]
  %v8689 = vld [vmem:[%s2 + $0x1cc] sm:$0xf]
  %v8690 = vld [vmem:[%s2 + $0x1d0] sm:$0xf]
  %v8691 = vld [vmem:[%s2 + $0x1d4] sm:$0xf]
  %v8692 = vld [vmem:[%s2 + $0x1d8] sm:$0xf]
  %v8693 = vld [vmem:[%s2 + $0x1dc] sm:$0xf]
  %v8694 = vld [vmem:[%s2 + $0x1e0] sm:$0xf]
  %v8695 = vld [vmem:[%s2 + $0x1e4] sm:$0xf]
  %v8696 = vld [vmem:[%s2 + $0x1e8] sm:$0xf]
  %v8697 = vld [vmem:[%s2 + $0x1ec] sm:$0xf]
  %v8698 = vld [vmem:[%s2 + $0x1f0] sm:$0xf]
  %v8699 = vld [vmem:[%s2 + $0x1f4] sm:$0xf]
  %v8700 = vld [vmem:[%s2 + $0x1f8] sm:$0xf]
  %v8701 = vld [vmem:[%s2 + $0x1fc] sm:$0xf]
  %v8702 = vld [vmem:[%s2 + $0x200] sm:$0xf]
  %v8703 = vld [vmem:[%s2 + $0x204] sm:$0xf]
  %v8704 = vld [vmem:[%s2 + $0x208] sm:$0xf]
  %v8705 = vld [vmem:[%s2 + $0x20c] sm:$0xf]
  %v8706 = vld [vmem:[%s2 + $0x210] sm:$0xf]
  %v8707 = vld [vmem:[%s2 + $0x214] sm:$0xf]
  %v8708 = vld [vmem:[%s2 + $0x218] sm:$0xf]
  %v8709 = vld [vmem:[%s2 + $0x21c] sm:$0xf]
  %v8710 = vld [vmem:[%s2 + $0x220] sm:$0xf]
  %v8711 = vld [vmem:[%s2 + $0x224] sm:$0xf]
  %v8712 = vld [vmem:[%s2 + $0x228] sm:$0xf]
  %v8713 = vld [vmem:[%s2 + $0x22c] sm:$0xf]
  %v8714 = vld [vmem:[%s2 + $0x230] sm:$0xf]
  %v8715 = vld [vmem:[%s2 + $0x234] sm:$0xf]
  %v8716 = vld [vmem:[%s2 + $0x238] sm:$0xf]
  %v8717 = vld [vmem:[%s2 + $0x23c] sm:$0xf]
  %v8862 = vunpack.c.l.b16 %v8574
  %v8863 = vunpack.c.l.b16 %v8575
  %v8864 = vunpack.c.l.b16 %v8576
  %v8865 = vunpack.c.l.b16 %v8577
  %v8866 = vunpack.c.l.b16 %v8578
  %v8867 = vunpack.c.l.b16 %v8579
  %v8868 = vunpack.c.l.b16 %v8580
  %v8869 = vunpack.c.l.b16 %v8581
  %v8870 = vunpack.c.l.b16 %v8582
  %v8871 = vunpack.c.l.b16 %v8583
  %v8872 = vunpack.c.l.b16 %v8584
  %v8873 = vunpack.c.l.b16 %v8585
  %v8874 = vunpack.c.l.b16 %v8586
  %v8875 = vunpack.c.l.b16 %v8587
  %v8876 = vunpack.c.l.b16 %v8588
  %v8877 = vunpack.c.l.b16 %v8589
  %v8878 = vunpack.c.l.b16 %v8590
  %v8879 = vunpack.c.l.b16 %v8591
  %v8880 = vunpack.c.l.b16 %v8592
  %v8881 = vunpack.c.l.b16 %v8593
  %v8882 = vunpack.c.l.b16 %v8594
  %v8883 = vunpack.c.l.b16 %v8595
  %v8884 = vunpack.c.l.b16 %v8596
  %v8885 = vunpack.c.l.b16 %v8597
  %v8886 = vunpack.c.l.b16 %v8598
  %v8887 = vunpack.c.l.b16 %v8599
  %v8888 = vunpack.c.l.b16 %v8600
  %v8889 = vunpack.c.l.b16 %v8601
  %v8890 = vunpack.c.l.b16 %v8602
  %v8891 = vunpack.c.l.b16 %v8603
  %v8892 = vunpack.c.l.b16 %v8604
  %v8893 = vunpack.c.l.b16 %v8605
  %v8894 = vunpack.c.l.b16 %v8606
  %v8895 = vunpack.c.l.b16 %v8607
  %v8896 = vunpack.c.l.b16 %v8608
  %v8897 = vunpack.c.l.b16 %v8609
  %v8898 = vunpack.c.l.b16 %v8610
  %v8899 = vunpack.c.l.b16 %v8611
  %v8900 = vunpack.c.l.b16 %v8612
  %v8901 = vunpack.c.l.b16 %v8613
  %v8902 = vunpack.c.l.b16 %v8614
  %v8903 = vunpack.c.l.b16 %v8615
  %v8904 = vunpack.c.l.b16 %v8616
  %v8905 = vunpack.c.l.b16 %v8617
  %v8906 = vunpack.c.l.b16 %v8618
  %v8907 = vunpack.c.l.b16 %v8619
  %v8908 = vunpack.c.l.b16 %v8620
  %v8909 = vunpack.c.l.b16 %v8621
  %v8910 = vunpack.c.l.b16 %v8622
  %v8911 = vunpack.c.l.b16 %v8623
  %v8912 = vunpack.c.l.b16 %v8624
  %v8913 = vunpack.c.l.b16 %v8625
  %v8914 = vunpack.c.l.b16 %v8626
  %v8915 = vunpack.c.l.b16 %v8627
  %v8916 = vunpack.c.l.b16 %v8628
  %v8917 = vunpack.c.l.b16 %v8629
  %v8918 = vunpack.c.l.b16 %v8630
  %v8919 = vunpack.c.l.b16 %v8631
  %v8920 = vunpack.c.l.b16 %v8632
  %v8921 = vunpack.c.l.b16 %v8633
  %v8922 = vunpack.c.l.b16 %v8634
  %v8923 = vunpack.c.l.b16 %v8635
  %v8924 = vunpack.c.l.b16 %v8636
  %v8925 = vunpack.c.l.b16 %v8637
  %v8926 = vunpack.c.l.b16 %v8638
  %v8927 = vunpack.c.l.b16 %v8639
  %v8928 = vunpack.c.l.b16 %v8640
  %v8929 = vunpack.c.l.b16 %v8641
  %v8930 = vunpack.c.l.b16 %v8642
  %v8931 = vunpack.c.l.b16 %v8643
  %v8932 = vunpack.c.l.b16 %v8644
  %v8933 = vunpack.c.l.b16 %v8645
  %v8934 = vunpack.c.l.b16 %v8646
  %v8935 = vunpack.c.l.b16 %v8647
  %v8936 = vunpack.c.l.b16 %v8648
  %v8937 = vunpack.c.l.b16 %v8649
  %v8938 = vunpack.c.l.b16 %v8650
  %v8939 = vunpack.c.l.b16 %v8651
  %v8940 = vunpack.c.l.b16 %v8652
  %v8941 = vunpack.c.l.b16 %v8653
  %v8942 = vunpack.c.l.b16 %v8654
  %v8943 = vunpack.c.l.b16 %v8655
  %v8944 = vunpack.c.l.b16 %v8656
  %v8945 = vunpack.c.l.b16 %v8657
  %v8946 = vunpack.c.l.b16 %v8658
  %v8947 = vunpack.c.l.b16 %v8659
  %v8948 = vunpack.c.l.b16 %v8660
  %v8949 = vunpack.c.l.b16 %v8661
  %v8950 = vunpack.c.l.b16 %v8662
  %v8951 = vunpack.c.l.b16 %v8663
  %v8952 = vunpack.c.l.b16 %v8664
  %v8953 = vunpack.c.l.b16 %v8665
  %v8954 = vunpack.c.l.b16 %v8666
  %v8955 = vunpack.c.l.b16 %v8667
  %v8956 = vunpack.c.l.b16 %v8668
  %v8957 = vunpack.c.l.b16 %v8669
  %v8958 = vunpack.c.l.b16 %v8670
  %v8959 = vunpack.c.l.b16 %v8671
  %v8960 = vunpack.c.l.b16 %v8672
  %v8961 = vunpack.c.l.b16 %v8673
  %v8962 = vunpack.c.l.b16 %v8674
  %v8963 = vunpack.c.l.b16 %v8675
  %v8964 = vunpack.c.l.b16 %v8676
  %v8965 = vunpack.c.l.b16 %v8677
  %v8966 = vunpack.c.l.b16 %v8678
  %v8967 = vunpack.c.l.b16 %v8679
  %v8968 = vunpack.c.l.b16 %v8680
  %v8969 = vunpack.c.l.b16 %v8681
  %v8970 = vunpack.c.l.b16 %v8682
  %v8971 = vunpack.c.l.b16 %v8683
  %v8972 = vunpack.c.l.b16 %v8684
  %v8973 = vunpack.c.l.b16 %v8685
  %v8974 = vunpack.c.l.b16 %v8686
  %v8975 = vunpack.c.l.b16 %v8687
  %v8976 = vunpack.c.l.b16 %v8688
  %v8977 = vunpack.c.l.b16 %v8689
  %v8978 = vunpack.c.l.b16 %v8690
  %v8979 = vunpack.c.l.b16 %v8691
  %v8980 = vunpack.c.l.b16 %v8692
  %v8981 = vunpack.c.l.b16 %v8693
  %v8982 = vunpack.c.l.b16 %v8694
  %v8983 = vunpack.c.l.b16 %v8695
  %v8984 = vunpack.c.l.b16 %v8696
  %v8985 = vunpack.c.l.b16 %v8697
  %v8986 = vunpack.c.l.b16 %v8698
  %v8987 = vunpack.c.l.b16 %v8699
  %v8988 = vunpack.c.l.b16 %v8700
  %v8989 = vunpack.c.l.b16 %v8701
  %v8990 = vunpack.c.l.b16 %v8702
  %v8991 = vunpack.c.l.b16 %v8703
  %v8992 = vunpack.c.l.b16 %v8704
  %v8993 = vunpack.c.l.b16 %v8705
  %v8994 = vunpack.c.l.b16 %v8706
  %v8995 = vunpack.c.l.b16 %v8707
  %v8996 = vunpack.c.l.b16 %v8708
  %v8997 = vunpack.c.l.b16 %v8709
  %v8998 = vunpack.c.l.b16 %v8710
  %v8999 = vunpack.c.l.b16 %v8711
  %v9000 = vunpack.c.l.b16 %v8712
  %v9001 = vunpack.c.l.b16 %v8713
  %v9002 = vunpack.c.l.b16 %v8714
  %v9003 = vunpack.c.l.b16 %v8715
  %v9004 = vunpack.c.l.b16 %v8716
  %v9005 = vunpack.c.l.b16 %v8717
  %v9006 = vpack.c.b16 %v8863, %v8862
  %v9007 = vpack.c.b16 %v8865, %v8864
  %v9008 = vpack.c.b16 %v8867, %v8866
  %v9009 = vpack.c.b16 %v8869, %v8868
  %v9010 = vpack.c.b16 %v8871, %v8870
  %v9011 = vpack.c.b16 %v8873, %v8872
  %v9012 = vpack.c.b16 %v8875, %v8874
  %v9013 = vpack.c.b16 %v8877, %v8876
  %v9014 = vpack.c.b16 %v8879, %v8878
  %v9015 = vpack.c.b16 %v8881, %v8880
  %v9016 = vpack.c.b16 %v8883, %v8882
  %v9017 = vpack.c.b16 %v8885, %v8884
  %v9018 = vpack.c.b16 %v8887, %v8886
  %v9019 = vpack.c.b16 %v8889, %v8888
  %v9020 = vpack.c.b16 %v8891, %v8890
  %v9021 = vpack.c.b16 %v8893, %v8892
  %v9022 = vpack.c.b16 %v8895, %v8894
  %v9023 = vpack.c.b16 %v8897, %v8896
  %v9024 = vpack.c.b16 %v8899, %v8898
  %v9025 = vpack.c.b16 %v8901, %v8900
  %v9026 = vpack.c.b16 %v8903, %v8902
  %v9027 = vpack.c.b16 %v8905, %v8904
  %v9028 = vpack.c.b16 %v8907, %v8906
  %v9029 = vpack.c.b16 %v8909, %v8908
  %v9030 = vpack.c.b16 %v8911, %v8910
  %v9031 = vpack.c.b16 %v8913, %v8912
  %v9032 = vpack.c.b16 %v8915, %v8914
  %v9033 = vpack.c.b16 %v8917, %v8916
  %v9034 = vpack.c.b16 %v8919, %v8918
  %v9035 = vpack.c.b16 %v8921, %v8920
  %v9036 = vpack.c.b16 %v8923, %v8922
  %v9037 = vpack.c.b16 %v8925, %v8924
  %v9038 = vpack.c.b16 %v8927, %v8926
  %v9039 = vpack.c.b16 %v8929, %v8928
  %v9040 = vpack.c.b16 %v8931, %v8930
  %v9041 = vpack.c.b16 %v8933, %v8932
  %v9042 = vpack.c.b16 %v8935, %v8934
  %v9043 = vpack.c.b16 %v8937, %v8936
  %v9044 = vpack.c.b16 %v8939, %v8938
  %v9045 = vpack.c.b16 %v8941, %v8940
  %v9046 = vpack.c.b16 %v8943, %v8942
  %v9047 = vpack.c.b16 %v8945, %v8944
  %v9048 = vpack.c.b16 %v8947, %v8946
  %v9049 = vpack.c.b16 %v8949, %v8948
  %v9050 = vpack.c.b16 %v8951, %v8950
  %v9051 = vpack.c.b16 %v8953, %v8952
  %v9052 = vpack.c.b16 %v8955, %v8954
  %v9053 = vpack.c.b16 %v8957, %v8956
  %v9054 = vpack.c.b16 %v8959, %v8958
  %v9055 = vpack.c.b16 %v8961, %v8960
  %v9056 = vpack.c.b16 %v8963, %v8962
  %v9057 = vpack.c.b16 %v8965, %v8964
  %v9058 = vpack.c.b16 %v8967, %v8966
  %v9059 = vpack.c.b16 %v8969, %v8968
  %v9060 = vpack.c.b16 %v8971, %v8970
  %v9061 = vpack.c.b16 %v8973, %v8972
  %v9062 = vpack.c.b16 %v8975, %v8974
  %v9063 = vpack.c.b16 %v8977, %v8976
  %v9064 = vpack.c.b16 %v8979, %v8978
  %v9065 = vpack.c.b16 %v8981, %v8980
  %v9066 = vpack.c.b16 %v8983, %v8982
  %v9067 = vpack.c.b16 %v8985, %v8984
  %v9068 = vpack.c.b16 %v8987, %v8986
  %v9069 = vpack.c.b16 %v8989, %v8988
  %v9070 = vpack.c.b16 %v8991, %v8990
  %v9071 = vpack.c.b16 %v8993, %v8992
  %v9072 = vpack.c.b16 %v8995, %v8994
  %v9073 = vpack.c.b16 %v8997, %v8996
  %v9074 = vpack.c.b16 %v8999, %v8998
  %v9075 = vpack.c.b16 %v9001, %v9000
  %v9076 = vpack.c.b16 %v9003, %v9002
  %v9077 = vpack.c.b16 %v9005, %v9004
  %9150 = vmatpush.bf16.msra.mxu0 %v9013
  %9151 = vmatpush.bf16.msra.mxu0 %v9012
  %9152 = vmatpush.bf16.msra.mxu0 %v9011
  %9153 = vmatpush.bf16.msra.mxu0 %v9010
  %9154 = vmatpush.bf16.msra.mxu0 %v9009
  %9155 = vmatpush.bf16.msra.mxu0 %v9008
  %9156 = vmatpush.bf16.msra.mxu0 %v9007
  %9157 = vmatpush.bf16.msra.mxu0 %v9006
  %9158 = vmatmul.bf16.gmra.mxu0 %v6974
  %v9159 = vpop.f32.mrf.mxu0
  %v9160 = vadd.f32 0.0, %v9159
  %v9161 = vpop.f32.mrf.mxu0
  %v9162 = vadd.f32 0.0, %v9161
  %9163 = vmatmul.bf16.gmra.mxu0 %v6975
  %v9164 = vpop.f32.mrf.mxu0
  %v9165 = vadd.f32 0.0, %v9164
  %v9166 = vpop.f32.mrf.mxu0
  %v9167 = vadd.f32 0.0, %v9166
  %9168 = vmatmul.bf16.gmra.mxu0 %v6976
  %v9169 = vpop.f32.mrf.mxu0
  %v9170 = vadd.f32 0.0, %v9169
  %v9171 = vpop.f32.mrf.mxu0
  %v9172 = vadd.f32 0.0, %v9171
  %9173 = vmatmul.bf16.gmra.mxu0 %v6977
  %v9174 = vpop.f32.mrf.mxu0
  %v9175 = vadd.f32 0.0, %v9174
  %v9176 = vpop.f32.mrf.mxu0
  %v9177 = vadd.f32 0.0, %v9176
  %9178 = vmatmul.bf16.gmra.mxu0 %v6978
  %v9179 = vpop.f32.mrf.mxu0
  %v9180 = vadd.f32 0.0, %v9179
  %v9181 = vpop.f32.mrf.mxu0
  %v9182 = vadd.f32 0.0, %v9181
  %9183 = vmatmul.bf16.gmra.mxu0 %v6979
  %v9184 = vpop.f32.mrf.mxu0
  %v9185 = vadd.f32 0.0, %v9184
  %v9186 = vpop.f32.mrf.mxu0
  %v9187 = vadd.f32 0.0, %v9186
  %9188 = vmatmul.bf16.gmra.mxu0 %v6980
  %v9189 = vpop.f32.mrf.mxu0
  %v9190 = vadd.f32 0.0, %v9189
  %v9191 = vpop.f32.mrf.mxu0
  %v9192 = vadd.f32 0.0, %v9191
  %9193 = vmatmul.bf16.gmra.mxu0 %v6981
  %v9194 = vpop.f32.mrf.mxu0
  %v9195 = vadd.f32 0.0, %v9194
  %v9196 = vpop.f32.mrf.mxu0
  %v9197 = vadd.f32 0.0, %v9196
  %9198 = vmatmul.bf16.gmra.mxu0 %v6982
  %v9199 = vpop.f32.mrf.mxu0
  %v9200 = vadd.f32 0.0, %v9199
  %v9201 = vpop.f32.mrf.mxu0
  %v9202 = vadd.f32 0.0, %v9201
  %9203 = vmatmul.bf16.gmra.mxu0 %v6983
  %v9204 = vpop.f32.mrf.mxu0
  %v9205 = vadd.f32 0.0, %v9204
  %v9206 = vpop.f32.mrf.mxu0
  %v9207 = vadd.f32 0.0, %v9206
  %9208 = vmatmul.bf16.gmra.mxu0 %v6984
  %v9209 = vpop.f32.mrf.mxu0
  %v9210 = vadd.f32 0.0, %v9209
  %v9211 = vpop.f32.mrf.mxu0
  %v9212 = vadd.f32 0.0, %v9211
  %9213 = vmatmul.bf16.gmra.mxu0 %v6985
  %v9214 = vpop.f32.mrf.mxu0
  %v9215 = vadd.f32 0.0, %v9214
  %v9216 = vpop.f32.mrf.mxu0
  %v9217 = vadd.f32 0.0, %v9216
  %9218 = vmatmul.bf16.gmra.mxu0 %v6986
  %v9219 = vpop.f32.mrf.mxu0
  %v9220 = vadd.f32 0.0, %v9219
  %v9221 = vpop.f32.mrf.mxu0
  %v9222 = vadd.f32 0.0, %v9221
  %9223 = vmatmul.bf16.gmra.mxu0 %v6987
  %v9224 = vpop.f32.mrf.mxu0
  %v9225 = vadd.f32 0.0, %v9224
  %v9226 = vpop.f32.mrf.mxu0
  %v9227 = vadd.f32 0.0, %v9226
  %9228 = vmatmul.bf16.gmra.mxu0 %v6988
  %v9229 = vpop.f32.mrf.mxu0
  %v9230 = vadd.f32 0.0, %v9229
  %v9231 = vpop.f32.mrf.mxu0
  %v9232 = vadd.f32 0.0, %v9231
  %9233 = vmatmul.bf16.gmra.mxu0 %v6989
  %v9234 = vpop.f32.mrf.mxu0
  %v9235 = vadd.f32 0.0, %v9234
  %v9236 = vpop.f32.mrf.mxu0
  %v9237 = vadd.f32 0.0, %v9236
  %9238 = vmatmul.bf16.gmra.mxu0 %v6990
  %v9239 = vpop.f32.mrf.mxu0
  %v9240 = vadd.f32 0.0, %v9239
  %v9241 = vpop.f32.mrf.mxu0
  %v9242 = vadd.f32 0.0, %v9241
  %9243 = vmatmul.bf16.gmra.mxu0 %v6991
  %v9244 = vpop.f32.mrf.mxu0
  %v9245 = vadd.f32 0.0, %v9244
  %v9246 = vpop.f32.mrf.mxu0
  %v9247 = vadd.f32 0.0, %v9246
  %9248 = vmatmul.bf16.gmra.mxu0 %v6992
  %v9249 = vpop.f32.mrf.mxu0
  %v9250 = vadd.f32 0.0, %v9249
  %v9251 = vpop.f32.mrf.mxu0
  %v9252 = vadd.f32 0.0, %v9251
  %9253 = vmatmul.bf16.gmra.mxu0 %v6993
  %v9254 = vpop.f32.mrf.mxu0
  %v9255 = vadd.f32 0.0, %v9254
  %v9256 = vpop.f32.mrf.mxu0
  %v9257 = vadd.f32 0.0, %v9256
  %9258 = vmatmul.bf16.gmra.mxu0 %v6994
  %v9259 = vpop.f32.mrf.mxu0
  %v9260 = vadd.f32 0.0, %v9259
  %v9261 = vpop.f32.mrf.mxu0
  %v9262 = vadd.f32 0.0, %v9261
  %9263 = vmatmul.bf16.gmra.mxu0 %v6995
  %v9264 = vpop.f32.mrf.mxu0
  %v9265 = vadd.f32 0.0, %v9264
  %v9266 = vpop.f32.mrf.mxu0
  %v9267 = vadd.f32 0.0, %v9266
  %9268 = vmatmul.bf16.gmra.mxu0 %v6996
  %v9269 = vpop.f32.mrf.mxu0
  %v9270 = vadd.f32 0.0, %v9269
  %v9271 = vpop.f32.mrf.mxu0
  %v9272 = vadd.f32 0.0, %v9271
  %9273 = vmatmul.bf16.gmra.mxu0 %v6997
  %v9274 = vpop.f32.mrf.mxu0
  %v9275 = vadd.f32 0.0, %v9274
  %v9276 = vpop.f32.mrf.mxu0
  %v9277 = vadd.f32 0.0, %v9276
  %9278 = vmatmul.bf16.gmra.mxu0 %v6998
  %v9279 = vpop.f32.mrf.mxu0
  %v9280 = vadd.f32 0.0, %v9279
  %v9281 = vpop.f32.mrf.mxu0
  %v9282 = vadd.f32 0.0, %v9281
  %9283 = vmatmul.bf16.gmra.mxu0 %v6999
  %v9284 = vpop.f32.mrf.mxu0
  %v9285 = vadd.f32 0.0, %v9284
  %v9286 = vpop.f32.mrf.mxu0
  %v9287 = vadd.f32 0.0, %v9286
  %9288 = vmatmul.bf16.gmra.mxu0 %v7000
  %v9289 = vpop.f32.mrf.mxu0
  %v9290 = vadd.f32 0.0, %v9289
  %v9291 = vpop.f32.mrf.mxu0
  %v9292 = vadd.f32 0.0, %v9291
  %9293 = vmatmul.bf16.gmra.mxu0 %v7001
  %v9294 = vpop.f32.mrf.mxu0
  %v9295 = vadd.f32 0.0, %v9294
  %v9296 = vpop.f32.mrf.mxu0
  %v9297 = vadd.f32 0.0, %v9296
  %9298 = vmatmul.bf16.gmra.mxu0 %v7002
  %v9299 = vpop.f32.mrf.mxu0
  %v9300 = vadd.f32 0.0, %v9299
  %v9301 = vpop.f32.mrf.mxu0
  %v9302 = vadd.f32 0.0, %v9301
  %9303 = vmatmul.bf16.gmra.mxu0 %v7003
  %v9304 = vpop.f32.mrf.mxu0
  %v9305 = vadd.f32 0.0, %v9304
  %v9306 = vpop.f32.mrf.mxu0
  %v9307 = vadd.f32 0.0, %v9306
  %9308 = vmatmul.bf16.gmra.mxu0 %v7004
  %v9309 = vpop.f32.mrf.mxu0
  %v9310 = vadd.f32 0.0, %v9309
  %v9311 = vpop.f32.mrf.mxu0
  %v9312 = vadd.f32 0.0, %v9311
  %9313 = vmatmul.bf16.gmra.mxu0 %v7005
  %v9314 = vpop.f32.mrf.mxu0
  %v9315 = vadd.f32 0.0, %v9314
  %v9316 = vpop.f32.mrf.mxu0
  %v9317 = vadd.f32 0.0, %v9316
  %9318 = vdwg.mxu0
  %9319 = vmatpush.bf16.msra.mxu0 %v9021
  %9320 = vmatpush.bf16.msra.mxu0 %v9020
  %9321 = vmatpush.bf16.msra.mxu0 %v9019
  %9322 = vmatpush.bf16.msra.mxu0 %v9018
  %9323 = vmatpush.bf16.msra.mxu0 %v9017
  %9324 = vmatpush.bf16.msra.mxu0 %v9016
  %9325 = vmatpush.bf16.msra.mxu0 %v9015
  %9326 = vmatpush.bf16.msra.mxu0 %v9014
  %9327 = vmatmul.bf16.gmra.mxu0 %v7166
  %v9328 = vpop.f32.mrf.mxu0
  %v9329 = vadd.f32 %v9160, %v9328
  %v9330 = vpop.f32.mrf.mxu0
  %v9331 = vadd.f32 %v9162, %v9330
  %9332 = vmatmul.bf16.gmra.mxu0 %v7167
  %v9333 = vpop.f32.mrf.mxu0
  %v9334 = vadd.f32 %v9165, %v9333
  %v9335 = vpop.f32.mrf.mxu0
  %v9336 = vadd.f32 %v9167, %v9335
  %9337 = vmatmul.bf16.gmra.mxu0 %v7168
  %v9338 = vpop.f32.mrf.mxu0
  %v9339 = vadd.f32 %v9170, %v9338
  %v9340 = vpop.f32.mrf.mxu0
  %v9341 = vadd.f32 %v9172, %v9340
  %9342 = vmatmul.bf16.gmra.mxu0 %v7169
  %v9343 = vpop.f32.mrf.mxu0
  %v9344 = vadd.f32 %v9175, %v9343
  %v9345 = vpop.f32.mrf.mxu0
  %v9346 = vadd.f32 %v9177, %v9345
  %9347 = vmatmul.bf16.gmra.mxu0 %v7170
  %v9348 = vpop.f32.mrf.mxu0
  %v9349 = vadd.f32 %v9180, %v9348
  %v9350 = vpop.f32.mrf.mxu0
  %v9351 = vadd.f32 %v9182, %v9350
  %9352 = vmatmul.bf16.gmra.mxu0 %v7171
  %v9353 = vpop.f32.mrf.mxu0
  %v9354 = vadd.f32 %v9185, %v9353
  %v9355 = vpop.f32.mrf.mxu0
  %v9356 = vadd.f32 %v9187, %v9355
  %9357 = vmatmul.bf16.gmra.mxu0 %v7172
  %v9358 = vpop.f32.mrf.mxu0
  %v9359 = vadd.f32 %v9190, %v9358
  %v9360 = vpop.f32.mrf.mxu0
  %v9361 = vadd.f32 %v9192, %v9360
  %9362 = vmatmul.bf16.gmra.mxu0 %v7173
  %v9363 = vpop.f32.mrf.mxu0
  %v9364 = vadd.f32 %v9195, %v9363
  %v9365 = vpop.f32.mrf.mxu0
  %v9366 = vadd.f32 %v9197, %v9365
  %9367 = vmatmul.bf16.gmra.mxu0 %v7174
  %v9368 = vpop.f32.mrf.mxu0
  %v9369 = vadd.f32 %v9200, %v9368
  %v9370 = vpop.f32.mrf.mxu0
  %v9371 = vadd.f32 %v9202, %v9370
  %9372 = vmatmul.bf16.gmra.mxu0 %v7175
  %v9373 = vpop.f32.mrf.mxu0
  %v9374 = vadd.f32 %v9205, %v9373
  %v9375 = vpop.f32.mrf.mxu0
  %v9376 = vadd.f32 %v9207, %v9375
  %9377 = vmatmul.bf16.gmra.mxu0 %v7176
  %v9378 = vpop.f32.mrf.mxu0
  %v9379 = vadd.f32 %v9210, %v9378
  %v9380 = vpop.f32.mrf.mxu0
  %v9381 = vadd.f32 %v9212, %v9380
  %9382 = vmatmul.bf16.gmra.mxu0 %v7177
  %v9383 = vpop.f32.mrf.mxu0
  %v9384 = vadd.f32 %v9215, %v9383
  %v9385 = vpop.f32.mrf.mxu0
  %v9386 = vadd.f32 %v9217, %v9385
  %9387 = vmatmul.bf16.gmra.mxu0 %v7178
  %v9388 = vpop.f32.mrf.mxu0
  %v9389 = vadd.f32 %v9220, %v9388
  %v9390 = vpop.f32.mrf.mxu0
  %v9391 = vadd.f32 %v9222, %v9390
  %9392 = vmatmul.bf16.gmra.mxu0 %v7179
  %v9393 = vpop.f32.mrf.mxu0
  %v9394 = vadd.f32 %v9225, %v9393
  %v9395 = vpop.f32.mrf.mxu0
  %v9396 = vadd.f32 %v9227, %v9395
  %9397 = vmatmul.bf16.gmra.mxu0 %v7180
  %v9398 = vpop.f32.mrf.mxu0
  %v9399 = vadd.f32 %v9230, %v9398
  %v9400 = vpop.f32.mrf.mxu0
  %v9401 = vadd.f32 %v9232, %v9400
  %9402 = vmatmul.bf16.gmra.mxu0 %v7181
  %v9403 = vpop.f32.mrf.mxu0
  %v9404 = vadd.f32 %v9235, %v9403
  %v9405 = vpop.f32.mrf.mxu0
  %v9406 = vadd.f32 %v9237, %v9405
  %9407 = vmatmul.bf16.gmra.mxu0 %v7182
  %v9408 = vpop.f32.mrf.mxu0
  %v9409 = vadd.f32 %v9240, %v9408
  %v9410 = vpop.f32.mrf.mxu0
  %v9411 = vadd.f32 %v9242, %v9410
  %9412 = vmatmul.bf16.gmra.mxu0 %v7183
  %v9413 = vpop.f32.mrf.mxu0
  %v9414 = vadd.f32 %v9245, %v9413
  %v9415 = vpop.f32.mrf.mxu0
  %v9416 = vadd.f32 %v9247, %v9415
  %9417 = vmatmul.bf16.gmra.mxu0 %v7184
  %v9418 = vpop.f32.mrf.mxu0
  %v9419 = vadd.f32 %v9250, %v9418
  %v9420 = vpop.f32.mrf.mxu0
  %v9421 = vadd.f32 %v9252, %v9420
  %9422 = vmatmul.bf16.gmra.mxu0 %v7185
  %v9423 = vpop.f32.mrf.mxu0
  %v9424 = vadd.f32 %v9255, %v9423
  %v9425 = vpop.f32.mrf.mxu0
  %v9426 = vadd.f32 %v9257, %v9425
  %9427 = vmatmul.bf16.gmra.mxu0 %v7186
  %v9428 = vpop.f32.mrf.mxu0
  %v9429 = vadd.f32 %v9260, %v9428
  %v9430 = vpop.f32.mrf.mxu0
  %v9431 = vadd.f32 %v9262, %v9430
  %9432 = vmatmul.bf16.gmra.mxu0 %v7187
  %v9433 = vpop.f32.mrf.mxu0
  %v9434 = vadd.f32 %v9265, %v9433
  %v9435 = vpop.f32.mrf.mxu0
  %v9436 = vadd.f32 %v9267, %v9435
  %9437 = vmatmul.bf16.gmra.mxu0 %v7188
  %v9438 = vpop.f32.mrf.mxu0
  %v9439 = vadd.f32 %v9270, %v9438
  %v9440 = vpop.f32.mrf.mxu0
  %v9441 = vadd.f32 %v9272, %v9440
  %9442 = vmatmul.bf16.gmra.mxu0 %v7189
  %v9443 = vpop.f32.mrf.mxu0
  %v9444 = vadd.f32 %v9275, %v9443
  %v9445 = vpop.f32.mrf.mxu0
  %v9446 = vadd.f32 %v9277, %v9445
  %9447 = vmatmul.bf16.gmra.mxu0 %v7190
  %v9448 = vpop.f32.mrf.mxu0
  %v9449 = vadd.f32 %v9280, %v9448
  %v9450 = vpop.f32.mrf.mxu0
  %v9451 = vadd.f32 %v9282, %v9450
  %9452 = vmatmul.bf16.gmra.mxu0 %v7191
  %v9453 = vpop.f32.mrf.mxu0
  %v9454 = vadd.f32 %v9285, %v9453
  %v9455 = vpop.f32.mrf.mxu0
  %v9456 = vadd.f32 %v9287, %v9455
  %9457 = vmatmul.bf16.gmra.mxu0 %v7192
  %v9458 = vpop.f32.mrf.mxu0
  %v9459 = vadd.f32 %v9290, %v9458
  %v9460 = vpop.f32.mrf.mxu0
  %v9461 = vadd.f32 %v9292, %v9460
  %9462 = vmatmul.bf16.gmra.mxu0 %v7193
  %v9463 = vpop.f32.mrf.mxu0
  %v9464 = vadd.f32 %v9295, %v9463
  %v9465 = vpop.f32.mrf.mxu0
  %v9466 = vadd.f32 %v9297, %v9465
  %9467 = vmatmul.bf16.gmra.mxu0 %v7194
  %v9468 = vpop.f32.mrf.mxu0
  %v9469 = vadd.f32 %v9300, %v9468
  %v9470 = vpop.f32.mrf.mxu0
  %v9471 = vadd.f32 %v9302, %v9470
  %9472 = vmatmul.bf16.gmra.mxu0 %v7195
  %v9473 = vpop.f32.mrf.mxu0
  %v9474 = vadd.f32 %v9305, %v9473
  %v9475 = vpop.f32.mrf.mxu0
  %v9476 = vadd.f32 %v9307, %v9475
  %9477 = vmatmul.bf16.gmra.mxu0 %v7196
  %v9478 = vpop.f32.mrf.mxu0
  %v9479 = vadd.f32 %v9310, %v9478
  %v9480 = vpop.f32.mrf.mxu0
  %v9481 = vadd.f32 %v9312, %v9480
  %9482 = vmatmul.bf16.gmra.mxu0 %v7197
  %v9483 = vpop.f32.mrf.mxu0
  %v9484 = vadd.f32 %v9315, %v9483
  %v9485 = vpop.f32.mrf.mxu0
  %v9486 = vadd.f32 %v9317, %v9485
  %9487 = vdwg.mxu0
  %9488 = vmatpush.bf16.msra.mxu0 %v9029
  %9489 = vmatpush.bf16.msra.mxu0 %v9028
  %9490 = vmatpush.bf16.msra.mxu0 %v9027
  %9491 = vmatpush.bf16.msra.mxu0 %v9026
  %9492 = vmatpush.bf16.msra.mxu0 %v9025
  %9493 = vmatpush.bf16.msra.mxu0 %v9024
  %9494 = vmatpush.bf16.msra.mxu0 %v9023
  %9495 = vmatpush.bf16.msra.mxu0 %v9022
  %9496 = vmatmul.bf16.gmra.mxu0 %v7358
  %v9497 = vpop.f32.mrf.mxu0
  %v9498 = vadd.f32 %v9329, %v9497
  %v9499 = vpop.f32.mrf.mxu0
  %v9500 = vadd.f32 %v9331, %v9499
  %9501 = vmatmul.bf16.gmra.mxu0 %v7359
  %v9502 = vpop.f32.mrf.mxu0
  %v9503 = vadd.f32 %v9334, %v9502
  %v9504 = vpop.f32.mrf.mxu0
  %v9505 = vadd.f32 %v9336, %v9504
  %9506 = vmatmul.bf16.gmra.mxu0 %v7360
  %v9507 = vpop.f32.mrf.mxu0
  %v9508 = vadd.f32 %v9339, %v9507
  %v9509 = vpop.f32.mrf.mxu0
  %v9510 = vadd.f32 %v9341, %v9509
  %9511 = vmatmul.bf16.gmra.mxu0 %v7361
  %v9512 = vpop.f32.mrf.mxu0
  %v9513 = vadd.f32 %v9344, %v9512
  %v9514 = vpop.f32.mrf.mxu0
  %v9515 = vadd.f32 %v9346, %v9514
  %9516 = vmatmul.bf16.gmra.mxu0 %v7362
  %v9517 = vpop.f32.mrf.mxu0
  %v9518 = vadd.f32 %v9349, %v9517
  %v9519 = vpop.f32.mrf.mxu0
  %v9520 = vadd.f32 %v9351, %v9519
  %9521 = vmatmul.bf16.gmra.mxu0 %v7363
  %v9522 = vpop.f32.mrf.mxu0
  %v9523 = vadd.f32 %v9354, %v9522
  %v9524 = vpop.f32.mrf.mxu0
  %v9525 = vadd.f32 %v9356, %v9524
  %9526 = vmatmul.bf16.gmra.mxu0 %v7364
  %v9527 = vpop.f32.mrf.mxu0
  %v9528 = vadd.f32 %v9359, %v9527
  %v9529 = vpop.f32.mrf.mxu0
  %v9530 = vadd.f32 %v9361, %v9529
  %9531 = vmatmul.bf16.gmra.mxu0 %v7365
  %v9532 = vpop.f32.mrf.mxu0
  %v9533 = vadd.f32 %v9364, %v9532
  %v9534 = vpop.f32.mrf.mxu0
  %v9535 = vadd.f32 %v9366, %v9534
  %9536 = vmatmul.bf16.gmra.mxu0 %v7366
  %v9537 = vpop.f32.mrf.mxu0
  %v9538 = vadd.f32 %v9369, %v9537
  %v9539 = vpop.f32.mrf.mxu0
  %v9540 = vadd.f32 %v9371, %v9539
  %9541 = vmatmul.bf16.gmra.mxu0 %v7367
  %v9542 = vpop.f32.mrf.mxu0
  %v9543 = vadd.f32 %v9374, %v9542
  %v9544 = vpop.f32.mrf.mxu0
  %v9545 = vadd.f32 %v9376, %v9544
  %9546 = vmatmul.bf16.gmra.mxu0 %v7368
  %v9547 = vpop.f32.mrf.mxu0
  %v9548 = vadd.f32 %v9379, %v9547
  %v9549 = vpop.f32.mrf.mxu0
  %v9550 = vadd.f32 %v9381, %v9549
  %9551 = vmatmul.bf16.gmra.mxu0 %v7369
  %v9552 = vpop.f32.mrf.mxu0
  %v9553 = vadd.f32 %v9384, %v9552
  %v9554 = vpop.f32.mrf.mxu0
  %v9555 = vadd.f32 %v9386, %v9554
  %9556 = vmatmul.bf16.gmra.mxu0 %v7370
  %v9557 = vpop.f32.mrf.mxu0
  %v9558 = vadd.f32 %v9389, %v9557
  %v9559 = vpop.f32.mrf.mxu0
  %v9560 = vadd.f32 %v9391, %v9559
  %9561 = vmatmul.bf16.gmra.mxu0 %v7371
  %v9562 = vpop.f32.mrf.mxu0
  %v9563 = vadd.f32 %v9394, %v9562
  %v9564 = vpop.f32.mrf.mxu0
  %v9565 = vadd.f32 %v9396, %v9564
  %9566 = vmatmul.bf16.gmra.mxu0 %v7372
  %v9567 = vpop.f32.mrf.mxu0
  %v9568 = vadd.f32 %v9399, %v9567
  %v9569 = vpop.f32.mrf.mxu0
  %v9570 = vadd.f32 %v9401, %v9569
  %9571 = vmatmul.bf16.gmra.mxu0 %v7373
  %v9572 = vpop.f32.mrf.mxu0
  %v9573 = vadd.f32 %v9404, %v9572
  %v9574 = vpop.f32.mrf.mxu0
  %v9575 = vadd.f32 %v9406, %v9574
  %9576 = vmatmul.bf16.gmra.mxu0 %v7374
  %v9577 = vpop.f32.mrf.mxu0
  %v9578 = vadd.f32 %v9409, %v9577
  %v9579 = vpop.f32.mrf.mxu0
  %v9580 = vadd.f32 %v9411, %v9579
  %9581 = vmatmul.bf16.gmra.mxu0 %v7375
  %v9582 = vpop.f32.mrf.mxu0
  %v9583 = vadd.f32 %v9414, %v9582
  %v9584 = vpop.f32.mrf.mxu0
  %v9585 = vadd.f32 %v9416, %v9584
  %9586 = vmatmul.bf16.gmra.mxu0 %v7376
  %v9587 = vpop.f32.mrf.mxu0
  %v9588 = vadd.f32 %v9419, %v9587
  %v9589 = vpop.f32.mrf.mxu0
  %v9590 = vadd.f32 %v9421, %v9589
  %9591 = vmatmul.bf16.gmra.mxu0 %v7377
  %v9592 = vpop.f32.mrf.mxu0
  %v9593 = vadd.f32 %v9424, %v9592
  %v9594 = vpop.f32.mrf.mxu0
  %v9595 = vadd.f32 %v9426, %v9594
  %9596 = vmatmul.bf16.gmra.mxu0 %v7378
  %v9597 = vpop.f32.mrf.mxu0
  %v9598 = vadd.f32 %v9429, %v9597
  %v9599 = vpop.f32.mrf.mxu0
  %v9600 = vadd.f32 %v9431, %v9599
  %9601 = vmatmul.bf16.gmra.mxu0 %v7379
  %v9602 = vpop.f32.mrf.mxu0
  %v9603 = vadd.f32 %v9434, %v9602
  %v9604 = vpop.f32.mrf.mxu0
  %v9605 = vadd.f32 %v9436, %v9604
  %9606 = vmatmul.bf16.gmra.mxu0 %v7380
  %v9607 = vpop.f32.mrf.mxu0
  %v9608 = vadd.f32 %v9439, %v9607
  %v9609 = vpop.f32.mrf.mxu0
  %v9610 = vadd.f32 %v9441, %v9609
  %9611 = vmatmul.bf16.gmra.mxu0 %v7381
  %v9612 = vpop.f32.mrf.mxu0
  %v9613 = vadd.f32 %v9444, %v9612
  %v9614 = vpop.f32.mrf.mxu0
  %v9615 = vadd.f32 %v9446, %v9614
  %9616 = vmatmul.bf16.gmra.mxu0 %v7382
  %v9617 = vpop.f32.mrf.mxu0
  %v9618 = vadd.f32 %v9449, %v9617
  %v9619 = vpop.f32.mrf.mxu0
  %v9620 = vadd.f32 %v9451, %v9619
  %9621 = vmatmul.bf16.gmra.mxu0 %v7383
  %v9622 = vpop.f32.mrf.mxu0
  %v9623 = vadd.f32 %v9454, %v9622
  %v9624 = vpop.f32.mrf.mxu0
  %v9625 = vadd.f32 %v9456, %v9624
  %9626 = vmatmul.bf16.gmra.mxu0 %v7384
  %v9627 = vpop.f32.mrf.mxu0
  %v9628 = vadd.f32 %v9459, %v9627
  %v9629 = vpop.f32.mrf.mxu0
  %v9630 = vadd.f32 %v9461, %v9629
  %9631 = vmatmul.bf16.gmra.mxu0 %v7385
  %v9632 = vpop.f32.mrf.mxu0
  %v9633 = vadd.f32 %v9464, %v9632
  %v9634 = vpop.f32.mrf.mxu0
  %v9635 = vadd.f32 %v9466, %v9634
  %9636 = vmatmul.bf16.gmra.mxu0 %v7386
  %v9637 = vpop.f32.mrf.mxu0
  %v9638 = vadd.f32 %v9469, %v9637
  %v9639 = vpop.f32.mrf.mxu0
  %v9640 = vadd.f32 %v9471, %v9639
  %9641 = vmatmul.bf16.gmra.mxu0 %v7387
  %v9642 = vpop.f32.mrf.mxu0
  %v9643 = vadd.f32 %v9474, %v9642
  %v9644 = vpop.f32.mrf.mxu0
  %v9645 = vadd.f32 %v9476, %v9644
  %9646 = vmatmul.bf16.gmra.mxu0 %v7388
  %v9647 = vpop.f32.mrf.mxu0
  %v9648 = vadd.f32 %v9479, %v9647
  %v9649 = vpop.f32.mrf.mxu0
  %v9650 = vadd.f32 %v9481, %v9649
  %9651 = vmatmul.bf16.gmra.mxu0 %v7389
  %v9652 = vpop.f32.mrf.mxu0
  %v9653 = vadd.f32 %v9484, %v9652
  %v9654 = vpop.f32.mrf.mxu0
  %v9655 = vadd.f32 %v9486, %v9654
  %9656 = vdwg.mxu0
  %9657 = vmatpush.bf16.msra.mxu0 %v9037
  %9658 = vmatpush.bf16.msra.mxu0 %v9036
  %9659 = vmatpush.bf16.msra.mxu0 %v9035
  %9660 = vmatpush.bf16.msra.mxu0 %v9034
  %9661 = vmatpush.bf16.msra.mxu0 %v9033
  %9662 = vmatpush.bf16.msra.mxu0 %v9032
  %9663 = vmatpush.bf16.msra.mxu0 %v9031
  %9664 = vmatpush.bf16.msra.mxu0 %v9030
  %9665 = vmatmul.bf16.gmra.mxu0 %v7550
  %v9666 = vpop.f32.mrf.mxu0
  %v9667 = vadd.f32 %v9498, %v9666
  %v9668 = vpop.f32.mrf.mxu0
  %v9669 = vadd.f32 %v9500, %v9668
  %9670 = vmatmul.bf16.gmra.mxu0 %v7551
  %v9671 = vpop.f32.mrf.mxu0
  %v9672 = vadd.f32 %v9503, %v9671
  %v9673 = vpop.f32.mrf.mxu0
  %v9674 = vadd.f32 %v9505, %v9673
  %9675 = vmatmul.bf16.gmra.mxu0 %v7552
  %v9676 = vpop.f32.mrf.mxu0
  %v9677 = vadd.f32 %v9508, %v9676
  %v9678 = vpop.f32.mrf.mxu0
  %v9679 = vadd.f32 %v9510, %v9678
  %9680 = vmatmul.bf16.gmra.mxu0 %v7553
  %v9681 = vpop.f32.mrf.mxu0
  %v9682 = vadd.f32 %v9513, %v9681
  %v9683 = vpop.f32.mrf.mxu0
  %v9684 = vadd.f32 %v9515, %v9683
  %9685 = vmatmul.bf16.gmra.mxu0 %v7554
  %v9686 = vpop.f32.mrf.mxu0
  %v9687 = vadd.f32 %v9518, %v9686
  %v9688 = vpop.f32.mrf.mxu0
  %v9689 = vadd.f32 %v9520, %v9688
  %9690 = vmatmul.bf16.gmra.mxu0 %v7555
  %v9691 = vpop.f32.mrf.mxu0
  %v9692 = vadd.f32 %v9523, %v9691
  %v9693 = vpop.f32.mrf.mxu0
  %v9694 = vadd.f32 %v9525, %v9693
  %9695 = vmatmul.bf16.gmra.mxu0 %v7556
  %v9696 = vpop.f32.mrf.mxu0
  %v9697 = vadd.f32 %v9528, %v9696
  %v9698 = vpop.f32.mrf.mxu0
  %v9699 = vadd.f32 %v9530, %v9698
  %9700 = vmatmul.bf16.gmra.mxu0 %v7557
  %v9701 = vpop.f32.mrf.mxu0
  %v9702 = vadd.f32 %v9533, %v9701
  %v9703 = vpop.f32.mrf.mxu0
  %v9704 = vadd.f32 %v9535, %v9703
  %9705 = vmatmul.bf16.gmra.mxu0 %v7558
  %v9706 = vpop.f32.mrf.mxu0
  %v9707 = vadd.f32 %v9538, %v9706
  %v9708 = vpop.f32.mrf.mxu0
  %v9709 = vadd.f32 %v9540, %v9708
  %9710 = vmatmul.bf16.gmra.mxu0 %v7559
  %v9711 = vpop.f32.mrf.mxu0
  %v9712 = vadd.f32 %v9543, %v9711
  %v9713 = vpop.f32.mrf.mxu0
  %v9714 = vadd.f32 %v9545, %v9713
  %9715 = vmatmul.bf16.gmra.mxu0 %v7560
  %v9716 = vpop.f32.mrf.mxu0
  %v9717 = vadd.f32 %v9548, %v9716
  %v9718 = vpop.f32.mrf.mxu0
  %v9719 = vadd.f32 %v9550, %v9718
  %9720 = vmatmul.bf16.gmra.mxu0 %v7561
  %v9721 = vpop.f32.mrf.mxu0
  %v9722 = vadd.f32 %v9553, %v9721
  %v9723 = vpop.f32.mrf.mxu0
  %v9724 = vadd.f32 %v9555, %v9723
  %9725 = vmatmul.bf16.gmra.mxu0 %v7562
  %v9726 = vpop.f32.mrf.mxu0
  %v9727 = vadd.f32 %v9558, %v9726
  %v9728 = vpop.f32.mrf.mxu0
  %v9729 = vadd.f32 %v9560, %v9728
  %9730 = vmatmul.bf16.gmra.mxu0 %v7563
  %v9731 = vpop.f32.mrf.mxu0
  %v9732 = vadd.f32 %v9563, %v9731
  %v9733 = vpop.f32.mrf.mxu0
  %v9734 = vadd.f32 %v9565, %v9733
  %9735 = vmatmul.bf16.gmra.mxu0 %v7564
  %v9736 = vpop.f32.mrf.mxu0
  %v9737 = vadd.f32 %v9568, %v9736
  %v9738 = vpop.f32.mrf.mxu0
  %v9739 = vadd.f32 %v9570, %v9738
  %9740 = vmatmul.bf16.gmra.mxu0 %v7565
  %v9741 = vpop.f32.mrf.mxu0
  %v9742 = vadd.f32 %v9573, %v9741
  %v9743 = vpop.f32.mrf.mxu0
  %v9744 = vadd.f32 %v9575, %v9743
  %9745 = vmatmul.bf16.gmra.mxu0 %v7566
  %v9746 = vpop.f32.mrf.mxu0
  %v9747 = vadd.f32 %v9578, %v9746
  %v9748 = vpop.f32.mrf.mxu0
  %v9749 = vadd.f32 %v9580, %v9748
  %9750 = vmatmul.bf16.gmra.mxu0 %v7567
  %v9751 = vpop.f32.mrf.mxu0
  %v9752 = vadd.f32 %v9583, %v9751
  %v9753 = vpop.f32.mrf.mxu0
  %v9754 = vadd.f32 %v9585, %v9753
  %9755 = vmatmul.bf16.gmra.mxu0 %v7568
  %v9756 = vpop.f32.mrf.mxu0
  %v9757 = vadd.f32 %v9588, %v9756
  %v9758 = vpop.f32.mrf.mxu0
  %v9759 = vadd.f32 %v9590, %v9758
  %9760 = vmatmul.bf16.gmra.mxu0 %v7569
  %v9761 = vpop.f32.mrf.mxu0
  %v9762 = vadd.f32 %v9593, %v9761
  %v9763 = vpop.f32.mrf.mxu0
  %v9764 = vadd.f32 %v9595, %v9763
  %9765 = vmatmul.bf16.gmra.mxu0 %v7570
  %v9766 = vpop.f32.mrf.mxu0
  %v9767 = vadd.f32 %v9598, %v9766
  %v9768 = vpop.f32.mrf.mxu0
  %v9769 = vadd.f32 %v9600, %v9768
  %9770 = vmatmul.bf16.gmra.mxu0 %v7571
  %v9771 = vpop.f32.mrf.mxu0
  %v9772 = vadd.f32 %v9603, %v9771
  %v9773 = vpop.f32.mrf.mxu0
  %v9774 = vadd.f32 %v9605, %v9773
  %9775 = vmatmul.bf16.gmra.mxu0 %v7572
  %v9776 = vpop.f32.mrf.mxu0
  %v9777 = vadd.f32 %v9608, %v9776
  %v9778 = vpop.f32.mrf.mxu0
  %v9779 = vadd.f32 %v9610, %v9778
  %9780 = vmatmul.bf16.gmra.mxu0 %v7573
  %v9781 = vpop.f32.mrf.mxu0
  %v9782 = vadd.f32 %v9613, %v9781
  %v9783 = vpop.f32.mrf.mxu0
  %v9784 = vadd.f32 %v9615, %v9783
  %9785 = vmatmul.bf16.gmra.mxu0 %v7574
  %v9786 = vpop.f32.mrf.mxu0
  %v9787 = vadd.f32 %v9618, %v9786
  %v9788 = vpop.f32.mrf.mxu0
  %v9789 = vadd.f32 %v9620, %v9788
  %9790 = vmatmul.bf16.gmra.mxu0 %v7575
  %v9791 = vpop.f32.mrf.mxu0
  %v9792 = vadd.f32 %v9623, %v9791
  %v9793 = vpop.f32.mrf.mxu0
  %v9794 = vadd.f32 %v9625, %v9793
  %9795 = vmatmul.bf16.gmra.mxu0 %v7576
  %v9796 = vpop.f32.mrf.mxu0
  %v9797 = vadd.f32 %v9628, %v9796
  %v9798 = vpop.f32.mrf.mxu0
  %v9799 = vadd.f32 %v9630, %v9798
  %9800 = vmatmul.bf16.gmra.mxu0 %v7577
  %v9801 = vpop.f32.mrf.mxu0
  %v9802 = vadd.f32 %v9633, %v9801
  %v9803 = vpop.f32.mrf.mxu0
  %v9804 = vadd.f32 %v9635, %v9803
  %9805 = vmatmul.bf16.gmra.mxu0 %v7578
  %v9806 = vpop.f32.mrf.mxu0
  %v9807 = vadd.f32 %v9638, %v9806
  %v9808 = vpop.f32.mrf.mxu0
  %v9809 = vadd.f32 %v9640, %v9808
  %9810 = vmatmul.bf16.gmra.mxu0 %v7579
  %v9811 = vpop.f32.mrf.mxu0
  %v9812 = vadd.f32 %v9643, %v9811
  %v9813 = vpop.f32.mrf.mxu0
  %v9814 = vadd.f32 %v9645, %v9813
  %9815 = vmatmul.bf16.gmra.mxu0 %v7580
  %v9816 = vpop.f32.mrf.mxu0
  %v9817 = vadd.f32 %v9648, %v9816
  %v9818 = vpop.f32.mrf.mxu0
  %v9819 = vadd.f32 %v9650, %v9818
  %9820 = vmatmul.bf16.gmra.mxu0 %v7581
  %v9821 = vpop.f32.mrf.mxu0
  %v9822 = vadd.f32 %v9653, %v9821
  %v9823 = vpop.f32.mrf.mxu0
  %v9824 = vadd.f32 %v9655, %v9823
  %9825 = vdwg.mxu0
  %9826 = vmatpush.bf16.msra.mxu0 %v9045
  %9827 = vmatpush.bf16.msra.mxu0 %v9044
  %9828 = vmatpush.bf16.msra.mxu0 %v9043
  %9829 = vmatpush.bf16.msra.mxu0 %v9042
  %9830 = vmatpush.bf16.msra.mxu0 %v9041
  %9831 = vmatpush.bf16.msra.mxu0 %v9040
  %9832 = vmatpush.bf16.msra.mxu0 %v9039
  %9833 = vmatpush.bf16.msra.mxu0 %v9038
  %9834 = vmatmul.bf16.gmra.mxu0 %v7742
  %v9835 = vpop.f32.mrf.mxu0
  %v9836 = vadd.f32 %v9667, %v9835
  %v9837 = vpop.f32.mrf.mxu0
  %v9838 = vadd.f32 %v9669, %v9837
  %9839 = vmatmul.bf16.gmra.mxu0 %v7743
  %v9840 = vpop.f32.mrf.mxu0
  %v9841 = vadd.f32 %v9672, %v9840
  %v9842 = vpop.f32.mrf.mxu0
  %v9843 = vadd.f32 %v9674, %v9842
  %9844 = vmatmul.bf16.gmra.mxu0 %v7744
  %v9845 = vpop.f32.mrf.mxu0
  %v9846 = vadd.f32 %v9677, %v9845
  %v9847 = vpop.f32.mrf.mxu0
  %v9848 = vadd.f32 %v9679, %v9847
  %9849 = vmatmul.bf16.gmra.mxu0 %v7745
  %v9850 = vpop.f32.mrf.mxu0
  %v9851 = vadd.f32 %v9682, %v9850
  %v9852 = vpop.f32.mrf.mxu0
  %v9853 = vadd.f32 %v9684, %v9852
  %9854 = vmatmul.bf16.gmra.mxu0 %v7746
  %v9855 = vpop.f32.mrf.mxu0
  %v9856 = vadd.f32 %v9687, %v9855
  %v9857 = vpop.f32.mrf.mxu0
  %v9858 = vadd.f32 %v9689, %v9857
  %9859 = vmatmul.bf16.gmra.mxu0 %v7747
  %v9860 = vpop.f32.mrf.mxu0
  %v9861 = vadd.f32 %v9692, %v9860
  %v9862 = vpop.f32.mrf.mxu0
  %v9863 = vadd.f32 %v9694, %v9862
  %9864 = vmatmul.bf16.gmra.mxu0 %v7748
  %v9865 = vpop.f32.mrf.mxu0
  %v9866 = vadd.f32 %v9697, %v9865
  %v9867 = vpop.f32.mrf.mxu0
  %v9868 = vadd.f32 %v9699, %v9867
  %9869 = vmatmul.bf16.gmra.mxu0 %v7749
  %v9870 = vpop.f32.mrf.mxu0
  %v9871 = vadd.f32 %v9702, %v9870
  %v9872 = vpop.f32.mrf.mxu0
  %v9873 = vadd.f32 %v9704, %v9872
  %9874 = vmatmul.bf16.gmra.mxu0 %v7750
  %v9875 = vpop.f32.mrf.mxu0
  %v9876 = vadd.f32 %v9707, %v9875
  %v9877 = vpop.f32.mrf.mxu0
  %v9878 = vadd.f32 %v9709, %v9877
  %9879 = vmatmul.bf16.gmra.mxu0 %v7751
  %v9880 = vpop.f32.mrf.mxu0
  %v9881 = vadd.f32 %v9712, %v9880
  %v9882 = vpop.f32.mrf.mxu0
  %v9883 = vadd.f32 %v9714, %v9882
  %9884 = vmatmul.bf16.gmra.mxu0 %v7752
  %v9885 = vpop.f32.mrf.mxu0
  %v9886 = vadd.f32 %v9717, %v9885
  %v9887 = vpop.f32.mrf.mxu0
  %v9888 = vadd.f32 %v9719, %v9887
  %9889 = vmatmul.bf16.gmra.mxu0 %v7753
  %v9890 = vpop.f32.mrf.mxu0
  %v9891 = vadd.f32 %v9722, %v9890
  %v9892 = vpop.f32.mrf.mxu0
  %v9893 = vadd.f32 %v9724, %v9892
  %9894 = vmatmul.bf16.gmra.mxu0 %v7754
  %v9895 = vpop.f32.mrf.mxu0
  %v9896 = vadd.f32 %v9727, %v9895
  %v9897 = vpop.f32.mrf.mxu0
  %v9898 = vadd.f32 %v9729, %v9897
  %9899 = vmatmul.bf16.gmra.mxu0 %v7755
  %v9900 = vpop.f32.mrf.mxu0
  %v9901 = vadd.f32 %v9732, %v9900
  %v9902 = vpop.f32.mrf.mxu0
  %v9903 = vadd.f32 %v9734, %v9902
  %9904 = vmatmul.bf16.gmra.mxu0 %v7756
  %v9905 = vpop.f32.mrf.mxu0
  %v9906 = vadd.f32 %v9737, %v9905
  %v9907 = vpop.f32.mrf.mxu0
  %v9908 = vadd.f32 %v9739, %v9907
  %9909 = vmatmul.bf16.gmra.mxu0 %v7757
  %v9910 = vpop.f32.mrf.mxu0
  %v9911 = vadd.f32 %v9742, %v9910
  %v9912 = vpop.f32.mrf.mxu0
  %v9913 = vadd.f32 %v9744, %v9912
  %9914 = vmatmul.bf16.gmra.mxu0 %v7758
  %v9915 = vpop.f32.mrf.mxu0
  %v9916 = vadd.f32 %v9747, %v9915
  %v9917 = vpop.f32.mrf.mxu0
  %v9918 = vadd.f32 %v9749, %v9917
  %9919 = vmatmul.bf16.gmra.mxu0 %v7759
  %v9920 = vpop.f32.mrf.mxu0
  %v9921 = vadd.f32 %v9752, %v9920
  %v9922 = vpop.f32.mrf.mxu0
  %v9923 = vadd.f32 %v9754, %v9922
  %9924 = vmatmul.bf16.gmra.mxu0 %v7760
  %v9925 = vpop.f32.mrf.mxu0
  %v9926 = vadd.f32 %v9757, %v9925
  %v9927 = vpop.f32.mrf.mxu0
  %v9928 = vadd.f32 %v9759, %v9927
  %9929 = vmatmul.bf16.gmra.mxu0 %v7761
  %v9930 = vpop.f32.mrf.mxu0
  %v9931 = vadd.f32 %v9762, %v9930
  %v9932 = vpop.f32.mrf.mxu0
  %v9933 = vadd.f32 %v9764, %v9932
  %9934 = vmatmul.bf16.gmra.mxu0 %v7762
  %v9935 = vpop.f32.mrf.mxu0
  %v9936 = vadd.f32 %v9767, %v9935
  %v9937 = vpop.f32.mrf.mxu0
  %v9938 = vadd.f32 %v9769, %v9937
  %9939 = vmatmul.bf16.gmra.mxu0 %v7763
  %v9940 = vpop.f32.mrf.mxu0
  %v9941 = vadd.f32 %v9772, %v9940
  %v9942 = vpop.f32.mrf.mxu0
  %v9943 = vadd.f32 %v9774, %v9942
  %9944 = vmatmul.bf16.gmra.mxu0 %v7764
  %v9945 = vpop.f32.mrf.mxu0
  %v9946 = vadd.f32 %v9777, %v9945
  %v9947 = vpop.f32.mrf.mxu0
  %v9948 = vadd.f32 %v9779, %v9947
  %9949 = vmatmul.bf16.gmra.mxu0 %v7765
  %v9950 = vpop.f32.mrf.mxu0
  %v9951 = vadd.f32 %v9782, %v9950
  %v9952 = vpop.f32.mrf.mxu0
  %v9953 = vadd.f32 %v9784, %v9952
  %9954 = vmatmul.bf16.gmra.mxu0 %v7766
  %v9955 = vpop.f32.mrf.mxu0
  %v9956 = vadd.f32 %v9787, %v9955
  %v9957 = vpop.f32.mrf.mxu0
  %v9958 = vadd.f32 %v9789, %v9957
  %9959 = vmatmul.bf16.gmra.mxu0 %v7767
  %v9960 = vpop.f32.mrf.mxu0
  %v9961 = vadd.f32 %v9792, %v9960
  %v9962 = vpop.f32.mrf.mxu0
  %v9963 = vadd.f32 %v9794, %v9962
  %9964 = vmatmul.bf16.gmra.mxu0 %v7768
  %v9965 = vpop.f32.mrf.mxu0
  %v9966 = vadd.f32 %v9797, %v9965
  %v9967 = vpop.f32.mrf.mxu0
  %v9968 = vadd.f32 %v9799, %v9967
  %9969 = vmatmul.bf16.gmra.mxu0 %v7769
  %v9970 = vpop.f32.mrf.mxu0
  %v9971 = vadd.f32 %v9802, %v9970
  %v9972 = vpop.f32.mrf.mxu0
  %v9973 = vadd.f32 %v9804, %v9972
  %9974 = vmatmul.bf16.gmra.mxu0 %v7770
  %v9975 = vpop.f32.mrf.mxu0
  %v9976 = vadd.f32 %v9807, %v9975
  %v9977 = vpop.f32.mrf.mxu0
  %v9978 = vadd.f32 %v9809, %v9977
  %9979 = vmatmul.bf16.gmra.mxu0 %v7771
  %v9980 = vpop.f32.mrf.mxu0
  %v9981 = vadd.f32 %v9812, %v9980
  %v9982 = vpop.f32.mrf.mxu0
  %v9983 = vadd.f32 %v9814, %v9982
  %9984 = vmatmul.bf16.gmra.mxu0 %v7772
  %v9985 = vpop.f32.mrf.mxu0
  %v9986 = vadd.f32 %v9817, %v9985
  %v9987 = vpop.f32.mrf.mxu0
  %v9988 = vadd.f32 %v9819, %v9987
  %9989 = vmatmul.bf16.gmra.mxu0 %v7773
  %v9990 = vpop.f32.mrf.mxu0
  %v9991 = vadd.f32 %v9822, %v9990
  %v9992 = vpop.f32.mrf.mxu0
  %v9993 = vadd.f32 %v9824, %v9992
  %9994 = vdwg.mxu0
  %9995 = vmatpush.bf16.msra.mxu0 %v9053
  %9996 = vmatpush.bf16.msra.mxu0 %v9052
  %9997 = vmatpush.bf16.msra.mxu0 %v9051
  %9998 = vmatpush.bf16.msra.mxu0 %v9050
  %9999 = vmatpush.bf16.msra.mxu0 %v9049
  %10000 = vmatpush.bf16.msra.mxu0 %v9048
  %10001 = vmatpush.bf16.msra.mxu0 %v9047
  %10002 = vmatpush.bf16.msra.mxu0 %v9046
  %10003 = vmatmul.bf16.gmra.mxu0 %v7934
  %v10004 = vpop.f32.mrf.mxu0
  %v10005 = vadd.f32 %v9836, %v10004
  %v10006 = vpop.f32.mrf.mxu0
  %v10007 = vadd.f32 %v9838, %v10006
  %10008 = vmatmul.bf16.gmra.mxu0 %v7935
  %v10009 = vpop.f32.mrf.mxu0
  %v10010 = vadd.f32 %v9841, %v10009
  %v10011 = vpop.f32.mrf.mxu0
  %v10012 = vadd.f32 %v9843, %v10011
  %10013 = vmatmul.bf16.gmra.mxu0 %v7936
  %v10014 = vpop.f32.mrf.mxu0
  %v10015 = vadd.f32 %v9846, %v10014
  %v10016 = vpop.f32.mrf.mxu0
  %v10017 = vadd.f32 %v9848, %v10016
  %10018 = vmatmul.bf16.gmra.mxu0 %v7937
  %v10019 = vpop.f32.mrf.mxu0
  %v10020 = vadd.f32 %v9851, %v10019
  %v10021 = vpop.f32.mrf.mxu0
  %v10022 = vadd.f32 %v9853, %v10021
  %10023 = vmatmul.bf16.gmra.mxu0 %v7938
  %v10024 = vpop.f32.mrf.mxu0
  %v10025 = vadd.f32 %v9856, %v10024
  %v10026 = vpop.f32.mrf.mxu0
  %v10027 = vadd.f32 %v9858, %v10026
  %10028 = vmatmul.bf16.gmra.mxu0 %v7939
  %v10029 = vpop.f32.mrf.mxu0
  %v10030 = vadd.f32 %v9861, %v10029
  %v10031 = vpop.f32.mrf.mxu0
  %v10032 = vadd.f32 %v9863, %v10031
  %10033 = vmatmul.bf16.gmra.mxu0 %v7940
  %v10034 = vpop.f32.mrf.mxu0
  %v10035 = vadd.f32 %v9866, %v10034
  %v10036 = vpop.f32.mrf.mxu0
  %v10037 = vadd.f32 %v9868, %v10036
  %10038 = vmatmul.bf16.gmra.mxu0 %v7941
  %v10039 = vpop.f32.mrf.mxu0
  %v10040 = vadd.f32 %v9871, %v10039
  %v10041 = vpop.f32.mrf.mxu0
  %v10042 = vadd.f32 %v9873, %v10041
  %10043 = vmatmul.bf16.gmra.mxu0 %v7942
  %v10044 = vpop.f32.mrf.mxu0
  %v10045 = vadd.f32 %v9876, %v10044
  %v10046 = vpop.f32.mrf.mxu0
  %v10047 = vadd.f32 %v9878, %v10046
  %10048 = vmatmul.bf16.gmra.mxu0 %v7943
  %v10049 = vpop.f32.mrf.mxu0
  %v10050 = vadd.f32 %v9881, %v10049
  %v10051 = vpop.f32.mrf.mxu0
  %v10052 = vadd.f32 %v9883, %v10051
  %10053 = vmatmul.bf16.gmra.mxu0 %v7944
  %v10054 = vpop.f32.mrf.mxu0
  %v10055 = vadd.f32 %v9886, %v10054
  %v10056 = vpop.f32.mrf.mxu0
  %v10057 = vadd.f32 %v9888, %v10056
  %10058 = vmatmul.bf16.gmra.mxu0 %v7945
  %v10059 = vpop.f32.mrf.mxu0
  %v10060 = vadd.f32 %v9891, %v10059
  %v10061 = vpop.f32.mrf.mxu0
  %v10062 = vadd.f32 %v9893, %v10061
  %10063 = vmatmul.bf16.gmra.mxu0 %v7946
  %v10064 = vpop.f32.mrf.mxu0
  %v10065 = vadd.f32 %v9896, %v10064
  %v10066 = vpop.f32.mrf.mxu0
  %v10067 = vadd.f32 %v9898, %v10066
  %10068 = vmatmul.bf16.gmra.mxu0 %v7947
  %v10069 = vpop.f32.mrf.mxu0
  %v10070 = vadd.f32 %v9901, %v10069
  %v10071 = vpop.f32.mrf.mxu0
  %v10072 = vadd.f32 %v9903, %v10071
  %10073 = vmatmul.bf16.gmra.mxu0 %v7948
  %v10074 = vpop.f32.mrf.mxu0
  %v10075 = vadd.f32 %v9906, %v10074
  %v10076 = vpop.f32.mrf.mxu0
  %v10077 = vadd.f32 %v9908, %v10076
  %10078 = vmatmul.bf16.gmra.mxu0 %v7949
  %v10079 = vpop.f32.mrf.mxu0
  %v10080 = vadd.f32 %v9911, %v10079
  %v10081 = vpop.f32.mrf.mxu0
  %v10082 = vadd.f32 %v9913, %v10081
  %10083 = vmatmul.bf16.gmra.mxu0 %v7950
  %v10084 = vpop.f32.mrf.mxu0
  %v10085 = vadd.f32 %v9916, %v10084
  %v10086 = vpop.f32.mrf.mxu0
  %v10087 = vadd.f32 %v9918, %v10086
  %10088 = vmatmul.bf16.gmra.mxu0 %v7951
  %v10089 = vpop.f32.mrf.mxu0
  %v10090 = vadd.f32 %v9921, %v10089
  %v10091 = vpop.f32.mrf.mxu0
  %v10092 = vadd.f32 %v9923, %v10091
  %10093 = vmatmul.bf16.gmra.mxu0 %v7952
  %v10094 = vpop.f32.mrf.mxu0
  %v10095 = vadd.f32 %v9926, %v10094
  %v10096 = vpop.f32.mrf.mxu0
  %v10097 = vadd.f32 %v9928, %v10096
  %10098 = vmatmul.bf16.gmra.mxu0 %v7953
  %v10099 = vpop.f32.mrf.mxu0
  %v10100 = vadd.f32 %v9931, %v10099
  %v10101 = vpop.f32.mrf.mxu0
  %v10102 = vadd.f32 %v9933, %v10101
  %10103 = vmatmul.bf16.gmra.mxu0 %v7954
  %v10104 = vpop.f32.mrf.mxu0
  %v10105 = vadd.f32 %v9936, %v10104
  %v10106 = vpop.f32.mrf.mxu0
  %v10107 = vadd.f32 %v9938, %v10106
  %10108 = vmatmul.bf16.gmra.mxu0 %v7955
  %v10109 = vpop.f32.mrf.mxu0
  %v10110 = vadd.f32 %v9941, %v10109
  %v10111 = vpop.f32.mrf.mxu0
  %v10112 = vadd.f32 %v9943, %v10111
  %10113 = vmatmul.bf16.gmra.mxu0 %v7956
  %v10114 = vpop.f32.mrf.mxu0
  %v10115 = vadd.f32 %v9946, %v10114
  %v10116 = vpop.f32.mrf.mxu0
  %v10117 = vadd.f32 %v9948, %v10116
  %10118 = vmatmul.bf16.gmra.mxu0 %v7957
  %v10119 = vpop.f32.mrf.mxu0
  %v10120 = vadd.f32 %v9951, %v10119
  %v10121 = vpop.f32.mrf.mxu0
  %v10122 = vadd.f32 %v9953, %v10121
  %10123 = vmatmul.bf16.gmra.mxu0 %v7958
  %v10124 = vpop.f32.mrf.mxu0
  %v10125 = vadd.f32 %v9956, %v10124
  %v10126 = vpop.f32.mrf.mxu0
  %v10127 = vadd.f32 %v9958, %v10126
  %10128 = vmatmul.bf16.gmra.mxu0 %v7959
  %v10129 = vpop.f32.mrf.mxu0
  %v10130 = vadd.f32 %v9961, %v10129
  %v10131 = vpop.f32.mrf.mxu0
  %v10132 = vadd.f32 %v9963, %v10131
  %10133 = vmatmul.bf16.gmra.mxu0 %v7960
  %v10134 = vpop.f32.mrf.mxu0
  %v10135 = vadd.f32 %v9966, %v10134
  %v10136 = vpop.f32.mrf.mxu0
  %v10137 = vadd.f32 %v9968, %v10136
  %10138 = vmatmul.bf16.gmra.mxu0 %v7961
  %v10139 = vpop.f32.mrf.mxu0
  %v10140 = vadd.f32 %v9971, %v10139
  %v10141 = vpop.f32.mrf.mxu0
  %v10142 = vadd.f32 %v9973, %v10141
  %10143 = vmatmul.bf16.gmra.mxu0 %v7962
  %v10144 = vpop.f32.mrf.mxu0
  %v10145 = vadd.f32 %v9976, %v10144
  %v10146 = vpop.f32.mrf.mxu0
  %v10147 = vadd.f32 %v9978, %v10146
  %10148 = vmatmul.bf16.gmra.mxu0 %v7963
  %v10149 = vpop.f32.mrf.mxu0
  %v10150 = vadd.f32 %v9981, %v10149
  %v10151 = vpop.f32.mrf.mxu0
  %v10152 = vadd.f32 %v9983, %v10151
  %10153 = vmatmul.bf16.gmra.mxu0 %v7964
  %v10154 = vpop.f32.mrf.mxu0
  %v10155 = vadd.f32 %v9986, %v10154
  %v10156 = vpop.f32.mrf.mxu0
  %v10157 = vadd.f32 %v9988, %v10156
  %10158 = vmatmul.bf16.gmra.mxu0 %v7965
  %v10159 = vpop.f32.mrf.mxu0
  %v10160 = vadd.f32 %v9991, %v10159
  %v10161 = vpop.f32.mrf.mxu0
  %v10162 = vadd.f32 %v9993, %v10161
  %10163 = vdwg.mxu0
  %10164 = vmatpush.bf16.msra.mxu0 %v9061
  %10165 = vmatpush.bf16.msra.mxu0 %v9060
  %10166 = vmatpush.bf16.msra.mxu0 %v9059
  %10167 = vmatpush.bf16.msra.mxu0 %v9058
  %10168 = vmatpush.bf16.msra.mxu0 %v9057
  %10169 = vmatpush.bf16.msra.mxu0 %v9056
  %10170 = vmatpush.bf16.msra.mxu0 %v9055
  %10171 = vmatpush.bf16.msra.mxu0 %v9054
  %10172 = vmatmul.bf16.gmra.mxu0 %v8126
  %v10173 = vpop.f32.mrf.mxu0
  %v10174 = vadd.f32 %v10005, %v10173
  %v10175 = vpop.f32.mrf.mxu0
  %v10176 = vadd.f32 %v10007, %v10175
  %10177 = vmatmul.bf16.gmra.mxu0 %v8127
  %v10178 = vpop.f32.mrf.mxu0
  %v10179 = vadd.f32 %v10010, %v10178
  %v10180 = vpop.f32.mrf.mxu0
  %v10181 = vadd.f32 %v10012, %v10180
  %10182 = vmatmul.bf16.gmra.mxu0 %v8128
  %v10183 = vpop.f32.mrf.mxu0
  %v10184 = vadd.f32 %v10015, %v10183
  %v10185 = vpop.f32.mrf.mxu0
  %v10186 = vadd.f32 %v10017, %v10185
  %10187 = vmatmul.bf16.gmra.mxu0 %v8129
  %v10188 = vpop.f32.mrf.mxu0
  %v10189 = vadd.f32 %v10020, %v10188
  %v10190 = vpop.f32.mrf.mxu0
  %v10191 = vadd.f32 %v10022, %v10190
  %10192 = vmatmul.bf16.gmra.mxu0 %v8130
  %v10193 = vpop.f32.mrf.mxu0
  %v10194 = vadd.f32 %v10025, %v10193
  %v10195 = vpop.f32.mrf.mxu0
  %v10196 = vadd.f32 %v10027, %v10195
  %10197 = vmatmul.bf16.gmra.mxu0 %v8131
  %v10198 = vpop.f32.mrf.mxu0
  %v10199 = vadd.f32 %v10030, %v10198
  %v10200 = vpop.f32.mrf.mxu0
  %v10201 = vadd.f32 %v10032, %v10200
  %10202 = vmatmul.bf16.gmra.mxu0 %v8132
  %v10203 = vpop.f32.mrf.mxu0
  %v10204 = vadd.f32 %v10035, %v10203
  %v10205 = vpop.f32.mrf.mxu0
  %v10206 = vadd.f32 %v10037, %v10205
  %10207 = vmatmul.bf16.gmra.mxu0 %v8133
  %v10208 = vpop.f32.mrf.mxu0
  %v10209 = vadd.f32 %v10040, %v10208
  %v10210 = vpop.f32.mrf.mxu0
  %v10211 = vadd.f32 %v10042, %v10210
  %10212 = vmatmul.bf16.gmra.mxu0 %v8134
  %v10213 = vpop.f32.mrf.mxu0
  %v10214 = vadd.f32 %v10045, %v10213
  %v10215 = vpop.f32.mrf.mxu0
  %v10216 = vadd.f32 %v10047, %v10215
  %10217 = vmatmul.bf16.gmra.mxu0 %v8135
  %v10218 = vpop.f32.mrf.mxu0
  %v10219 = vadd.f32 %v10050, %v10218
  %v10220 = vpop.f32.mrf.mxu0
  %v10221 = vadd.f32 %v10052, %v10220
  %10222 = vmatmul.bf16.gmra.mxu0 %v8136
  %v10223 = vpop.f32.mrf.mxu0
  %v10224 = vadd.f32 %v10055, %v10223
  %v10225 = vpop.f32.mrf.mxu0
  %v10226 = vadd.f32 %v10057, %v10225
  %10227 = vmatmul.bf16.gmra.mxu0 %v8137
  %v10228 = vpop.f32.mrf.mxu0
  %v10229 = vadd.f32 %v10060, %v10228
  %v10230 = vpop.f32.mrf.mxu0
  %v10231 = vadd.f32 %v10062, %v10230
  %10232 = vmatmul.bf16.gmra.mxu0 %v8138
  %v10233 = vpop.f32.mrf.mxu0
  %v10234 = vadd.f32 %v10065, %v10233
  %v10235 = vpop.f32.mrf.mxu0
  %v10236 = vadd.f32 %v10067, %v10235
  %10237 = vmatmul.bf16.gmra.mxu0 %v8139
  %v10238 = vpop.f32.mrf.mxu0
  %v10239 = vadd.f32 %v10070, %v10238
  %v10240 = vpop.f32.mrf.mxu0
  %v10241 = vadd.f32 %v10072, %v10240
  %10242 = vmatmul.bf16.gmra.mxu0 %v8140
  %v10243 = vpop.f32.mrf.mxu0
  %v10244 = vadd.f32 %v10075, %v10243
  %v10245 = vpop.f32.mrf.mxu0
  %v10246 = vadd.f32 %v10077, %v10245
  %10247 = vmatmul.bf16.gmra.mxu0 %v8141
  %v10248 = vpop.f32.mrf.mxu0
  %v10249 = vadd.f32 %v10080, %v10248
  %v10250 = vpop.f32.mrf.mxu0
  %v10251 = vadd.f32 %v10082, %v10250
  %10252 = vmatmul.bf16.gmra.mxu0 %v8142
  %v10253 = vpop.f32.mrf.mxu0
  %v10254 = vadd.f32 %v10085, %v10253
  %v10255 = vpop.f32.mrf.mxu0
  %v10256 = vadd.f32 %v10087, %v10255
  %10257 = vmatmul.bf16.gmra.mxu0 %v8143
  %v10258 = vpop.f32.mrf.mxu0
  %v10259 = vadd.f32 %v10090, %v10258
  %v10260 = vpop.f32.mrf.mxu0
  %v10261 = vadd.f32 %v10092, %v10260
  %10262 = vmatmul.bf16.gmra.mxu0 %v8144
  %v10263 = vpop.f32.mrf.mxu0
  %v10264 = vadd.f32 %v10095, %v10263
  %v10265 = vpop.f32.mrf.mxu0
  %v10266 = vadd.f32 %v10097, %v10265
  %10267 = vmatmul.bf16.gmra.mxu0 %v8145
  %v10268 = vpop.f32.mrf.mxu0
  %v10269 = vadd.f32 %v10100, %v10268
  %v10270 = vpop.f32.mrf.mxu0
  %v10271 = vadd.f32 %v10102, %v10270
  %10272 = vmatmul.bf16.gmra.mxu0 %v8146
  %v10273 = vpop.f32.mrf.mxu0
  %v10274 = vadd.f32 %v10105, %v10273
  %v10275 = vpop.f32.mrf.mxu0
  %v10276 = vadd.f32 %v10107, %v10275
  %10277 = vmatmul.bf16.gmra.mxu0 %v8147
  %v10278 = vpop.f32.mrf.mxu0
  %v10279 = vadd.f32 %v10110, %v10278
  %v10280 = vpop.f32.mrf.mxu0
  %v10281 = vadd.f32 %v10112, %v10280
  %10282 = vmatmul.bf16.gmra.mxu0 %v8148
  %v10283 = vpop.f32.mrf.mxu0
  %v10284 = vadd.f32 %v10115, %v10283
  %v10285 = vpop.f32.mrf.mxu0
  %v10286 = vadd.f32 %v10117, %v10285
  %10287 = vmatmul.bf16.gmra.mxu0 %v8149
  %v10288 = vpop.f32.mrf.mxu0
  %v10289 = vadd.f32 %v10120, %v10288
  %v10290 = vpop.f32.mrf.mxu0
  %v10291 = vadd.f32 %v10122, %v10290
  %10292 = vmatmul.bf16.gmra.mxu0 %v8150
  %v10293 = vpop.f32.mrf.mxu0
  %v10294 = vadd.f32 %v10125, %v10293
  %v10295 = vpop.f32.mrf.mxu0
  %v10296 = vadd.f32 %v10127, %v10295
  %10297 = vmatmul.bf16.gmra.mxu0 %v8151
  %v10298 = vpop.f32.mrf.mxu0
  %v10299 = vadd.f32 %v10130, %v10298
  %v10300 = vpop.f32.mrf.mxu0
  %v10301 = vadd.f32 %v10132, %v10300
  %10302 = vmatmul.bf16.gmra.mxu0 %v8152
  %v10303 = vpop.f32.mrf.mxu0
  %v10304 = vadd.f32 %v10135, %v10303
  %v10305 = vpop.f32.mrf.mxu0
  %v10306 = vadd.f32 %v10137, %v10305
  %10307 = vmatmul.bf16.gmra.mxu0 %v8153
  %v10308 = vpop.f32.mrf.mxu0
  %v10309 = vadd.f32 %v10140, %v10308
  %v10310 = vpop.f32.mrf.mxu0
  %v10311 = vadd.f32 %v10142, %v10310
  %10312 = vmatmul.bf16.gmra.mxu0 %v8154
  %v10313 = vpop.f32.mrf.mxu0
  %v10314 = vadd.f32 %v10145, %v10313
  %v10315 = vpop.f32.mrf.mxu0
  %v10316 = vadd.f32 %v10147, %v10315
  %10317 = vmatmul.bf16.gmra.mxu0 %v8155
  %v10318 = vpop.f32.mrf.mxu0
  %v10319 = vadd.f32 %v10150, %v10318
  %v10320 = vpop.f32.mrf.mxu0
  %v10321 = vadd.f32 %v10152, %v10320
  %10322 = vmatmul.bf16.gmra.mxu0 %v8156
  %v10323 = vpop.f32.mrf.mxu0
  %v10324 = vadd.f32 %v10155, %v10323
  %v10325 = vpop.f32.mrf.mxu0
  %v10326 = vadd.f32 %v10157, %v10325
  %10327 = vmatmul.bf16.gmra.mxu0 %v8157
  %v10328 = vpop.f32.mrf.mxu0
  %v10329 = vadd.f32 %v10160, %v10328
  %v10330 = vpop.f32.mrf.mxu0
  %v10331 = vadd.f32 %v10162, %v10330
  %10332 = vdwg.mxu0
  %10333 = vmatpush.bf16.msra.mxu0 %v9069
  %10334 = vmatpush.bf16.msra.mxu0 %v9068
  %10335 = vmatpush.bf16.msra.mxu0 %v9067
  %10336 = vmatpush.bf16.msra.mxu0 %v9066
  %10337 = vmatpush.bf16.msra.mxu0 %v9065
  %10338 = vmatpush.bf16.msra.mxu0 %v9064
  %10339 = vmatpush.bf16.msra.mxu0 %v9063
  %10340 = vmatpush.bf16.msra.mxu0 %v9062
  %10341 = vmatmul.bf16.gmra.mxu0 %v8318
  %v10342 = vpop.f32.mrf.mxu0
  %v10343 = vadd.f32 %v10174, %v10342
  %v10344 = vpop.f32.mrf.mxu0
  %v10345 = vadd.f32 %v10176, %v10344
  %10346 = vmatmul.bf16.gmra.mxu0 %v8319
  %v10347 = vpop.f32.mrf.mxu0
  %v10348 = vadd.f32 %v10179, %v10347
  %v10349 = vpop.f32.mrf.mxu0
  %v10350 = vadd.f32 %v10181, %v10349
  %10351 = vmatmul.bf16.gmra.mxu0 %v8320
  %v10352 = vpop.f32.mrf.mxu0
  %v10353 = vadd.f32 %v10184, %v10352
  %v10354 = vpop.f32.mrf.mxu0
  %v10355 = vadd.f32 %v10186, %v10354
  %10356 = vmatmul.bf16.gmra.mxu0 %v8321
  %v10357 = vpop.f32.mrf.mxu0
  %v10358 = vadd.f32 %v10189, %v10357
  %v10359 = vpop.f32.mrf.mxu0
  %v10360 = vadd.f32 %v10191, %v10359
  %10361 = vmatmul.bf16.gmra.mxu0 %v8322
  %v10362 = vpop.f32.mrf.mxu0
  %v10363 = vadd.f32 %v10194, %v10362
  %v10364 = vpop.f32.mrf.mxu0
  %v10365 = vadd.f32 %v10196, %v10364
  %10366 = vmatmul.bf16.gmra.mxu0 %v8323
  %v10367 = vpop.f32.mrf.mxu0
  %v10368 = vadd.f32 %v10199, %v10367
  %v10369 = vpop.f32.mrf.mxu0
  %v10370 = vadd.f32 %v10201, %v10369
  %10371 = vmatmul.bf16.gmra.mxu0 %v8324
  %v10372 = vpop.f32.mrf.mxu0
  %v10373 = vadd.f32 %v10204, %v10372
  %v10374 = vpop.f32.mrf.mxu0
  %v10375 = vadd.f32 %v10206, %v10374
  %10376 = vmatmul.bf16.gmra.mxu0 %v8325
  %v10377 = vpop.f32.mrf.mxu0
  %v10378 = vadd.f32 %v10209, %v10377
  %v10379 = vpop.f32.mrf.mxu0
  %v10380 = vadd.f32 %v10211, %v10379
  %10381 = vmatmul.bf16.gmra.mxu0 %v8326
  %v10382 = vpop.f32.mrf.mxu0
  %v10383 = vadd.f32 %v10214, %v10382
  %v10384 = vpop.f32.mrf.mxu0
  %v10385 = vadd.f32 %v10216, %v10384
  %10386 = vmatmul.bf16.gmra.mxu0 %v8327
  %v10387 = vpop.f32.mrf.mxu0
  %v10388 = vadd.f32 %v10219, %v10387
  %v10389 = vpop.f32.mrf.mxu0
  %v10390 = vadd.f32 %v10221, %v10389
  %10391 = vmatmul.bf16.gmra.mxu0 %v8328
  %v10392 = vpop.f32.mrf.mxu0
  %v10393 = vadd.f32 %v10224, %v10392
  %v10394 = vpop.f32.mrf.mxu0
  %v10395 = vadd.f32 %v10226, %v10394
  %10396 = vmatmul.bf16.gmra.mxu0 %v8329
  %v10397 = vpop.f32.mrf.mxu0
  %v10398 = vadd.f32 %v10229, %v10397
  %v10399 = vpop.f32.mrf.mxu0
  %v10400 = vadd.f32 %v10231, %v10399
  %10401 = vmatmul.bf16.gmra.mxu0 %v8330
  %v10402 = vpop.f32.mrf.mxu0
  %v10403 = vadd.f32 %v10234, %v10402
  %v10404 = vpop.f32.mrf.mxu0
  %v10405 = vadd.f32 %v10236, %v10404
  %10406 = vmatmul.bf16.gmra.mxu0 %v8331
  %v10407 = vpop.f32.mrf.mxu0
  %v10408 = vadd.f32 %v10239, %v10407
  %v10409 = vpop.f32.mrf.mxu0
  %v10410 = vadd.f32 %v10241, %v10409
  %10411 = vmatmul.bf16.gmra.mxu0 %v8332
  %v10412 = vpop.f32.mrf.mxu0
  %v10413 = vadd.f32 %v10244, %v10412
  %v10414 = vpop.f32.mrf.mxu0
  %v10415 = vadd.f32 %v10246, %v10414
  %10416 = vmatmul.bf16.gmra.mxu0 %v8333
  %v10417 = vpop.f32.mrf.mxu0
  %v10418 = vadd.f32 %v10249, %v10417
  %v10419 = vpop.f32.mrf.mxu0
  %v10420 = vadd.f32 %v10251, %v10419
  %10421 = vmatmul.bf16.gmra.mxu0 %v8334
  %v10422 = vpop.f32.mrf.mxu0
  %v10423 = vadd.f32 %v10254, %v10422
  %v10424 = vpop.f32.mrf.mxu0
  %v10425 = vadd.f32 %v10256, %v10424
  %10426 = vmatmul.bf16.gmra.mxu0 %v8335
  %v10427 = vpop.f32.mrf.mxu0
  %v10428 = vadd.f32 %v10259, %v10427
  %v10429 = vpop.f32.mrf.mxu0
  %v10430 = vadd.f32 %v10261, %v10429
  %10431 = vmatmul.bf16.gmra.mxu0 %v8336
  %v10432 = vpop.f32.mrf.mxu0
  %v10433 = vadd.f32 %v10264, %v10432
  %v10434 = vpop.f32.mrf.mxu0
  %v10435 = vadd.f32 %v10266, %v10434
  %10436 = vmatmul.bf16.gmra.mxu0 %v8337
  %v10437 = vpop.f32.mrf.mxu0
  %v10438 = vadd.f32 %v10269, %v10437
  %v10439 = vpop.f32.mrf.mxu0
  %v10440 = vadd.f32 %v10271, %v10439
  %10441 = vmatmul.bf16.gmra.mxu0 %v8338
  %v10442 = vpop.f32.mrf.mxu0
  %v10443 = vadd.f32 %v10274, %v10442
  %v10444 = vpop.f32.mrf.mxu0
  %v10445 = vadd.f32 %v10276, %v10444
  %10446 = vmatmul.bf16.gmra.mxu0 %v8339
  %v10447 = vpop.f32.mrf.mxu0
  %v10448 = vadd.f32 %v10279, %v10447
  %v10449 = vpop.f32.mrf.mxu0
  %v10450 = vadd.f32 %v10281, %v10449
  %10451 = vmatmul.bf16.gmra.mxu0 %v8340
  %v10452 = vpop.f32.mrf.mxu0
  %v10453 = vadd.f32 %v10284, %v10452
  %v10454 = vpop.f32.mrf.mxu0
  %v10455 = vadd.f32 %v10286, %v10454
  %10456 = vmatmul.bf16.gmra.mxu0 %v8341
  %v10457 = vpop.f32.mrf.mxu0
  %v10458 = vadd.f32 %v10289, %v10457
  %v10459 = vpop.f32.mrf.mxu0
  %v10460 = vadd.f32 %v10291, %v10459
  %10461 = vmatmul.bf16.gmra.mxu0 %v8342
  %v10462 = vpop.f32.mrf.mxu0
  %v10463 = vadd.f32 %v10294, %v10462
  %v10464 = vpop.f32.mrf.mxu0
  %v10465 = vadd.f32 %v10296, %v10464
  %10466 = vmatmul.bf16.gmra.mxu0 %v8343
  %v10467 = vpop.f32.mrf.mxu0
  %v10468 = vadd.f32 %v10299, %v10467
  %v10469 = vpop.f32.mrf.mxu0
  %v10470 = vadd.f32 %v10301, %v10469
  %10471 = vmatmul.bf16.gmra.mxu0 %v8344
  %v10472 = vpop.f32.mrf.mxu0
  %v10473 = vadd.f32 %v10304, %v10472
  %v10474 = vpop.f32.mrf.mxu0
  %v10475 = vadd.f32 %v10306, %v10474
  %10476 = vmatmul.bf16.gmra.mxu0 %v8345
  %v10477 = vpop.f32.mrf.mxu0
  %v10478 = vadd.f32 %v10309, %v10477
  %v10479 = vpop.f32.mrf.mxu0
  %v10480 = vadd.f32 %v10311, %v10479
  %10481 = vmatmul.bf16.gmra.mxu0 %v8346
  %v10482 = vpop.f32.mrf.mxu0
  %v10483 = vadd.f32 %v10314, %v10482
  %v10484 = vpop.f32.mrf.mxu0
  %v10485 = vadd.f32 %v10316, %v10484
  %10486 = vmatmul.bf16.gmra.mxu0 %v8347
  %v10487 = vpop.f32.mrf.mxu0
  %v10488 = vadd.f32 %v10319, %v10487
  %v10489 = vpop.f32.mrf.mxu0
  %v10490 = vadd.f32 %v10321, %v10489
  %10491 = vmatmul.bf16.gmra.mxu0 %v8348
  %v10492 = vpop.f32.mrf.mxu0
  %v10493 = vadd.f32 %v10324, %v10492
  %v10494 = vpop.f32.mrf.mxu0
  %v10495 = vadd.f32 %v10326, %v10494
  %10496 = vmatmul.bf16.gmra.mxu0 %v8349
  %v10497 = vpop.f32.mrf.mxu0
  %v10498 = vadd.f32 %v10329, %v10497
  %v10499 = vpop.f32.mrf.mxu0
  %v10500 = vadd.f32 %v10331, %v10499
  %10501 = vdwg.mxu0
  %10502 = vmatpush.bf16.msra.mxu0 %v9077
  %10503 = vmatpush.bf16.msra.mxu0 %v9076
  %10504 = vmatpush.bf16.msra.mxu0 %v9075
  %10505 = vmatpush.bf16.msra.mxu0 %v9074
  %10506 = vmatpush.bf16.msra.mxu0 %v9073
  %10507 = vmatpush.bf16.msra.mxu0 %v9072
  %10508 = vmatpush.bf16.msra.mxu0 %v9071
  %10509 = vmatpush.bf16.msra.mxu0 %v9070
  %10510 = vmatmul.bf16.gmra.mxu0 %v8510
  %v10511 = vpop.f32.mrf.mxu0
  %v10512 = vadd.f32 %v10343, %v10511
  %v10513 = vpop.f32.mrf.mxu0
  %v10514 = vadd.f32 %v10345, %v10513
  %10515 = vmatmul.bf16.gmra.mxu0 %v8511
  %v10516 = vpop.f32.mrf.mxu0
  %v10517 = vadd.f32 %v10348, %v10516
  %v10518 = vpop.f32.mrf.mxu0
  %v10519 = vadd.f32 %v10350, %v10518
  %10520 = vmatmul.bf16.gmra.mxu0 %v8512
  %v10521 = vpop.f32.mrf.mxu0
  %v10522 = vadd.f32 %v10353, %v10521
  %v10523 = vpop.f32.mrf.mxu0
  %v10524 = vadd.f32 %v10355, %v10523
  %10525 = vmatmul.bf16.gmra.mxu0 %v8513
  %v10526 = vpop.f32.mrf.mxu0
  %v10527 = vadd.f32 %v10358, %v10526
  %v10528 = vpop.f32.mrf.mxu0
  %v10529 = vadd.f32 %v10360, %v10528
  %10530 = vmatmul.bf16.gmra.mxu0 %v8514
  %v10531 = vpop.f32.mrf.mxu0
  %v10532 = vadd.f32 %v10363, %v10531
  %v10533 = vpop.f32.mrf.mxu0
  %v10534 = vadd.f32 %v10365, %v10533
  %10535 = vmatmul.bf16.gmra.mxu0 %v8515
  %v10536 = vpop.f32.mrf.mxu0
  %v10537 = vadd.f32 %v10368, %v10536
  %v10538 = vpop.f32.mrf.mxu0
  %v10539 = vadd.f32 %v10370, %v10538
  %10540 = vmatmul.bf16.gmra.mxu0 %v8516
  %v10541 = vpop.f32.mrf.mxu0
  %v10542 = vadd.f32 %v10373, %v10541
  %v10543 = vpop.f32.mrf.mxu0
  %v10544 = vadd.f32 %v10375, %v10543
  %10545 = vmatmul.bf16.gmra.mxu0 %v8517
  %v10546 = vpop.f32.mrf.mxu0
  %v10547 = vadd.f32 %v10378, %v10546
  %v10548 = vpop.f32.mrf.mxu0
  %v10549 = vadd.f32 %v10380, %v10548
  %10550 = vmatmul.bf16.gmra.mxu0 %v8518
  %v10551 = vpop.f32.mrf.mxu0
  %v10552 = vadd.f32 %v10383, %v10551
  %v10553 = vpop.f32.mrf.mxu0
  %v10554 = vadd.f32 %v10385, %v10553
  %10555 = vmatmul.bf16.gmra.mxu0 %v8519
  %v10556 = vpop.f32.mrf.mxu0
  %v10557 = vadd.f32 %v10388, %v10556
  %v10558 = vpop.f32.mrf.mxu0
  %v10559 = vadd.f32 %v10390, %v10558
  %10560 = vmatmul.bf16.gmra.mxu0 %v8520
  %v10561 = vpop.f32.mrf.mxu0
  %v10562 = vadd.f32 %v10393, %v10561
  %v10563 = vpop.f32.mrf.mxu0
  %v10564 = vadd.f32 %v10395, %v10563
  %10565 = vmatmul.bf16.gmra.mxu0 %v8521
  %v10566 = vpop.f32.mrf.mxu0
  %v10567 = vadd.f32 %v10398, %v10566
  %v10568 = vpop.f32.mrf.mxu0
  %v10569 = vadd.f32 %v10400, %v10568
  %10570 = vmatmul.bf16.gmra.mxu0 %v8522
  %v10571 = vpop.f32.mrf.mxu0
  %v10572 = vadd.f32 %v10403, %v10571
  %v10573 = vpop.f32.mrf.mxu0
  %v10574 = vadd.f32 %v10405, %v10573
  %10575 = vmatmul.bf16.gmra.mxu0 %v8523
  %v10576 = vpop.f32.mrf.mxu0
  %v10577 = vadd.f32 %v10408, %v10576
  %v10578 = vpop.f32.mrf.mxu0
  %v10579 = vadd.f32 %v10410, %v10578
  %10580 = vmatmul.bf16.gmra.mxu0 %v8524
  %v10581 = vpop.f32.mrf.mxu0
  %v10582 = vadd.f32 %v10413, %v10581
  %v10583 = vpop.f32.mrf.mxu0
  %v10584 = vadd.f32 %v10415, %v10583
  %10585 = vmatmul.bf16.gmra.mxu0 %v8525
  %v10586 = vpop.f32.mrf.mxu0
  %v10587 = vadd.f32 %v10418, %v10586
  %v10588 = vpop.f32.mrf.mxu0
  %v10589 = vadd.f32 %v10420, %v10588
  %10590 = vmatmul.bf16.gmra.mxu0 %v8526
  %v10591 = vpop.f32.mrf.mxu0
  %v10592 = vadd.f32 %v10423, %v10591
  %v10593 = vpop.f32.mrf.mxu0
  %v10594 = vadd.f32 %v10425, %v10593
  %10595 = vmatmul.bf16.gmra.mxu0 %v8527
  %v10596 = vpop.f32.mrf.mxu0
  %v10597 = vadd.f32 %v10428, %v10596
  %v10598 = vpop.f32.mrf.mxu0
  %v10599 = vadd.f32 %v10430, %v10598
  %10600 = vmatmul.bf16.gmra.mxu0 %v8528
  %v10601 = vpop.f32.mrf.mxu0
  %v10602 = vadd.f32 %v10433, %v10601
  %v10603 = vpop.f32.mrf.mxu0
  %v10604 = vadd.f32 %v10435, %v10603
  %10605 = vmatmul.bf16.gmra.mxu0 %v8529
  %v10606 = vpop.f32.mrf.mxu0
  %v10607 = vadd.f32 %v10438, %v10606
  %v10608 = vpop.f32.mrf.mxu0
  %v10609 = vadd.f32 %v10440, %v10608
  %10610 = vmatmul.bf16.gmra.mxu0 %v8530
  %v10611 = vpop.f32.mrf.mxu0
  %v10612 = vadd.f32 %v10443, %v10611
  %v10613 = vpop.f32.mrf.mxu0
  %v10614 = vadd.f32 %v10445, %v10613
  %10615 = vmatmul.bf16.gmra.mxu0 %v8531
  %v10616 = vpop.f32.mrf.mxu0
  %v10617 = vadd.f32 %v10448, %v10616
  %v10618 = vpop.f32.mrf.mxu0
  %v10619 = vadd.f32 %v10450, %v10618
  %10620 = vmatmul.bf16.gmra.mxu0 %v8532
  %v10621 = vpop.f32.mrf.mxu0
  %v10622 = vadd.f32 %v10453, %v10621
  %v10623 = vpop.f32.mrf.mxu0
  %v10624 = vadd.f32 %v10455, %v10623
  %10625 = vmatmul.bf16.gmra.mxu0 %v8533
  %v10626 = vpop.f32.mrf.mxu0
  %v10627 = vadd.f32 %v10458, %v10626
  %v10628 = vpop.f32.mrf.mxu0
  %v10629 = vadd.f32 %v10460, %v10628
  %10630 = vmatmul.bf16.gmra.mxu0 %v8534
  %v10631 = vpop.f32.mrf.mxu0
  %v10632 = vadd.f32 %v10463, %v10631
  %v10633 = vpop.f32.mrf.mxu0
  %v10634 = vadd.f32 %v10465, %v10633
  %10635 = vmatmul.bf16.gmra.mxu0 %v8535
  %v10636 = vpop.f32.mrf.mxu0
  %v10637 = vadd.f32 %v10468, %v10636
  %v10638 = vpop.f32.mrf.mxu0
  %v10639 = vadd.f32 %v10470, %v10638
  %10640 = vmatmul.bf16.gmra.mxu0 %v8536
  %v10641 = vpop.f32.mrf.mxu0
  %v10642 = vadd.f32 %v10473, %v10641
  %v10643 = vpop.f32.mrf.mxu0
  %v10644 = vadd.f32 %v10475, %v10643
  %10645 = vmatmul.bf16.gmra.mxu0 %v8537
  %v10646 = vpop.f32.mrf.mxu0
  %v10647 = vadd.f32 %v10478, %v10646
  %v10648 = vpop.f32.mrf.mxu0
  %v10649 = vadd.f32 %v10480, %v10648
  %10650 = vmatmul.bf16.gmra.mxu0 %v8538
  %v10651 = vpop.f32.mrf.mxu0
  %v10652 = vadd.f32 %v10483, %v10651
  %v10653 = vpop.f32.mrf.mxu0
  %v10654 = vadd.f32 %v10485, %v10653
  %10655 = vmatmul.bf16.gmra.mxu0 %v8539
  %v10656 = vpop.f32.mrf.mxu0
  %v10657 = vadd.f32 %v10488, %v10656
  %v10658 = vpop.f32.mrf.mxu0
  %v10659 = vadd.f32 %v10490, %v10658
  %10660 = vmatmul.bf16.gmra.mxu0 %v8540
  %v10661 = vpop.f32.mrf.mxu0
  %v10662 = vadd.f32 %v10493, %v10661
  %v10663 = vpop.f32.mrf.mxu0
  %v10664 = vadd.f32 %v10495, %v10663
  %10665 = vmatmul.bf16.gmra.mxu0 %v8541
  %v10666 = vpop.f32.mrf.mxu0
  %v10667 = vadd.f32 %v10498, %v10666
  %v10668 = vpop.f32.mrf.mxu0
  %v10669 = vadd.f32 %v10500, %v10668
  %10670 = vdwg.mxu0
  %v10671 = vld [vmem:[%s5] sm:$0x1]
  %v10672 = vld [vmem:[%s6] sm:$0x1]
  %v10673 = vadd.f32 %v10512, %v10514
  %v10674 = vadd.f32 %v10673, %v10517
  %v10675 = vadd.f32 %v10674, %v10519
  %v10676 = vadd.f32 %v10675, %v10522
  %v10677 = vadd.f32 %v10676, %v10524
  %v10678 = vadd.f32 %v10677, %v10527
  %v10679 = vadd.f32 %v10678, %v10529
  %v10680 = vadd.f32 %v10679, %v10532
  %v10681 = vadd.f32 %v10680, %v10534
  %v10682 = vadd.f32 %v10681, %v10537
  %v10683 = vadd.f32 %v10682, %v10539
  %v10684 = vadd.f32 %v10683, %v10542
  %v10685 = vadd.f32 %v10684, %v10544
  %v10686 = vadd.f32 %v10685, %v10547
  %v10687 = vadd.f32 %v10686, %v10549
  %v10688 = vadd.f32 %v10687, %v10552
  %v10689 = vadd.f32 %v10688, %v10554
  %v10690 = vadd.f32 %v10689, %v10557
  %v10691 = vadd.f32 %v10690, %v10559
  %v10692 = vadd.f32 %v10691, %v10562
  %v10693 = vadd.f32 %v10692, %v10564
  %v10694 = vadd.f32 %v10693, %v10567
  %v10695 = vadd.f32 %v10694, %v10569
  %v10696 = vadd.f32 %v10695, %v10572
  %v10697 = vadd.f32 %v10696, %v10574
  %v10698 = vadd.f32 %v10697, %v10577
  %v10699 = vadd.f32 %v10698, %v10579
  %v10700 = vadd.f32 %v10699, %v10582
  %v10701 = vadd.f32 %v10700, %v10584
  %v10702 = vadd.f32 %v10701, %v10587
  %v10703 = vadd.f32 %v10702, %v10589
  %v10704 = vadd.f32 %v10703, %v10592
  %v10705 = vadd.f32 %v10704, %v10594
  %v10706 = vadd.f32 %v10705, %v10597
  %v10707 = vadd.f32 %v10706, %v10599
  %v10708 = vadd.f32 %v10707, %v10602
  %v10709 = vadd.f32 %v10708, %v10604
  %v10710 = vadd.f32 %v10709, %v10607
  %v10711 = vadd.f32 %v10710, %v10609
  %v10712 = vadd.f32 %v10711, %v10612
  %v10713 = vadd.f32 %v10712, %v10614
  %v10714 = vadd.f32 %v10713, %v10617
  %v10715 = vadd.f32 %v10714, %v10619
  %v10716 = vadd.f32 %v10715, %v10622
  %v10717 = vadd.f32 %v10716, %v10624
  %v10718 = vadd.f32 %v10717, %v10627
  %v10719 = vadd.f32 %v10718, %v10629
  %v10720 = vadd.f32 %v10719, %v10632
  %v10721 = vadd.f32 %v10720, %v10634
  %v10722 = vadd.f32 %v10721, %v10637
  %v10723 = vadd.f32 %v10722, %v10639
  %v10724 = vadd.f32 %v10723, %v10642
  %v10725 = vadd.f32 %v10724, %v10644
  %v10726 = vadd.f32 %v10725, %v10647
  %v10727 = vadd.f32 %v10726, %v10649
  %v10728 = vadd.f32 %v10727, %v10652
  %v10729 = vadd.f32 %v10728, %v10654
  %v10730 = vadd.f32 %v10729, %v10657
  %v10731 = vadd.f32 %v10730, %v10659
  %v10732 = vadd.f32 %v10731, %v10662
  %v10733 = vadd.f32 %v10732, %v10664
  %v10734 = vadd.f32 %v10733, %v10667
  %v10735 = vadd.f32 %v10734, %v10669
  %v10736 = vrot.slane %v10735, 4
  %v10737 = vadd.f32 %v10735, %v10736
  %v10738 = vrot.slane %v10737, 2
  %v10739 = vadd.f32 %v10737, %v10738
  %v10740 = vrot.slane %v10739, 1
  %v10741 = vadd.f32 %v10739, %v10740
  %v10742 = vmul.f32 %v10512, %v10512
  %v10743 = vmul.f32 %v10514, %v10514
  %v10744 = vmul.f32 %v10517, %v10517
  %v10745 = vmul.f32 %v10519, %v10519
  %v10746 = vmul.f32 %v10522, %v10522
  %v10747 = vmul.f32 %v10524, %v10524
  %v10748 = vmul.f32 %v10527, %v10527
  %v10749 = vmul.f32 %v10529, %v10529
  %v10750 = vmul.f32 %v10532, %v10532
  %v10751 = vmul.f32 %v10534, %v10534
  %v10752 = vmul.f32 %v10537, %v10537
  %v10753 = vmul.f32 %v10539, %v10539
  %v10754 = vmul.f32 %v10542, %v10542
  %v10755 = vmul.f32 %v10544, %v10544
  %v10756 = vmul.f32 %v10547, %v10547
  %v10757 = vmul.f32 %v10549, %v10549
  %v10758 = vmul.f32 %v10552, %v10552
  %v10759 = vmul.f32 %v10554, %v10554
  %v10760 = vmul.f32 %v10557, %v10557
  %v10761 = vmul.f32 %v10559, %v10559
  %v10762 = vmul.f32 %v10562, %v10562
  %v10763 = vmul.f32 %v10564, %v10564
  %v10764 = vmul.f32 %v10567, %v10567
  %v10765 = vmul.f32 %v10569, %v10569
  %v10766 = vmul.f32 %v10572, %v10572
  %v10767 = vmul.f32 %v10574, %v10574
  %v10768 = vmul.f32 %v10577, %v10577
  %v10769 = vmul.f32 %v10579, %v10579
  %v10770 = vmul.f32 %v10582, %v10582
  %v10771 = vmul.f32 %v10584, %v10584
  %v10772 = vmul.f32 %v10587, %v10587
  %v10773 = vmul.f32 %v10589, %v10589
  %v10774 = vmul.f32 %v10592, %v10592
  %v10775 = vmul.f32 %v10594, %v10594
  %v10776 = vmul.f32 %v10597, %v10597
  %v10777 = vmul.f32 %v10599, %v10599
  %v10778 = vmul.f32 %v10602, %v10602
  %v10779 = vmul.f32 %v10604, %v10604
  %v10780 = vmul.f32 %v10607, %v10607
  %v10781 = vmul.f32 %v10609, %v10609
  %v10782 = vmul.f32 %v10612, %v10612
  %v10783 = vmul.f32 %v10614, %v10614
  %v10784 = vmul.f32 %v10617, %v10617
  %v10785 = vmul.f32 %v10619, %v10619
  %v10786 = vmul.f32 %v10622, %v10622
  %v10787 = vmul.f32 %v10624, %v10624
  %v10788 = vmul.f32 %v10627, %v10627
  %v10789 = vmul.f32 %v10629, %v10629
  %v10790 = vmul.f32 %v10632, %v10632
  %v10791 = vmul.f32 %v10634, %v10634
  %v10792 = vmul.f32 %v10637, %v10637
  %v10793 = vmul.f32 %v10639, %v10639
  %v10794 = vmul.f32 %v10642, %v10642
  %v10795 = vmul.f32 %v10644, %v10644
  %v10796 = vmul.f32 %v10647, %v10647
  %v10797 = vmul.f32 %v10649, %v10649
  %v10798 = vmul.f32 %v10652, %v10652
  %v10799 = vmul.f32 %v10654, %v10654
  %v10800 = vmul.f32 %v10657, %v10657
  %v10801 = vmul.f32 %v10659, %v10659
  %v10802 = vmul.f32 %v10662, %v10662
  %v10803 = vmul.f32 %v10664, %v10664
  %v10804 = vmul.f32 %v10667, %v10667
  %v10805 = vmul.f32 %v10669, %v10669
  %v10806 = vadd.f32 %v10742, %v10743
  %v10807 = vadd.f32 %v10806, %v10744
  %v10808 = vadd.f32 %v10807, %v10745
  %v10809 = vadd.f32 %v10808, %v10746
  %v10810 = vadd.f32 %v10809, %v10747
  %v10811 = vadd.f32 %v10810, %v10748
  %v10812 = vadd.f32 %v10811, %v10749
  %v10813 = vadd.f32 %v10812, %v10750
  %v10814 = vadd.f32 %v10813, %v10751
  %v10815 = vadd.f32 %v10814, %v10752
  %v10816 = vadd.f32 %v10815, %v10753
  %v10817 = vadd.f32 %v10816, %v10754
  %v10818 = vadd.f32 %v10817, %v10755
  %v10819 = vadd.f32 %v10818, %v10756
  %v10820 = vadd.f32 %v10819, %v10757
  %v10821 = vadd.f32 %v10820, %v10758
  %v10822 = vadd.f32 %v10821, %v10759
  %v10823 = vadd.f32 %v10822, %v10760
  %v10824 = vadd.f32 %v10823, %v10761
  %v10825 = vadd.f32 %v10824, %v10762
  %v10826 = vadd.f32 %v10825, %v10763
  %v10827 = vadd.f32 %v10826, %v10764
  %v10828 = vadd.f32 %v10827, %v10765
  %v10829 = vadd.f32 %v10828, %v10766
  %v10830 = vadd.f32 %v10829, %v10767
  %v10831 = vadd.f32 %v10830, %v10768
  %v10832 = vadd.f32 %v10831, %v10769
  %v10833 = vadd.f32 %v10832, %v10770
  %v10834 = vadd.f32 %v10833, %v10771
  %v10835 = vadd.f32 %v10834, %v10772
  %v10836 = vadd.f32 %v10835, %v10773
  %v10837 = vadd.f32 %v10836, %v10774
  %v10838 = vadd.f32 %v10837, %v10775
  %v10839 = vadd.f32 %v10838, %v10776
  %v10840 = vadd.f32 %v10839, %v10777
  %v10841 = vadd.f32 %v10840, %v10778
  %v10842 = vadd.f32 %v10841, %v10779
  %v10843 = vadd.f32 %v10842, %v10780
  %v10844 = vadd.f32 %v10843, %v10781
  %v10845 = vadd.f32 %v10844, %v10782
  %v10846 = vadd.f32 %v10845, %v10783
  %v10847 = vadd.f32 %v10846, %v10784
  %v10848 = vadd.f32 %v10847, %v10785
  %v10849 = vadd.f32 %v10848, %v10786
  %v10850 = vadd.f32 %v10849, %v10787
  %v10851 = vadd.f32 %v10850, %v10788
  %v10852 = vadd.f32 %v10851, %v10789
  %v10853 = vadd.f32 %v10852, %v10790
  %v10854 = vadd.f32 %v10853, %v10791
  %v10855 = vadd.f32 %v10854, %v10792
  %v10856 = vadd.f32 %v10855, %v10793
  %v10857 = vadd.f32 %v10856, %v10794
  %v10858 = vadd.f32 %v10857, %v10795
  %v10859 = vadd.f32 %v10858, %v10796
  %v10860 = vadd.f32 %v10859, %v10797
  %v10861 = vadd.f32 %v10860, %v10798
  %v10862 = vadd.f32 %v10861, %v10799
  %v10863 = vadd.f32 %v10862, %v10800
  %v10864 = vadd.f32 %v10863, %v10801
  %v10865 = vadd.f32 %v10864, %v10802
  %v10866 = vadd.f32 %v10865, %v10803
  %v10867 = vadd.f32 %v10866, %v10804
  %v10868 = vadd.f32 %v10867, %v10805
  %v10869 = vrot.slane %v10868, 4
  %v10870 = vadd.f32 %v10868, %v10869
  %v10871 = vrot.slane %v10870, 2
  %v10872 = vadd.f32 %v10870, %v10871
  %v10873 = vrot.slane %v10872, 1
  %v10874 = vadd.f32 %v10872, %v10873
  %v10875 = vmul.f32 %v10741, 0.001953125
  %v10876 = vmul.f32 %v10874, 0.001953125
  %v10877 = vmul.f32 %v10875, %v10875
  %v10878 = vsub.f32 %v10876, %v10877
  %v10879 = vadd.f32 %v10878, 1e-05
  %v10880 = vrsqrt.pop %v10879
  %v10881 = vmul.f32 %v10880, %v10879
  %v10882 = vmul.f32 %v10881, %v10880
  %v10883 = vmul.f32 0.5, %v10882
  %v10884 = vsub.f32 1.5, %v10883
  %v10885 = vmul.f32 %v10880, %v10884
  %vm10886 = vweird.f32 %v10879
  %vm10887 = vweird.f32 %v10880
  %vm10888 = vmor %vm10886, %vm10887
  %v10889 = vsel %vm10888, %v10880, %v10885
  %v10890 = vmul.f32 %v10671, %v10889
  %v10891 = vmul.f32 %v10875, %v10890
  %v10892 = vsub.f32 %v10672, %v10891
  %v10894 = vperm.slane %v10890, 0
  %v10896 = vmul.f32 %v10512, %v10894
  %v10897 = vmul.f32 %v10514, %v10894
  %v10898 = vmul.f32 %v10517, %v10894
  %v10899 = vmul.f32 %v10519, %v10894
  %v10900 = vmul.f32 %v10522, %v10894
  %v10901 = vmul.f32 %v10524, %v10894
  %v10902 = vmul.f32 %v10527, %v10894
  %v10903 = vmul.f32 %v10529, %v10894
  %v10904 = vmul.f32 %v10532, %v10894
  %v10905 = vmul.f32 %v10534, %v10894
  %v10906 = vmul.f32 %v10537, %v10894
  %v10907 = vmul.f32 %v10539, %v10894
  %v10908 = vmul.f32 %v10542, %v10894
  %v10909 = vmul.f32 %v10544, %v10894
  %v10910 = vmul.f32 %v10547, %v10894
  %v10911 = vmul.f32 %v10549, %v10894
  %v10912 = vmul.f32 %v10552, %v10894
  %v10913 = vmul.f32 %v10554, %v10894
  %v10914 = vmul.f32 %v10557, %v10894
  %v10915 = vmul.f32 %v10559, %v10894
  %v10916 = vmul.f32 %v10562, %v10894
  %v10917 = vmul.f32 %v10564, %v10894
  %v10918 = vmul.f32 %v10567, %v10894
  %v10919 = vmul.f32 %v10569, %v10894
  %v10920 = vmul.f32 %v10572, %v10894
  %v10921 = vmul.f32 %v10574, %v10894
  %v10922 = vmul.f32 %v10577, %v10894
  %v10923 = vmul.f32 %v10579, %v10894
  %v10924 = vmul.f32 %v10582, %v10894
  %v10925 = vmul.f32 %v10584, %v10894
  %v10926 = vmul.f32 %v10587, %v10894
  %v10927 = vmul.f32 %v10589, %v10894
  %v10928 = vmul.f32 %v10592, %v10894
  %v10929 = vmul.f32 %v10594, %v10894
  %v10930 = vmul.f32 %v10597, %v10894
  %v10931 = vmul.f32 %v10599, %v10894
  %v10932 = vmul.f32 %v10602, %v10894
  %v10933 = vmul.f32 %v10604, %v10894
  %v10934 = vmul.f32 %v10607, %v10894
  %v10935 = vmul.f32 %v10609, %v10894
  %v10936 = vmul.f32 %v10612, %v10894
  %v10937 = vmul.f32 %v10614, %v10894
  %v10938 = vmul.f32 %v10617, %v10894
  %v10939 = vmul.f32 %v10619, %v10894
  %v10940 = vmul.f32 %v10622, %v10894
  %v10941 = vmul.f32 %v10624, %v10894
  %v10942 = vmul.f32 %v10627, %v10894
  %v10943 = vmul.f32 %v10629, %v10894
  %v10944 = vmul.f32 %v10632, %v10894
  %v10945 = vmul.f32 %v10634, %v10894
  %v10946 = vmul.f32 %v10637, %v10894
  %v10947 = vmul.f32 %v10639, %v10894
  %v10948 = vmul.f32 %v10642, %v10894
  %v10949 = vmul.f32 %v10644, %v10894
  %v10950 = vmul.f32 %v10647, %v10894
  %v10951 = vmul.f32 %v10649, %v10894
  %v10952 = vmul.f32 %v10652, %v10894
  %v10953 = vmul.f32 %v10654, %v10894
  %v10954 = vmul.f32 %v10657, %v10894
  %v10955 = vmul.f32 %v10659, %v10894
  %v10956 = vmul.f32 %v10662, %v10894
  %v10957 = vmul.f32 %v10664, %v10894
  %v10958 = vmul.f32 %v10667, %v10894
  %v10959 = vmul.f32 %v10669, %v10894
  %v10961 = vperm.slane %v10892, 0
  %v10963 = vadd.f32 %v10896, %v10961
  %v10964 = vadd.f32 %v10897, %v10961
  %v10965 = vadd.f32 %v10898, %v10961
  %v10966 = vadd.f32 %v10899, %v10961
  %v10967 = vadd.f32 %v10900, %v10961
  %v10968 = vadd.f32 %v10901, %v10961
  %v10969 = vadd.f32 %v10902, %v10961
  %v10970 = vadd.f32 %v10903, %v10961
  %v10971 = vadd.f32 %v10904, %v10961
  %v10972 = vadd.f32 %v10905, %v10961
  %v10973 = vadd.f32 %v10906, %v10961
  %v10974 = vadd.f32 %v10907, %v10961
  %v10975 = vadd.f32 %v10908, %v10961
  %v10976 = vadd.f32 %v10909, %v10961
  %v10977 = vadd.f32 %v10910, %v10961
  %v10978 = vadd.f32 %v10911, %v10961
  %v10979 = vadd.f32 %v10912, %v10961
  %v10980 = vadd.f32 %v10913, %v10961
  %v10981 = vadd.f32 %v10914, %v10961
  %v10982 = vadd.f32 %v10915, %v10961
  %v10983 = vadd.f32 %v10916, %v10961
  %v10984 = vadd.f32 %v10917, %v10961
  %v10985 = vadd.f32 %v10918, %v10961
  %v10986 = vadd.f32 %v10919, %v10961
  %v10987 = vadd.f32 %v10920, %v10961
  %v10988 = vadd.f32 %v10921, %v10961
  %v10989 = vadd.f32 %v10922, %v10961
  %v10990 = vadd.f32 %v10923, %v10961
  %v10991 = vadd.f32 %v10924, %v10961
  %v10992 = vadd.f32 %v10925, %v10961
  %v10993 = vadd.f32 %v10926, %v10961
  %v10994 = vadd.f32 %v10927, %v10961
  %v10995 = vadd.f32 %v10928, %v10961
  %v10996 = vadd.f32 %v10929, %v10961
  %v10997 = vadd.f32 %v10930, %v10961
  %v10998 = vadd.f32 %v10931, %v10961
  %v10999 = vadd.f32 %v10932, %v10961
  %v11000 = vadd.f32 %v10933, %v10961
  %v11001 = vadd.f32 %v10934, %v10961
  %v11002 = vadd.f32 %v10935, %v10961
  %v11003 = vadd.f32 %v10936, %v10961
  %v11004 = vadd.f32 %v10937, %v10961
  %v11005 = vadd.f32 %v10938, %v10961
  %v11006 = vadd.f32 %v10939, %v10961
  %v11007 = vadd.f32 %v10940, %v10961
  %v11008 = vadd.f32 %v10941, %v10961
  %v11009 = vadd.f32 %v10942, %v10961
  %v11010 = vadd.f32 %v10943, %v10961
  %v11011 = vadd.f32 %v10944, %v10961
  %v11012 = vadd.f32 %v10945, %v10961
  %v11013 = vadd.f32 %v10946, %v10961
  %v11014 = vadd.f32 %v10947, %v10961
  %v11015 = vadd.f32 %v10948, %v10961
  %v11016 = vadd.f32 %v10949, %v10961
  %v11017 = vadd.f32 %v10950, %v10961
  %v11018 = vadd.f32 %v10951, %v10961
  %v11019 = vadd.f32 %v10952, %v10961
  %v11020 = vadd.f32 %v10953, %v10961
  %v11021 = vadd.f32 %v10954, %v10961
  %v11022 = vadd.f32 %v10955, %v10961
  %v11023 = vadd.f32 %v10956, %v10961
  %v11024 = vadd.f32 %v10957, %v10961
  %v11025 = vadd.f32 %v10958, %v10961
  %v11026 = vadd.f32 %v10959, %v10961
  %v11027 = vmax.f32 %v10963, 0.0
  %v11028 = vmax.f32 %v10964, 0.0
  %v11029 = vmax.f32 %v10965, 0.0
  %v11030 = vmax.f32 %v10966, 0.0
  %v11031 = vmax.f32 %v10967, 0.0
  %v11032 = vmax.f32 %v10968, 0.0
  %v11033 = vmax.f32 %v10969, 0.0
  %v11034 = vmax.f32 %v10970, 0.0
  %v11035 = vmax.f32 %v10971, 0.0
  %v11036 = vmax.f32 %v10972, 0.0
  %v11037 = vmax.f32 %v10973, 0.0
  %v11038 = vmax.f32 %v10974, 0.0
  %v11039 = vmax.f32 %v10975, 0.0
  %v11040 = vmax.f32 %v10976, 0.0
  %v11041 = vmax.f32 %v10977, 0.0
  %v11042 = vmax.f32 %v10978, 0.0
  %v11043 = vmax.f32 %v10979, 0.0
  %v11044 = vmax.f32 %v10980, 0.0
  %v11045 = vmax.f32 %v10981, 0.0
  %v11046 = vmax.f32 %v10982, 0.0
  %v11047 = vmax.f32 %v10983, 0.0
  %v11048 = vmax.f32 %v10984, 0.0
  %v11049 = vmax.f32 %v10985, 0.0
  %v11050 = vmax.f32 %v10986, 0.0
  %v11051 = vmax.f32 %v10987, 0.0
  %v11052 = vmax.f32 %v10988, 0.0
  %v11053 = vmax.f32 %v10989, 0.0
  %v11054 = vmax.f32 %v10990, 0.0
  %v11055 = vmax.f32 %v10991, 0.0
  %v11056 = vmax.f32 %v10992, 0.0
  %v11057 = vmax.f32 %v10993, 0.0
  %v11058 = vmax.f32 %v10994, 0.0
  %v11059 = vmax.f32 %v10995, 0.0
  %v11060 = vmax.f32 %v10996, 0.0
  %v11061 = vmax.f32 %v10997, 0.0
  %v11062 = vmax.f32 %v10998, 0.0
  %v11063 = vmax.f32 %v10999, 0.0
  %v11064 = vmax.f32 %v11000, 0.0
  %v11065 = vmax.f32 %v11001, 0.0
  %v11066 = vmax.f32 %v11002, 0.0
  %v11067 = vmax.f32 %v11003, 0.0
  %v11068 = vmax.f32 %v11004, 0.0
  %v11069 = vmax.f32 %v11005, 0.0
  %v11070 = vmax.f32 %v11006, 0.0
  %v11071 = vmax.f32 %v11007, 0.0
  %v11072 = vmax.f32 %v11008, 0.0
  %v11073 = vmax.f32 %v11009, 0.0
  %v11074 = vmax.f32 %v11010, 0.0
  %v11075 = vmax.f32 %v11011, 0.0
  %v11076 = vmax.f32 %v11012, 0.0
  %v11077 = vmax.f32 %v11013, 0.0
  %v11078 = vmax.f32 %v11014, 0.0
  %v11079 = vmax.f32 %v11015, 0.0
  %v11080 = vmax.f32 %v11016, 0.0
  %v11081 = vmax.f32 %v11017, 0.0
  %v11082 = vmax.f32 %v11018, 0.0
  %v11083 = vmax.f32 %v11019, 0.0
  %v11084 = vmax.f32 %v11020, 0.0
  %v11085 = vmax.f32 %v11021, 0.0
  %v11086 = vmax.f32 %v11022, 0.0
  %v11087 = vmax.f32 %v11023, 0.0
  %v11088 = vmax.f32 %v11024, 0.0
  %v11089 = vmax.f32 %v11025, 0.0
  %v11090 = vmax.f32 %v11026, 0.0
  %v11091 = vadd.f32 %v104, %v11027
  %v11092 = vadd.f32 %v105, %v11028
  %v11093 = vadd.f32 %v106, %v11029
  %v11094 = vadd.f32 %v107, %v11030
  %v11095 = vadd.f32 %v108, %v11031
  %v11096 = vadd.f32 %v109, %v11032
  %v11097 = vadd.f32 %v110, %v11033
  %v11098 = vadd.f32 %v111, %v11034
  %v11099 = vadd.f32 %v112, %v11035
  %v11100 = vadd.f32 %v113, %v11036
  %v11101 = vadd.f32 %v114, %v11037
  %v11102 = vadd.f32 %v115, %v11038
  %v11103 = vadd.f32 %v116, %v11039
  %v11104 = vadd.f32 %v117, %v11040
  %v11105 = vadd.f32 %v118, %v11041
  %v11106 = vadd.f32 %v119, %v11042
  %v11107 = vadd.f32 %v120, %v11043
  %v11108 = vadd.f32 %v121, %v11044
  %v11109 = vadd.f32 %v122, %v11045
  %v11110 = vadd.f32 %v123, %v11046
  %v11111 = vadd.f32 %v124, %v11047
  %v11112 = vadd.f32 %v125, %v11048
  %v11113 = vadd.f32 %v126, %v11049
  %v11114 = vadd.f32 %v127, %v11050
  %v11115 = vadd.f32 %v128, %v11051
  %v11116 = vadd.f32 %v129, %v11052
  %v11117 = vadd.f32 %v130, %v11053
  %v11118 = vadd.f32 %v131, %v11054
  %v11119 = vadd.f32 %v132, %v11055
  %v11120 = vadd.f32 %v133, %v11056
  %v11121 = vadd.f32 %v134, %v11057
  %v11122 = vadd.f32 %v135, %v11058
  %v11123 = vadd.f32 %v136, %v11059
  %v11124 = vadd.f32 %v137, %v11060
  %v11125 = vadd.f32 %v138, %v11061
  %v11126 = vadd.f32 %v139, %v11062
  %v11127 = vadd.f32 %v140, %v11063
  %v11128 = vadd.f32 %v141, %v11064
  %v11129 = vadd.f32 %v142, %v11065
  %v11130 = vadd.f32 %v143, %v11066
  %v11131 = vadd.f32 %v144, %v11067
  %v11132 = vadd.f32 %v145, %v11068
  %v11133 = vadd.f32 %v146, %v11069
  %v11134 = vadd.f32 %v147, %v11070
  %v11135 = vadd.f32 %v148, %v11071
  %v11136 = vadd.f32 %v149, %v11072
  %v11137 = vadd.f32 %v150, %v11073
  %v11138 = vadd.f32 %v151, %v11074
  %v11139 = vadd.f32 %v152, %v11075
  %v11140 = vadd.f32 %v153, %v11076
  %v11141 = vadd.f32 %v154, %v11077
  %v11142 = vadd.f32 %v155, %v11078
  %v11143 = vadd.f32 %v156, %v11079
  %v11144 = vadd.f32 %v157, %v11080
  %v11145 = vadd.f32 %v158, %v11081
  %v11146 = vadd.f32 %v159, %v11082
  %v11147 = vadd.f32 %v160, %v11083
  %v11148 = vadd.f32 %v161, %v11084
  %v11149 = vadd.f32 %v162, %v11085
  %v11150 = vadd.f32 %v163, %v11086
  %v11151 = vadd.f32 %v164, %v11087
  %v11152 = vadd.f32 %v165, %v11088
  %v11153 = vadd.f32 %v166, %v11089
  %v11154 = vadd.f32 %v167, %v11090
  %11155 = vst [vmem:[%s7] sm:$0xff] %v11091
  %11156 = vst [vmem:[%s7 + $0x8] sm:$0xff] %v11092
  %11157 = vst [vmem:[%s7 + $0x10] sm:$0xff] %v11093
  %11158 = vst [vmem:[%s7 + $0x18] sm:$0xff] %v11094
  %11159 = vst [vmem:[%s7 + $0x20] sm:$0xff] %v11095
  %11160 = vst [vmem:[%s7 + $0x28] sm:$0xff] %v11096
  %11161 = vst [vmem:[%s7 + $0x30] sm:$0xff] %v11097
  %11162 = vst [vmem:[%s7 + $0x38] sm:$0xff] %v11098
  %11163 = vst [vmem:[%s7 + $0x40] sm:$0xff] %v11099
  %11164 = vst [vmem:[%s7 + $0x48] sm:$0xff] %v11100
  %11165 = vst [vmem:[%s7 + $0x50] sm:$0xff] %v11101
  %11166 = vst [vmem:[%s7 + $0x58] sm:$0xff] %v11102
  %11167 = vst [vmem:[%s7 + $0x60] sm:$0xff] %v11103
  %11168 = vst [vmem:[%s7 + $0x68] sm:$0xff] %v11104
  %11169 = vst [vmem:[%s7 + $0x70] sm:$0xff] %v11105
  %11170 = vst [vmem:[%s7 + $0x78] sm:$0xff] %v11106
  %11171 = vst [vmem:[%s7 + $0x80] sm:$0xff] %v11107
  %11172 = vst [vmem:[%s7 + $0x88] sm:$0xff] %v11108
  %11173 = vst [vmem:[%s7 + $0x90] sm:$0xff] %v11109
  %11174 = vst [vmem:[%s7 + $0x98] sm:$0xff] %v11110
  %11175 = vst [vmem:[%s7 + $0xa0] sm:$0xff] %v11111
  %11176 = vst [vmem:[%s7 + $0xa8] sm:$0xff] %v11112
  %11177 = vst [vmem:[%s7 + $0xb0] sm:$0xff] %v11113
  %11178 = vst [vmem:[%s7 + $0xb8] sm:$0xff] %v11114
  %11179 = vst [vmem:[%s7 + $0xc0] sm:$0xff] %v11115
  %11180 = vst [vmem:[%s7 + $0xc8] sm:$0xff] %v11116
  %11181 = vst [vmem:[%s7 + $0xd0] sm:$0xff] %v11117
  %11182 = vst [vmem:[%s7 + $0xd8] sm:$0xff] %v11118
  %11183 = vst [vmem:[%s7 + $0xe0] sm:$0xff] %v11119
  %11184 = vst [vmem:[%s7 + $0xe8] sm:$0xff] %v11120
  %11185 = vst [vmem:[%s7 + $0xf0] sm:$0xff] %v11121
  %11186 = vst [vmem:[%s7 + $0xf8] sm:$0xff] %v11122
  %11187 = vst [vmem:[%s7 + $0x100] sm:$0xff] %v11123
  %11188 = vst [vmem:[%s7 + $0x108] sm:$0xff] %v11124
  %11189 = vst [vmem:[%s7 + $0x110] sm:$0xff] %v11125
  %11190 = vst [vmem:[%s7 + $0x118] sm:$0xff] %v11126
  %11191 = vst [vmem:[%s7 + $0x120] sm:$0xff] %v11127
  %11192 = vst [vmem:[%s7 + $0x128] sm:$0xff] %v11128
  %11193 = vst [vmem:[%s7 + $0x130] sm:$0xff] %v11129
  %11194 = vst [vmem:[%s7 + $0x138] sm:$0xff] %v11130
  %11195 = vst [vmem:[%s7 + $0x140] sm:$0xff] %v11131
  %11196 = vst [vmem:[%s7 + $0x148] sm:$0xff] %v11132
  %11197 = vst [vmem:[%s7 + $0x150] sm:$0xff] %v11133
  %11198 = vst [vmem:[%s7 + $0x158] sm:$0xff] %v11134
  %11199 = vst [vmem:[%s7 + $0x160] sm:$0xff] %v11135
  %11200 = vst [vmem:[%s7 + $0x168] sm:$0xff] %v11136
  %11201 = vst [vmem:[%s7 + $0x170] sm:$0xff] %v11137
  %11202 = vst [vmem:[%s7 + $0x178] sm:$0xff] %v11138
  %11203 = vst [vmem:[%s7 + $0x180] sm:$0xff] %v11139
  %11204 = vst [vmem:[%s7 + $0x188] sm:$0xff] %v11140
  %11205 = vst [vmem:[%s7 + $0x190] sm:$0xff] %v11141
  %11206 = vst [vmem:[%s7 + $0x198] sm:$0xff] %v11142
  %11207 = vst [vmem:[%s7 + $0x1a0] sm:$0xff] %v11143
  %11208 = vst [vmem:[%s7 + $0x1a8] sm:$0xff] %v11144
  %11209 = vst [vmem:[%s7 + $0x1b0] sm:$0xff] %v11145
  %11210 = vst [vmem:[%s7 + $0x1b8] sm:$0xff] %v11146
  %11211 = vst [vmem:[%s7 + $0x1c0] sm:$0xff] %v11147
  %11212 = vst [vmem:[%s7 + $0x1c8] sm:$0xff] %v11148
  %11213 = vst [vmem:[%s7 + $0x1d0] sm:$0xff] %v11149
  %11214 = vst [vmem:[%s7 + $0x1d8] sm:$0xff] %v11150
  %11215 = vst [vmem:[%s7 + $0x1e0] sm:$0xff] %v11151
  %11216 = vst [vmem:[%s7 + $0x1e8] sm:$0xff] %v11152
  %11217 = vst [vmem:[%s7 + $0x1f0] sm:$0xff] %v11153
  %11218 = vst [vmem:[%s7 + $0x1f8] sm:$0xff] %v11154
  // Predicated region
  $region30: #{resblock2d_pallas.1} parent=0 // pred_check
    _
  $region31: #{resblock2d_pallas.1} parent=0 // pred_check_branch
    %11220 = sbr.rel (0) target = $region33
  $region32: #{resblock2d_pallas.1} parent=0 // pred_region
    _
  $region33: #{resblock2d_pallas.1} parent=0 // pred_fallthru
    _
  // Predicated region
  $region34: #{resblock2d_pallas.1} parent=0 // pred_check
    _
  $region35: #{resblock2d_pallas.1} parent=0 // pred_check_branch
    %11222 = sbr.rel (0) target = $region37
  $region36: #{resblock2d_pallas.1} parent=0 // pred_region
    _
  $region37: #{resblock2d_pallas.1} parent=0 // pred_fallthru
    _

</llo_original>
